<compile_context>
chip_gen: v7x
topology: tpu7x:2x2x1
jax: 0.10.0
libtpu: 0.0.40
codegen_flags: <defaults>
</compile_context>

<pallas_src>
import functools
import math

import jax
import jax.numpy as jnp
from jax.experimental import pallas as pl
from jax.experimental.pallas import tpu as pltpu

# Cody-Waite split of pi (PI_HI has few mantissa bits so n*PI_HI is exact for
# n <= 2^11; max n here is round(max_len/pi) ~ 1592).
_PI_HI = 3.140625
_PI_LO = 9.676535897932e-04
_INV_PI = 0.3183098861837907
_HALF_PI = math.pi / 2.0


def _pe_kernel(freq_ref, ph_half_ref, ph_val_ref, o_ref):
    """Fill one (tile_rows, e_pad) tile of the sinusoidal PE table.

    freq_ref:    (1, e_pad) f32 — per-column frequency exp(2*(d//2)*(-ln 1e4 / E))
    ph_half_ref: (1, e_pad) f32 — 0.0 for even cols, 0.5 for odd (quotient shift)
    ph_val_ref:  (1, e_pad) f32 — 0.0 for even cols, pi/2 for odd (post-reduction)
    o_ref:       (tile_rows, e_pad) f32 output tile.
    """
    tile_rows, e_pad = o_ref.shape
    row_off = pl.program_id(0) * tile_rows
    pos = (jax.lax.broadcasted_iota(jnp.int32, (tile_rows, e_pad), 0)
           + row_off).astype(jnp.float32)

    # Angle (without the cos phase); identical to what the reference feeds sin/cos.
    a = pos * freq_ref[...]

    # n = round((a + phase)/pi); tie direction is irrelevant for the identity
    # sin(x) = (-1)^n * sin(x - n*pi).
    n = jnp.floor(a * jnp.float32(_INV_PI) + ph_half_ref[...] + jnp.float32(0.5))

    # Cody-Waite reduction; the cos phase (pi/2) is added to the small reduced
    # value, avoiding large-argument cancellation.
    r = ((a - n * jnp.float32(_PI_HI)) - n * jnp.float32(_PI_LO)) + ph_val_ref[...]

    # sign = (-1)^n  (n >= 0 and integer-valued).
    half_n = n * jnp.float32(0.5)
    sign = jnp.float32(1.0) - jnp.float32(4.0) * (half_n - jnp.floor(half_n))

    # Degree-11 odd polynomial for sin on |r| <= pi/2 (+eps).
    r2 = r * r
    p = jnp.float32(-2.5052108e-08)
    p = p * r2 + jnp.float32(2.7557319e-06)
    p = p * r2 + jnp.float32(-1.9841270e-04)
    p = p * r2 + jnp.float32(8.3333333e-03)
    p = p * r2 + jnp.float32(-1.6666667e-01)
    s = p * r2 * r + r

    o_ref[...] = sign * s


def _choose_tile_rows(n_rows, e_pad, budget_bytes=24 << 20):
    """Rows per tile: fit double-buffered f32 output in `budget_bytes`,
    multiple of 8, and force >= 2 grid steps (when possible) for v7x megacore."""
    if n_rows <= 8:
        return n_rows  # full-array block (also covers n_rows not multiple of 8)
    rows = budget_bytes // (2 * e_pad * 4)
    rows = max(8, (rows // 8) * 8)
    half = ((-(-n_rows // 2)) + 7) // 8 * 8      # ceil(n/2) rounded up to 8
    full = ((n_rows + 7) // 8) * 8
    return min(rows, half, full)


@functools.lru_cache(maxsize=None)
def _build_pe_table(embed_size, max_len):
    """Build the full (max_len, 1, embed_size) PE buffer with one pallas_call."""
    e_pad = max(128, ((embed_size + 127) // 128) * 128)   # lane-dense output
    tile_rows = _choose_tile_rows(max_len, e_pad)
    grid = (pl.cdiv(max_len, tile_rows),)

    # Column-only quantities (computed once, resident (1, e_pad) blocks).
    d = jnp.arange(e_pad)
    freq = jnp.exp(
        (2.0 * (d // 2)).astype(jnp.float32)
        * jnp.float32(-math.log(10000.0) / embed_size)
    )[None, :]
    odd = (d % 2).astype(jnp.float32)
    ph_half = (odd * jnp.float32(0.5))[None, :]
    ph_val = (odd * jnp.float32(_HALF_PI))[None, :]

    cost = pl.CostEstimate(
        flops=30 * max_len * e_pad,
        transcendentals=0,
        bytes_accessed=max_len * e_pad * 4 + 3 * e_pad * 4,
    )

    pe_2d = pl.pallas_call(
        _pe_kernel,
        out_shape=jax.ShapeDtypeStruct((max_len, e_pad), jnp.float32),
        grid_spec=pltpu.PrefetchScalarGridSpec(
            num_scalar_prefetch=0,
            grid=grid,
            in_specs=[
                pl.BlockSpec((1, e_pad), lambda i: (0, 0)),
                pl.BlockSpec((1, e_pad), lambda i: (0, 0)),
                pl.BlockSpec((1, e_pad), lambda i: (0, 0)),
            ],
            out_specs=pl.BlockSpec((tile_rows, e_pad), lambda i: (i, 0)),
        ),
        compiler_params=pltpu.CompilerParams(
            dimension_semantics=("parallel",),
            vmem_limit_bytes=32 * 1024 * 1024,
        ),
        cost_estimate=cost,
    )(freq, ph_half, ph_val)

    # Drop lane padding and add the singleton batch dim:
    # pe.unsqueeze(0).transpose(0,1)  ->  (max_len, 1, embed_size)
    return pe_2d[:, :embed_size][:, None, :]


def positional_encoding_forward(x, embed_size, max_len=5000):
    """Pallas equivalent of PositionalEncoding.forward(x).

    x: (seq_len, batch, embed_size); only x.shape[0] is consumed (as in PyTorch).
    Returns: (seq_len, 1, embed_size) float32.
    """
    seq_len = x.shape[0]
    assert seq_len <= max_len, "sequence longer than max_len"
    pe = _build_pe_table(int(embed_size), int(max_len))   # kernel runs once, cached
    return pe[:seq_len]


def _reference_pe(seq_len, embed_size):
    """Pure-JAX reference of the PyTorch buffer construction."""
    position = jnp.arange(seq_len, dtype=jnp.float32)[:, None]
    div_term = jnp.exp(
        jnp.arange(0, embed_size, 2, dtype=jnp.float32)
        * (-math.log(10000.0) / embed_size)
    )
    ref = jnp.zeros((seq_len, embed_size), dtype=jnp.float32)
    ref = ref.at[:, 0::2].set(jnp.sin(position * div_term))
    ref = ref.at[:, 1::2].set(jnp.cos(position * div_term))
    return ref[:, None, :]


if __name__ == "__main__":
    key = jax.random.PRNGKey(0)

    # Small shapes consistent with the module; only x.shape[0] is consumed.
    seq_len, batch, embed_size = 8, 2, 32
    x = jax.random.normal(key, (seq_len, batch, embed_size), dtype=jnp.float32)

    out = positional_encoding_forward(x, embed_size=embed_size, max_len=5000)
    out = jax.block_until_ready(out)
    ref = _reference_pe(seq_len, embed_size)
    assert out.shape == (seq_len, 1, embed_size), out.shape
    assert jnp.allclose(out, ref, atol=1e-5, rtol=1e-5), "mismatch vs reference"

    # Multi-tile / partial-last-tile path (embed multiple of 128, long seq).
    seq_len2, embed_size2 = 1030, 128
    x2 = jnp.zeros((seq_len2, batch, embed_size2), dtype=jnp.float32)
    out2 = positional_encoding_forward(x2, embed_size=embed_size2, max_len=5000)
    out2 = jax.block_until_ready(out2)
    ref2 = _reference_pe(seq_len2, embed_size2)
    assert out2.shape == (seq_len2, 1, embed_size2), out2.shape
    assert jnp.allclose(out2, ref2, atol=1e-4, rtol=1e-5), "tiled mismatch"

    # Worst-case positions (near max_len) exercise the Cody-Waite sine path;
    # table is reused from the cache (no extra kernel launch).
    seq_len3 = 5000
    x3 = jnp.zeros((seq_len3, batch, embed_size2), dtype=jnp.float32)
    out3 = positional_encoding_forward(x3, embed_size=embed_size2, max_len=5000)
    out3 = jax.block_until_ready(out3)
    ref3 = _reference_pe(seq_len3, embed_size2)
    assert jnp.allclose(out3, ref3, atol=1e-4, rtol=1e-5), "large-pos mismatch"

    print("KERNEL_OK")
</pallas_src>

<mosaic_0001>
module attributes {stable_mosaic.version = 11 : i64} {
  func.func @_pe_kernel(%arg0: i32, %arg1: memref<1x128xf32, #tpu.memory_space<vmem>>, %arg2: memref<1x128xf32, #tpu.memory_space<vmem>>, %arg3: memref<1x128xf32, #tpu.memory_space<vmem>>, %arg4: memref<2504x128xf32, #tpu.memory_space<vmem>>) attributes {dimension_semantics = [#tpu.dimension_semantics<parallel>], iteration_bounds = array<i64: 2>, scalar_prefetch = 0 : i64, scratch_operands = 0 : i64, tpu.core_type = #tpu.core_type<tc>, window_params = [{pipeline_mode = #tpu.pipeline_mode<synchronous>, transform_indices = @transform_0, window_bounds = array<i64: 1, 128>}, {pipeline_mode = #tpu.pipeline_mode<synchronous>, transform_indices = @transform_1, window_bounds = array<i64: 1, 128>}, {pipeline_mode = #tpu.pipeline_mode<synchronous>, transform_indices = @transform_2, window_bounds = array<i64: 1, 128>}, {transform_indices = @transform_3, window_bounds = array<i64: 2504, 128>}]} {
    %c2504_i32 = arith.constant 2504 : i32
    %0 = arith.muli %arg0, %c2504_i32 : i32
    %1 = tpu.iota {dimensions = array<i32: 0>} : vector<2504x128xi32>
    %2 = vector.broadcast %0 : i32 to vector<2504x128xi32>
    %3 = arith.addi %1, %2 : vector<2504x128xi32>
    %4 = arith.sitofp %3 : vector<2504x128xi32> to vector<2504x128xf32>
    %c0 = arith.constant 0 : index
    %c0_0 = arith.constant 0 : index
    %5 = vector.load %arg1[%c0, %c0_0] : memref<1x128xf32, #tpu.memory_space<vmem>>, vector<1x128xf32>
    %6 = vector.broadcast %5 : vector<1x128xf32> to vector<2504x128xf32>
    %7 = arith.mulf %4, %6 : vector<2504x128xf32>
    %cst = arith.constant 0.318309873 : f32
    %8 = vector.broadcast %cst : f32 to vector<2504x128xf32>
    %9 = arith.mulf %7, %8 : vector<2504x128xf32>
    %c0_1 = arith.constant 0 : index
    %c0_2 = arith.constant 0 : index
    %10 = vector.load %arg2[%c0_1, %c0_2] : memref<1x128xf32, #tpu.memory_space<vmem>>, vector<1x128xf32>
    %11 = vector.broadcast %10 : vector<1x128xf32> to vector<2504x128xf32>
    %12 = arith.addf %9, %11 : vector<2504x128xf32>
    %cst_3 = arith.constant 5.000000e-01 : f32
    %13 = vector.broadcast %cst_3 : f32 to vector<2504x128xf32>
    %14 = arith.addf %12, %13 : vector<2504x128xf32>
    %15 = math.floor %14 : vector<2504x128xf32>
    %cst_4 = arith.constant 3.140625 : f32
    %16 = vector.broadcast %cst_4 : f32 to vector<2504x128xf32>
    %17 = arith.mulf %15, %16 : vector<2504x128xf32>
    %18 = arith.subf %7, %17 : vector<2504x128xf32>
    %cst_5 = arith.constant 9.67653584E-4 : f32
    %19 = vector.broadcast %cst_5 : f32 to vector<2504x128xf32>
    %20 = arith.mulf %15, %19 : vector<2504x128xf32>
    %21 = arith.subf %18, %20 : vector<2504x128xf32>
    %c0_6 = arith.constant 0 : index
    %c0_7 = arith.constant 0 : index
    %22 = vector.load %arg3[%c0_6, %c0_7] : memref<1x128xf32, #tpu.memory_space<vmem>>, vector<1x128xf32>
    %23 = vector.broadcast %22 : vector<1x128xf32> to vector<2504x128xf32>
    %24 = arith.addf %21, %23 : vector<2504x128xf32>
    %cst_8 = arith.constant 5.000000e-01 : f32
    %25 = vector.broadcast %cst_8 : f32 to vector<2504x128xf32>
    %26 = arith.mulf %15, %25 : vector<2504x128xf32>
    %27 = math.floor %26 : vector<2504x128xf32>
    %28 = arith.subf %26, %27 : vector<2504x128xf32>
    %cst_9 = arith.constant 4.000000e+00 : f32
    %29 = vector.broadcast %cst_9 : f32 to vector<2504x128xf32>
    %30 = arith.mulf %29, %28 : vector<2504x128xf32>
    %cst_10 = arith.constant 1.000000e+00 : f32
    %31 = vector.broadcast %cst_10 : f32 to vector<2504x128xf32>
    %32 = arith.subf %31, %30 : vector<2504x128xf32>
    %33 = arith.mulf %24, %24 : vector<2504x128xf32>
    %cst_11 = arith.constant -2.50521079E-8 : f32
    %34 = vector.broadcast %cst_11 : f32 to vector<2504x128xf32>
    %35 = arith.mulf %34, %33 : vector<2504x128xf32>
    %cst_12 = arith.constant 2.75573188E-6 : f32
    %36 = vector.broadcast %cst_12 : f32 to vector<2504x128xf32>
    %37 = arith.addf %35, %36 : vector<2504x128xf32>
    %38 = arith.mulf %37, %33 : vector<2504x128xf32>
    %cst_13 = arith.constant -1.98412701E-4 : f32
    %39 = vector.broadcast %cst_13 : f32 to vector<2504x128xf32>
    %40 = arith.addf %38, %39 : vector<2504x128xf32>
    %41 = arith.mulf %40, %33 : vector<2504x128xf32>
    %cst_14 = arith.constant 0.00833333284 : f32
    %42 = vector.broadcast %cst_14 : f32 to vector<2504x128xf32>
    %43 = arith.addf %41, %42 : vector<2504x128xf32>
    %44 = arith.mulf %43, %33 : vector<2504x128xf32>
    %cst_15 = arith.constant -0.166666672 : f32
    %45 = vector.broadcast %cst_15 : f32 to vector<2504x128xf32>
    %46 = arith.addf %44, %45 : vector<2504x128xf32>
    %47 = arith.mulf %46, %33 : vector<2504x128xf32>
    %48 = arith.mulf %47, %24 : vector<2504x128xf32>
    %49 = arith.addf %48, %24 : vector<2504x128xf32>
    %50 = arith.mulf %32, %49 : vector<2504x128xf32>
    %c0_16 = arith.constant 0 : index
    %c0_17 = arith.constant 0 : index
    %51 = vector.load %arg4[%c0_16, %c0_17] : memref<2504x128xf32, #tpu.memory_space<vmem>>, vector<2504x128xf32>
    tpu.vector_store %arg4[%c0_16, %c0_17], %50 {strides = array<i32>} : memref<2504x128xf32, #tpu.memory_space<vmem>>, vector<2504x128xf32>,
    return
  }
  func.func @transform_0(%arg0: i32) -> (i32, i32) {
    %c0_i32 = arith.constant 0 : i32
    %c0_i32_0 = arith.constant 0 : i32
    %c0_i32_1 = arith.constant 0 : i32
    return %c0_i32, %c0_i32_0 : i32, i32
  }
  func.func @transform_1(%arg0: i32) -> (i32, i32) {
    %c0_i32 = arith.constant 0 : i32
    %c0_i32_0 = arith.constant 0 : i32
    %c0_i32_1 = arith.constant 0 : i32
    return %c0_i32, %c0_i32_0 : i32, i32
  }
  func.func @transform_2(%arg0: i32) -> (i32, i32) {
    %c0_i32 = arith.constant 0 : i32
    %c0_i32_0 = arith.constant 0 : i32
    %c0_i32_1 = arith.constant 0 : i32
    return %c0_i32, %c0_i32_0 : i32, i32
  }
  func.func @transform_3(%arg0: i32) -> (i32, i32) {
    %c0_i32 = arith.constant 0 : i32
    %c0_i32_0 = arith.constant 0 : i32
    return %arg0, %c0_i32 : i32, i32
  }
}

</mosaic_0001>

<llo_original>
// kernel: tpu_custom_call.1
$region0: #{tpu_custom_call.1}
  #allocation0 [shape = 'u32[]', space=smem, size = 0x4, offset = 0x4, fixed_abs, tag = 'smem constant byte address 0x4 - core index']
  #allocation1 [shape = 'u32[144,128]{1,0:T(1,128)}', space=vmem, size = 0x12000, scoped, tag = 'internal scratch']
  %s0 = inlined_call_operand.hbm [shape: f32[1,128], index: 0, kind: input, shape index: {}]
  %s1 = inlined_call_operand.hbm [shape: f32[1,128], index: 1, kind: input, shape index: {}]
  %s2 = inlined_call_operand.hbm [shape: f32[1,128], index: 2, kind: input, shape index: {}]
  %s3 = inlined_call_operand.hbm [shape: f32[5000,128], index: 3, kind: output, shape index: {}]
  %s4 = sld [smem:[#allocation0]]
  $region57: #{tpu_custom_call.1} parent=0
    _
  %s6 = ssub.s32 1, %s4
  %s7 = scalar_select 0, %s6, %s4
  $region1: #{tpu_custom_call.1} parent=0
    #allocation2 [shape = 'u8[512]{0}', space=vmem, size = 0x400, scoped, tag = 'input window, operand 0, single buffered']
    #allocation3 [shape = 's32[2]{0}', space=sflag, size = 0x8, scoped, tag = 'scoped memory for tpu_custom_call.1']
    #allocation4 [shape = 's32[2]{0}', space=sflag, size = 0x8, scoped, tag = 'scoped memory for tpu_custom_call.1']
    #allocation5 [shape = 'u8[512]{0}', space=vmem, size = 0x400, scoped, tag = 'input window, operand 1, single buffered']
    #allocation6 [shape = 's32[1]{0}', space=sflag, size = 0x4, scoped, tag = 'scoped memory for tpu_custom_call.1']
    #allocation7 [shape = 'u8[512]{0}', space=vmem, size = 0x400, scoped, tag = 'input window, operand 2, single buffered']
    #allocation8 [shape = 'u8[2564096]{0}', space=vmem, size = 0x272000, scoped, tag = 'output window, operand 0']
    %8 = vsyncpa [#allocation3], 0
    %9 = vsyncpa [#allocation6], 0
    %10 = vsyncpa [#allocation4], 0
    %s11 = scalar_lea.sflag [#allocation4], 1
    %12 = vsyncpa %s11, 0
    loop: start=0, step=1, limit=4
    $region2: #{tpu_custom_call.1} parent=1 // loop_pre_header
      _
    $region3: #{tpu_custom_call.1} parent=1 // loop_header
      %s14 = sphi 0, %s18
      %p15 = scmp.ge.s32.totalorder %s14, 4
      %s22 = sphi 0, %s22
      %s24 = sphi 0, %s22
      %s25 = sphi 0, %s24
      %s39 = sphi 0, %s25
      %s43 = sphi 0, %s43
      %s45 = sphi 0, %s43
      %s46 = sphi 0, %s45
      %s60 = sphi 0, %s46
      %s64 = sphi 0, %s64
      %s66 = sphi 0, %s64
      %s67 = sphi 0, %s66
      %s81 = sphi 0, %s67
      %s87 = sphi 0, %s89
      %s90 = sphi 0, %s87
      %s91 = sphi 0, %s90
      %s107 = sphi 0, %s91
    $region4: #{tpu_custom_call.1} parent=1 // loop_header_branch
      %17 = sbr.rel (%p15) target = $region8
    $region5: #{tpu_custom_call.1} parent=1 // loop_body
      %s19 = ssub.s32 %s14, 1
      %s20 = ssub.s32 %s14, 2
      %s21 = sadd.s32 %s14, 1
      %s23 = sadd.s32 %s22, 1
      %p26 = scmp.eq.s32.totalorder %s14, 1
      %p27 = scmp.ne.s32.totalorder %s22, %s24
      %p28 = scmp.eq.s32.totalorder %s14, 0
      %p29 = por %p27, %p28
      %p30 = scmp.ne.s32.totalorder %s22, %s24
      %p31 = scmp.eq.s32.totalorder %s19, 1
      %p32 = por %p30, %p31
      %p33 = scmp.ne.s32.totalorder %s24, %s25
      %p34 = scmp.eq.s32.totalorder %s19, 0
      %p35 = por %p33, %p34
      %p36 = scmp.ne.s32.totalorder %s24, %s25
      %p37 = scmp.eq.s32.totalorder %s20, 1
      %p38 = por %p36, %p37
      %p40 = scmp.ne.s32.totalorder %s25, %s39
      %p41 = scmp.eq.s32.totalorder %s20, 0
      %p42 = por %p40, %p41
      %s44 = sadd.s32 %s43, 1
      %p47 = scmp.eq.s32.totalorder %s14, 1
      %p48 = scmp.ne.s32.totalorder %s43, %s45
      %p49 = scmp.eq.s32.totalorder %s14, 0
      %p50 = por %p48, %p49
      %p51 = scmp.ne.s32.totalorder %s43, %s45
      %p52 = scmp.eq.s32.totalorder %s19, 1
      %p53 = por %p51, %p52
      %p54 = scmp.ne.s32.totalorder %s45, %s46
      %p55 = scmp.eq.s32.totalorder %s19, 0
      %p56 = por %p54, %p55
      %p57 = scmp.ne.s32.totalorder %s45, %s46
      %p58 = scmp.eq.s32.totalorder %s20, 1
      %p59 = por %p57, %p58
      %p61 = scmp.ne.s32.totalorder %s46, %s60
      %p62 = scmp.eq.s32.totalorder %s20, 0
      %p63 = por %p61, %p62
      %s65 = sadd.s32 %s64, 1
      %p68 = scmp.eq.s32.totalorder %s14, 1
      %p69 = scmp.ne.s32.totalorder %s64, %s66
      %p70 = scmp.eq.s32.totalorder %s14, 0
      %p71 = por %p69, %p70
      %p72 = scmp.ne.s32.totalorder %s64, %s66
      %p73 = scmp.eq.s32.totalorder %s19, 1
      %p74 = por %p72, %p73
      %p75 = scmp.ne.s32.totalorder %s66, %s67
      %p76 = scmp.eq.s32.totalorder %s19, 0
      %p77 = por %p75, %p76
      %p78 = scmp.ne.s32.totalorder %s66, %s67
      %p79 = scmp.eq.s32.totalorder %s20, 1
      %p80 = por %p78, %p79
      %p82 = scmp.ne.s32.totalorder %s67, %s81
      %p83 = scmp.eq.s32.totalorder %s20, 0
      %p84 = por %p82, %p83
      %s85 = ssub.s32 %s14, %s21
      %p86 = scmp.eq.s32.totalorder %s85, 0
      %s88 = sadd.s32 %s87, 1
      %s89 = scalar_select %p86, %s87, %s88
      %p92 = pneg %p86
      %p93 = scmp.eq.s32.totalorder %s14, 1
      %p94 = por %p92, %p93
      %p95 = scmp.ne.s32.totalorder %s87, %s90
      %p96 = scmp.eq.s32.totalorder %s14, 0
      %p97 = por %p95, %p96
      %p98 = scmp.ne.s32.totalorder %s87, %s90
      %p99 = scmp.eq.s32.totalorder %s19, 1
      %p100 = por %p98, %p99
      %p101 = scmp.ne.s32.totalorder %s90, %s91
      %p102 = scmp.eq.s32.totalorder %s19, 0
      %p103 = por %p101, %p102
      %p104 = scmp.ne.s32.totalorder %s90, %s91
      %p105 = scmp.eq.s32.totalorder %s20, 1
      %p106 = por %p104, %p105
      %p108 = scmp.ne.s32.totalorder %s91, %s107
      %p109 = scmp.eq.s32.totalorder %s20, 0
      %p110 = por %p108, %p109
      %p111 = scmp.le.s32.totalorder 1, %s14
      %p112 = scmp.lt.s32.totalorder %s14, 3
      %p113 = pnand %p111, %p112
      %p114 = pneg %p113
      // Predicated region
      $region9: #{tpu_custom_call.1} parent=5 // pred_check
        _
      $region10: #{tpu_custom_call.1} parent=5 // pred_check_branch
        %116 = sbr.rel (%p113) target = $region12
      $region11: #{tpu_custom_call.1} parent=5 // pred_region
        %s117 = ssub.s32 %s14, 1
        // Predicated region
        $region13: #{tpu_custom_call.1} parent=11 // pred_check
          %p118 = pneg %p35
        $region14: #{tpu_custom_call.1} parent=11 // pred_check_branch
          %120 = sbr.rel (%p118) target = $region16
        $region15: #{tpu_custom_call.1} parent=11 // pred_region
          %s122 = ssub.s32 16, 16
          %123 = vsyncadd [#allocation3], %s122
          %s125 = sshll.u32 [#allocation2], 4
          %s126 = int_to_ptr.vmem [resolvable:$true] %s125
          %128 = dma.hbm_to_vmem [thread:$0]  %s0, 16, %s126, [#allocation3]
        $region16: #{tpu_custom_call.1} parent=11 // pred_fallthru
          _
        // Predicated region
        $region17: #{tpu_custom_call.1} parent=11 // pred_check
          %p129 = pneg %p56
        $region18: #{tpu_custom_call.1} parent=11 // pred_check_branch
          %131 = sbr.rel (%p129) target = $region20
        $region19: #{tpu_custom_call.1} parent=11 // pred_region
          %s133 = ssub.s32 16, 16
          %134 = vsyncadd [#allocation6], %s133
          %s136 = sshll.u32 [#allocation5], 4
          %s137 = int_to_ptr.vmem [resolvable:$true] %s136
          %139 = dma.hbm_to_vmem [thread:$0]  %s1, 16, %s137, [#allocation6]
        $region20: #{tpu_custom_call.1} parent=11 // pred_fallthru
          _
        // Predicated region
        $region21: #{tpu_custom_call.1} parent=11 // pred_check
          %p140 = pneg %p77
        $region22: #{tpu_custom_call.1} parent=11 // pred_check_branch
          %142 = sbr.rel (%p140) target = $region24
        $region23: #{tpu_custom_call.1} parent=11 // pred_region
          %s144 = ssub.s32 16, 16
          %145 = vsyncadd [#allocation6], %s144
          %s147 = sshll.u32 [#allocation7], 4
          %s148 = int_to_ptr.vmem [resolvable:$true] %s147
          %150 = dma.hbm_to_vmem [thread:$0]  %s2, 16, %s148, [#allocation6]
        $region24: #{tpu_custom_call.1} parent=11 // pred_fallthru
          _
      $region12: #{tpu_custom_call.1} parent=5 // pred_fallthru
        _
      %p151 = scmp.lt.s32.totalorder %s14, 2
      // Predicated region
      $region25: #{tpu_custom_call.1} parent=5 // pred_check
        %p152 = pneg %p151
      $region26: #{tpu_custom_call.1} parent=5 // pred_check_branch
        %154 = sbr.rel (%p152) target = $region28
      $region27: #{tpu_custom_call.1} parent=5 // pred_region
        _
      $region28: #{tpu_custom_call.1} parent=5 // pred_fallthru
        _
      %p155 = scmp.le.s32.totalorder 1, %s14
      %p156 = scmp.lt.s32.totalorder %s14, 3
      %p157 = pnand %p155, %p156
      %p158 = pneg %p157
      // Predicated region
      $region29: #{tpu_custom_call.1} parent=5 // pred_check
        _
      $region30: #{tpu_custom_call.1} parent=5 // pred_check_branch
        %160 = sbr.rel (%p157) target = $region32
      $region31: #{tpu_custom_call.1} parent=5 // pred_region
        %s161 = ssub.s32 %s14, 1
        // Predicated region
        $region33: #{tpu_custom_call.1} parent=31 // pred_check
          %p162 = pneg %p35
        $region34: #{tpu_custom_call.1} parent=31 // pred_check_branch
          %164 = sbr.rel (%p162) target = $region36
        $region35: #{tpu_custom_call.1} parent=31 // pred_region
          %165 = dma.done [#allocation3], 16
        $region36: #{tpu_custom_call.1} parent=31 // pred_fallthru
          _
        // Predicated region
        $region37: #{tpu_custom_call.1} parent=31 // pred_check
          %p166 = pneg %p56
        $region38: #{tpu_custom_call.1} parent=31 // pred_check_branch
          %168 = sbr.rel (%p166) target = $region40
        $region39: #{tpu_custom_call.1} parent=31 // pred_region
          %169 = dma.done [#allocation6], 16
        $region40: #{tpu_custom_call.1} parent=31 // pred_fallthru
          _
        // Predicated region
        $region41: #{tpu_custom_call.1} parent=31 // pred_check
          %p170 = pneg %p77
        $region42: #{tpu_custom_call.1} parent=31 // pred_check_branch
          %172 = sbr.rel (%p170) target = $region44
        $region43: #{tpu_custom_call.1} parent=31 // pred_region
          %173 = dma.done [#allocation6], 16
        $region44: #{tpu_custom_call.1} parent=31 // pred_fallthru
          _
        %p174 = pneg %p35
        %p175 = pneg %p32
        %p176 = pneg %p56
        %p177 = pneg %p53
        %p178 = pneg %p77
        %p179 = pneg %p74
        %p180 = pneg %p103
        %p181 = pneg %p100
        %s182 = sand.u32 %s90, 1
        %s183 = scalar_lea.sflag [#allocation4], %s182
        %s184 = sand.u32 %s90, 1
        %s185 = smul.addr %s184, 2504
        %s186 = scalar_lea.vmem [#allocation8], %s185
        %s187 = smul.u32 313, %s19
        %s188 = ssub.s32 625, %s187
        %p189 = scmp.lt.s32.totalorder %s188, 313
        %s190 = scalar_select %p189, %s188, 313
        %s191 = smul.u32 128, %s190
        %s192 = smul.u32 %s19, 2504
        %v193 = vlaneseq
        %v194 = vshrl.u32 %v193, 7
        %v195 = vadd.s32 %v194, 8
        %v196 = vadd.s32 %v194, 16
        %v197 = vadd.s32 %v194, 24
        %v198 = vadd.s32 %v194, 32
        %v199 = vadd.s32 %v194, 40
        %v200 = vadd.s32 %v194, 48
        %v201 = vadd.s32 %v194, 56
        %v202 = vadd.s32 %v194, 64
        %v203 = vadd.s32 %v194, 72
        %v204 = vadd.s32 %v194, 80
        %v205 = vadd.s32 %v194, 88
        %v206 = vadd.s32 %v194, 96
        %v207 = vadd.s32 %v194, 104
        %v208 = vadd.s32 %v194, 112
        %v209 = vadd.s32 %v194, 120
        %v210 = vadd.s32 %v194, 128
        %v211 = vadd.s32 %v194, 136
        %v212 = vadd.s32 %v194, 144
        %v213 = vadd.s32 %v194, 152
        %v214 = vadd.s32 %v194, 160
        %v215 = vadd.s32 %v194, 168
        %v216 = vadd.s32 %v194, 176
        %v217 = vadd.s32 %v194, 184
        %v218 = vadd.s32 %v194, 192
        %v219 = vadd.s32 %v194, 200
        %v220 = vadd.s32 %v194, 208
        %v221 = vadd.s32 %v194, 216
        %v222 = vadd.s32 %v194, 224
        %v223 = vadd.s32 %v194, 232
        %v224 = vadd.s32 %v194, 240
        %v225 = vadd.s32 %v194, 248
        %v226 = vadd.s32 %v194, 256
        %v227 = vadd.s32 %v194, 264
        %v228 = vadd.s32 %v194, 272
        %v229 = vadd.s32 %v194, 280
        %v230 = vadd.s32 %v194, 288
        %v231 = vadd.s32 %v194, 296
        %v232 = vadd.s32 %v194, 304
        %v233 = vadd.s32 %v194, 312
        %v234 = vadd.s32 %v194, 320
        %v235 = vadd.s32 %v194, 328
        %v236 = vadd.s32 %v194, 336
        %v237 = vadd.s32 %v194, 344
        %v238 = vadd.s32 %v194, 352
        %v239 = vadd.s32 %v194, 360
        %v240 = vadd.s32 %v194, 368
        %v241 = vadd.s32 %v194, 376
        %v242 = vadd.s32 %v194, 384
        %v243 = vadd.s32 %v194, 392
        %v244 = vadd.s32 %v194, 400
        %v245 = vadd.s32 %v194, 408
        %v246 = vadd.s32 %v194, 416
        %v247 = vadd.s32 %v194, 424
        %v248 = vadd.s32 %v194, 432
        %v249 = vadd.s32 %v194, 440
        %v250 = vadd.s32 %v194, 448
        %v251 = vadd.s32 %v194, 456
        %v252 = vadd.s32 %v194, 464
        %v253 = vadd.s32 %v194, 472
        %v254 = vadd.s32 %v194, 480
        %v255 = vadd.s32 %v194, 488
        %v256 = vadd.s32 %v194, 496
        %v257 = vadd.s32 %v194, 504
        %v258 = vadd.s32 %v194, 512
        %v259 = vadd.s32 %v194, 520
        %v260 = vadd.s32 %v194, 528
        %v261 = vadd.s32 %v194, 536
        %v262 = vadd.s32 %v194, 544
        %v263 = vadd.s32 %v194, 552
        %v264 = vadd.s32 %v194, 560
        %v265 = vadd.s32 %v194, 568
        %v266 = vadd.s32 %v194, 576
        %v267 = vadd.s32 %v194, 584
        %v268 = vadd.s32 %v194, 592
        %v269 = vadd.s32 %v194, 600
        %v270 = vadd.s32 %v194, 608
        %v271 = vadd.s32 %v194, 616
        %v272 = vadd.s32 %v194, 624
        %v273 = vadd.s32 %v194, 632
        %v274 = vadd.s32 %v194, 640
        %v275 = vadd.s32 %v194, 648
        %v276 = vadd.s32 %v194, 656
        %v277 = vadd.s32 %v194, 664
        %v278 = vadd.s32 %v194, 672
        %v279 = vadd.s32 %v194, 680
        %v280 = vadd.s32 %v194, 688
        %v281 = vadd.s32 %v194, 696
        %v282 = vadd.s32 %v194, 704
        %v283 = vadd.s32 %v194, 712
        %v284 = vadd.s32 %v194, 720
        %v285 = vadd.s32 %v194, 728
        %v286 = vadd.s32 %v194, 736
        %v287 = vadd.s32 %v194, 744
        %v288 = vadd.s32 %v194, 752
        %v289 = vadd.s32 %v194, 760
        %v290 = vadd.s32 %v194, 768
        %v291 = vadd.s32 %v194, 776
        %v292 = vadd.s32 %v194, 784
        %v293 = vadd.s32 %v194, 792
        %v294 = vadd.s32 %v194, 800
        %v295 = vadd.s32 %v194, 808
        %v296 = vadd.s32 %v194, 816
        %v297 = vadd.s32 %v194, 824
        %v298 = vadd.s32 %v194, 832
        %v299 = vadd.s32 %v194, 840
        %v300 = vadd.s32 %v194, 848
        %v301 = vadd.s32 %v194, 856
        %v302 = vadd.s32 %v194, 864
        %v303 = vadd.s32 %v194, 872
        %v304 = vadd.s32 %v194, 880
        %v305 = vadd.s32 %v194, 888
        %v306 = vadd.s32 %v194, 896
        %v307 = vadd.s32 %v194, 904
        %v308 = vadd.s32 %v194, 912
        %v309 = vadd.s32 %v194, 920
        %v310 = vadd.s32 %v194, 928
        %v311 = vadd.s32 %v194, 936
        %v312 = vadd.s32 %v194, 944
        %v313 = vadd.s32 %v194, 952
        %v314 = vadd.s32 %v194, 960
        %v315 = vadd.s32 %v194, 968
        %v316 = vadd.s32 %v194, 976
        %v317 = vadd.s32 %v194, 984
        %v318 = vadd.s32 %v194, 992
        %v319 = vadd.s32 %v194, 1000
        %v320 = vadd.s32 %v194, 1008
        %v321 = vadd.s32 %v194, 1016
        %v322 = vadd.s32 %v194, 1024
        %v323 = vadd.s32 %v194, 1032
        %v324 = vadd.s32 %v194, 1040
        %v325 = vadd.s32 %v194, 1048
        %v326 = vadd.s32 %v194, 1056
        %v327 = vadd.s32 %v194, 1064
        %v328 = vadd.s32 %v194, 1072
        %v329 = vadd.s32 %v194, 1080
        %v330 = vadd.s32 %v194, 1088
        %v331 = vadd.s32 %v194, 1096
        %v332 = vadd.s32 %v194, 1104
        %v333 = vadd.s32 %v194, 1112
        %v334 = vadd.s32 %v194, 1120
        %v335 = vadd.s32 %v194, 1128
        %v336 = vadd.s32 %v194, 1136
        %v337 = vadd.s32 %v194, 1144
        %v338 = vadd.s32 %v194, 1152
        %v339 = vadd.s32 %v194, 1160
        %v340 = vadd.s32 %v194, 1168
        %v341 = vadd.s32 %v194, 1176
        %v342 = vadd.s32 %v194, 1184
        %v343 = vadd.s32 %v194, 1192
        %v344 = vadd.s32 %v194, 1200
        %v345 = vadd.s32 %v194, 1208
        %v346 = vadd.s32 %v194, 1216
        %v347 = vadd.s32 %v194, 1224
        %v348 = vadd.s32 %v194, 1232
        %v349 = vadd.s32 %v194, 1240
        %v350 = vadd.s32 %v194, 1248
        %v351 = vadd.s32 %v194, 1256
        %v352 = vadd.s32 %v194, 1264
        %v353 = vadd.s32 %v194, 1272
        %v354 = vadd.s32 %v194, 1280
        %v355 = vadd.s32 %v194, 1288
        %v356 = vadd.s32 %v194, 1296
        %v357 = vadd.s32 %v194, 1304
        %v358 = vadd.s32 %v194, 1312
        %v359 = vadd.s32 %v194, 1320
        %v360 = vadd.s32 %v194, 1328
        %v361 = vadd.s32 %v194, 1336
        %v362 = vadd.s32 %v194, 1344
        %v363 = vadd.s32 %v194, 1352
        %v364 = vadd.s32 %v194, 1360
        %v365 = vadd.s32 %v194, 1368
        %v366 = vadd.s32 %v194, 1376
        %v367 = vadd.s32 %v194, 1384
        %v368 = vadd.s32 %v194, 1392
        %v369 = vadd.s32 %v194, 1400
        %v370 = vadd.s32 %v194, 1408
        %v371 = vadd.s32 %v194, 1416
        %v372 = vadd.s32 %v194, 1424
        %v373 = vadd.s32 %v194, 1432
        %v374 = vadd.s32 %v194, 1440
        %v375 = vadd.s32 %v194, 1448
        %v376 = vadd.s32 %v194, 1456
        %v377 = vadd.s32 %v194, 1464
        %v378 = vadd.s32 %v194, 1472
        %v379 = vadd.s32 %v194, 1480
        %v380 = vadd.s32 %v194, 1488
        %v381 = vadd.s32 %v194, 1496
        %v382 = vadd.s32 %v194, 1504
        %v383 = vadd.s32 %v194, 1512
        %v384 = vadd.s32 %v194, 1520
        %v385 = vadd.s32 %v194, 1528
        %v386 = vadd.s32 %v194, 1536
        %v387 = vadd.s32 %v194, 1544
        %v388 = vadd.s32 %v194, 1552
        %v389 = vadd.s32 %v194, 1560
        %v390 = vadd.s32 %v194, 1568
        %v391 = vadd.s32 %v194, 1576
        %v392 = vadd.s32 %v194, 1584
        %v393 = vadd.s32 %v194, 1592
        %v394 = vadd.s32 %v194, 1600
        %v395 = vadd.s32 %v194, 1608
        %v396 = vadd.s32 %v194, 1616
        %v397 = vadd.s32 %v194, 1624
        %v398 = vadd.s32 %v194, 1632
        %v399 = vadd.s32 %v194, 1640
        %v400 = vadd.s32 %v194, 1648
        %v401 = vadd.s32 %v194, 1656
        %v402 = vadd.s32 %v194, 1664
        %v403 = vadd.s32 %v194, 1672
        %v404 = vadd.s32 %v194, 1680
        %v405 = vadd.s32 %v194, 1688
        %v406 = vadd.s32 %v194, 1696
        %v407 = vadd.s32 %v194, 1704
        %v408 = vadd.s32 %v194, 1712
        %v409 = vadd.s32 %v194, 1720
        %v410 = vadd.s32 %v194, 1728
        %v411 = vadd.s32 %v194, 1736
        %v412 = vadd.s32 %v194, 1744
        %v413 = vadd.s32 %v194, 1752
        %v414 = vadd.s32 %v194, 1760
        %v415 = vadd.s32 %v194, 1768
        %v416 = vadd.s32 %v194, 1776
        %v417 = vadd.s32 %v194, 1784
        %v418 = vadd.s32 %v194, 1792
        %v419 = vadd.s32 %v194, 1800
        %v420 = vadd.s32 %v194, 1808
        %v421 = vadd.s32 %v194, 1816
        %v422 = vadd.s32 %v194, 1824
        %v423 = vadd.s32 %v194, 1832
        %v424 = vadd.s32 %v194, 1840
        %v425 = vadd.s32 %v194, 1848
        %v426 = vadd.s32 %v194, 1856
        %v427 = vadd.s32 %v194, 1864
        %v428 = vadd.s32 %v194, 1872
        %v429 = vadd.s32 %v194, 1880
        %v430 = vadd.s32 %v194, 1888
        %v431 = vadd.s32 %v194, 1896
        %v432 = vadd.s32 %v194, 1904
        %v433 = vadd.s32 %v194, 1912
        %v434 = vadd.s32 %v194, 1920
        %v435 = vadd.s32 %v194, 1928
        %v436 = vadd.s32 %v194, 1936
        %v437 = vadd.s32 %v194, 1944
        %v438 = vadd.s32 %v194, 1952
        %v439 = vadd.s32 %v194, 1960
        %v440 = vadd.s32 %v194, 1968
        %v441 = vadd.s32 %v194, 1976
        %v442 = vadd.s32 %v194, 1984
        %v443 = vadd.s32 %v194, 1992
        %v444 = vadd.s32 %v194, 2000
        %v445 = vadd.s32 %v194, 2008
        %v446 = vadd.s32 %v194, 2016
        %v447 = vadd.s32 %v194, 2024
        %v448 = vadd.s32 %v194, 2032
        %v449 = vadd.s32 %v194, 2040
        %v450 = vadd.s32 %v194, 2048
        %v451 = vadd.s32 %v194, 2056
        %v452 = vadd.s32 %v194, 2064
        %v453 = vadd.s32 %v194, 2072
        %v454 = vadd.s32 %v194, 2080
        %v455 = vadd.s32 %v194, 2088
        %v456 = vadd.s32 %v194, 2096
        %v457 = vadd.s32 %v194, 2104
        %v458 = vadd.s32 %v194, 2112
        %v459 = vadd.s32 %v194, 2120
        %v460 = vadd.s32 %v194, 2128
        %v461 = vadd.s32 %v194, 2136
        %v462 = vadd.s32 %v194, 2144
        %v463 = vadd.s32 %v194, 2152
        %v464 = vadd.s32 %v194, 2160
        %v465 = vadd.s32 %v194, 2168
        %v466 = vadd.s32 %v194, 2176
        %v467 = vadd.s32 %v194, 2184
        %v468 = vadd.s32 %v194, 2192
        %v469 = vadd.s32 %v194, 2200
        %v470 = vadd.s32 %v194, 2208
        %v471 = vadd.s32 %v194, 2216
        %v472 = vadd.s32 %v194, 2224
        %v473 = vadd.s32 %v194, 2232
        %v474 = vadd.s32 %v194, 2240
        %v475 = vadd.s32 %v194, 2248
        %v476 = vadd.s32 %v194, 2256
        %v477 = vadd.s32 %v194, 2264
        %v478 = vadd.s32 %v194, 2272
        %v479 = vadd.s32 %v194, 2280
        %v480 = vadd.s32 %v194, 2288
        %v481 = vadd.s32 %v194, 2296
        %v482 = vadd.s32 %v194, 2304
        %v483 = vadd.s32 %v194, 2312
        %v484 = vadd.s32 %v194, 2320
        %v485 = vadd.s32 %v194, 2328
        %v486 = vadd.s32 %v194, 2336
        %v487 = vadd.s32 %v194, 2344
        %v488 = vadd.s32 %v194, 2352
        %v489 = vadd.s32 %v194, 2360
        %v490 = vadd.s32 %v194, 2368
        %v491 = vadd.s32 %v194, 2376
        %v492 = vadd.s32 %v194, 2384
        %v493 = vadd.s32 %v194, 2392
        %v494 = vadd.s32 %v194, 2400
        %v495 = vadd.s32 %v194, 2408
        %v496 = vadd.s32 %v194, 2416
        %v497 = vadd.s32 %v194, 2424
        %v498 = vadd.s32 %v194, 2432
        %v499 = vadd.s32 %v194, 2440
        %v500 = vadd.s32 %v194, 2448
        %v501 = vadd.s32 %v194, 2456
        %v502 = vadd.s32 %v194, 2464
        %v503 = vadd.s32 %v194, 2472
        %v504 = vadd.s32 %v194, 2480
        %v505 = vadd.s32 %v194, 2488
        %v506 = vadd.s32 %v194, 2496
        %v507 = vstv %s192
        %v508 = vadd.s32 %v194, %v507
        %v509 = vadd.s32 %v195, %v507
        %v510 = vadd.s32 %v196, %v507
        %v511 = vadd.s32 %v197, %v507
        %v512 = vadd.s32 %v198, %v507
        %v513 = vadd.s32 %v199, %v507
        %v514 = vadd.s32 %v200, %v507
        %v515 = vadd.s32 %v201, %v507
        %v516 = vadd.s32 %v202, %v507
        %v517 = vadd.s32 %v203, %v507
        %v518 = vadd.s32 %v204, %v507
        %v519 = vadd.s32 %v205, %v507
        %v520 = vadd.s32 %v206, %v507
        %v521 = vadd.s32 %v207, %v507
        %v522 = vadd.s32 %v208, %v507
        %v523 = vadd.s32 %v209, %v507
        %v524 = vadd.s32 %v210, %v507
        %v525 = vadd.s32 %v211, %v507
        %v526 = vadd.s32 %v212, %v507
        %v527 = vadd.s32 %v213, %v507
        %v528 = vadd.s32 %v214, %v507
        %v529 = vadd.s32 %v215, %v507
        %v530 = vadd.s32 %v216, %v507
        %v531 = vadd.s32 %v217, %v507
        %v532 = vadd.s32 %v218, %v507
        %v533 = vadd.s32 %v219, %v507
        %v534 = vadd.s32 %v220, %v507
        %v535 = vadd.s32 %v221, %v507
        %v536 = vadd.s32 %v222, %v507
        %v537 = vadd.s32 %v223, %v507
        %v538 = vadd.s32 %v224, %v507
        %v539 = vadd.s32 %v225, %v507
        %v540 = vadd.s32 %v226, %v507
        %v541 = vadd.s32 %v227, %v507
        %v542 = vadd.s32 %v228, %v507
        %v543 = vadd.s32 %v229, %v507
        %v544 = vadd.s32 %v230, %v507
        %v545 = vadd.s32 %v231, %v507
        %v546 = vadd.s32 %v232, %v507
        %v547 = vadd.s32 %v233, %v507
        %v548 = vadd.s32 %v234, %v507
        %v549 = vadd.s32 %v235, %v507
        %v550 = vadd.s32 %v236, %v507
        %v551 = vadd.s32 %v237, %v507
        %v552 = vadd.s32 %v238, %v507
        %v553 = vadd.s32 %v239, %v507
        %v554 = vadd.s32 %v240, %v507
        %v555 = vadd.s32 %v241, %v507
        %v556 = vadd.s32 %v242, %v507
        %v557 = vadd.s32 %v243, %v507
        %v558 = vadd.s32 %v244, %v507
        %v559 = vadd.s32 %v245, %v507
        %v560 = vadd.s32 %v246, %v507
        %v561 = vadd.s32 %v247, %v507
        %v562 = vadd.s32 %v248, %v507
        %v563 = vadd.s32 %v249, %v507
        %v564 = vadd.s32 %v250, %v507
        %v565 = vadd.s32 %v251, %v507
        %v566 = vadd.s32 %v252, %v507
        %v567 = vadd.s32 %v253, %v507
        %v568 = vadd.s32 %v254, %v507
        %v569 = vadd.s32 %v255, %v507
        %v570 = vadd.s32 %v256, %v507
        %v571 = vadd.s32 %v257, %v507
        %v572 = vadd.s32 %v258, %v507
        %v573 = vadd.s32 %v259, %v507
        %v574 = vadd.s32 %v260, %v507
        %v575 = vadd.s32 %v261, %v507
        %v576 = vadd.s32 %v262, %v507
        %v577 = vadd.s32 %v263, %v507
        %v578 = vadd.s32 %v264, %v507
        %v579 = vadd.s32 %v265, %v507
        %v580 = vadd.s32 %v266, %v507
        %v581 = vadd.s32 %v267, %v507
        %v582 = vadd.s32 %v268, %v507
        %v583 = vadd.s32 %v269, %v507
        %v584 = vadd.s32 %v270, %v507
        %v585 = vadd.s32 %v271, %v507
        %v586 = vadd.s32 %v272, %v507
        %v587 = vadd.s32 %v273, %v507
        %v588 = vadd.s32 %v274, %v507
        %v589 = vadd.s32 %v275, %v507
        %v590 = vadd.s32 %v276, %v507
        %v591 = vadd.s32 %v277, %v507
        %v592 = vadd.s32 %v278, %v507
        %v593 = vadd.s32 %v279, %v507
        %v594 = vadd.s32 %v280, %v507
        %v595 = vadd.s32 %v281, %v507
        %v596 = vadd.s32 %v282, %v507
        %v597 = vadd.s32 %v283, %v507
        %v598 = vadd.s32 %v284, %v507
        %v599 = vadd.s32 %v285, %v507
        %v600 = vadd.s32 %v286, %v507
        %v601 = vadd.s32 %v287, %v507
        %v602 = vadd.s32 %v288, %v507
        %v603 = vadd.s32 %v289, %v507
        %v604 = vadd.s32 %v290, %v507
        %v605 = vadd.s32 %v291, %v507
        %v606 = vadd.s32 %v292, %v507
        %v607 = vadd.s32 %v293, %v507
        %v608 = vadd.s32 %v294, %v507
        %v609 = vadd.s32 %v295, %v507
        %v610 = vadd.s32 %v296, %v507
        %v611 = vadd.s32 %v297, %v507
        %v612 = vadd.s32 %v298, %v507
        %v613 = vadd.s32 %v299, %v507
        %v614 = vadd.s32 %v300, %v507
        %v615 = vadd.s32 %v301, %v507
        %v616 = vadd.s32 %v302, %v507
        %v617 = vadd.s32 %v303, %v507
        %v618 = vadd.s32 %v304, %v507
        %v619 = vadd.s32 %v305, %v507
        %v620 = vadd.s32 %v306, %v507
        %v621 = vadd.s32 %v307, %v507
        %v622 = vadd.s32 %v308, %v507
        %v623 = vadd.s32 %v309, %v507
        %v624 = vadd.s32 %v310, %v507
        %v625 = vadd.s32 %v311, %v507
        %v626 = vadd.s32 %v312, %v507
        %v627 = vadd.s32 %v313, %v507
        %v628 = vadd.s32 %v314, %v507
        %v629 = vadd.s32 %v315, %v507
        %v630 = vadd.s32 %v316, %v507
        %v631 = vadd.s32 %v317, %v507
        %v632 = vadd.s32 %v318, %v507
        %v633 = vadd.s32 %v319, %v507
        %v634 = vadd.s32 %v320, %v507
        %v635 = vadd.s32 %v321, %v507
        %v636 = vadd.s32 %v322, %v507
        %v637 = vadd.s32 %v323, %v507
        %v638 = vadd.s32 %v324, %v507
        %v639 = vadd.s32 %v325, %v507
        %v640 = vadd.s32 %v326, %v507
        %v641 = vadd.s32 %v327, %v507
        %v642 = vadd.s32 %v328, %v507
        %v643 = vadd.s32 %v329, %v507
        %v644 = vadd.s32 %v330, %v507
        %v645 = vadd.s32 %v331, %v507
        %v646 = vadd.s32 %v332, %v507
        %v647 = vadd.s32 %v333, %v507
        %v648 = vadd.s32 %v334, %v507
        %v649 = vadd.s32 %v335, %v507
        %v650 = vadd.s32 %v336, %v507
        %v651 = vadd.s32 %v337, %v507
        %v652 = vadd.s32 %v338, %v507
        %v653 = vadd.s32 %v339, %v507
        %v654 = vadd.s32 %v340, %v507
        %v655 = vadd.s32 %v341, %v507
        %v656 = vadd.s32 %v342, %v507
        %v657 = vadd.s32 %v343, %v507
        %v658 = vadd.s32 %v344, %v507
        %v659 = vadd.s32 %v345, %v507
        %v660 = vadd.s32 %v346, %v507
        %v661 = vadd.s32 %v347, %v507
        %v662 = vadd.s32 %v348, %v507
        %v663 = vadd.s32 %v349, %v507
        %v664 = vadd.s32 %v350, %v507
        %v665 = vadd.s32 %v351, %v507
        %v666 = vadd.s32 %v352, %v507
        %v667 = vadd.s32 %v353, %v507
        %v668 = vadd.s32 %v354, %v507
        %v669 = vadd.s32 %v355, %v507
        %v670 = vadd.s32 %v356, %v507
        %v671 = vadd.s32 %v357, %v507
        %v672 = vadd.s32 %v358, %v507
        %v673 = vadd.s32 %v359, %v507
        %v674 = vadd.s32 %v360, %v507
        %v675 = vadd.s32 %v361, %v507
        %v676 = vadd.s32 %v362, %v507
        %v677 = vadd.s32 %v363, %v507
        %v678 = vadd.s32 %v364, %v507
        %v679 = vadd.s32 %v365, %v507
        %v680 = vadd.s32 %v366, %v507
        %v681 = vadd.s32 %v367, %v507
        %v682 = vadd.s32 %v368, %v507
        %v683 = vadd.s32 %v369, %v507
        %v684 = vadd.s32 %v370, %v507
        %v685 = vadd.s32 %v371, %v507
        %v686 = vadd.s32 %v372, %v507
        %v687 = vadd.s32 %v373, %v507
        %v688 = vadd.s32 %v374, %v507
        %v689 = vadd.s32 %v375, %v507
        %v690 = vadd.s32 %v376, %v507
        %v691 = vadd.s32 %v377, %v507
        %v692 = vadd.s32 %v378, %v507
        %v693 = vadd.s32 %v379, %v507
        %v694 = vadd.s32 %v380, %v507
        %v695 = vadd.s32 %v381, %v507
        %v696 = vadd.s32 %v382, %v507
        %v697 = vadd.s32 %v383, %v507
        %v698 = vadd.s32 %v384, %v507
        %v699 = vadd.s32 %v385, %v507
        %v700 = vadd.s32 %v386, %v507
        %v701 = vadd.s32 %v387, %v507
        %v702 = vadd.s32 %v388, %v507
        %v703 = vadd.s32 %v389, %v507
        %v704 = vadd.s32 %v390, %v507
        %v705 = vadd.s32 %v391, %v507
        %v706 = vadd.s32 %v392, %v507
        %v707 = vadd.s32 %v393, %v507
        %v708 = vadd.s32 %v394, %v507
        %v709 = vadd.s32 %v395, %v507
        %v710 = vadd.s32 %v396, %v507
        %v711 = vadd.s32 %v397, %v507
        %v712 = vadd.s32 %v398, %v507
        %v713 = vadd.s32 %v399, %v507
        %v714 = vadd.s32 %v400, %v507
        %v715 = vadd.s32 %v401, %v507
        %v716 = vadd.s32 %v402, %v507
        %v717 = vadd.s32 %v403, %v507
        %v718 = vadd.s32 %v404, %v507
        %v719 = vadd.s32 %v405, %v507
        %v720 = vadd.s32 %v406, %v507
        %v721 = vadd.s32 %v407, %v507
        %v722 = vadd.s32 %v408, %v507
        %v723 = vadd.s32 %v409, %v507
        %v724 = vadd.s32 %v410, %v507
        %v725 = vadd.s32 %v411, %v507
        %v726 = vadd.s32 %v412, %v507
        %v727 = vadd.s32 %v413, %v507
        %v728 = vadd.s32 %v414, %v507
        %v729 = vadd.s32 %v415, %v507
        %v730 = vadd.s32 %v416, %v507
        %v731 = vadd.s32 %v417, %v507
        %v732 = vadd.s32 %v418, %v507
        %v733 = vadd.s32 %v419, %v507
        %v734 = vadd.s32 %v420, %v507
        %v735 = vadd.s32 %v421, %v507
        %v736 = vadd.s32 %v422, %v507
        %v737 = vadd.s32 %v423, %v507
        %v738 = vadd.s32 %v424, %v507
        %v739 = vadd.s32 %v425, %v507
        %v740 = vadd.s32 %v426, %v507
        %v741 = vadd.s32 %v427, %v507
        %v742 = vadd.s32 %v428, %v507
        %v743 = vadd.s32 %v429, %v507
        %v744 = vadd.s32 %v430, %v507
        %v745 = vadd.s32 %v431, %v507
        %v746 = vadd.s32 %v432, %v507
        %v747 = vadd.s32 %v433, %v507
        %v748 = vadd.s32 %v434, %v507
        %v749 = vadd.s32 %v435, %v507
        %v750 = vadd.s32 %v436, %v507
        %v751 = vadd.s32 %v437, %v507
        %v752 = vadd.s32 %v438, %v507
        %v753 = vadd.s32 %v439, %v507
        %v754 = vadd.s32 %v440, %v507
        %v755 = vadd.s32 %v441, %v507
        %v756 = vadd.s32 %v442, %v507
        %v757 = vadd.s32 %v443, %v507
        %v758 = vadd.s32 %v444, %v507
        %v759 = vadd.s32 %v445, %v507
        %v760 = vadd.s32 %v446, %v507
        %v761 = vadd.s32 %v447, %v507
        %v762 = vadd.s32 %v448, %v507
        %v763 = vadd.s32 %v449, %v507
        %v764 = vadd.s32 %v450, %v507
        %v765 = vadd.s32 %v451, %v507
        %v766 = vadd.s32 %v452, %v507
        %v767 = vadd.s32 %v453, %v507
        %v768 = vadd.s32 %v454, %v507
        %v769 = vadd.s32 %v455, %v507
        %v770 = vadd.s32 %v456, %v507
        %v771 = vadd.s32 %v457, %v507
        %v772 = vadd.s32 %v458, %v507
        %v773 = vadd.s32 %v459, %v507
        %v774 = vadd.s32 %v460, %v507
        %v775 = vadd.s32 %v461, %v507
        %v776 = vadd.s32 %v462, %v507
        %v777 = vadd.s32 %v463, %v507
        %v778 = vadd.s32 %v464, %v507
        %v779 = vadd.s32 %v465, %v507
        %v780 = vadd.s32 %v466, %v507
        %v781 = vadd.s32 %v467, %v507
        %v782 = vadd.s32 %v468, %v507
        %v783 = vadd.s32 %v469, %v507
        %v784 = vadd.s32 %v470, %v507
        %v785 = vadd.s32 %v471, %v507
        %v786 = vadd.s32 %v472, %v507
        %v787 = vadd.s32 %v473, %v507
        %v788 = vadd.s32 %v474, %v507
        %v789 = vadd.s32 %v475, %v507
        %v790 = vadd.s32 %v476, %v507
        %v791 = vadd.s32 %v477, %v507
        %v792 = vadd.s32 %v478, %v507
        %v793 = vadd.s32 %v479, %v507
        %v794 = vadd.s32 %v480, %v507
        %v795 = vadd.s32 %v481, %v507
        %v796 = vadd.s32 %v482, %v507
        %v797 = vadd.s32 %v483, %v507
        %v798 = vadd.s32 %v484, %v507
        %v799 = vadd.s32 %v485, %v507
        %v800 = vadd.s32 %v486, %v507
        %v801 = vadd.s32 %v487, %v507
        %v802 = vadd.s32 %v488, %v507
        %v803 = vadd.s32 %v489, %v507
        %v804 = vadd.s32 %v490, %v507
        %v805 = vadd.s32 %v491, %v507
        %v806 = vadd.s32 %v492, %v507
        %v807 = vadd.s32 %v493, %v507
        %v808 = vadd.s32 %v494, %v507
        %v809 = vadd.s32 %v495, %v507
        %v810 = vadd.s32 %v496, %v507
        %v811 = vadd.s32 %v497, %v507
        %v812 = vadd.s32 %v498, %v507
        %v813 = vadd.s32 %v499, %v507
        %v814 = vadd.s32 %v500, %v507
        %v815 = vadd.s32 %v501, %v507
        %v816 = vadd.s32 %v502, %v507
        %v817 = vadd.s32 %v503, %v507
        %v818 = vadd.s32 %v504, %v507
        %v819 = vadd.s32 %v505, %v507
        %v820 = vadd.s32 %v506, %v507
        %v821 = vcvt.s32.f32 %v508
        %v822 = vcvt.s32.f32 %v509
        %v823 = vcvt.s32.f32 %v510
        %v824 = vcvt.s32.f32 %v511
        %v825 = vcvt.s32.f32 %v512
        %v826 = vcvt.s32.f32 %v513
        %v827 = vcvt.s32.f32 %v514
        %v828 = vcvt.s32.f32 %v515
        %v829 = vcvt.s32.f32 %v516
        %v830 = vcvt.s32.f32 %v517
        %v831 = vcvt.s32.f32 %v518
        %v832 = vcvt.s32.f32 %v519
        %v833 = vcvt.s32.f32 %v520
        %v834 = vcvt.s32.f32 %v521
        %v835 = vcvt.s32.f32 %v522
        %v836 = vcvt.s32.f32 %v523
        %v837 = vcvt.s32.f32 %v524
        %v838 = vcvt.s32.f32 %v525
        %v839 = vcvt.s32.f32 %v526
        %v840 = vcvt.s32.f32 %v527
        %v841 = vcvt.s32.f32 %v528
        %v842 = vcvt.s32.f32 %v529
        %v843 = vcvt.s32.f32 %v530
        %v844 = vcvt.s32.f32 %v531
        %v845 = vcvt.s32.f32 %v532
        %v846 = vcvt.s32.f32 %v533
        %v847 = vcvt.s32.f32 %v534
        %v848 = vcvt.s32.f32 %v535
        %v849 = vcvt.s32.f32 %v536
        %v850 = vcvt.s32.f32 %v537
        %v851 = vcvt.s32.f32 %v538
        %v852 = vcvt.s32.f32 %v539
        %v853 = vcvt.s32.f32 %v540
        %v854 = vcvt.s32.f32 %v541
        %v855 = vcvt.s32.f32 %v542
        %v856 = vcvt.s32.f32 %v543
        %v857 = vcvt.s32.f32 %v544
        %v858 = vcvt.s32.f32 %v545
        %v859 = vcvt.s32.f32 %v546
        %v860 = vcvt.s32.f32 %v547
        %v861 = vcvt.s32.f32 %v548
        %v862 = vcvt.s32.f32 %v549
        %v863 = vcvt.s32.f32 %v550
        %v864 = vcvt.s32.f32 %v551
        %v865 = vcvt.s32.f32 %v552
        %v866 = vcvt.s32.f32 %v553
        %v867 = vcvt.s32.f32 %v554
        %v868 = vcvt.s32.f32 %v555
        %v869 = vcvt.s32.f32 %v556
        %v870 = vcvt.s32.f32 %v557
        %v871 = vcvt.s32.f32 %v558
        %v872 = vcvt.s32.f32 %v559
        %v873 = vcvt.s32.f32 %v560
        %v874 = vcvt.s32.f32 %v561
        %v875 = vcvt.s32.f32 %v562
        %v876 = vcvt.s32.f32 %v563
        %v877 = vcvt.s32.f32 %v564
        %v878 = vcvt.s32.f32 %v565
        %v879 = vcvt.s32.f32 %v566
        %v880 = vcvt.s32.f32 %v567
        %v881 = vcvt.s32.f32 %v568
        %v882 = vcvt.s32.f32 %v569
        %v883 = vcvt.s32.f32 %v570
        %v884 = vcvt.s32.f32 %v571
        %v885 = vcvt.s32.f32 %v572
        %v886 = vcvt.s32.f32 %v573
        %v887 = vcvt.s32.f32 %v574
        %v888 = vcvt.s32.f32 %v575
        %v889 = vcvt.s32.f32 %v576
        %v890 = vcvt.s32.f32 %v577
        %v891 = vcvt.s32.f32 %v578
        %v892 = vcvt.s32.f32 %v579
        %v893 = vcvt.s32.f32 %v580
        %v894 = vcvt.s32.f32 %v581
        %v895 = vcvt.s32.f32 %v582
        %v896 = vcvt.s32.f32 %v583
        %v897 = vcvt.s32.f32 %v584
        %v898 = vcvt.s32.f32 %v585
        %v899 = vcvt.s32.f32 %v586
        %v900 = vcvt.s32.f32 %v587
        %v901 = vcvt.s32.f32 %v588
        %v902 = vcvt.s32.f32 %v589
        %v903 = vcvt.s32.f32 %v590
        %v904 = vcvt.s32.f32 %v591
        %v905 = vcvt.s32.f32 %v592
        %v906 = vcvt.s32.f32 %v593
        %v907 = vcvt.s32.f32 %v594
        %v908 = vcvt.s32.f32 %v595
        %v909 = vcvt.s32.f32 %v596
        %v910 = vcvt.s32.f32 %v597
        %v911 = vcvt.s32.f32 %v598
        %v912 = vcvt.s32.f32 %v599
        %v913 = vcvt.s32.f32 %v600
        %v914 = vcvt.s32.f32 %v601
        %v915 = vcvt.s32.f32 %v602
        %v916 = vcvt.s32.f32 %v603
        %v917 = vcvt.s32.f32 %v604
        %v918 = vcvt.s32.f32 %v605
        %v919 = vcvt.s32.f32 %v606
        %v920 = vcvt.s32.f32 %v607
        %v921 = vcvt.s32.f32 %v608
        %v922 = vcvt.s32.f32 %v609
        %v923 = vcvt.s32.f32 %v610
        %v924 = vcvt.s32.f32 %v611
        %v925 = vcvt.s32.f32 %v612
        %v926 = vcvt.s32.f32 %v613
        %v927 = vcvt.s32.f32 %v614
        %v928 = vcvt.s32.f32 %v615
        %v929 = vcvt.s32.f32 %v616
        %v930 = vcvt.s32.f32 %v617
        %v931 = vcvt.s32.f32 %v618
        %v932 = vcvt.s32.f32 %v619
        %v933 = vcvt.s32.f32 %v620
        %v934 = vcvt.s32.f32 %v621
        %v935 = vcvt.s32.f32 %v622
        %v936 = vcvt.s32.f32 %v623
        %v937 = vcvt.s32.f32 %v624
        %v938 = vcvt.s32.f32 %v625
        %v939 = vcvt.s32.f32 %v626
        %v940 = vcvt.s32.f32 %v627
        %v941 = vcvt.s32.f32 %v628
        %v942 = vcvt.s32.f32 %v629
        %v943 = vcvt.s32.f32 %v630
        %v944 = vcvt.s32.f32 %v631
        %v945 = vcvt.s32.f32 %v632
        %v946 = vcvt.s32.f32 %v633
        %v947 = vcvt.s32.f32 %v634
        %v948 = vcvt.s32.f32 %v635
        %v949 = vcvt.s32.f32 %v636
        %v950 = vcvt.s32.f32 %v637
        %v951 = vcvt.s32.f32 %v638
        %v952 = vcvt.s32.f32 %v639
        %v953 = vcvt.s32.f32 %v640
        %v954 = vcvt.s32.f32 %v641
        %v955 = vcvt.s32.f32 %v642
        %v956 = vcvt.s32.f32 %v643
        %v957 = vcvt.s32.f32 %v644
        %v958 = vcvt.s32.f32 %v645
        %v959 = vcvt.s32.f32 %v646
        %v960 = vcvt.s32.f32 %v647
        %v961 = vcvt.s32.f32 %v648
        %v962 = vcvt.s32.f32 %v649
        %v963 = vcvt.s32.f32 %v650
        %v964 = vcvt.s32.f32 %v651
        %v965 = vcvt.s32.f32 %v652
        %v966 = vcvt.s32.f32 %v653
        %v967 = vcvt.s32.f32 %v654
        %v968 = vcvt.s32.f32 %v655
        %v969 = vcvt.s32.f32 %v656
        %v970 = vcvt.s32.f32 %v657
        %v971 = vcvt.s32.f32 %v658
        %v972 = vcvt.s32.f32 %v659
        %v973 = vcvt.s32.f32 %v660
        %v974 = vcvt.s32.f32 %v661
        %v975 = vcvt.s32.f32 %v662
        %v976 = vcvt.s32.f32 %v663
        %v977 = vcvt.s32.f32 %v664
        %v978 = vcvt.s32.f32 %v665
        %v979 = vcvt.s32.f32 %v666
        %v980 = vcvt.s32.f32 %v667
        %v981 = vcvt.s32.f32 %v668
        %v982 = vcvt.s32.f32 %v669
        %v983 = vcvt.s32.f32 %v670
        %v984 = vcvt.s32.f32 %v671
        %v985 = vcvt.s32.f32 %v672
        %v986 = vcvt.s32.f32 %v673
        %v987 = vcvt.s32.f32 %v674
        %v988 = vcvt.s32.f32 %v675
        %v989 = vcvt.s32.f32 %v676
        %v990 = vcvt.s32.f32 %v677
        %v991 = vcvt.s32.f32 %v678
        %v992 = vcvt.s32.f32 %v679
        %v993 = vcvt.s32.f32 %v680
        %v994 = vcvt.s32.f32 %v681
        %v995 = vcvt.s32.f32 %v682
        %v996 = vcvt.s32.f32 %v683
        %v997 = vcvt.s32.f32 %v684
        %v998 = vcvt.s32.f32 %v685
        %v999 = vcvt.s32.f32 %v686
        %v1000 = vcvt.s32.f32 %v687
        %v1001 = vcvt.s32.f32 %v688
        %v1002 = vcvt.s32.f32 %v689
        %v1003 = vcvt.s32.f32 %v690
        %v1004 = vcvt.s32.f32 %v691
        %v1005 = vcvt.s32.f32 %v692
        %v1006 = vcvt.s32.f32 %v693
        %v1007 = vcvt.s32.f32 %v694
        %v1008 = vcvt.s32.f32 %v695
        %v1009 = vcvt.s32.f32 %v696
        %v1010 = vcvt.s32.f32 %v697
        %v1011 = vcvt.s32.f32 %v698
        %v1012 = vcvt.s32.f32 %v699
        %v1013 = vcvt.s32.f32 %v700
        %v1014 = vcvt.s32.f32 %v701
        %v1015 = vcvt.s32.f32 %v702
        %v1016 = vcvt.s32.f32 %v703
        %v1017 = vcvt.s32.f32 %v704
        %v1018 = vcvt.s32.f32 %v705
        %v1019 = vcvt.s32.f32 %v706
        %v1020 = vcvt.s32.f32 %v707
        %v1021 = vcvt.s32.f32 %v708
        %v1022 = vcvt.s32.f32 %v709
        %v1023 = vcvt.s32.f32 %v710
        %v1024 = vcvt.s32.f32 %v711
        %v1025 = vcvt.s32.f32 %v712
        %v1026 = vcvt.s32.f32 %v713
        %v1027 = vcvt.s32.f32 %v714
        %v1028 = vcvt.s32.f32 %v715
        %v1029 = vcvt.s32.f32 %v716
        %v1030 = vcvt.s32.f32 %v717
        %v1031 = vcvt.s32.f32 %v718
        %v1032 = vcvt.s32.f32 %v719
        %v1033 = vcvt.s32.f32 %v720
        %v1034 = vcvt.s32.f32 %v721
        %v1035 = vcvt.s32.f32 %v722
        %v1036 = vcvt.s32.f32 %v723
        %v1037 = vcvt.s32.f32 %v724
        %v1038 = vcvt.s32.f32 %v725
        %v1039 = vcvt.s32.f32 %v726
        %v1040 = vcvt.s32.f32 %v727
        %v1041 = vcvt.s32.f32 %v728
        %v1042 = vcvt.s32.f32 %v729
        %v1043 = vcvt.s32.f32 %v730
        %v1044 = vcvt.s32.f32 %v731
        %v1045 = vcvt.s32.f32 %v732
        %v1046 = vcvt.s32.f32 %v733
        %v1047 = vcvt.s32.f32 %v734
        %v1048 = vcvt.s32.f32 %v735
        %v1049 = vcvt.s32.f32 %v736
        %v1050 = vcvt.s32.f32 %v737
        %v1051 = vcvt.s32.f32 %v738
        %v1052 = vcvt.s32.f32 %v739
        %v1053 = vcvt.s32.f32 %v740
        %v1054 = vcvt.s32.f32 %v741
        %v1055 = vcvt.s32.f32 %v742
        %v1056 = vcvt.s32.f32 %v743
        %v1057 = vcvt.s32.f32 %v744
        %v1058 = vcvt.s32.f32 %v745
        %v1059 = vcvt.s32.f32 %v746
        %v1060 = vcvt.s32.f32 %v747
        %v1061 = vcvt.s32.f32 %v748
        %v1062 = vcvt.s32.f32 %v749
        %v1063 = vcvt.s32.f32 %v750
        %v1064 = vcvt.s32.f32 %v751
        %v1065 = vcvt.s32.f32 %v752
        %v1066 = vcvt.s32.f32 %v753
        %v1067 = vcvt.s32.f32 %v754
        %v1068 = vcvt.s32.f32 %v755
        %v1069 = vcvt.s32.f32 %v756
        %v1070 = vcvt.s32.f32 %v757
        %v1071 = vcvt.s32.f32 %v758
        %v1072 = vcvt.s32.f32 %v759
        %v1073 = vcvt.s32.f32 %v760
        %v1074 = vcvt.s32.f32 %v761
        %v1075 = vcvt.s32.f32 %v762
        %v1076 = vcvt.s32.f32 %v763
        %v1077 = vcvt.s32.f32 %v764
        %v1078 = vcvt.s32.f32 %v765
        %v1079 = vcvt.s32.f32 %v766
        %v1080 = vcvt.s32.f32 %v767
        %v1081 = vcvt.s32.f32 %v768
        %v1082 = vcvt.s32.f32 %v769
        %v1083 = vcvt.s32.f32 %v770
        %v1084 = vcvt.s32.f32 %v771
        %v1085 = vcvt.s32.f32 %v772
        %v1086 = vcvt.s32.f32 %v773
        %v1087 = vcvt.s32.f32 %v774
        %v1088 = vcvt.s32.f32 %v775
        %v1089 = vcvt.s32.f32 %v776
        %v1090 = vcvt.s32.f32 %v777
        %v1091 = vcvt.s32.f32 %v778
        %v1092 = vcvt.s32.f32 %v779
        %v1093 = vcvt.s32.f32 %v780
        %v1094 = vcvt.s32.f32 %v781
        %v1095 = vcvt.s32.f32 %v782
        %v1096 = vcvt.s32.f32 %v783
        %v1097 = vcvt.s32.f32 %v784
        %v1098 = vcvt.s32.f32 %v785
        %v1099 = vcvt.s32.f32 %v786
        %v1100 = vcvt.s32.f32 %v787
        %v1101 = vcvt.s32.f32 %v788
        %v1102 = vcvt.s32.f32 %v789
        %v1103 = vcvt.s32.f32 %v790
        %v1104 = vcvt.s32.f32 %v791
        %v1105 = vcvt.s32.f32 %v792
        %v1106 = vcvt.s32.f32 %v793
        %v1107 = vcvt.s32.f32 %v794
        %v1108 = vcvt.s32.f32 %v795
        %v1109 = vcvt.s32.f32 %v796
        %v1110 = vcvt.s32.f32 %v797
        %v1111 = vcvt.s32.f32 %v798
        %v1112 = vcvt.s32.f32 %v799
        %v1113 = vcvt.s32.f32 %v800
        %v1114 = vcvt.s32.f32 %v801
        %v1115 = vcvt.s32.f32 %v802
        %v1116 = vcvt.s32.f32 %v803
        %v1117 = vcvt.s32.f32 %v804
        %v1118 = vcvt.s32.f32 %v805
        %v1119 = vcvt.s32.f32 %v806
        %v1120 = vcvt.s32.f32 %v807
        %v1121 = vcvt.s32.f32 %v808
        %v1122 = vcvt.s32.f32 %v809
        %v1123 = vcvt.s32.f32 %v810
        %v1124 = vcvt.s32.f32 %v811
        %v1125 = vcvt.s32.f32 %v812
        %v1126 = vcvt.s32.f32 %v813
        %v1127 = vcvt.s32.f32 %v814
        %v1128 = vcvt.s32.f32 %v815
        %v1129 = vcvt.s32.f32 %v816
        %v1130 = vcvt.s32.f32 %v817
        %v1131 = vcvt.s32.f32 %v818
        %v1132 = vcvt.s32.f32 %v819
        %v1133 = vcvt.s32.f32 %v820
        %v1134 = vld [vmem:[#allocation2] sm:$0x1]
        %v1136 = vlaneseq
        %v1137 = vshrl.u32 %v1136, 7
        %v1138 = vsub.s32 0, %v1137
        %v1139 = vrot.slane %v1134, %v1138
        %v1141 = vmul.f32 %v821, %v1139
        %v1142 = vmul.f32 %v822, %v1139
        %v1143 = vmul.f32 %v823, %v1139
        %v1144 = vmul.f32 %v824, %v1139
        %v1145 = vmul.f32 %v825, %v1139
        %v1146 = vmul.f32 %v826, %v1139
        %v1147 = vmul.f32 %v827, %v1139
        %v1148 = vmul.f32 %v828, %v1139
        %v1149 = vmul.f32 %v829, %v1139
        %v1150 = vmul.f32 %v830, %v1139
        %v1151 = vmul.f32 %v831, %v1139
        %v1152 = vmul.f32 %v832, %v1139
        %v1153 = vmul.f32 %v833, %v1139
        %v1154 = vmul.f32 %v834, %v1139
        %v1155 = vmul.f32 %v835, %v1139
        %v1156 = vmul.f32 %v836, %v1139
        %v1157 = vmul.f32 %v837, %v1139
        %v1158 = vmul.f32 %v838, %v1139
        %v1159 = vmul.f32 %v839, %v1139
        %v1160 = vmul.f32 %v840, %v1139
        %v1161 = vmul.f32 %v841, %v1139
        %v1162 = vmul.f32 %v842, %v1139
        %v1163 = vmul.f32 %v843, %v1139
        %v1164 = vmul.f32 %v844, %v1139
        %v1165 = vmul.f32 %v845, %v1139
        %v1166 = vmul.f32 %v846, %v1139
        %v1167 = vmul.f32 %v847, %v1139
        %v1168 = vmul.f32 %v848, %v1139
        %v1169 = vmul.f32 %v849, %v1139
        %v1170 = vmul.f32 %v850, %v1139
        %v1171 = vmul.f32 %v851, %v1139
        %v1172 = vmul.f32 %v852, %v1139
        %v1173 = vmul.f32 %v853, %v1139
        %v1174 = vmul.f32 %v854, %v1139
        %v1175 = vmul.f32 %v855, %v1139
        %v1176 = vmul.f32 %v856, %v1139
        %v1177 = vmul.f32 %v857, %v1139
        %v1178 = vmul.f32 %v858, %v1139
        %v1179 = vmul.f32 %v859, %v1139
        %v1180 = vmul.f32 %v860, %v1139
        %v1181 = vmul.f32 %v861, %v1139
        %v1182 = vmul.f32 %v862, %v1139
        %v1183 = vmul.f32 %v863, %v1139
        %v1184 = vmul.f32 %v864, %v1139
        %v1185 = vmul.f32 %v865, %v1139
        %v1186 = vmul.f32 %v866, %v1139
        %v1187 = vmul.f32 %v867, %v1139
        %v1188 = vmul.f32 %v868, %v1139
        %v1189 = vmul.f32 %v869, %v1139
        %v1190 = vmul.f32 %v870, %v1139
        %v1191 = vmul.f32 %v871, %v1139
        %v1192 = vmul.f32 %v872, %v1139
        %v1193 = vmul.f32 %v873, %v1139
        %v1194 = vmul.f32 %v874, %v1139
        %v1195 = vmul.f32 %v875, %v1139
        %v1196 = vmul.f32 %v876, %v1139
        %v1197 = vmul.f32 %v877, %v1139
        %v1198 = vmul.f32 %v878, %v1139
        %v1199 = vmul.f32 %v879, %v1139
        %v1200 = vmul.f32 %v880, %v1139
        %v1201 = vmul.f32 %v881, %v1139
        %v1202 = vmul.f32 %v882, %v1139
        %v1203 = vmul.f32 %v883, %v1139
        %v1204 = vmul.f32 %v884, %v1139
        %v1205 = vmul.f32 %v885, %v1139
        %v1206 = vmul.f32 %v886, %v1139
        %v1207 = vmul.f32 %v887, %v1139
        %v1208 = vmul.f32 %v888, %v1139
        %v1209 = vmul.f32 %v889, %v1139
        %v1210 = vmul.f32 %v890, %v1139
        %v1211 = vmul.f32 %v891, %v1139
        %v1212 = vmul.f32 %v892, %v1139
        %v1213 = vmul.f32 %v893, %v1139
        %v1214 = vmul.f32 %v894, %v1139
        %v1215 = vmul.f32 %v895, %v1139
        %v1216 = vmul.f32 %v896, %v1139
        %v1217 = vmul.f32 %v897, %v1139
        %v1218 = vmul.f32 %v898, %v1139
        %v1219 = vmul.f32 %v899, %v1139
        %v1220 = vmul.f32 %v900, %v1139
        %v1221 = vmul.f32 %v901, %v1139
        %v1222 = vmul.f32 %v902, %v1139
        %v1223 = vmul.f32 %v903, %v1139
        %v1224 = vmul.f32 %v904, %v1139
        %v1225 = vmul.f32 %v905, %v1139
        %v1226 = vmul.f32 %v906, %v1139
        %v1227 = vmul.f32 %v907, %v1139
        %v1228 = vmul.f32 %v908, %v1139
        %v1229 = vmul.f32 %v909, %v1139
        %v1230 = vmul.f32 %v910, %v1139
        %v1231 = vmul.f32 %v911, %v1139
        %v1232 = vmul.f32 %v912, %v1139
        %v1233 = vmul.f32 %v913, %v1139
        %v1234 = vmul.f32 %v914, %v1139
        %v1235 = vmul.f32 %v915, %v1139
        %v1236 = vmul.f32 %v916, %v1139
        %v1237 = vmul.f32 %v917, %v1139
        %v1238 = vmul.f32 %v918, %v1139
        %v1239 = vmul.f32 %v919, %v1139
        %v1240 = vmul.f32 %v920, %v1139
        %v1241 = vmul.f32 %v921, %v1139
        %v1242 = vmul.f32 %v922, %v1139
        %v1243 = vmul.f32 %v923, %v1139
        %v1244 = vmul.f32 %v924, %v1139
        %v1245 = vmul.f32 %v925, %v1139
        %v1246 = vmul.f32 %v926, %v1139
        %v1247 = vmul.f32 %v927, %v1139
        %v1248 = vmul.f32 %v928, %v1139
        %v1249 = vmul.f32 %v929, %v1139
        %v1250 = vmul.f32 %v930, %v1139
        %v1251 = vmul.f32 %v931, %v1139
        %v1252 = vmul.f32 %v932, %v1139
        %v1253 = vmul.f32 %v933, %v1139
        %v1254 = vmul.f32 %v934, %v1139
        %v1255 = vmul.f32 %v935, %v1139
        %v1256 = vmul.f32 %v936, %v1139
        %v1257 = vmul.f32 %v937, %v1139
        %v1258 = vmul.f32 %v938, %v1139
        %v1259 = vmul.f32 %v939, %v1139
        %v1260 = vmul.f32 %v940, %v1139
        %v1261 = vmul.f32 %v941, %v1139
        %v1262 = vmul.f32 %v942, %v1139
        %v1263 = vmul.f32 %v943, %v1139
        %v1264 = vmul.f32 %v944, %v1139
        %v1265 = vmul.f32 %v945, %v1139
        %v1266 = vmul.f32 %v946, %v1139
        %v1267 = vmul.f32 %v947, %v1139
        %v1268 = vmul.f32 %v948, %v1139
        %v1269 = vmul.f32 %v949, %v1139
        %v1270 = vmul.f32 %v950, %v1139
        %v1271 = vmul.f32 %v951, %v1139
        %v1272 = vmul.f32 %v952, %v1139
        %v1273 = vmul.f32 %v953, %v1139
        %v1274 = vmul.f32 %v954, %v1139
        %v1275 = vmul.f32 %v955, %v1139
        %v1276 = vmul.f32 %v956, %v1139
        %v1277 = vmul.f32 %v957, %v1139
        %v1278 = vmul.f32 %v958, %v1139
        %v1279 = vmul.f32 %v959, %v1139
        %v1280 = vmul.f32 %v960, %v1139
        %v1281 = vmul.f32 %v961, %v1139
        %v1282 = vmul.f32 %v962, %v1139
        %v1283 = vmul.f32 %v963, %v1139
        %v1284 = vmul.f32 %v964, %v1139
        %v1285 = vmul.f32 %v965, %v1139
        %v1286 = vmul.f32 %v966, %v1139
        %v1287 = vmul.f32 %v967, %v1139
        %v1288 = vmul.f32 %v968, %v1139
        %v1289 = vmul.f32 %v969, %v1139
        %v1290 = vmul.f32 %v970, %v1139
        %v1291 = vmul.f32 %v971, %v1139
        %v1292 = vmul.f32 %v972, %v1139
        %v1293 = vmul.f32 %v973, %v1139
        %v1294 = vmul.f32 %v974, %v1139
        %v1295 = vmul.f32 %v975, %v1139
        %v1296 = vmul.f32 %v976, %v1139
        %v1297 = vmul.f32 %v977, %v1139
        %v1298 = vmul.f32 %v978, %v1139
        %v1299 = vmul.f32 %v979, %v1139
        %v1300 = vmul.f32 %v980, %v1139
        %v1301 = vmul.f32 %v981, %v1139
        %v1302 = vmul.f32 %v982, %v1139
        %v1303 = vmul.f32 %v983, %v1139
        %v1304 = vmul.f32 %v984, %v1139
        %v1305 = vmul.f32 %v985, %v1139
        %v1306 = vmul.f32 %v986, %v1139
        %v1307 = vmul.f32 %v987, %v1139
        %v1308 = vmul.f32 %v988, %v1139
        %v1309 = vmul.f32 %v989, %v1139
        %v1310 = vmul.f32 %v990, %v1139
        %v1311 = vmul.f32 %v991, %v1139
        %v1312 = vmul.f32 %v992, %v1139
        %v1313 = vmul.f32 %v993, %v1139
        %v1314 = vmul.f32 %v994, %v1139
        %v1315 = vmul.f32 %v995, %v1139
        %v1316 = vmul.f32 %v996, %v1139
        %v1317 = vmul.f32 %v997, %v1139
        %v1318 = vmul.f32 %v998, %v1139
        %v1319 = vmul.f32 %v999, %v1139
        %v1320 = vmul.f32 %v1000, %v1139
        %v1321 = vmul.f32 %v1001, %v1139
        %v1322 = vmul.f32 %v1002, %v1139
        %v1323 = vmul.f32 %v1003, %v1139
        %v1324 = vmul.f32 %v1004, %v1139
        %v1325 = vmul.f32 %v1005, %v1139
        %v1326 = vmul.f32 %v1006, %v1139
        %v1327 = vmul.f32 %v1007, %v1139
        %v1328 = vmul.f32 %v1008, %v1139
        %v1329 = vmul.f32 %v1009, %v1139
        %v1330 = vmul.f32 %v1010, %v1139
        %v1331 = vmul.f32 %v1011, %v1139
        %v1332 = vmul.f32 %v1012, %v1139
        %v1333 = vmul.f32 %v1013, %v1139
        %v1334 = vmul.f32 %v1014, %v1139
        %v1335 = vmul.f32 %v1015, %v1139
        %v1336 = vmul.f32 %v1016, %v1139
        %v1337 = vmul.f32 %v1017, %v1139
        %v1338 = vmul.f32 %v1018, %v1139
        %v1339 = vmul.f32 %v1019, %v1139
        %v1340 = vmul.f32 %v1020, %v1139
        %v1341 = vmul.f32 %v1021, %v1139
        %v1342 = vmul.f32 %v1022, %v1139
        %v1343 = vmul.f32 %v1023, %v1139
        %v1344 = vmul.f32 %v1024, %v1139
        %v1345 = vmul.f32 %v1025, %v1139
        %v1346 = vmul.f32 %v1026, %v1139
        %v1347 = vmul.f32 %v1027, %v1139
        %v1348 = vmul.f32 %v1028, %v1139
        %v1349 = vmul.f32 %v1029, %v1139
        %v1350 = vmul.f32 %v1030, %v1139
        %v1351 = vmul.f32 %v1031, %v1139
        %v1352 = vmul.f32 %v1032, %v1139
        %v1353 = vmul.f32 %v1033, %v1139
        %v1354 = vmul.f32 %v1034, %v1139
        %v1355 = vmul.f32 %v1035, %v1139
        %v1356 = vmul.f32 %v1036, %v1139
        %v1357 = vmul.f32 %v1037, %v1139
        %v1358 = vmul.f32 %v1038, %v1139
        %v1359 = vmul.f32 %v1039, %v1139
        %v1360 = vmul.f32 %v1040, %v1139
        %v1361 = vmul.f32 %v1041, %v1139
        %v1362 = vmul.f32 %v1042, %v1139
        %v1363 = vmul.f32 %v1043, %v1139
        %v1364 = vmul.f32 %v1044, %v1139
        %v1365 = vmul.f32 %v1045, %v1139
        %v1366 = vmul.f32 %v1046, %v1139
        %v1367 = vmul.f32 %v1047, %v1139
        %v1368 = vmul.f32 %v1048, %v1139
        %v1369 = vmul.f32 %v1049, %v1139
        %v1370 = vmul.f32 %v1050, %v1139
        %v1371 = vmul.f32 %v1051, %v1139
        %v1372 = vmul.f32 %v1052, %v1139
        %v1373 = vmul.f32 %v1053, %v1139
        %v1374 = vmul.f32 %v1054, %v1139
        %v1375 = vmul.f32 %v1055, %v1139
        %v1376 = vmul.f32 %v1056, %v1139
        %v1377 = vmul.f32 %v1057, %v1139
        %v1378 = vmul.f32 %v1058, %v1139
        %v1379 = vmul.f32 %v1059, %v1139
        %v1380 = vmul.f32 %v1060, %v1139
        %v1381 = vmul.f32 %v1061, %v1139
        %v1382 = vmul.f32 %v1062, %v1139
        %v1383 = vmul.f32 %v1063, %v1139
        %v1384 = vmul.f32 %v1064, %v1139
        %v1385 = vmul.f32 %v1065, %v1139
        %v1386 = vmul.f32 %v1066, %v1139
        %v1387 = vmul.f32 %v1067, %v1139
        %v1388 = vmul.f32 %v1068, %v1139
        %v1389 = vmul.f32 %v1069, %v1139
        %v1390 = vmul.f32 %v1070, %v1139
        %v1391 = vmul.f32 %v1071, %v1139
        %v1392 = vmul.f32 %v1072, %v1139
        %v1393 = vmul.f32 %v1073, %v1139
        %v1394 = vmul.f32 %v1074, %v1139
        %v1395 = vmul.f32 %v1075, %v1139
        %v1396 = vmul.f32 %v1076, %v1139
        %v1397 = vmul.f32 %v1077, %v1139
        %v1398 = vmul.f32 %v1078, %v1139
        %v1399 = vmul.f32 %v1079, %v1139
        %v1400 = vmul.f32 %v1080, %v1139
        %v1401 = vmul.f32 %v1081, %v1139
        %v1402 = vmul.f32 %v1082, %v1139
        %v1403 = vmul.f32 %v1083, %v1139
        %v1404 = vmul.f32 %v1084, %v1139
        %v1405 = vmul.f32 %v1085, %v1139
        %v1406 = vmul.f32 %v1086, %v1139
        %v1407 = vmul.f32 %v1087, %v1139
        %v1408 = vmul.f32 %v1088, %v1139
        %v1409 = vmul.f32 %v1089, %v1139
        %v1410 = vmul.f32 %v1090, %v1139
        %v1411 = vmul.f32 %v1091, %v1139
        %v1412 = vmul.f32 %v1092, %v1139
        %v1413 = vmul.f32 %v1093, %v1139
        %v1414 = vmul.f32 %v1094, %v1139
        %v1415 = vmul.f32 %v1095, %v1139
        %v1416 = vmul.f32 %v1096, %v1139
        %v1417 = vmul.f32 %v1097, %v1139
        %v1418 = vmul.f32 %v1098, %v1139
        %v1419 = vmul.f32 %v1099, %v1139
        %v1420 = vmul.f32 %v1100, %v1139
        %v1421 = vmul.f32 %v1101, %v1139
        %v1422 = vmul.f32 %v1102, %v1139
        %v1423 = vmul.f32 %v1103, %v1139
        %v1424 = vmul.f32 %v1104, %v1139
        %v1425 = vmul.f32 %v1105, %v1139
        %v1426 = vmul.f32 %v1106, %v1139
        %v1427 = vmul.f32 %v1107, %v1139
        %v1428 = vmul.f32 %v1108, %v1139
        %v1429 = vmul.f32 %v1109, %v1139
        %v1430 = vmul.f32 %v1110, %v1139
        %v1431 = vmul.f32 %v1111, %v1139
        %v1432 = vmul.f32 %v1112, %v1139
        %v1433 = vmul.f32 %v1113, %v1139
        %v1434 = vmul.f32 %v1114, %v1139
        %v1435 = vmul.f32 %v1115, %v1139
        %v1436 = vmul.f32 %v1116, %v1139
        %v1437 = vmul.f32 %v1117, %v1139
        %v1438 = vmul.f32 %v1118, %v1139
        %v1439 = vmul.f32 %v1119, %v1139
        %v1440 = vmul.f32 %v1120, %v1139
        %v1441 = vmul.f32 %v1121, %v1139
        %v1442 = vmul.f32 %v1122, %v1139
        %v1443 = vmul.f32 %v1123, %v1139
        %v1444 = vmul.f32 %v1124, %v1139
        %v1445 = vmul.f32 %v1125, %v1139
        %v1446 = vmul.f32 %v1126, %v1139
        %v1447 = vmul.f32 %v1127, %v1139
        %v1448 = vmul.f32 %v1128, %v1139
        %v1449 = vmul.f32 %v1129, %v1139
        %v1450 = vmul.f32 %v1130, %v1139
        %v1451 = vmul.f32 %v1131, %v1139
        %v1452 = vmul.f32 %v1132, %v1139
        %v1453 = vmul.f32 %v1133, %v1139
        %v1454 = vmul.f32 %v1141, 0.31830987
        %v1455 = vmul.f32 %v1142, 0.31830987
        %v1456 = vmul.f32 %v1143, 0.31830987
        %v1457 = vmul.f32 %v1144, 0.31830987
        %v1458 = vmul.f32 %v1145, 0.31830987
        %v1459 = vmul.f32 %v1146, 0.31830987
        %v1460 = vmul.f32 %v1147, 0.31830987
        %v1461 = vmul.f32 %v1148, 0.31830987
        %v1462 = vmul.f32 %v1149, 0.31830987
        %v1463 = vmul.f32 %v1150, 0.31830987
        %v1464 = vmul.f32 %v1151, 0.31830987
        %v1465 = vmul.f32 %v1152, 0.31830987
        %v1466 = vmul.f32 %v1153, 0.31830987
        %v1467 = vmul.f32 %v1154, 0.31830987
        %v1468 = vmul.f32 %v1155, 0.31830987
        %v1469 = vmul.f32 %v1156, 0.31830987
        %v1470 = vmul.f32 %v1157, 0.31830987
        %v1471 = vmul.f32 %v1158, 0.31830987
        %v1472 = vmul.f32 %v1159, 0.31830987
        %v1473 = vmul.f32 %v1160, 0.31830987
        %v1474 = vmul.f32 %v1161, 0.31830987
        %v1475 = vmul.f32 %v1162, 0.31830987
        %v1476 = vmul.f32 %v1163, 0.31830987
        %v1477 = vmul.f32 %v1164, 0.31830987
        %v1478 = vmul.f32 %v1165, 0.31830987
        %v1479 = vmul.f32 %v1166, 0.31830987
        %v1480 = vmul.f32 %v1167, 0.31830987
        %v1481 = vmul.f32 %v1168, 0.31830987
        %v1482 = vmul.f32 %v1169, 0.31830987
        %v1483 = vmul.f32 %v1170, 0.31830987
        %v1484 = vmul.f32 %v1171, 0.31830987
        %v1485 = vmul.f32 %v1172, 0.31830987
        %v1486 = vmul.f32 %v1173, 0.31830987
        %v1487 = vmul.f32 %v1174, 0.31830987
        %v1488 = vmul.f32 %v1175, 0.31830987
        %v1489 = vmul.f32 %v1176, 0.31830987
        %v1490 = vmul.f32 %v1177, 0.31830987
        %v1491 = vmul.f32 %v1178, 0.31830987
        %v1492 = vmul.f32 %v1179, 0.31830987
        %v1493 = vmul.f32 %v1180, 0.31830987
        %v1494 = vmul.f32 %v1181, 0.31830987
        %v1495 = vmul.f32 %v1182, 0.31830987
        %v1496 = vmul.f32 %v1183, 0.31830987
        %v1497 = vmul.f32 %v1184, 0.31830987
        %v1498 = vmul.f32 %v1185, 0.31830987
        %v1499 = vmul.f32 %v1186, 0.31830987
        %v1500 = vmul.f32 %v1187, 0.31830987
        %v1501 = vmul.f32 %v1188, 0.31830987
        %v1502 = vmul.f32 %v1189, 0.31830987
        %v1503 = vmul.f32 %v1190, 0.31830987
        %v1504 = vmul.f32 %v1191, 0.31830987
        %v1505 = vmul.f32 %v1192, 0.31830987
        %v1506 = vmul.f32 %v1193, 0.31830987
        %v1507 = vmul.f32 %v1194, 0.31830987
        %v1508 = vmul.f32 %v1195, 0.31830987
        %v1509 = vmul.f32 %v1196, 0.31830987
        %v1510 = vmul.f32 %v1197, 0.31830987
        %v1511 = vmul.f32 %v1198, 0.31830987
        %v1512 = vmul.f32 %v1199, 0.31830987
        %v1513 = vmul.f32 %v1200, 0.31830987
        %v1514 = vmul.f32 %v1201, 0.31830987
        %v1515 = vmul.f32 %v1202, 0.31830987
        %v1516 = vmul.f32 %v1203, 0.31830987
        %v1517 = vmul.f32 %v1204, 0.31830987
        %v1518 = vmul.f32 %v1205, 0.31830987
        %v1519 = vmul.f32 %v1206, 0.31830987
        %v1520 = vmul.f32 %v1207, 0.31830987
        %v1521 = vmul.f32 %v1208, 0.31830987
        %v1522 = vmul.f32 %v1209, 0.31830987
        %v1523 = vmul.f32 %v1210, 0.31830987
        %v1524 = vmul.f32 %v1211, 0.31830987
        %v1525 = vmul.f32 %v1212, 0.31830987
        %v1526 = vmul.f32 %v1213, 0.31830987
        %v1527 = vmul.f32 %v1214, 0.31830987
        %v1528 = vmul.f32 %v1215, 0.31830987
        %v1529 = vmul.f32 %v1216, 0.31830987
        %v1530 = vmul.f32 %v1217, 0.31830987
        %v1531 = vmul.f32 %v1218, 0.31830987
        %v1532 = vmul.f32 %v1219, 0.31830987
        %v1533 = vmul.f32 %v1220, 0.31830987
        %v1534 = vmul.f32 %v1221, 0.31830987
        %v1535 = vmul.f32 %v1222, 0.31830987
        %v1536 = vmul.f32 %v1223, 0.31830987
        %v1537 = vmul.f32 %v1224, 0.31830987
        %v1538 = vmul.f32 %v1225, 0.31830987
        %v1539 = vmul.f32 %v1226, 0.31830987
        %v1540 = vmul.f32 %v1227, 0.31830987
        %v1541 = vmul.f32 %v1228, 0.31830987
        %v1542 = vmul.f32 %v1229, 0.31830987
        %v1543 = vmul.f32 %v1230, 0.31830987
        %v1544 = vmul.f32 %v1231, 0.31830987
        %v1545 = vmul.f32 %v1232, 0.31830987
        %v1546 = vmul.f32 %v1233, 0.31830987
        %v1547 = vmul.f32 %v1234, 0.31830987
        %v1548 = vmul.f32 %v1235, 0.31830987
        %v1549 = vmul.f32 %v1236, 0.31830987
        %v1550 = vmul.f32 %v1237, 0.31830987
        %v1551 = vmul.f32 %v1238, 0.31830987
        %v1552 = vmul.f32 %v1239, 0.31830987
        %v1553 = vmul.f32 %v1240, 0.31830987
        %v1554 = vmul.f32 %v1241, 0.31830987
        %v1555 = vmul.f32 %v1242, 0.31830987
        %v1556 = vmul.f32 %v1243, 0.31830987
        %v1557 = vmul.f32 %v1244, 0.31830987
        %v1558 = vmul.f32 %v1245, 0.31830987
        %v1559 = vmul.f32 %v1246, 0.31830987
        %v1560 = vmul.f32 %v1247, 0.31830987
        %v1561 = vmul.f32 %v1248, 0.31830987
        %v1562 = vmul.f32 %v1249, 0.31830987
        %v1563 = vmul.f32 %v1250, 0.31830987
        %v1564 = vmul.f32 %v1251, 0.31830987
        %v1565 = vmul.f32 %v1252, 0.31830987
        %v1566 = vmul.f32 %v1253, 0.31830987
        %v1567 = vmul.f32 %v1254, 0.31830987
        %v1568 = vmul.f32 %v1255, 0.31830987
        %v1569 = vmul.f32 %v1256, 0.31830987
        %v1570 = vmul.f32 %v1257, 0.31830987
        %v1571 = vmul.f32 %v1258, 0.31830987
        %v1572 = vmul.f32 %v1259, 0.31830987
        %v1573 = vmul.f32 %v1260, 0.31830987
        %v1574 = vmul.f32 %v1261, 0.31830987
        %v1575 = vmul.f32 %v1262, 0.31830987
        %v1576 = vmul.f32 %v1263, 0.31830987
        %v1577 = vmul.f32 %v1264, 0.31830987
        %v1578 = vmul.f32 %v1265, 0.31830987
        %v1579 = vmul.f32 %v1266, 0.31830987
        %v1580 = vmul.f32 %v1267, 0.31830987
        %v1581 = vmul.f32 %v1268, 0.31830987
        %v1582 = vmul.f32 %v1269, 0.31830987
        %v1583 = vmul.f32 %v1270, 0.31830987
        %v1584 = vmul.f32 %v1271, 0.31830987
        %v1585 = vmul.f32 %v1272, 0.31830987
        %v1586 = vmul.f32 %v1273, 0.31830987
        %v1587 = vmul.f32 %v1274, 0.31830987
        %v1588 = vmul.f32 %v1275, 0.31830987
        %v1589 = vmul.f32 %v1276, 0.31830987
        %v1590 = vmul.f32 %v1277, 0.31830987
        %v1591 = vmul.f32 %v1278, 0.31830987
        %v1592 = vmul.f32 %v1279, 0.31830987
        %v1593 = vmul.f32 %v1280, 0.31830987
        %v1594 = vmul.f32 %v1281, 0.31830987
        %v1595 = vmul.f32 %v1282, 0.31830987
        %v1596 = vmul.f32 %v1283, 0.31830987
        %v1597 = vmul.f32 %v1284, 0.31830987
        %v1598 = vmul.f32 %v1285, 0.31830987
        %v1599 = vmul.f32 %v1286, 0.31830987
        %v1600 = vmul.f32 %v1287, 0.31830987
        %v1601 = vmul.f32 %v1288, 0.31830987
        %v1602 = vmul.f32 %v1289, 0.31830987
        %v1603 = vmul.f32 %v1290, 0.31830987
        %v1604 = vmul.f32 %v1291, 0.31830987
        %v1605 = vmul.f32 %v1292, 0.31830987
        %v1606 = vmul.f32 %v1293, 0.31830987
        %v1607 = vmul.f32 %v1294, 0.31830987
        %v1608 = vmul.f32 %v1295, 0.31830987
        %v1609 = vmul.f32 %v1296, 0.31830987
        %v1610 = vmul.f32 %v1297, 0.31830987
        %v1611 = vmul.f32 %v1298, 0.31830987
        %v1612 = vmul.f32 %v1299, 0.31830987
        %v1613 = vmul.f32 %v1300, 0.31830987
        %v1614 = vmul.f32 %v1301, 0.31830987
        %v1615 = vmul.f32 %v1302, 0.31830987
        %v1616 = vmul.f32 %v1303, 0.31830987
        %v1617 = vmul.f32 %v1304, 0.31830987
        %v1618 = vmul.f32 %v1305, 0.31830987
        %v1619 = vmul.f32 %v1306, 0.31830987
        %v1620 = vmul.f32 %v1307, 0.31830987
        %v1621 = vmul.f32 %v1308, 0.31830987
        %v1622 = vmul.f32 %v1309, 0.31830987
        %v1623 = vmul.f32 %v1310, 0.31830987
        %v1624 = vmul.f32 %v1311, 0.31830987
        %v1625 = vmul.f32 %v1312, 0.31830987
        %v1626 = vmul.f32 %v1313, 0.31830987
        %v1627 = vmul.f32 %v1314, 0.31830987
        %v1628 = vmul.f32 %v1315, 0.31830987
        %v1629 = vmul.f32 %v1316, 0.31830987
        %v1630 = vmul.f32 %v1317, 0.31830987
        %v1631 = vmul.f32 %v1318, 0.31830987
        %v1632 = vmul.f32 %v1319, 0.31830987
        %v1633 = vmul.f32 %v1320, 0.31830987
        %v1634 = vmul.f32 %v1321, 0.31830987
        %v1635 = vmul.f32 %v1322, 0.31830987
        %v1636 = vmul.f32 %v1323, 0.31830987
        %v1637 = vmul.f32 %v1324, 0.31830987
        %v1638 = vmul.f32 %v1325, 0.31830987
        %v1639 = vmul.f32 %v1326, 0.31830987
        %v1640 = vmul.f32 %v1327, 0.31830987
        %v1641 = vmul.f32 %v1328, 0.31830987
        %v1642 = vmul.f32 %v1329, 0.31830987
        %v1643 = vmul.f32 %v1330, 0.31830987
        %v1644 = vmul.f32 %v1331, 0.31830987
        %v1645 = vmul.f32 %v1332, 0.31830987
        %v1646 = vmul.f32 %v1333, 0.31830987
        %v1647 = vmul.f32 %v1334, 0.31830987
        %v1648 = vmul.f32 %v1335, 0.31830987
        %v1649 = vmul.f32 %v1336, 0.31830987
        %v1650 = vmul.f32 %v1337, 0.31830987
        %v1651 = vmul.f32 %v1338, 0.31830987
        %v1652 = vmul.f32 %v1339, 0.31830987
        %v1653 = vmul.f32 %v1340, 0.31830987
        %v1654 = vmul.f32 %v1341, 0.31830987
        %v1655 = vmul.f32 %v1342, 0.31830987
        %v1656 = vmul.f32 %v1343, 0.31830987
        %v1657 = vmul.f32 %v1344, 0.31830987
        %v1658 = vmul.f32 %v1345, 0.31830987
        %v1659 = vmul.f32 %v1346, 0.31830987
        %v1660 = vmul.f32 %v1347, 0.31830987
        %v1661 = vmul.f32 %v1348, 0.31830987
        %v1662 = vmul.f32 %v1349, 0.31830987
        %v1663 = vmul.f32 %v1350, 0.31830987
        %v1664 = vmul.f32 %v1351, 0.31830987
        %v1665 = vmul.f32 %v1352, 0.31830987
        %v1666 = vmul.f32 %v1353, 0.31830987
        %v1667 = vmul.f32 %v1354, 0.31830987
        %v1668 = vmul.f32 %v1355, 0.31830987
        %v1669 = vmul.f32 %v1356, 0.31830987
        %v1670 = vmul.f32 %v1357, 0.31830987
        %v1671 = vmul.f32 %v1358, 0.31830987
        %v1672 = vmul.f32 %v1359, 0.31830987
        %v1673 = vmul.f32 %v1360, 0.31830987
        %v1674 = vmul.f32 %v1361, 0.31830987
        %v1675 = vmul.f32 %v1362, 0.31830987
        %v1676 = vmul.f32 %v1363, 0.31830987
        %v1677 = vmul.f32 %v1364, 0.31830987
        %v1678 = vmul.f32 %v1365, 0.31830987
        %v1679 = vmul.f32 %v1366, 0.31830987
        %v1680 = vmul.f32 %v1367, 0.31830987
        %v1681 = vmul.f32 %v1368, 0.31830987
        %v1682 = vmul.f32 %v1369, 0.31830987
        %v1683 = vmul.f32 %v1370, 0.31830987
        %v1684 = vmul.f32 %v1371, 0.31830987
        %v1685 = vmul.f32 %v1372, 0.31830987
        %v1686 = vmul.f32 %v1373, 0.31830987
        %v1687 = vmul.f32 %v1374, 0.31830987
        %v1688 = vmul.f32 %v1375, 0.31830987
        %v1689 = vmul.f32 %v1376, 0.31830987
        %v1690 = vmul.f32 %v1377, 0.31830987
        %v1691 = vmul.f32 %v1378, 0.31830987
        %v1692 = vmul.f32 %v1379, 0.31830987
        %v1693 = vmul.f32 %v1380, 0.31830987
        %v1694 = vmul.f32 %v1381, 0.31830987
        %v1695 = vmul.f32 %v1382, 0.31830987
        %v1696 = vmul.f32 %v1383, 0.31830987
        %v1697 = vmul.f32 %v1384, 0.31830987
        %v1698 = vmul.f32 %v1385, 0.31830987
        %v1699 = vmul.f32 %v1386, 0.31830987
        %v1700 = vmul.f32 %v1387, 0.31830987
        %v1701 = vmul.f32 %v1388, 0.31830987
        %v1702 = vmul.f32 %v1389, 0.31830987
        %v1703 = vmul.f32 %v1390, 0.31830987
        %v1704 = vmul.f32 %v1391, 0.31830987
        %v1705 = vmul.f32 %v1392, 0.31830987
        %v1706 = vmul.f32 %v1393, 0.31830987
        %v1707 = vmul.f32 %v1394, 0.31830987
        %v1708 = vmul.f32 %v1395, 0.31830987
        %v1709 = vmul.f32 %v1396, 0.31830987
        %v1710 = vmul.f32 %v1397, 0.31830987
        %v1711 = vmul.f32 %v1398, 0.31830987
        %v1712 = vmul.f32 %v1399, 0.31830987
        %v1713 = vmul.f32 %v1400, 0.31830987
        %v1714 = vmul.f32 %v1401, 0.31830987
        %v1715 = vmul.f32 %v1402, 0.31830987
        %v1716 = vmul.f32 %v1403, 0.31830987
        %v1717 = vmul.f32 %v1404, 0.31830987
        %v1718 = vmul.f32 %v1405, 0.31830987
        %v1719 = vmul.f32 %v1406, 0.31830987
        %v1720 = vmul.f32 %v1407, 0.31830987
        %v1721 = vmul.f32 %v1408, 0.31830987
        %v1722 = vmul.f32 %v1409, 0.31830987
        %v1723 = vmul.f32 %v1410, 0.31830987
        %v1724 = vmul.f32 %v1411, 0.31830987
        %v1725 = vmul.f32 %v1412, 0.31830987
        %v1726 = vmul.f32 %v1413, 0.31830987
        %v1727 = vmul.f32 %v1414, 0.31830987
        %v1728 = vmul.f32 %v1415, 0.31830987
        %v1729 = vmul.f32 %v1416, 0.31830987
        %v1730 = vmul.f32 %v1417, 0.31830987
        %v1731 = vmul.f32 %v1418, 0.31830987
        %v1732 = vmul.f32 %v1419, 0.31830987
        %v1733 = vmul.f32 %v1420, 0.31830987
        %v1734 = vmul.f32 %v1421, 0.31830987
        %v1735 = vmul.f32 %v1422, 0.31830987
        %v1736 = vmul.f32 %v1423, 0.31830987
        %v1737 = vmul.f32 %v1424, 0.31830987
        %v1738 = vmul.f32 %v1425, 0.31830987
        %v1739 = vmul.f32 %v1426, 0.31830987
        %v1740 = vmul.f32 %v1427, 0.31830987
        %v1741 = vmul.f32 %v1428, 0.31830987
        %v1742 = vmul.f32 %v1429, 0.31830987
        %v1743 = vmul.f32 %v1430, 0.31830987
        %v1744 = vmul.f32 %v1431, 0.31830987
        %v1745 = vmul.f32 %v1432, 0.31830987
        %v1746 = vmul.f32 %v1433, 0.31830987
        %v1747 = vmul.f32 %v1434, 0.31830987
        %v1748 = vmul.f32 %v1435, 0.31830987
        %v1749 = vmul.f32 %v1436, 0.31830987
        %v1750 = vmul.f32 %v1437, 0.31830987
        %v1751 = vmul.f32 %v1438, 0.31830987
        %v1752 = vmul.f32 %v1439, 0.31830987
        %v1753 = vmul.f32 %v1440, 0.31830987
        %v1754 = vmul.f32 %v1441, 0.31830987
        %v1755 = vmul.f32 %v1442, 0.31830987
        %v1756 = vmul.f32 %v1443, 0.31830987
        %v1757 = vmul.f32 %v1444, 0.31830987
        %v1758 = vmul.f32 %v1445, 0.31830987
        %v1759 = vmul.f32 %v1446, 0.31830987
        %v1760 = vmul.f32 %v1447, 0.31830987
        %v1761 = vmul.f32 %v1448, 0.31830987
        %v1762 = vmul.f32 %v1449, 0.31830987
        %v1763 = vmul.f32 %v1450, 0.31830987
        %v1764 = vmul.f32 %v1451, 0.31830987
        %v1765 = vmul.f32 %v1452, 0.31830987
        %v1766 = vmul.f32 %v1453, 0.31830987
        %v1767 = vld [vmem:[#allocation5] sm:$0x1]
        %v1769 = vlaneseq
        %v1770 = vshrl.u32 %v1769, 7
        %v1771 = vsub.s32 0, %v1770
        %v1772 = vrot.slane %v1767, %v1771
        %v1774 = vadd.f32 %v1454, %v1772
        %v1775 = vadd.f32 %v1455, %v1772
        %v1776 = vadd.f32 %v1456, %v1772
        %v1777 = vadd.f32 %v1457, %v1772
        %v1778 = vadd.f32 %v1458, %v1772
        %v1779 = vadd.f32 %v1459, %v1772
        %v1780 = vadd.f32 %v1460, %v1772
        %v1781 = vadd.f32 %v1461, %v1772
        %v1782 = vadd.f32 %v1462, %v1772
        %v1783 = vadd.f32 %v1463, %v1772
        %v1784 = vadd.f32 %v1464, %v1772
        %v1785 = vadd.f32 %v1465, %v1772
        %v1786 = vadd.f32 %v1466, %v1772
        %v1787 = vadd.f32 %v1467, %v1772
        %v1788 = vadd.f32 %v1468, %v1772
        %v1789 = vadd.f32 %v1469, %v1772
        %v1790 = vadd.f32 %v1470, %v1772
        %v1791 = vadd.f32 %v1471, %v1772
        %v1792 = vadd.f32 %v1472, %v1772
        %v1793 = vadd.f32 %v1473, %v1772
        %v1794 = vadd.f32 %v1474, %v1772
        %v1795 = vadd.f32 %v1475, %v1772
        %v1796 = vadd.f32 %v1476, %v1772
        %v1797 = vadd.f32 %v1477, %v1772
        %v1798 = vadd.f32 %v1478, %v1772
        %v1799 = vadd.f32 %v1479, %v1772
        %v1800 = vadd.f32 %v1480, %v1772
        %v1801 = vadd.f32 %v1481, %v1772
        %v1802 = vadd.f32 %v1482, %v1772
        %v1803 = vadd.f32 %v1483, %v1772
        %v1804 = vadd.f32 %v1484, %v1772
        %v1805 = vadd.f32 %v1485, %v1772
        %v1806 = vadd.f32 %v1486, %v1772
        %v1807 = vadd.f32 %v1487, %v1772
        %v1808 = vadd.f32 %v1488, %v1772
        %v1809 = vadd.f32 %v1489, %v1772
        %v1810 = vadd.f32 %v1490, %v1772
        %v1811 = vadd.f32 %v1491, %v1772
        %v1812 = vadd.f32 %v1492, %v1772
        %v1813 = vadd.f32 %v1493, %v1772
        %v1814 = vadd.f32 %v1494, %v1772
        %v1815 = vadd.f32 %v1495, %v1772
        %v1816 = vadd.f32 %v1496, %v1772
        %v1817 = vadd.f32 %v1497, %v1772
        %v1818 = vadd.f32 %v1498, %v1772
        %v1819 = vadd.f32 %v1499, %v1772
        %v1820 = vadd.f32 %v1500, %v1772
        %v1821 = vadd.f32 %v1501, %v1772
        %v1822 = vadd.f32 %v1502, %v1772
        %v1823 = vadd.f32 %v1503, %v1772
        %v1824 = vadd.f32 %v1504, %v1772
        %v1825 = vadd.f32 %v1505, %v1772
        %v1826 = vadd.f32 %v1506, %v1772
        %v1827 = vadd.f32 %v1507, %v1772
        %v1828 = vadd.f32 %v1508, %v1772
        %v1829 = vadd.f32 %v1509, %v1772
        %v1830 = vadd.f32 %v1510, %v1772
        %v1831 = vadd.f32 %v1511, %v1772
        %v1832 = vadd.f32 %v1512, %v1772
        %v1833 = vadd.f32 %v1513, %v1772
        %v1834 = vadd.f32 %v1514, %v1772
        %v1835 = vadd.f32 %v1515, %v1772
        %v1836 = vadd.f32 %v1516, %v1772
        %v1837 = vadd.f32 %v1517, %v1772
        %v1838 = vadd.f32 %v1518, %v1772
        %v1839 = vadd.f32 %v1519, %v1772
        %v1840 = vadd.f32 %v1520, %v1772
        %v1841 = vadd.f32 %v1521, %v1772
        %v1842 = vadd.f32 %v1522, %v1772
        %v1843 = vadd.f32 %v1523, %v1772
        %v1844 = vadd.f32 %v1524, %v1772
        %v1845 = vadd.f32 %v1525, %v1772
        %v1846 = vadd.f32 %v1526, %v1772
        %v1847 = vadd.f32 %v1527, %v1772
        %v1848 = vadd.f32 %v1528, %v1772
        %v1849 = vadd.f32 %v1529, %v1772
        %v1850 = vadd.f32 %v1530, %v1772
        %v1851 = vadd.f32 %v1531, %v1772
        %v1852 = vadd.f32 %v1532, %v1772
        %v1853 = vadd.f32 %v1533, %v1772
        %v1854 = vadd.f32 %v1534, %v1772
        %v1855 = vadd.f32 %v1535, %v1772
        %v1856 = vadd.f32 %v1536, %v1772
        %v1857 = vadd.f32 %v1537, %v1772
        %v1858 = vadd.f32 %v1538, %v1772
        %v1859 = vadd.f32 %v1539, %v1772
        %v1860 = vadd.f32 %v1540, %v1772
        %v1861 = vadd.f32 %v1541, %v1772
        %v1862 = vadd.f32 %v1542, %v1772
        %v1863 = vadd.f32 %v1543, %v1772
        %v1864 = vadd.f32 %v1544, %v1772
        %v1865 = vadd.f32 %v1545, %v1772
        %v1866 = vadd.f32 %v1546, %v1772
        %v1867 = vadd.f32 %v1547, %v1772
        %v1868 = vadd.f32 %v1548, %v1772
        %v1869 = vadd.f32 %v1549, %v1772
        %v1870 = vadd.f32 %v1550, %v1772
        %v1871 = vadd.f32 %v1551, %v1772
        %v1872 = vadd.f32 %v1552, %v1772
        %v1873 = vadd.f32 %v1553, %v1772
        %v1874 = vadd.f32 %v1554, %v1772
        %v1875 = vadd.f32 %v1555, %v1772
        %v1876 = vadd.f32 %v1556, %v1772
        %v1877 = vadd.f32 %v1557, %v1772
        %v1878 = vadd.f32 %v1558, %v1772
        %v1879 = vadd.f32 %v1559, %v1772
        %v1880 = vadd.f32 %v1560, %v1772
        %v1881 = vadd.f32 %v1561, %v1772
        %v1882 = vadd.f32 %v1562, %v1772
        %v1883 = vadd.f32 %v1563, %v1772
        %v1884 = vadd.f32 %v1564, %v1772
        %v1885 = vadd.f32 %v1565, %v1772
        %v1886 = vadd.f32 %v1566, %v1772
        %v1887 = vadd.f32 %v1567, %v1772
        %v1888 = vadd.f32 %v1568, %v1772
        %v1889 = vadd.f32 %v1569, %v1772
        %v1890 = vadd.f32 %v1570, %v1772
        %v1891 = vadd.f32 %v1571, %v1772
        %v1892 = vadd.f32 %v1572, %v1772
        %v1893 = vadd.f32 %v1573, %v1772
        %v1894 = vadd.f32 %v1574, %v1772
        %v1895 = vadd.f32 %v1575, %v1772
        %v1896 = vadd.f32 %v1576, %v1772
        %v1897 = vadd.f32 %v1577, %v1772
        %v1898 = vadd.f32 %v1578, %v1772
        %v1899 = vadd.f32 %v1579, %v1772
        %v1900 = vadd.f32 %v1580, %v1772
        %v1901 = vadd.f32 %v1581, %v1772
        %v1902 = vadd.f32 %v1582, %v1772
        %v1903 = vadd.f32 %v1583, %v1772
        %v1904 = vadd.f32 %v1584, %v1772
        %v1905 = vadd.f32 %v1585, %v1772
        %v1906 = vadd.f32 %v1586, %v1772
        %v1907 = vadd.f32 %v1587, %v1772
        %v1908 = vadd.f32 %v1588, %v1772
        %v1909 = vadd.f32 %v1589, %v1772
        %v1910 = vadd.f32 %v1590, %v1772
        %v1911 = vadd.f32 %v1591, %v1772
        %v1912 = vadd.f32 %v1592, %v1772
        %v1913 = vadd.f32 %v1593, %v1772
        %v1914 = vadd.f32 %v1594, %v1772
        %v1915 = vadd.f32 %v1595, %v1772
        %v1916 = vadd.f32 %v1596, %v1772
        %v1917 = vadd.f32 %v1597, %v1772
        %v1918 = vadd.f32 %v1598, %v1772
        %v1919 = vadd.f32 %v1599, %v1772
        %v1920 = vadd.f32 %v1600, %v1772
        %v1921 = vadd.f32 %v1601, %v1772
        %v1922 = vadd.f32 %v1602, %v1772
        %v1923 = vadd.f32 %v1603, %v1772
        %v1924 = vadd.f32 %v1604, %v1772
        %v1925 = vadd.f32 %v1605, %v1772
        %v1926 = vadd.f32 %v1606, %v1772
        %v1927 = vadd.f32 %v1607, %v1772
        %v1928 = vadd.f32 %v1608, %v1772
        %v1929 = vadd.f32 %v1609, %v1772
        %v1930 = vadd.f32 %v1610, %v1772
        %v1931 = vadd.f32 %v1611, %v1772
        %v1932 = vadd.f32 %v1612, %v1772
        %v1933 = vadd.f32 %v1613, %v1772
        %v1934 = vadd.f32 %v1614, %v1772
        %v1935 = vadd.f32 %v1615, %v1772
        %v1936 = vadd.f32 %v1616, %v1772
        %v1937 = vadd.f32 %v1617, %v1772
        %v1938 = vadd.f32 %v1618, %v1772
        %v1939 = vadd.f32 %v1619, %v1772
        %v1940 = vadd.f32 %v1620, %v1772
        %v1941 = vadd.f32 %v1621, %v1772
        %v1942 = vadd.f32 %v1622, %v1772
        %v1943 = vadd.f32 %v1623, %v1772
        %v1944 = vadd.f32 %v1624, %v1772
        %v1945 = vadd.f32 %v1625, %v1772
        %v1946 = vadd.f32 %v1626, %v1772
        %v1947 = vadd.f32 %v1627, %v1772
        %v1948 = vadd.f32 %v1628, %v1772
        %v1949 = vadd.f32 %v1629, %v1772
        %v1950 = vadd.f32 %v1630, %v1772
        %v1951 = vadd.f32 %v1631, %v1772
        %v1952 = vadd.f32 %v1632, %v1772
        %v1953 = vadd.f32 %v1633, %v1772
        %v1954 = vadd.f32 %v1634, %v1772
        %v1955 = vadd.f32 %v1635, %v1772
        %v1956 = vadd.f32 %v1636, %v1772
        %v1957 = vadd.f32 %v1637, %v1772
        %v1958 = vadd.f32 %v1638, %v1772
        %v1959 = vadd.f32 %v1639, %v1772
        %v1960 = vadd.f32 %v1640, %v1772
        %v1961 = vadd.f32 %v1641, %v1772
        %v1962 = vadd.f32 %v1642, %v1772
        %v1963 = vadd.f32 %v1643, %v1772
        %v1964 = vadd.f32 %v1644, %v1772
        %v1965 = vadd.f32 %v1645, %v1772
        %v1966 = vadd.f32 %v1646, %v1772
        %v1967 = vadd.f32 %v1647, %v1772
        %v1968 = vadd.f32 %v1648, %v1772
        %v1969 = vadd.f32 %v1649, %v1772
        %v1970 = vadd.f32 %v1650, %v1772
        %v1971 = vadd.f32 %v1651, %v1772
        %v1972 = vadd.f32 %v1652, %v1772
        %v1973 = vadd.f32 %v1653, %v1772
        %v1974 = vadd.f32 %v1654, %v1772
        %v1975 = vadd.f32 %v1655, %v1772
        %v1976 = vadd.f32 %v1656, %v1772
        %v1977 = vadd.f32 %v1657, %v1772
        %v1978 = vadd.f32 %v1658, %v1772
        %v1979 = vadd.f32 %v1659, %v1772
        %v1980 = vadd.f32 %v1660, %v1772
        %v1981 = vadd.f32 %v1661, %v1772
        %v1982 = vadd.f32 %v1662, %v1772
        %v1983 = vadd.f32 %v1663, %v1772
        %v1984 = vadd.f32 %v1664, %v1772
        %v1985 = vadd.f32 %v1665, %v1772
        %v1986 = vadd.f32 %v1666, %v1772
        %v1987 = vadd.f32 %v1667, %v1772
        %v1988 = vadd.f32 %v1668, %v1772
        %v1989 = vadd.f32 %v1669, %v1772
        %v1990 = vadd.f32 %v1670, %v1772
        %v1991 = vadd.f32 %v1671, %v1772
        %v1992 = vadd.f32 %v1672, %v1772
        %v1993 = vadd.f32 %v1673, %v1772
        %v1994 = vadd.f32 %v1674, %v1772
        %v1995 = vadd.f32 %v1675, %v1772
        %v1996 = vadd.f32 %v1676, %v1772
        %v1997 = vadd.f32 %v1677, %v1772
        %v1998 = vadd.f32 %v1678, %v1772
        %v1999 = vadd.f32 %v1679, %v1772
        %v2000 = vadd.f32 %v1680, %v1772
        %v2001 = vadd.f32 %v1681, %v1772
        %v2002 = vadd.f32 %v1682, %v1772
        %v2003 = vadd.f32 %v1683, %v1772
        %v2004 = vadd.f32 %v1684, %v1772
        %v2005 = vadd.f32 %v1685, %v1772
        %v2006 = vadd.f32 %v1686, %v1772
        %v2007 = vadd.f32 %v1687, %v1772
        %v2008 = vadd.f32 %v1688, %v1772
        %v2009 = vadd.f32 %v1689, %v1772
        %v2010 = vadd.f32 %v1690, %v1772
        %v2011 = vadd.f32 %v1691, %v1772
        %v2012 = vadd.f32 %v1692, %v1772
        %v2013 = vadd.f32 %v1693, %v1772
        %v2014 = vadd.f32 %v1694, %v1772
        %v2015 = vadd.f32 %v1695, %v1772
        %v2016 = vadd.f32 %v1696, %v1772
        %v2017 = vadd.f32 %v1697, %v1772
        %v2018 = vadd.f32 %v1698, %v1772
        %v2019 = vadd.f32 %v1699, %v1772
        %v2020 = vadd.f32 %v1700, %v1772
        %v2021 = vadd.f32 %v1701, %v1772
        %v2022 = vadd.f32 %v1702, %v1772
        %v2023 = vadd.f32 %v1703, %v1772
        %v2024 = vadd.f32 %v1704, %v1772
        %v2025 = vadd.f32 %v1705, %v1772
        %v2026 = vadd.f32 %v1706, %v1772
        %v2027 = vadd.f32 %v1707, %v1772
        %v2028 = vadd.f32 %v1708, %v1772
        %v2029 = vadd.f32 %v1709, %v1772
        %v2030 = vadd.f32 %v1710, %v1772
        %v2031 = vadd.f32 %v1711, %v1772
        %v2032 = vadd.f32 %v1712, %v1772
        %v2033 = vadd.f32 %v1713, %v1772
        %v2034 = vadd.f32 %v1714, %v1772
        %v2035 = vadd.f32 %v1715, %v1772
        %v2036 = vadd.f32 %v1716, %v1772
        %v2037 = vadd.f32 %v1717, %v1772
        %v2038 = vadd.f32 %v1718, %v1772
        %v2039 = vadd.f32 %v1719, %v1772
        %v2040 = vadd.f32 %v1720, %v1772
        %v2041 = vadd.f32 %v1721, %v1772
        %v2042 = vadd.f32 %v1722, %v1772
        %v2043 = vadd.f32 %v1723, %v1772
        %v2044 = vadd.f32 %v1724, %v1772
        %v2045 = vadd.f32 %v1725, %v1772
        %v2046 = vadd.f32 %v1726, %v1772
        %v2047 = vadd.f32 %v1727, %v1772
        %v2048 = vadd.f32 %v1728, %v1772
        %v2049 = vadd.f32 %v1729, %v1772
        %v2050 = vadd.f32 %v1730, %v1772
        %v2051 = vadd.f32 %v1731, %v1772
        %v2052 = vadd.f32 %v1732, %v1772
        %v2053 = vadd.f32 %v1733, %v1772
        %v2054 = vadd.f32 %v1734, %v1772
        %v2055 = vadd.f32 %v1735, %v1772
        %v2056 = vadd.f32 %v1736, %v1772
        %v2057 = vadd.f32 %v1737, %v1772
        %v2058 = vadd.f32 %v1738, %v1772
        %v2059 = vadd.f32 %v1739, %v1772
        %v2060 = vadd.f32 %v1740, %v1772
        %v2061 = vadd.f32 %v1741, %v1772
        %v2062 = vadd.f32 %v1742, %v1772
        %v2063 = vadd.f32 %v1743, %v1772
        %v2064 = vadd.f32 %v1744, %v1772
        %v2065 = vadd.f32 %v1745, %v1772
        %v2066 = vadd.f32 %v1746, %v1772
        %v2067 = vadd.f32 %v1747, %v1772
        %v2068 = vadd.f32 %v1748, %v1772
        %v2069 = vadd.f32 %v1749, %v1772
        %v2070 = vadd.f32 %v1750, %v1772
        %v2071 = vadd.f32 %v1751, %v1772
        %v2072 = vadd.f32 %v1752, %v1772
        %v2073 = vadd.f32 %v1753, %v1772
        %v2074 = vadd.f32 %v1754, %v1772
        %v2075 = vadd.f32 %v1755, %v1772
        %v2076 = vadd.f32 %v1756, %v1772
        %v2077 = vadd.f32 %v1757, %v1772
        %v2078 = vadd.f32 %v1758, %v1772
        %v2079 = vadd.f32 %v1759, %v1772
        %v2080 = vadd.f32 %v1760, %v1772
        %v2081 = vadd.f32 %v1761, %v1772
        %v2082 = vadd.f32 %v1762, %v1772
        %v2083 = vadd.f32 %v1763, %v1772
        %v2084 = vadd.f32 %v1764, %v1772
        %v2085 = vadd.f32 %v1765, %v1772
        %v2086 = vadd.f32 %v1766, %v1772
        %v2087 = vadd.f32 %v1774, 0.5
        %v2088 = vadd.f32 %v1775, 0.5
        %v2089 = vadd.f32 %v1776, 0.5
        %v2090 = vadd.f32 %v1777, 0.5
        %v2091 = vadd.f32 %v1778, 0.5
        %v2092 = vadd.f32 %v1779, 0.5
        %v2093 = vadd.f32 %v1780, 0.5
        %v2094 = vadd.f32 %v1781, 0.5
        %v2095 = vadd.f32 %v1782, 0.5
        %v2096 = vadd.f32 %v1783, 0.5
        %v2097 = vadd.f32 %v1784, 0.5
        %v2098 = vadd.f32 %v1785, 0.5
        %v2099 = vadd.f32 %v1786, 0.5
        %v2100 = vadd.f32 %v1787, 0.5
        %v2101 = vadd.f32 %v1788, 0.5
        %v2102 = vadd.f32 %v1789, 0.5
        %v2103 = vadd.f32 %v1790, 0.5
        %v2104 = vadd.f32 %v1791, 0.5
        %v2105 = vadd.f32 %v1792, 0.5
        %v2106 = vadd.f32 %v1793, 0.5
        %v2107 = vadd.f32 %v1794, 0.5
        %v2108 = vadd.f32 %v1795, 0.5
        %v2109 = vadd.f32 %v1796, 0.5
        %v2110 = vadd.f32 %v1797, 0.5
        %v2111 = vadd.f32 %v1798, 0.5
        %v2112 = vadd.f32 %v1799, 0.5
        %v2113 = vadd.f32 %v1800, 0.5
        %v2114 = vadd.f32 %v1801, 0.5
        %v2115 = vadd.f32 %v1802, 0.5
        %v2116 = vadd.f32 %v1803, 0.5
        %v2117 = vadd.f32 %v1804, 0.5
        %v2118 = vadd.f32 %v1805, 0.5
        %v2119 = vadd.f32 %v1806, 0.5
        %v2120 = vadd.f32 %v1807, 0.5
        %v2121 = vadd.f32 %v1808, 0.5
        %v2122 = vadd.f32 %v1809, 0.5
        %v2123 = vadd.f32 %v1810, 0.5
        %v2124 = vadd.f32 %v1811, 0.5
        %v2125 = vadd.f32 %v1812, 0.5
        %v2126 = vadd.f32 %v1813, 0.5
        %v2127 = vadd.f32 %v1814, 0.5
        %v2128 = vadd.f32 %v1815, 0.5
        %v2129 = vadd.f32 %v1816, 0.5
        %v2130 = vadd.f32 %v1817, 0.5
        %v2131 = vadd.f32 %v1818, 0.5
        %v2132 = vadd.f32 %v1819, 0.5
        %v2133 = vadd.f32 %v1820, 0.5
        %v2134 = vadd.f32 %v1821, 0.5
        %v2135 = vadd.f32 %v1822, 0.5
        %v2136 = vadd.f32 %v1823, 0.5
        %v2137 = vadd.f32 %v1824, 0.5
        %v2138 = vadd.f32 %v1825, 0.5
        %v2139 = vadd.f32 %v1826, 0.5
        %v2140 = vadd.f32 %v1827, 0.5
        %v2141 = vadd.f32 %v1828, 0.5
        %v2142 = vadd.f32 %v1829, 0.5
        %v2143 = vadd.f32 %v1830, 0.5
        %v2144 = vadd.f32 %v1831, 0.5
        %v2145 = vadd.f32 %v1832, 0.5
        %v2146 = vadd.f32 %v1833, 0.5
        %v2147 = vadd.f32 %v1834, 0.5
        %v2148 = vadd.f32 %v1835, 0.5
        %v2149 = vadd.f32 %v1836, 0.5
        %v2150 = vadd.f32 %v1837, 0.5
        %v2151 = vadd.f32 %v1838, 0.5
        %v2152 = vadd.f32 %v1839, 0.5
        %v2153 = vadd.f32 %v1840, 0.5
        %v2154 = vadd.f32 %v1841, 0.5
        %v2155 = vadd.f32 %v1842, 0.5
        %v2156 = vadd.f32 %v1843, 0.5
        %v2157 = vadd.f32 %v1844, 0.5
        %v2158 = vadd.f32 %v1845, 0.5
        %v2159 = vadd.f32 %v1846, 0.5
        %v2160 = vadd.f32 %v1847, 0.5
        %v2161 = vadd.f32 %v1848, 0.5
        %v2162 = vadd.f32 %v1849, 0.5
        %v2163 = vadd.f32 %v1850, 0.5
        %v2164 = vadd.f32 %v1851, 0.5
        %v2165 = vadd.f32 %v1852, 0.5
        %v2166 = vadd.f32 %v1853, 0.5
        %v2167 = vadd.f32 %v1854, 0.5
        %v2168 = vadd.f32 %v1855, 0.5
        %v2169 = vadd.f32 %v1856, 0.5
        %v2170 = vadd.f32 %v1857, 0.5
        %v2171 = vadd.f32 %v1858, 0.5
        %v2172 = vadd.f32 %v1859, 0.5
        %v2173 = vadd.f32 %v1860, 0.5
        %v2174 = vadd.f32 %v1861, 0.5
        %v2175 = vadd.f32 %v1862, 0.5
        %v2176 = vadd.f32 %v1863, 0.5
        %v2177 = vadd.f32 %v1864, 0.5
        %v2178 = vadd.f32 %v1865, 0.5
        %v2179 = vadd.f32 %v1866, 0.5
        %v2180 = vadd.f32 %v1867, 0.5
        %v2181 = vadd.f32 %v1868, 0.5
        %v2182 = vadd.f32 %v1869, 0.5
        %v2183 = vadd.f32 %v1870, 0.5
        %v2184 = vadd.f32 %v1871, 0.5
        %v2185 = vadd.f32 %v1872, 0.5
        %v2186 = vadd.f32 %v1873, 0.5
        %v2187 = vadd.f32 %v1874, 0.5
        %v2188 = vadd.f32 %v1875, 0.5
        %v2189 = vadd.f32 %v1876, 0.5
        %v2190 = vadd.f32 %v1877, 0.5
        %v2191 = vadd.f32 %v1878, 0.5
        %v2192 = vadd.f32 %v1879, 0.5
        %v2193 = vadd.f32 %v1880, 0.5
        %v2194 = vadd.f32 %v1881, 0.5
        %v2195 = vadd.f32 %v1882, 0.5
        %v2196 = vadd.f32 %v1883, 0.5
        %v2197 = vadd.f32 %v1884, 0.5
        %v2198 = vadd.f32 %v1885, 0.5
        %v2199 = vadd.f32 %v1886, 0.5
        %v2200 = vadd.f32 %v1887, 0.5
        %v2201 = vadd.f32 %v1888, 0.5
        %v2202 = vadd.f32 %v1889, 0.5
        %v2203 = vadd.f32 %v1890, 0.5
        %v2204 = vadd.f32 %v1891, 0.5
        %v2205 = vadd.f32 %v1892, 0.5
        %v2206 = vadd.f32 %v1893, 0.5
        %v2207 = vadd.f32 %v1894, 0.5
        %v2208 = vadd.f32 %v1895, 0.5
        %v2209 = vadd.f32 %v1896, 0.5
        %v2210 = vadd.f32 %v1897, 0.5
        %v2211 = vadd.f32 %v1898, 0.5
        %v2212 = vadd.f32 %v1899, 0.5
        %v2213 = vadd.f32 %v1900, 0.5
        %v2214 = vadd.f32 %v1901, 0.5
        %v2215 = vadd.f32 %v1902, 0.5
        %v2216 = vadd.f32 %v1903, 0.5
        %v2217 = vadd.f32 %v1904, 0.5
        %v2218 = vadd.f32 %v1905, 0.5
        %v2219 = vadd.f32 %v1906, 0.5
        %v2220 = vadd.f32 %v1907, 0.5
        %v2221 = vadd.f32 %v1908, 0.5
        %v2222 = vadd.f32 %v1909, 0.5
        %v2223 = vadd.f32 %v1910, 0.5
        %v2224 = vadd.f32 %v1911, 0.5
        %v2225 = vadd.f32 %v1912, 0.5
        %v2226 = vadd.f32 %v1913, 0.5
        %v2227 = vadd.f32 %v1914, 0.5
        %v2228 = vadd.f32 %v1915, 0.5
        %v2229 = vadd.f32 %v1916, 0.5
        %v2230 = vadd.f32 %v1917, 0.5
        %v2231 = vadd.f32 %v1918, 0.5
        %v2232 = vadd.f32 %v1919, 0.5
        %v2233 = vadd.f32 %v1920, 0.5
        %v2234 = vadd.f32 %v1921, 0.5
        %v2235 = vadd.f32 %v1922, 0.5
        %v2236 = vadd.f32 %v1923, 0.5
        %v2237 = vadd.f32 %v1924, 0.5
        %v2238 = vadd.f32 %v1925, 0.5
        %v2239 = vadd.f32 %v1926, 0.5
        %v2240 = vadd.f32 %v1927, 0.5
        %v2241 = vadd.f32 %v1928, 0.5
        %v2242 = vadd.f32 %v1929, 0.5
        %v2243 = vadd.f32 %v1930, 0.5
        %v2244 = vadd.f32 %v1931, 0.5
        %v2245 = vadd.f32 %v1932, 0.5
        %v2246 = vadd.f32 %v1933, 0.5
        %v2247 = vadd.f32 %v1934, 0.5
        %v2248 = vadd.f32 %v1935, 0.5
        %v2249 = vadd.f32 %v1936, 0.5
        %v2250 = vadd.f32 %v1937, 0.5
        %v2251 = vadd.f32 %v1938, 0.5
        %v2252 = vadd.f32 %v1939, 0.5
        %v2253 = vadd.f32 %v1940, 0.5
        %v2254 = vadd.f32 %v1941, 0.5
        %v2255 = vadd.f32 %v1942, 0.5
        %v2256 = vadd.f32 %v1943, 0.5
        %v2257 = vadd.f32 %v1944, 0.5
        %v2258 = vadd.f32 %v1945, 0.5
        %v2259 = vadd.f32 %v1946, 0.5
        %v2260 = vadd.f32 %v1947, 0.5
        %v2261 = vadd.f32 %v1948, 0.5
        %v2262 = vadd.f32 %v1949, 0.5
        %v2263 = vadd.f32 %v1950, 0.5
        %v2264 = vadd.f32 %v1951, 0.5
        %v2265 = vadd.f32 %v1952, 0.5
        %v2266 = vadd.f32 %v1953, 0.5
        %v2267 = vadd.f32 %v1954, 0.5
        %v2268 = vadd.f32 %v1955, 0.5
        %v2269 = vadd.f32 %v1956, 0.5
        %v2270 = vadd.f32 %v1957, 0.5
        %v2271 = vadd.f32 %v1958, 0.5
        %v2272 = vadd.f32 %v1959, 0.5
        %v2273 = vadd.f32 %v1960, 0.5
        %v2274 = vadd.f32 %v1961, 0.5
        %v2275 = vadd.f32 %v1962, 0.5
        %v2276 = vadd.f32 %v1963, 0.5
        %v2277 = vadd.f32 %v1964, 0.5
        %v2278 = vadd.f32 %v1965, 0.5
        %v2279 = vadd.f32 %v1966, 0.5
        %v2280 = vadd.f32 %v1967, 0.5
        %v2281 = vadd.f32 %v1968, 0.5
        %v2282 = vadd.f32 %v1969, 0.5
        %v2283 = vadd.f32 %v1970, 0.5
        %v2284 = vadd.f32 %v1971, 0.5
        %v2285 = vadd.f32 %v1972, 0.5
        %v2286 = vadd.f32 %v1973, 0.5
        %v2287 = vadd.f32 %v1974, 0.5
        %v2288 = vadd.f32 %v1975, 0.5
        %v2289 = vadd.f32 %v1976, 0.5
        %v2290 = vadd.f32 %v1977, 0.5
        %v2291 = vadd.f32 %v1978, 0.5
        %v2292 = vadd.f32 %v1979, 0.5
        %v2293 = vadd.f32 %v1980, 0.5
        %v2294 = vadd.f32 %v1981, 0.5
        %v2295 = vadd.f32 %v1982, 0.5
        %v2296 = vadd.f32 %v1983, 0.5
        %v2297 = vadd.f32 %v1984, 0.5
        %v2298 = vadd.f32 %v1985, 0.5
        %v2299 = vadd.f32 %v1986, 0.5
        %v2300 = vadd.f32 %v1987, 0.5
        %v2301 = vadd.f32 %v1988, 0.5
        %v2302 = vadd.f32 %v1989, 0.5
        %v2303 = vadd.f32 %v1990, 0.5
        %v2304 = vadd.f32 %v1991, 0.5
        %v2305 = vadd.f32 %v1992, 0.5
        %v2306 = vadd.f32 %v1993, 0.5
        %v2307 = vadd.f32 %v1994, 0.5
        %v2308 = vadd.f32 %v1995, 0.5
        %v2309 = vadd.f32 %v1996, 0.5
        %v2310 = vadd.f32 %v1997, 0.5
        %v2311 = vadd.f32 %v1998, 0.5
        %v2312 = vadd.f32 %v1999, 0.5
        %v2313 = vadd.f32 %v2000, 0.5
        %v2314 = vadd.f32 %v2001, 0.5
        %v2315 = vadd.f32 %v2002, 0.5
        %v2316 = vadd.f32 %v2003, 0.5
        %v2317 = vadd.f32 %v2004, 0.5
        %v2318 = vadd.f32 %v2005, 0.5
        %v2319 = vadd.f32 %v2006, 0.5
        %v2320 = vadd.f32 %v2007, 0.5
        %v2321 = vadd.f32 %v2008, 0.5
        %v2322 = vadd.f32 %v2009, 0.5
        %v2323 = vadd.f32 %v2010, 0.5
        %v2324 = vadd.f32 %v2011, 0.5
        %v2325 = vadd.f32 %v2012, 0.5
        %v2326 = vadd.f32 %v2013, 0.5
        %v2327 = vadd.f32 %v2014, 0.5
        %v2328 = vadd.f32 %v2015, 0.5
        %v2329 = vadd.f32 %v2016, 0.5
        %v2330 = vadd.f32 %v2017, 0.5
        %v2331 = vadd.f32 %v2018, 0.5
        %v2332 = vadd.f32 %v2019, 0.5
        %v2333 = vadd.f32 %v2020, 0.5
        %v2334 = vadd.f32 %v2021, 0.5
        %v2335 = vadd.f32 %v2022, 0.5
        %v2336 = vadd.f32 %v2023, 0.5
        %v2337 = vadd.f32 %v2024, 0.5
        %v2338 = vadd.f32 %v2025, 0.5
        %v2339 = vadd.f32 %v2026, 0.5
        %v2340 = vadd.f32 %v2027, 0.5
        %v2341 = vadd.f32 %v2028, 0.5
        %v2342 = vadd.f32 %v2029, 0.5
        %v2343 = vadd.f32 %v2030, 0.5
        %v2344 = vadd.f32 %v2031, 0.5
        %v2345 = vadd.f32 %v2032, 0.5
        %v2346 = vadd.f32 %v2033, 0.5
        %v2347 = vadd.f32 %v2034, 0.5
        %v2348 = vadd.f32 %v2035, 0.5
        %v2349 = vadd.f32 %v2036, 0.5
        %v2350 = vadd.f32 %v2037, 0.5
        %v2351 = vadd.f32 %v2038, 0.5
        %v2352 = vadd.f32 %v2039, 0.5
        %v2353 = vadd.f32 %v2040, 0.5
        %v2354 = vadd.f32 %v2041, 0.5
        %v2355 = vadd.f32 %v2042, 0.5
        %v2356 = vadd.f32 %v2043, 0.5
        %v2357 = vadd.f32 %v2044, 0.5
        %v2358 = vadd.f32 %v2045, 0.5
        %v2359 = vadd.f32 %v2046, 0.5
        %v2360 = vadd.f32 %v2047, 0.5
        %v2361 = vadd.f32 %v2048, 0.5
        %v2362 = vadd.f32 %v2049, 0.5
        %v2363 = vadd.f32 %v2050, 0.5
        %v2364 = vadd.f32 %v2051, 0.5
        %v2365 = vadd.f32 %v2052, 0.5
        %v2366 = vadd.f32 %v2053, 0.5
        %v2367 = vadd.f32 %v2054, 0.5
        %v2368 = vadd.f32 %v2055, 0.5
        %v2369 = vadd.f32 %v2056, 0.5
        %v2370 = vadd.f32 %v2057, 0.5
        %v2371 = vadd.f32 %v2058, 0.5
        %v2372 = vadd.f32 %v2059, 0.5
        %v2373 = vadd.f32 %v2060, 0.5
        %v2374 = vadd.f32 %v2061, 0.5
        %v2375 = vadd.f32 %v2062, 0.5
        %v2376 = vadd.f32 %v2063, 0.5
        %v2377 = vadd.f32 %v2064, 0.5
        %v2378 = vadd.f32 %v2065, 0.5
        %v2379 = vadd.f32 %v2066, 0.5
        %v2380 = vadd.f32 %v2067, 0.5
        %v2381 = vadd.f32 %v2068, 0.5
        %v2382 = vadd.f32 %v2069, 0.5
        %v2383 = vadd.f32 %v2070, 0.5
        %v2384 = vadd.f32 %v2071, 0.5
        %v2385 = vadd.f32 %v2072, 0.5
        %v2386 = vadd.f32 %v2073, 0.5
        %v2387 = vadd.f32 %v2074, 0.5
        %v2388 = vadd.f32 %v2075, 0.5
        %v2389 = vadd.f32 %v2076, 0.5
        %v2390 = vadd.f32 %v2077, 0.5
        %v2391 = vadd.f32 %v2078, 0.5
        %v2392 = vadd.f32 %v2079, 0.5
        %v2393 = vadd.f32 %v2080, 0.5
        %v2394 = vadd.f32 %v2081, 0.5
        %v2395 = vadd.f32 %v2082, 0.5
        %v2396 = vadd.f32 %v2083, 0.5
        %v2397 = vadd.f32 %v2084, 0.5
        %v2398 = vadd.f32 %v2085, 0.5
        %v2399 = vadd.f32 %v2086, 0.5
        %v2400 = vfloor.f32 %v2087
        %v2401 = vfloor.f32 %v2088
        %v2402 = vfloor.f32 %v2089
        %v2403 = vfloor.f32 %v2090
        %v2404 = vfloor.f32 %v2091
        %v2405 = vfloor.f32 %v2092
        %v2406 = vfloor.f32 %v2093
        %v2407 = vfloor.f32 %v2094
        %v2408 = vfloor.f32 %v2095
        %v2409 = vfloor.f32 %v2096
        %v2410 = vfloor.f32 %v2097
        %v2411 = vfloor.f32 %v2098
        %v2412 = vfloor.f32 %v2099
        %v2413 = vfloor.f32 %v2100
        %v2414 = vfloor.f32 %v2101
        %v2415 = vfloor.f32 %v2102
        %v2416 = vfloor.f32 %v2103
        %v2417 = vfloor.f32 %v2104
        %v2418 = vfloor.f32 %v2105
        %v2419 = vfloor.f32 %v2106
        %v2420 = vfloor.f32 %v2107
        %v2421 = vfloor.f32 %v2108
        %v2422 = vfloor.f32 %v2109
        %v2423 = vfloor.f32 %v2110
        %v2424 = vfloor.f32 %v2111
        %v2425 = vfloor.f32 %v2112
        %v2426 = vfloor.f32 %v2113
        %v2427 = vfloor.f32 %v2114
        %v2428 = vfloor.f32 %v2115
        %v2429 = vfloor.f32 %v2116
        %v2430 = vfloor.f32 %v2117
        %v2431 = vfloor.f32 %v2118
        %v2432 = vfloor.f32 %v2119
        %v2433 = vfloor.f32 %v2120
        %v2434 = vfloor.f32 %v2121
        %v2435 = vfloor.f32 %v2122
        %v2436 = vfloor.f32 %v2123
        %v2437 = vfloor.f32 %v2124
        %v2438 = vfloor.f32 %v2125
        %v2439 = vfloor.f32 %v2126
        %v2440 = vfloor.f32 %v2127
        %v2441 = vfloor.f32 %v2128
        %v2442 = vfloor.f32 %v2129
        %v2443 = vfloor.f32 %v2130
        %v2444 = vfloor.f32 %v2131
        %v2445 = vfloor.f32 %v2132
        %v2446 = vfloor.f32 %v2133
        %v2447 = vfloor.f32 %v2134
        %v2448 = vfloor.f32 %v2135
        %v2449 = vfloor.f32 %v2136
        %v2450 = vfloor.f32 %v2137
        %v2451 = vfloor.f32 %v2138
        %v2452 = vfloor.f32 %v2139
        %v2453 = vfloor.f32 %v2140
        %v2454 = vfloor.f32 %v2141
        %v2455 = vfloor.f32 %v2142
        %v2456 = vfloor.f32 %v2143
        %v2457 = vfloor.f32 %v2144
        %v2458 = vfloor.f32 %v2145
        %v2459 = vfloor.f32 %v2146
        %v2460 = vfloor.f32 %v2147
        %v2461 = vfloor.f32 %v2148
        %v2462 = vfloor.f32 %v2149
        %v2463 = vfloor.f32 %v2150
        %v2464 = vfloor.f32 %v2151
        %v2465 = vfloor.f32 %v2152
        %v2466 = vfloor.f32 %v2153
        %v2467 = vfloor.f32 %v2154
        %v2468 = vfloor.f32 %v2155
        %v2469 = vfloor.f32 %v2156
        %v2470 = vfloor.f32 %v2157
        %v2471 = vfloor.f32 %v2158
        %v2472 = vfloor.f32 %v2159
        %v2473 = vfloor.f32 %v2160
        %v2474 = vfloor.f32 %v2161
        %v2475 = vfloor.f32 %v2162
        %v2476 = vfloor.f32 %v2163
        %v2477 = vfloor.f32 %v2164
        %v2478 = vfloor.f32 %v2165
        %v2479 = vfloor.f32 %v2166
        %v2480 = vfloor.f32 %v2167
        %v2481 = vfloor.f32 %v2168
        %v2482 = vfloor.f32 %v2169
        %v2483 = vfloor.f32 %v2170
        %v2484 = vfloor.f32 %v2171
        %v2485 = vfloor.f32 %v2172
        %v2486 = vfloor.f32 %v2173
        %v2487 = vfloor.f32 %v2174
        %v2488 = vfloor.f32 %v2175
        %v2489 = vfloor.f32 %v2176
        %v2490 = vfloor.f32 %v2177
        %v2491 = vfloor.f32 %v2178
        %v2492 = vfloor.f32 %v2179
        %v2493 = vfloor.f32 %v2180
        %v2494 = vfloor.f32 %v2181
        %v2495 = vfloor.f32 %v2182
        %v2496 = vfloor.f32 %v2183
        %v2497 = vfloor.f32 %v2184
        %v2498 = vfloor.f32 %v2185
        %v2499 = vfloor.f32 %v2186
        %v2500 = vfloor.f32 %v2187
        %v2501 = vfloor.f32 %v2188
        %v2502 = vfloor.f32 %v2189
        %v2503 = vfloor.f32 %v2190
        %v2504 = vfloor.f32 %v2191
        %v2505 = vfloor.f32 %v2192
        %v2506 = vfloor.f32 %v2193
        %v2507 = vfloor.f32 %v2194
        %v2508 = vfloor.f32 %v2195
        %v2509 = vfloor.f32 %v2196
        %v2510 = vfloor.f32 %v2197
        %v2511 = vfloor.f32 %v2198
        %v2512 = vfloor.f32 %v2199
        %v2513 = vfloor.f32 %v2200
        %v2514 = vfloor.f32 %v2201
        %v2515 = vfloor.f32 %v2202
        %v2516 = vfloor.f32 %v2203
        %v2517 = vfloor.f32 %v2204
        %v2518 = vfloor.f32 %v2205
        %v2519 = vfloor.f32 %v2206
        %v2520 = vfloor.f32 %v2207
        %v2521 = vfloor.f32 %v2208
        %v2522 = vfloor.f32 %v2209
        %v2523 = vfloor.f32 %v2210
        %v2524 = vfloor.f32 %v2211
        %v2525 = vfloor.f32 %v2212
        %v2526 = vfloor.f32 %v2213
        %v2527 = vfloor.f32 %v2214
        %v2528 = vfloor.f32 %v2215
        %v2529 = vfloor.f32 %v2216
        %v2530 = vfloor.f32 %v2217
        %v2531 = vfloor.f32 %v2218
        %v2532 = vfloor.f32 %v2219
        %v2533 = vfloor.f32 %v2220
        %v2534 = vfloor.f32 %v2221
        %v2535 = vfloor.f32 %v2222
        %v2536 = vfloor.f32 %v2223
        %v2537 = vfloor.f32 %v2224
        %v2538 = vfloor.f32 %v2225
        %v2539 = vfloor.f32 %v2226
        %v2540 = vfloor.f32 %v2227
        %v2541 = vfloor.f32 %v2228
        %v2542 = vfloor.f32 %v2229
        %v2543 = vfloor.f32 %v2230
        %v2544 = vfloor.f32 %v2231
        %v2545 = vfloor.f32 %v2232
        %v2546 = vfloor.f32 %v2233
        %v2547 = vfloor.f32 %v2234
        %v2548 = vfloor.f32 %v2235
        %v2549 = vfloor.f32 %v2236
        %v2550 = vfloor.f32 %v2237
        %v2551 = vfloor.f32 %v2238
        %v2552 = vfloor.f32 %v2239
        %v2553 = vfloor.f32 %v2240
        %v2554 = vfloor.f32 %v2241
        %v2555 = vfloor.f32 %v2242
        %v2556 = vfloor.f32 %v2243
        %v2557 = vfloor.f32 %v2244
        %v2558 = vfloor.f32 %v2245
        %v2559 = vfloor.f32 %v2246
        %v2560 = vfloor.f32 %v2247
        %v2561 = vfloor.f32 %v2248
        %v2562 = vfloor.f32 %v2249
        %v2563 = vfloor.f32 %v2250
        %v2564 = vfloor.f32 %v2251
        %v2565 = vfloor.f32 %v2252
        %v2566 = vfloor.f32 %v2253
        %v2567 = vfloor.f32 %v2254
        %v2568 = vfloor.f32 %v2255
        %v2569 = vfloor.f32 %v2256
        %v2570 = vfloor.f32 %v2257
        %v2571 = vfloor.f32 %v2258
        %v2572 = vfloor.f32 %v2259
        %v2573 = vfloor.f32 %v2260
        %v2574 = vfloor.f32 %v2261
        %v2575 = vfloor.f32 %v2262
        %v2576 = vfloor.f32 %v2263
        %v2577 = vfloor.f32 %v2264
        %v2578 = vfloor.f32 %v2265
        %v2579 = vfloor.f32 %v2266
        %v2580 = vfloor.f32 %v2267
        %v2581 = vfloor.f32 %v2268
        %v2582 = vfloor.f32 %v2269
        %v2583 = vfloor.f32 %v2270
        %v2584 = vfloor.f32 %v2271
        %v2585 = vfloor.f32 %v2272
        %v2586 = vfloor.f32 %v2273
        %v2587 = vfloor.f32 %v2274
        %v2588 = vfloor.f32 %v2275
        %v2589 = vfloor.f32 %v2276
        %v2590 = vfloor.f32 %v2277
        %v2591 = vfloor.f32 %v2278
        %v2592 = vfloor.f32 %v2279
        %v2593 = vfloor.f32 %v2280
        %v2594 = vfloor.f32 %v2281
        %v2595 = vfloor.f32 %v2282
        %v2596 = vfloor.f32 %v2283
        %v2597 = vfloor.f32 %v2284
        %v2598 = vfloor.f32 %v2285
        %v2599 = vfloor.f32 %v2286
        %v2600 = vfloor.f32 %v2287
        %v2601 = vfloor.f32 %v2288
        %v2602 = vfloor.f32 %v2289
        %v2603 = vfloor.f32 %v2290
        %v2604 = vfloor.f32 %v2291
        %v2605 = vfloor.f32 %v2292
        %v2606 = vfloor.f32 %v2293
        %v2607 = vfloor.f32 %v2294
        %v2608 = vfloor.f32 %v2295
        %v2609 = vfloor.f32 %v2296
        %v2610 = vfloor.f32 %v2297
        %v2611 = vfloor.f32 %v2298
        %v2612 = vfloor.f32 %v2299
        %v2613 = vfloor.f32 %v2300
        %v2614 = vfloor.f32 %v2301
        %v2615 = vfloor.f32 %v2302
        %v2616 = vfloor.f32 %v2303
        %v2617 = vfloor.f32 %v2304
        %v2618 = vfloor.f32 %v2305
        %v2619 = vfloor.f32 %v2306
        %v2620 = vfloor.f32 %v2307
        %v2621 = vfloor.f32 %v2308
        %v2622 = vfloor.f32 %v2309
        %v2623 = vfloor.f32 %v2310
        %v2624 = vfloor.f32 %v2311
        %v2625 = vfloor.f32 %v2312
        %v2626 = vfloor.f32 %v2313
        %v2627 = vfloor.f32 %v2314
        %v2628 = vfloor.f32 %v2315
        %v2629 = vfloor.f32 %v2316
        %v2630 = vfloor.f32 %v2317
        %v2631 = vfloor.f32 %v2318
        %v2632 = vfloor.f32 %v2319
        %v2633 = vfloor.f32 %v2320
        %v2634 = vfloor.f32 %v2321
        %v2635 = vfloor.f32 %v2322
        %v2636 = vfloor.f32 %v2323
        %v2637 = vfloor.f32 %v2324
        %v2638 = vfloor.f32 %v2325
        %v2639 = vfloor.f32 %v2326
        %v2640 = vfloor.f32 %v2327
        %v2641 = vfloor.f32 %v2328
        %v2642 = vfloor.f32 %v2329
        %v2643 = vfloor.f32 %v2330
        %v2644 = vfloor.f32 %v2331
        %v2645 = vfloor.f32 %v2332
        %v2646 = vfloor.f32 %v2333
        %v2647 = vfloor.f32 %v2334
        %v2648 = vfloor.f32 %v2335
        %v2649 = vfloor.f32 %v2336
        %v2650 = vfloor.f32 %v2337
        %v2651 = vfloor.f32 %v2338
        %v2652 = vfloor.f32 %v2339
        %v2653 = vfloor.f32 %v2340
        %v2654 = vfloor.f32 %v2341
        %v2655 = vfloor.f32 %v2342
        %v2656 = vfloor.f32 %v2343
        %v2657 = vfloor.f32 %v2344
        %v2658 = vfloor.f32 %v2345
        %v2659 = vfloor.f32 %v2346
        %v2660 = vfloor.f32 %v2347
        %v2661 = vfloor.f32 %v2348
        %v2662 = vfloor.f32 %v2349
        %v2663 = vfloor.f32 %v2350
        %v2664 = vfloor.f32 %v2351
        %v2665 = vfloor.f32 %v2352
        %v2666 = vfloor.f32 %v2353
        %v2667 = vfloor.f32 %v2354
        %v2668 = vfloor.f32 %v2355
        %v2669 = vfloor.f32 %v2356
        %v2670 = vfloor.f32 %v2357
        %v2671 = vfloor.f32 %v2358
        %v2672 = vfloor.f32 %v2359
        %v2673 = vfloor.f32 %v2360
        %v2674 = vfloor.f32 %v2361
        %v2675 = vfloor.f32 %v2362
        %v2676 = vfloor.f32 %v2363
        %v2677 = vfloor.f32 %v2364
        %v2678 = vfloor.f32 %v2365
        %v2679 = vfloor.f32 %v2366
        %v2680 = vfloor.f32 %v2367
        %v2681 = vfloor.f32 %v2368
        %v2682 = vfloor.f32 %v2369
        %v2683 = vfloor.f32 %v2370
        %v2684 = vfloor.f32 %v2371
        %v2685 = vfloor.f32 %v2372
        %v2686 = vfloor.f32 %v2373
        %v2687 = vfloor.f32 %v2374
        %v2688 = vfloor.f32 %v2375
        %v2689 = vfloor.f32 %v2376
        %v2690 = vfloor.f32 %v2377
        %v2691 = vfloor.f32 %v2378
        %v2692 = vfloor.f32 %v2379
        %v2693 = vfloor.f32 %v2380
        %v2694 = vfloor.f32 %v2381
        %v2695 = vfloor.f32 %v2382
        %v2696 = vfloor.f32 %v2383
        %v2697 = vfloor.f32 %v2384
        %v2698 = vfloor.f32 %v2385
        %v2699 = vfloor.f32 %v2386
        %v2700 = vfloor.f32 %v2387
        %v2701 = vfloor.f32 %v2388
        %v2702 = vfloor.f32 %v2389
        %v2703 = vfloor.f32 %v2390
        %v2704 = vfloor.f32 %v2391
        %v2705 = vfloor.f32 %v2392
        %v2706 = vfloor.f32 %v2393
        %v2707 = vfloor.f32 %v2394
        %v2708 = vfloor.f32 %v2395
        %v2709 = vfloor.f32 %v2396
        %v2710 = vfloor.f32 %v2397
        %v2711 = vfloor.f32 %v2398
        %v2712 = vfloor.f32 %v2399
        %v2713 = vmul.f32 %v2400, 3.140625
        %v2714 = vmul.f32 %v2401, 3.140625
        %v2715 = vmul.f32 %v2402, 3.140625
        %v2716 = vmul.f32 %v2403, 3.140625
        %v2717 = vmul.f32 %v2404, 3.140625
        %v2718 = vmul.f32 %v2405, 3.140625
        %v2719 = vmul.f32 %v2406, 3.140625
        %v2720 = vmul.f32 %v2407, 3.140625
        %v2721 = vmul.f32 %v2408, 3.140625
        %v2722 = vmul.f32 %v2409, 3.140625
        %v2723 = vmul.f32 %v2410, 3.140625
        %v2724 = vmul.f32 %v2411, 3.140625
        %v2725 = vmul.f32 %v2412, 3.140625
        %v2726 = vmul.f32 %v2413, 3.140625
        %v2727 = vmul.f32 %v2414, 3.140625
        %v2728 = vmul.f32 %v2415, 3.140625
        %v2729 = vmul.f32 %v2416, 3.140625
        %v2730 = vmul.f32 %v2417, 3.140625
        %v2731 = vmul.f32 %v2418, 3.140625
        %v2732 = vmul.f32 %v2419, 3.140625
        %v2733 = vmul.f32 %v2420, 3.140625
        %v2734 = vmul.f32 %v2421, 3.140625
        %v2735 = vmul.f32 %v2422, 3.140625
        %v2736 = vmul.f32 %v2423, 3.140625
        %v2737 = vmul.f32 %v2424, 3.140625
        %v2738 = vmul.f32 %v2425, 3.140625
        %v2739 = vmul.f32 %v2426, 3.140625
        %v2740 = vmul.f32 %v2427, 3.140625
        %v2741 = vmul.f32 %v2428, 3.140625
        %v2742 = vmul.f32 %v2429, 3.140625
        %v2743 = vmul.f32 %v2430, 3.140625
        %v2744 = vmul.f32 %v2431, 3.140625
        %v2745 = vmul.f32 %v2432, 3.140625
        %v2746 = vmul.f32 %v2433, 3.140625
        %v2747 = vmul.f32 %v2434, 3.140625
        %v2748 = vmul.f32 %v2435, 3.140625
        %v2749 = vmul.f32 %v2436, 3.140625
        %v2750 = vmul.f32 %v2437, 3.140625
        %v2751 = vmul.f32 %v2438, 3.140625
        %v2752 = vmul.f32 %v2439, 3.140625
        %v2753 = vmul.f32 %v2440, 3.140625
        %v2754 = vmul.f32 %v2441, 3.140625
        %v2755 = vmul.f32 %v2442, 3.140625
        %v2756 = vmul.f32 %v2443, 3.140625
        %v2757 = vmul.f32 %v2444, 3.140625
        %v2758 = vmul.f32 %v2445, 3.140625
        %v2759 = vmul.f32 %v2446, 3.140625
        %v2760 = vmul.f32 %v2447, 3.140625
        %v2761 = vmul.f32 %v2448, 3.140625
        %v2762 = vmul.f32 %v2449, 3.140625
        %v2763 = vmul.f32 %v2450, 3.140625
        %v2764 = vmul.f32 %v2451, 3.140625
        %v2765 = vmul.f32 %v2452, 3.140625
        %v2766 = vmul.f32 %v2453, 3.140625
        %v2767 = vmul.f32 %v2454, 3.140625
        %v2768 = vmul.f32 %v2455, 3.140625
        %v2769 = vmul.f32 %v2456, 3.140625
        %v2770 = vmul.f32 %v2457, 3.140625
        %v2771 = vmul.f32 %v2458, 3.140625
        %v2772 = vmul.f32 %v2459, 3.140625
        %v2773 = vmul.f32 %v2460, 3.140625
        %v2774 = vmul.f32 %v2461, 3.140625
        %v2775 = vmul.f32 %v2462, 3.140625
        %v2776 = vmul.f32 %v2463, 3.140625
        %v2777 = vmul.f32 %v2464, 3.140625
        %v2778 = vmul.f32 %v2465, 3.140625
        %v2779 = vmul.f32 %v2466, 3.140625
        %v2780 = vmul.f32 %v2467, 3.140625
        %v2781 = vmul.f32 %v2468, 3.140625
        %v2782 = vmul.f32 %v2469, 3.140625
        %v2783 = vmul.f32 %v2470, 3.140625
        %v2784 = vmul.f32 %v2471, 3.140625
        %v2785 = vmul.f32 %v2472, 3.140625
        %v2786 = vmul.f32 %v2473, 3.140625
        %v2787 = vmul.f32 %v2474, 3.140625
        %v2788 = vmul.f32 %v2475, 3.140625
        %v2789 = vmul.f32 %v2476, 3.140625
        %v2790 = vmul.f32 %v2477, 3.140625
        %v2791 = vmul.f32 %v2478, 3.140625
        %v2792 = vmul.f32 %v2479, 3.140625
        %v2793 = vmul.f32 %v2480, 3.140625
        %v2794 = vmul.f32 %v2481, 3.140625
        %v2795 = vmul.f32 %v2482, 3.140625
        %v2796 = vmul.f32 %v2483, 3.140625
        %v2797 = vmul.f32 %v2484, 3.140625
        %v2798 = vmul.f32 %v2485, 3.140625
        %v2799 = vmul.f32 %v2486, 3.140625
        %v2800 = vmul.f32 %v2487, 3.140625
        %v2801 = vmul.f32 %v2488, 3.140625
        %v2802 = vmul.f32 %v2489, 3.140625
        %v2803 = vmul.f32 %v2490, 3.140625
        %v2804 = vmul.f32 %v2491, 3.140625
        %v2805 = vmul.f32 %v2492, 3.140625
        %v2806 = vmul.f32 %v2493, 3.140625
        %v2807 = vmul.f32 %v2494, 3.140625
        %v2808 = vmul.f32 %v2495, 3.140625
        %v2809 = vmul.f32 %v2496, 3.140625
        %v2810 = vmul.f32 %v2497, 3.140625
        %v2811 = vmul.f32 %v2498, 3.140625
        %v2812 = vmul.f32 %v2499, 3.140625
        %v2813 = vmul.f32 %v2500, 3.140625
        %v2814 = vmul.f32 %v2501, 3.140625
        %v2815 = vmul.f32 %v2502, 3.140625
        %v2816 = vmul.f32 %v2503, 3.140625
        %v2817 = vmul.f32 %v2504, 3.140625
        %v2818 = vmul.f32 %v2505, 3.140625
        %v2819 = vmul.f32 %v2506, 3.140625
        %v2820 = vmul.f32 %v2507, 3.140625
        %v2821 = vmul.f32 %v2508, 3.140625
        %v2822 = vmul.f32 %v2509, 3.140625
        %v2823 = vmul.f32 %v2510, 3.140625
        %v2824 = vmul.f32 %v2511, 3.140625
        %v2825 = vmul.f32 %v2512, 3.140625
        %v2826 = vmul.f32 %v2513, 3.140625
        %v2827 = vmul.f32 %v2514, 3.140625
        %v2828 = vmul.f32 %v2515, 3.140625
        %v2829 = vmul.f32 %v2516, 3.140625
        %v2830 = vmul.f32 %v2517, 3.140625
        %v2831 = vmul.f32 %v2518, 3.140625
        %v2832 = vmul.f32 %v2519, 3.140625
        %v2833 = vmul.f32 %v2520, 3.140625
        %v2834 = vmul.f32 %v2521, 3.140625
        %v2835 = vmul.f32 %v2522, 3.140625
        %v2836 = vmul.f32 %v2523, 3.140625
        %v2837 = vmul.f32 %v2524, 3.140625
        %v2838 = vmul.f32 %v2525, 3.140625
        %v2839 = vmul.f32 %v2526, 3.140625
        %v2840 = vmul.f32 %v2527, 3.140625
        %v2841 = vmul.f32 %v2528, 3.140625
        %v2842 = vmul.f32 %v2529, 3.140625
        %v2843 = vmul.f32 %v2530, 3.140625
        %v2844 = vmul.f32 %v2531, 3.140625
        %v2845 = vmul.f32 %v2532, 3.140625
        %v2846 = vmul.f32 %v2533, 3.140625
        %v2847 = vmul.f32 %v2534, 3.140625
        %v2848 = vmul.f32 %v2535, 3.140625
        %v2849 = vmul.f32 %v2536, 3.140625
        %v2850 = vmul.f32 %v2537, 3.140625
        %v2851 = vmul.f32 %v2538, 3.140625
        %v2852 = vmul.f32 %v2539, 3.140625
        %v2853 = vmul.f32 %v2540, 3.140625
        %v2854 = vmul.f32 %v2541, 3.140625
        %v2855 = vmul.f32 %v2542, 3.140625
        %v2856 = vmul.f32 %v2543, 3.140625
        %v2857 = vmul.f32 %v2544, 3.140625
        %v2858 = vmul.f32 %v2545, 3.140625
        %v2859 = vmul.f32 %v2546, 3.140625
        %v2860 = vmul.f32 %v2547, 3.140625
        %v2861 = vmul.f32 %v2548, 3.140625
        %v2862 = vmul.f32 %v2549, 3.140625
        %v2863 = vmul.f32 %v2550, 3.140625
        %v2864 = vmul.f32 %v2551, 3.140625
        %v2865 = vmul.f32 %v2552, 3.140625
        %v2866 = vmul.f32 %v2553, 3.140625
        %v2867 = vmul.f32 %v2554, 3.140625
        %v2868 = vmul.f32 %v2555, 3.140625
        %v2869 = vmul.f32 %v2556, 3.140625
        %v2870 = vmul.f32 %v2557, 3.140625
        %v2871 = vmul.f32 %v2558, 3.140625
        %v2872 = vmul.f32 %v2559, 3.140625
        %v2873 = vmul.f32 %v2560, 3.140625
        %v2874 = vmul.f32 %v2561, 3.140625
        %v2875 = vmul.f32 %v2562, 3.140625
        %v2876 = vmul.f32 %v2563, 3.140625
        %v2877 = vmul.f32 %v2564, 3.140625
        %v2878 = vmul.f32 %v2565, 3.140625
        %v2879 = vmul.f32 %v2566, 3.140625
        %v2880 = vmul.f32 %v2567, 3.140625
        %v2881 = vmul.f32 %v2568, 3.140625
        %v2882 = vmul.f32 %v2569, 3.140625
        %v2883 = vmul.f32 %v2570, 3.140625
        %v2884 = vmul.f32 %v2571, 3.140625
        %v2885 = vmul.f32 %v2572, 3.140625
        %v2886 = vmul.f32 %v2573, 3.140625
        %v2887 = vmul.f32 %v2574, 3.140625
        %v2888 = vmul.f32 %v2575, 3.140625
        %v2889 = vmul.f32 %v2576, 3.140625
        %v2890 = vmul.f32 %v2577, 3.140625
        %v2891 = vmul.f32 %v2578, 3.140625
        %v2892 = vmul.f32 %v2579, 3.140625
        %v2893 = vmul.f32 %v2580, 3.140625
        %v2894 = vmul.f32 %v2581, 3.140625
        %v2895 = vmul.f32 %v2582, 3.140625
        %v2896 = vmul.f32 %v2583, 3.140625
        %v2897 = vmul.f32 %v2584, 3.140625
        %v2898 = vmul.f32 %v2585, 3.140625
        %v2899 = vmul.f32 %v2586, 3.140625
        %v2900 = vmul.f32 %v2587, 3.140625
        %v2901 = vmul.f32 %v2588, 3.140625
        %v2902 = vmul.f32 %v2589, 3.140625
        %v2903 = vmul.f32 %v2590, 3.140625
        %v2904 = vmul.f32 %v2591, 3.140625
        %v2905 = vmul.f32 %v2592, 3.140625
        %v2906 = vmul.f32 %v2593, 3.140625
        %v2907 = vmul.f32 %v2594, 3.140625
        %v2908 = vmul.f32 %v2595, 3.140625
        %v2909 = vmul.f32 %v2596, 3.140625
        %v2910 = vmul.f32 %v2597, 3.140625
        %v2911 = vmul.f32 %v2598, 3.140625
        %v2912 = vmul.f32 %v2599, 3.140625
        %v2913 = vmul.f32 %v2600, 3.140625
        %v2914 = vmul.f32 %v2601, 3.140625
        %v2915 = vmul.f32 %v2602, 3.140625
        %v2916 = vmul.f32 %v2603, 3.140625
        %v2917 = vmul.f32 %v2604, 3.140625
        %v2918 = vmul.f32 %v2605, 3.140625
        %v2919 = vmul.f32 %v2606, 3.140625
        %v2920 = vmul.f32 %v2607, 3.140625
        %v2921 = vmul.f32 %v2608, 3.140625
        %v2922 = vmul.f32 %v2609, 3.140625
        %v2923 = vmul.f32 %v2610, 3.140625
        %v2924 = vmul.f32 %v2611, 3.140625
        %v2925 = vmul.f32 %v2612, 3.140625
        %v2926 = vmul.f32 %v2613, 3.140625
        %v2927 = vmul.f32 %v2614, 3.140625
        %v2928 = vmul.f32 %v2615, 3.140625
        %v2929 = vmul.f32 %v2616, 3.140625
        %v2930 = vmul.f32 %v2617, 3.140625
        %v2931 = vmul.f32 %v2618, 3.140625
        %v2932 = vmul.f32 %v2619, 3.140625
        %v2933 = vmul.f32 %v2620, 3.140625
        %v2934 = vmul.f32 %v2621, 3.140625
        %v2935 = vmul.f32 %v2622, 3.140625
        %v2936 = vmul.f32 %v2623, 3.140625
        %v2937 = vmul.f32 %v2624, 3.140625
        %v2938 = vmul.f32 %v2625, 3.140625
        %v2939 = vmul.f32 %v2626, 3.140625
        %v2940 = vmul.f32 %v2627, 3.140625
        %v2941 = vmul.f32 %v2628, 3.140625
        %v2942 = vmul.f32 %v2629, 3.140625
        %v2943 = vmul.f32 %v2630, 3.140625
        %v2944 = vmul.f32 %v2631, 3.140625
        %v2945 = vmul.f32 %v2632, 3.140625
        %v2946 = vmul.f32 %v2633, 3.140625
        %v2947 = vmul.f32 %v2634, 3.140625
        %v2948 = vmul.f32 %v2635, 3.140625
        %v2949 = vmul.f32 %v2636, 3.140625
        %v2950 = vmul.f32 %v2637, 3.140625
        %v2951 = vmul.f32 %v2638, 3.140625
        %v2952 = vmul.f32 %v2639, 3.140625
        %v2953 = vmul.f32 %v2640, 3.140625
        %v2954 = vmul.f32 %v2641, 3.140625
        %v2955 = vmul.f32 %v2642, 3.140625
        %v2956 = vmul.f32 %v2643, 3.140625
        %v2957 = vmul.f32 %v2644, 3.140625
        %v2958 = vmul.f32 %v2645, 3.140625
        %v2959 = vmul.f32 %v2646, 3.140625
        %v2960 = vmul.f32 %v2647, 3.140625
        %v2961 = vmul.f32 %v2648, 3.140625
        %v2962 = vmul.f32 %v2649, 3.140625
        %v2963 = vmul.f32 %v2650, 3.140625
        %v2964 = vmul.f32 %v2651, 3.140625
        %v2965 = vmul.f32 %v2652, 3.140625
        %v2966 = vmul.f32 %v2653, 3.140625
        %v2967 = vmul.f32 %v2654, 3.140625
        %v2968 = vmul.f32 %v2655, 3.140625
        %v2969 = vmul.f32 %v2656, 3.140625
        %v2970 = vmul.f32 %v2657, 3.140625
        %v2971 = vmul.f32 %v2658, 3.140625
        %v2972 = vmul.f32 %v2659, 3.140625
        %v2973 = vmul.f32 %v2660, 3.140625
        %v2974 = vmul.f32 %v2661, 3.140625
        %v2975 = vmul.f32 %v2662, 3.140625
        %v2976 = vmul.f32 %v2663, 3.140625
        %v2977 = vmul.f32 %v2664, 3.140625
        %v2978 = vmul.f32 %v2665, 3.140625
        %v2979 = vmul.f32 %v2666, 3.140625
        %v2980 = vmul.f32 %v2667, 3.140625
        %v2981 = vmul.f32 %v2668, 3.140625
        %v2982 = vmul.f32 %v2669, 3.140625
        %v2983 = vmul.f32 %v2670, 3.140625
        %v2984 = vmul.f32 %v2671, 3.140625
        %v2985 = vmul.f32 %v2672, 3.140625
        %v2986 = vmul.f32 %v2673, 3.140625
        %v2987 = vmul.f32 %v2674, 3.140625
        %v2988 = vmul.f32 %v2675, 3.140625
        %v2989 = vmul.f32 %v2676, 3.140625
        %v2990 = vmul.f32 %v2677, 3.140625
        %v2991 = vmul.f32 %v2678, 3.140625
        %v2992 = vmul.f32 %v2679, 3.140625
        %v2993 = vmul.f32 %v2680, 3.140625
        %v2994 = vmul.f32 %v2681, 3.140625
        %v2995 = vmul.f32 %v2682, 3.140625
        %v2996 = vmul.f32 %v2683, 3.140625
        %v2997 = vmul.f32 %v2684, 3.140625
        %v2998 = vmul.f32 %v2685, 3.140625
        %v2999 = vmul.f32 %v2686, 3.140625
        %v3000 = vmul.f32 %v2687, 3.140625
        %v3001 = vmul.f32 %v2688, 3.140625
        %v3002 = vmul.f32 %v2689, 3.140625
        %v3003 = vmul.f32 %v2690, 3.140625
        %v3004 = vmul.f32 %v2691, 3.140625
        %v3005 = vmul.f32 %v2692, 3.140625
        %v3006 = vmul.f32 %v2693, 3.140625
        %v3007 = vmul.f32 %v2694, 3.140625
        %v3008 = vmul.f32 %v2695, 3.140625
        %v3009 = vmul.f32 %v2696, 3.140625
        %v3010 = vmul.f32 %v2697, 3.140625
        %v3011 = vmul.f32 %v2698, 3.140625
        %v3012 = vmul.f32 %v2699, 3.140625
        %v3013 = vmul.f32 %v2700, 3.140625
        %v3014 = vmul.f32 %v2701, 3.140625
        %v3015 = vmul.f32 %v2702, 3.140625
        %v3016 = vmul.f32 %v2703, 3.140625
        %v3017 = vmul.f32 %v2704, 3.140625
        %v3018 = vmul.f32 %v2705, 3.140625
        %v3019 = vmul.f32 %v2706, 3.140625
        %v3020 = vmul.f32 %v2707, 3.140625
        %v3021 = vmul.f32 %v2708, 3.140625
        %v3022 = vmul.f32 %v2709, 3.140625
        %v3023 = vmul.f32 %v2710, 3.140625
        %v3024 = vmul.f32 %v2711, 3.140625
        %v3025 = vmul.f32 %v2712, 3.140625
        %v3026 = vsub.f32 %v1141, %v2713
        %v3027 = vsub.f32 %v1142, %v2714
        %v3028 = vsub.f32 %v1143, %v2715
        %v3029 = vsub.f32 %v1144, %v2716
        %v3030 = vsub.f32 %v1145, %v2717
        %v3031 = vsub.f32 %v1146, %v2718
        %v3032 = vsub.f32 %v1147, %v2719
        %v3033 = vsub.f32 %v1148, %v2720
        %v3034 = vsub.f32 %v1149, %v2721
        %v3035 = vsub.f32 %v1150, %v2722
        %v3036 = vsub.f32 %v1151, %v2723
        %v3037 = vsub.f32 %v1152, %v2724
        %v3038 = vsub.f32 %v1153, %v2725
        %v3039 = vsub.f32 %v1154, %v2726
        %v3040 = vsub.f32 %v1155, %v2727
        %v3041 = vsub.f32 %v1156, %v2728
        %v3042 = vsub.f32 %v1157, %v2729
        %v3043 = vsub.f32 %v1158, %v2730
        %v3044 = vsub.f32 %v1159, %v2731
        %v3045 = vsub.f32 %v1160, %v2732
        %v3046 = vsub.f32 %v1161, %v2733
        %v3047 = vsub.f32 %v1162, %v2734
        %v3048 = vsub.f32 %v1163, %v2735
        %v3049 = vsub.f32 %v1164, %v2736
        %v3050 = vsub.f32 %v1165, %v2737
        %v3051 = vsub.f32 %v1166, %v2738
        %v3052 = vsub.f32 %v1167, %v2739
        %v3053 = vsub.f32 %v1168, %v2740
        %v3054 = vsub.f32 %v1169, %v2741
        %v3055 = vsub.f32 %v1170, %v2742
        %v3056 = vsub.f32 %v1171, %v2743
        %v3057 = vsub.f32 %v1172, %v2744
        %v3058 = vsub.f32 %v1173, %v2745
        %v3059 = vsub.f32 %v1174, %v2746
        %v3060 = vsub.f32 %v1175, %v2747
        %v3061 = vsub.f32 %v1176, %v2748
        %v3062 = vsub.f32 %v1177, %v2749
        %v3063 = vsub.f32 %v1178, %v2750
        %v3064 = vsub.f32 %v1179, %v2751
        %v3065 = vsub.f32 %v1180, %v2752
        %v3066 = vsub.f32 %v1181, %v2753
        %v3067 = vsub.f32 %v1182, %v2754
        %v3068 = vsub.f32 %v1183, %v2755
        %v3069 = vsub.f32 %v1184, %v2756
        %v3070 = vsub.f32 %v1185, %v2757
        %v3071 = vsub.f32 %v1186, %v2758
        %v3072 = vsub.f32 %v1187, %v2759
        %v3073 = vsub.f32 %v1188, %v2760
        %v3074 = vsub.f32 %v1189, %v2761
        %v3075 = vsub.f32 %v1190, %v2762
        %v3076 = vsub.f32 %v1191, %v2763
        %v3077 = vsub.f32 %v1192, %v2764
        %v3078 = vsub.f32 %v1193, %v2765
        %v3079 = vsub.f32 %v1194, %v2766
        %v3080 = vsub.f32 %v1195, %v2767
        %v3081 = vsub.f32 %v1196, %v2768
        %v3082 = vsub.f32 %v1197, %v2769
        %v3083 = vsub.f32 %v1198, %v2770
        %v3084 = vsub.f32 %v1199, %v2771
        %v3085 = vsub.f32 %v1200, %v2772
        %v3086 = vsub.f32 %v1201, %v2773
        %v3087 = vsub.f32 %v1202, %v2774
        %v3088 = vsub.f32 %v1203, %v2775
        %v3089 = vsub.f32 %v1204, %v2776
        %v3090 = vsub.f32 %v1205, %v2777
        %v3091 = vsub.f32 %v1206, %v2778
        %v3092 = vsub.f32 %v1207, %v2779
        %v3093 = vsub.f32 %v1208, %v2780
        %v3094 = vsub.f32 %v1209, %v2781
        %v3095 = vsub.f32 %v1210, %v2782
        %v3096 = vsub.f32 %v1211, %v2783
        %v3097 = vsub.f32 %v1212, %v2784
        %v3098 = vsub.f32 %v1213, %v2785
        %v3099 = vsub.f32 %v1214, %v2786
        %v3100 = vsub.f32 %v1215, %v2787
        %v3101 = vsub.f32 %v1216, %v2788
        %v3102 = vsub.f32 %v1217, %v2789
        %v3103 = vsub.f32 %v1218, %v2790
        %v3104 = vsub.f32 %v1219, %v2791
        %v3105 = vsub.f32 %v1220, %v2792
        %v3106 = vsub.f32 %v1221, %v2793
        %v3107 = vsub.f32 %v1222, %v2794
        %v3108 = vsub.f32 %v1223, %v2795
        %v3109 = vsub.f32 %v1224, %v2796
        %v3110 = vsub.f32 %v1225, %v2797
        %v3111 = vsub.f32 %v1226, %v2798
        %v3112 = vsub.f32 %v1227, %v2799
        %v3113 = vsub.f32 %v1228, %v2800
        %v3114 = vsub.f32 %v1229, %v2801
        %v3115 = vsub.f32 %v1230, %v2802
        %v3116 = vsub.f32 %v1231, %v2803
        %v3117 = vsub.f32 %v1232, %v2804
        %v3118 = vsub.f32 %v1233, %v2805
        %v3119 = vsub.f32 %v1234, %v2806
        %v3120 = vsub.f32 %v1235, %v2807
        %v3121 = vsub.f32 %v1236, %v2808
        %v3122 = vsub.f32 %v1237, %v2809
        %v3123 = vsub.f32 %v1238, %v2810
        %v3124 = vsub.f32 %v1239, %v2811
        %v3125 = vsub.f32 %v1240, %v2812
        %v3126 = vsub.f32 %v1241, %v2813
        %v3127 = vsub.f32 %v1242, %v2814
        %v3128 = vsub.f32 %v1243, %v2815
        %v3129 = vsub.f32 %v1244, %v2816
        %v3130 = vsub.f32 %v1245, %v2817
        %v3131 = vsub.f32 %v1246, %v2818
        %v3132 = vsub.f32 %v1247, %v2819
        %v3133 = vsub.f32 %v1248, %v2820
        %v3134 = vsub.f32 %v1249, %v2821
        %v3135 = vsub.f32 %v1250, %v2822
        %v3136 = vsub.f32 %v1251, %v2823
        %v3137 = vsub.f32 %v1252, %v2824
        %v3138 = vsub.f32 %v1253, %v2825
        %v3139 = vsub.f32 %v1254, %v2826
        %v3140 = vsub.f32 %v1255, %v2827
        %v3141 = vsub.f32 %v1256, %v2828
        %v3142 = vsub.f32 %v1257, %v2829
        %v3143 = vsub.f32 %v1258, %v2830
        %v3144 = vsub.f32 %v1259, %v2831
        %v3145 = vsub.f32 %v1260, %v2832
        %v3146 = vsub.f32 %v1261, %v2833
        %v3147 = vsub.f32 %v1262, %v2834
        %v3148 = vsub.f32 %v1263, %v2835
        %v3149 = vsub.f32 %v1264, %v2836
        %v3150 = vsub.f32 %v1265, %v2837
        %v3151 = vsub.f32 %v1266, %v2838
        %v3152 = vsub.f32 %v1267, %v2839
        %v3153 = vsub.f32 %v1268, %v2840
        %v3154 = vsub.f32 %v1269, %v2841
        %v3155 = vsub.f32 %v1270, %v2842
        %v3156 = vsub.f32 %v1271, %v2843
        %v3157 = vsub.f32 %v1272, %v2844
        %v3158 = vsub.f32 %v1273, %v2845
        %v3159 = vsub.f32 %v1274, %v2846
        %v3160 = vsub.f32 %v1275, %v2847
        %v3161 = vsub.f32 %v1276, %v2848
        %v3162 = vsub.f32 %v1277, %v2849
        %v3163 = vsub.f32 %v1278, %v2850
        %v3164 = vsub.f32 %v1279, %v2851
        %v3165 = vsub.f32 %v1280, %v2852
        %v3166 = vsub.f32 %v1281, %v2853
        %v3167 = vsub.f32 %v1282, %v2854
        %v3168 = vsub.f32 %v1283, %v2855
        %v3169 = vsub.f32 %v1284, %v2856
        %v3170 = vsub.f32 %v1285, %v2857
        %v3171 = vsub.f32 %v1286, %v2858
        %v3172 = vsub.f32 %v1287, %v2859
        %v3173 = vsub.f32 %v1288, %v2860
        %v3174 = vsub.f32 %v1289, %v2861
        %v3175 = vsub.f32 %v1290, %v2862
        %v3176 = vsub.f32 %v1291, %v2863
        %v3177 = vsub.f32 %v1292, %v2864
        %v3178 = vsub.f32 %v1293, %v2865
        %v3179 = vsub.f32 %v1294, %v2866
        %v3180 = vsub.f32 %v1295, %v2867
        %v3181 = vsub.f32 %v1296, %v2868
        %v3182 = vsub.f32 %v1297, %v2869
        %v3183 = vsub.f32 %v1298, %v2870
        %v3184 = vsub.f32 %v1299, %v2871
        %v3185 = vsub.f32 %v1300, %v2872
        %v3186 = vsub.f32 %v1301, %v2873
        %v3187 = vsub.f32 %v1302, %v2874
        %v3188 = vsub.f32 %v1303, %v2875
        %v3189 = vsub.f32 %v1304, %v2876
        %v3190 = vsub.f32 %v1305, %v2877
        %v3191 = vsub.f32 %v1306, %v2878
        %v3192 = vsub.f32 %v1307, %v2879
        %v3193 = vsub.f32 %v1308, %v2880
        %v3194 = vsub.f32 %v1309, %v2881
        %v3195 = vsub.f32 %v1310, %v2882
        %v3196 = vsub.f32 %v1311, %v2883
        %v3197 = vsub.f32 %v1312, %v2884
        %v3198 = vsub.f32 %v1313, %v2885
        %v3199 = vsub.f32 %v1314, %v2886
        %v3200 = vsub.f32 %v1315, %v2887
        %v3201 = vsub.f32 %v1316, %v2888
        %v3202 = vsub.f32 %v1317, %v2889
        %v3203 = vsub.f32 %v1318, %v2890
        %v3204 = vsub.f32 %v1319, %v2891
        %v3205 = vsub.f32 %v1320, %v2892
        %v3206 = vsub.f32 %v1321, %v2893
        %v3207 = vsub.f32 %v1322, %v2894
        %v3208 = vsub.f32 %v1323, %v2895
        %v3209 = vsub.f32 %v1324, %v2896
        %v3210 = vsub.f32 %v1325, %v2897
        %v3211 = vsub.f32 %v1326, %v2898
        %v3212 = vsub.f32 %v1327, %v2899
        %v3213 = vsub.f32 %v1328, %v2900
        %v3214 = vsub.f32 %v1329, %v2901
        %v3215 = vsub.f32 %v1330, %v2902
        %v3216 = vsub.f32 %v1331, %v2903
        %v3217 = vsub.f32 %v1332, %v2904
        %v3218 = vsub.f32 %v1333, %v2905
        %v3219 = vsub.f32 %v1334, %v2906
        %v3220 = vsub.f32 %v1335, %v2907
        %v3221 = vsub.f32 %v1336, %v2908
        %v3222 = vsub.f32 %v1337, %v2909
        %v3223 = vsub.f32 %v1338, %v2910
        %v3224 = vsub.f32 %v1339, %v2911
        %v3225 = vsub.f32 %v1340, %v2912
        %v3226 = vsub.f32 %v1341, %v2913
        %v3227 = vsub.f32 %v1342, %v2914
        %v3228 = vsub.f32 %v1343, %v2915
        %v3229 = vsub.f32 %v1344, %v2916
        %v3230 = vsub.f32 %v1345, %v2917
        %v3231 = vsub.f32 %v1346, %v2918
        %v3232 = vsub.f32 %v1347, %v2919
        %v3233 = vsub.f32 %v1348, %v2920
        %v3234 = vsub.f32 %v1349, %v2921
        %v3235 = vsub.f32 %v1350, %v2922
        %v3236 = vsub.f32 %v1351, %v2923
        %v3237 = vsub.f32 %v1352, %v2924
        %v3238 = vsub.f32 %v1353, %v2925
        %v3239 = vsub.f32 %v1354, %v2926
        %v3240 = vsub.f32 %v1355, %v2927
        %v3241 = vsub.f32 %v1356, %v2928
        %v3242 = vsub.f32 %v1357, %v2929
        %v3243 = vsub.f32 %v1358, %v2930
        %v3244 = vsub.f32 %v1359, %v2931
        %v3245 = vsub.f32 %v1360, %v2932
        %v3246 = vsub.f32 %v1361, %v2933
        %v3247 = vsub.f32 %v1362, %v2934
        %v3248 = vsub.f32 %v1363, %v2935
        %v3249 = vsub.f32 %v1364, %v2936
        %v3250 = vsub.f32 %v1365, %v2937
        %v3251 = vsub.f32 %v1366, %v2938
        %v3252 = vsub.f32 %v1367, %v2939
        %v3253 = vsub.f32 %v1368, %v2940
        %v3254 = vsub.f32 %v1369, %v2941
        %v3255 = vsub.f32 %v1370, %v2942
        %v3256 = vsub.f32 %v1371, %v2943
        %v3257 = vsub.f32 %v1372, %v2944
        %v3258 = vsub.f32 %v1373, %v2945
        %v3259 = vsub.f32 %v1374, %v2946
        %v3260 = vsub.f32 %v1375, %v2947
        %v3261 = vsub.f32 %v1376, %v2948
        %v3262 = vsub.f32 %v1377, %v2949
        %v3263 = vsub.f32 %v1378, %v2950
        %v3264 = vsub.f32 %v1379, %v2951
        %v3265 = vsub.f32 %v1380, %v2952
        %v3266 = vsub.f32 %v1381, %v2953
        %v3267 = vsub.f32 %v1382, %v2954
        %v3268 = vsub.f32 %v1383, %v2955
        %v3269 = vsub.f32 %v1384, %v2956
        %v3270 = vsub.f32 %v1385, %v2957
        %v3271 = vsub.f32 %v1386, %v2958
        %v3272 = vsub.f32 %v1387, %v2959
        %v3273 = vsub.f32 %v1388, %v2960
        %v3274 = vsub.f32 %v1389, %v2961
        %v3275 = vsub.f32 %v1390, %v2962
        %v3276 = vsub.f32 %v1391, %v2963
        %v3277 = vsub.f32 %v1392, %v2964
        %v3278 = vsub.f32 %v1393, %v2965
        %v3279 = vsub.f32 %v1394, %v2966
        %v3280 = vsub.f32 %v1395, %v2967
        %v3281 = vsub.f32 %v1396, %v2968
        %v3282 = vsub.f32 %v1397, %v2969
        %v3283 = vsub.f32 %v1398, %v2970
        %v3284 = vsub.f32 %v1399, %v2971
        %v3285 = vsub.f32 %v1400, %v2972
        %v3286 = vsub.f32 %v1401, %v2973
        %v3287 = vsub.f32 %v1402, %v2974
        %v3288 = vsub.f32 %v1403, %v2975
        %v3289 = vsub.f32 %v1404, %v2976
        %v3290 = vsub.f32 %v1405, %v2977
        %v3291 = vsub.f32 %v1406, %v2978
        %v3292 = vsub.f32 %v1407, %v2979
        %v3293 = vsub.f32 %v1408, %v2980
        %v3294 = vsub.f32 %v1409, %v2981
        %v3295 = vsub.f32 %v1410, %v2982
        %v3296 = vsub.f32 %v1411, %v2983
        %v3297 = vsub.f32 %v1412, %v2984
        %v3298 = vsub.f32 %v1413, %v2985
        %v3299 = vsub.f32 %v1414, %v2986
        %v3300 = vsub.f32 %v1415, %v2987
        %v3301 = vsub.f32 %v1416, %v2988
        %v3302 = vsub.f32 %v1417, %v2989
        %v3303 = vsub.f32 %v1418, %v2990
        %v3304 = vsub.f32 %v1419, %v2991
        %v3305 = vsub.f32 %v1420, %v2992
        %v3306 = vsub.f32 %v1421, %v2993
        %v3307 = vsub.f32 %v1422, %v2994
        %v3308 = vsub.f32 %v1423, %v2995
        %v3309 = vsub.f32 %v1424, %v2996
        %v3310 = vsub.f32 %v1425, %v2997
        %v3311 = vsub.f32 %v1426, %v2998
        %v3312 = vsub.f32 %v1427, %v2999
        %v3313 = vsub.f32 %v1428, %v3000
        %v3314 = vsub.f32 %v1429, %v3001
        %v3315 = vsub.f32 %v1430, %v3002
        %v3316 = vsub.f32 %v1431, %v3003
        %v3317 = vsub.f32 %v1432, %v3004
        %v3318 = vsub.f32 %v1433, %v3005
        %v3319 = vsub.f32 %v1434, %v3006
        %v3320 = vsub.f32 %v1435, %v3007
        %v3321 = vsub.f32 %v1436, %v3008
        %v3322 = vsub.f32 %v1437, %v3009
        %v3323 = vsub.f32 %v1438, %v3010
        %v3324 = vsub.f32 %v1439, %v3011
        %v3325 = vsub.f32 %v1440, %v3012
        %v3326 = vsub.f32 %v1441, %v3013
        %v3327 = vsub.f32 %v1442, %v3014
        %v3328 = vsub.f32 %v1443, %v3015
        %v3329 = vsub.f32 %v1444, %v3016
        %v3330 = vsub.f32 %v1445, %v3017
        %v3331 = vsub.f32 %v1446, %v3018
        %v3332 = vsub.f32 %v1447, %v3019
        %v3333 = vsub.f32 %v1448, %v3020
        %v3334 = vsub.f32 %v1449, %v3021
        %v3335 = vsub.f32 %v1450, %v3022
        %v3336 = vsub.f32 %v1451, %v3023
        %v3337 = vsub.f32 %v1452, %v3024
        %v3338 = vsub.f32 %v1453, %v3025
        %v3339 = vmul.f32 %v2400, 0.0009676536
        %v3340 = vmul.f32 %v2401, 0.0009676536
        %v3341 = vmul.f32 %v2402, 0.0009676536
        %v3342 = vmul.f32 %v2403, 0.0009676536
        %v3343 = vmul.f32 %v2404, 0.0009676536
        %v3344 = vmul.f32 %v2405, 0.0009676536
        %v3345 = vmul.f32 %v2406, 0.0009676536
        %v3346 = vmul.f32 %v2407, 0.0009676536
        %v3347 = vmul.f32 %v2408, 0.0009676536
        %v3348 = vmul.f32 %v2409, 0.0009676536
        %v3349 = vmul.f32 %v2410, 0.0009676536
        %v3350 = vmul.f32 %v2411, 0.0009676536
        %v3351 = vmul.f32 %v2412, 0.0009676536
        %v3352 = vmul.f32 %v2413, 0.0009676536
        %v3353 = vmul.f32 %v2414, 0.0009676536
        %v3354 = vmul.f32 %v2415, 0.0009676536
        %v3355 = vmul.f32 %v2416, 0.0009676536
        %v3356 = vmul.f32 %v2417, 0.0009676536
        %v3357 = vmul.f32 %v2418, 0.0009676536
        %v3358 = vmul.f32 %v2419, 0.0009676536
        %v3359 = vmul.f32 %v2420, 0.0009676536
        %v3360 = vmul.f32 %v2421, 0.0009676536
        %v3361 = vmul.f32 %v2422, 0.0009676536
        %v3362 = vmul.f32 %v2423, 0.0009676536
        %v3363 = vmul.f32 %v2424, 0.0009676536
        %v3364 = vmul.f32 %v2425, 0.0009676536
        %v3365 = vmul.f32 %v2426, 0.0009676536
        %v3366 = vmul.f32 %v2427, 0.0009676536
        %v3367 = vmul.f32 %v2428, 0.0009676536
        %v3368 = vmul.f32 %v2429, 0.0009676536
        %v3369 = vmul.f32 %v2430, 0.0009676536
        %v3370 = vmul.f32 %v2431, 0.0009676536
        %v3371 = vmul.f32 %v2432, 0.0009676536
        %v3372 = vmul.f32 %v2433, 0.0009676536
        %v3373 = vmul.f32 %v2434, 0.0009676536
        %v3374 = vmul.f32 %v2435, 0.0009676536
        %v3375 = vmul.f32 %v2436, 0.0009676536
        %v3376 = vmul.f32 %v2437, 0.0009676536
        %v3377 = vmul.f32 %v2438, 0.0009676536
        %v3378 = vmul.f32 %v2439, 0.0009676536
        %v3379 = vmul.f32 %v2440, 0.0009676536
        %v3380 = vmul.f32 %v2441, 0.0009676536
        %v3381 = vmul.f32 %v2442, 0.0009676536
        %v3382 = vmul.f32 %v2443, 0.0009676536
        %v3383 = vmul.f32 %v2444, 0.0009676536
        %v3384 = vmul.f32 %v2445, 0.0009676536
        %v3385 = vmul.f32 %v2446, 0.0009676536
        %v3386 = vmul.f32 %v2447, 0.0009676536
        %v3387 = vmul.f32 %v2448, 0.0009676536
        %v3388 = vmul.f32 %v2449, 0.0009676536
        %v3389 = vmul.f32 %v2450, 0.0009676536
        %v3390 = vmul.f32 %v2451, 0.0009676536
        %v3391 = vmul.f32 %v2452, 0.0009676536
        %v3392 = vmul.f32 %v2453, 0.0009676536
        %v3393 = vmul.f32 %v2454, 0.0009676536
        %v3394 = vmul.f32 %v2455, 0.0009676536
        %v3395 = vmul.f32 %v2456, 0.0009676536
        %v3396 = vmul.f32 %v2457, 0.0009676536
        %v3397 = vmul.f32 %v2458, 0.0009676536
        %v3398 = vmul.f32 %v2459, 0.0009676536
        %v3399 = vmul.f32 %v2460, 0.0009676536
        %v3400 = vmul.f32 %v2461, 0.0009676536
        %v3401 = vmul.f32 %v2462, 0.0009676536
        %v3402 = vmul.f32 %v2463, 0.0009676536
        %v3403 = vmul.f32 %v2464, 0.0009676536
        %v3404 = vmul.f32 %v2465, 0.0009676536
        %v3405 = vmul.f32 %v2466, 0.0009676536
        %v3406 = vmul.f32 %v2467, 0.0009676536
        %v3407 = vmul.f32 %v2468, 0.0009676536
        %v3408 = vmul.f32 %v2469, 0.0009676536
        %v3409 = vmul.f32 %v2470, 0.0009676536
        %v3410 = vmul.f32 %v2471, 0.0009676536
        %v3411 = vmul.f32 %v2472, 0.0009676536
        %v3412 = vmul.f32 %v2473, 0.0009676536
        %v3413 = vmul.f32 %v2474, 0.0009676536
        %v3414 = vmul.f32 %v2475, 0.0009676536
        %v3415 = vmul.f32 %v2476, 0.0009676536
        %v3416 = vmul.f32 %v2477, 0.0009676536
        %v3417 = vmul.f32 %v2478, 0.0009676536
        %v3418 = vmul.f32 %v2479, 0.0009676536
        %v3419 = vmul.f32 %v2480, 0.0009676536
        %v3420 = vmul.f32 %v2481, 0.0009676536
        %v3421 = vmul.f32 %v2482, 0.0009676536
        %v3422 = vmul.f32 %v2483, 0.0009676536
        %v3423 = vmul.f32 %v2484, 0.0009676536
        %v3424 = vmul.f32 %v2485, 0.0009676536
        %v3425 = vmul.f32 %v2486, 0.0009676536
        %v3426 = vmul.f32 %v2487, 0.0009676536
        %v3427 = vmul.f32 %v2488, 0.0009676536
        %v3428 = vmul.f32 %v2489, 0.0009676536
        %v3429 = vmul.f32 %v2490, 0.0009676536
        %v3430 = vmul.f32 %v2491, 0.0009676536
        %v3431 = vmul.f32 %v2492, 0.0009676536
        %v3432 = vmul.f32 %v2493, 0.0009676536
        %v3433 = vmul.f32 %v2494, 0.0009676536
        %v3434 = vmul.f32 %v2495, 0.0009676536
        %v3435 = vmul.f32 %v2496, 0.0009676536
        %v3436 = vmul.f32 %v2497, 0.0009676536
        %v3437 = vmul.f32 %v2498, 0.0009676536
        %v3438 = vmul.f32 %v2499, 0.0009676536
        %v3439 = vmul.f32 %v2500, 0.0009676536
        %v3440 = vmul.f32 %v2501, 0.0009676536
        %v3441 = vmul.f32 %v2502, 0.0009676536
        %v3442 = vmul.f32 %v2503, 0.0009676536
        %v3443 = vmul.f32 %v2504, 0.0009676536
        %v3444 = vmul.f32 %v2505, 0.0009676536
        %v3445 = vmul.f32 %v2506, 0.0009676536
        %v3446 = vmul.f32 %v2507, 0.0009676536
        %v3447 = vmul.f32 %v2508, 0.0009676536
        %v3448 = vmul.f32 %v2509, 0.0009676536
        %v3449 = vmul.f32 %v2510, 0.0009676536
        %v3450 = vmul.f32 %v2511, 0.0009676536
        %v3451 = vmul.f32 %v2512, 0.0009676536
        %v3452 = vmul.f32 %v2513, 0.0009676536
        %v3453 = vmul.f32 %v2514, 0.0009676536
        %v3454 = vmul.f32 %v2515, 0.0009676536
        %v3455 = vmul.f32 %v2516, 0.0009676536
        %v3456 = vmul.f32 %v2517, 0.0009676536
        %v3457 = vmul.f32 %v2518, 0.0009676536
        %v3458 = vmul.f32 %v2519, 0.0009676536
        %v3459 = vmul.f32 %v2520, 0.0009676536
        %v3460 = vmul.f32 %v2521, 0.0009676536
        %v3461 = vmul.f32 %v2522, 0.0009676536
        %v3462 = vmul.f32 %v2523, 0.0009676536
        %v3463 = vmul.f32 %v2524, 0.0009676536
        %v3464 = vmul.f32 %v2525, 0.0009676536
        %v3465 = vmul.f32 %v2526, 0.0009676536
        %v3466 = vmul.f32 %v2527, 0.0009676536
        %v3467 = vmul.f32 %v2528, 0.0009676536
        %v3468 = vmul.f32 %v2529, 0.0009676536
        %v3469 = vmul.f32 %v2530, 0.0009676536
        %v3470 = vmul.f32 %v2531, 0.0009676536
        %v3471 = vmul.f32 %v2532, 0.0009676536
        %v3472 = vmul.f32 %v2533, 0.0009676536
        %v3473 = vmul.f32 %v2534, 0.0009676536
        %v3474 = vmul.f32 %v2535, 0.0009676536
        %v3475 = vmul.f32 %v2536, 0.0009676536
        %v3476 = vmul.f32 %v2537, 0.0009676536
        %v3477 = vmul.f32 %v2538, 0.0009676536
        %v3478 = vmul.f32 %v2539, 0.0009676536
        %v3479 = vmul.f32 %v2540, 0.0009676536
        %v3480 = vmul.f32 %v2541, 0.0009676536
        %v3481 = vmul.f32 %v2542, 0.0009676536
        %v3482 = vmul.f32 %v2543, 0.0009676536
        %v3483 = vmul.f32 %v2544, 0.0009676536
        %v3484 = vmul.f32 %v2545, 0.0009676536
        %v3485 = vmul.f32 %v2546, 0.0009676536
        %v3486 = vmul.f32 %v2547, 0.0009676536
        %v3487 = vmul.f32 %v2548, 0.0009676536
        %v3488 = vmul.f32 %v2549, 0.0009676536
        %v3489 = vmul.f32 %v2550, 0.0009676536
        %v3490 = vmul.f32 %v2551, 0.0009676536
        %v3491 = vmul.f32 %v2552, 0.0009676536
        %v3492 = vmul.f32 %v2553, 0.0009676536
        %v3493 = vmul.f32 %v2554, 0.0009676536
        %v3494 = vmul.f32 %v2555, 0.0009676536
        %v3495 = vmul.f32 %v2556, 0.0009676536
        %v3496 = vmul.f32 %v2557, 0.0009676536
        %v3497 = vmul.f32 %v2558, 0.0009676536
        %v3498 = vmul.f32 %v2559, 0.0009676536
        %v3499 = vmul.f32 %v2560, 0.0009676536
        %v3500 = vmul.f32 %v2561, 0.0009676536
        %v3501 = vmul.f32 %v2562, 0.0009676536
        %v3502 = vmul.f32 %v2563, 0.0009676536
        %v3503 = vmul.f32 %v2564, 0.0009676536
        %v3504 = vmul.f32 %v2565, 0.0009676536
        %v3505 = vmul.f32 %v2566, 0.0009676536
        %v3506 = vmul.f32 %v2567, 0.0009676536
        %v3507 = vmul.f32 %v2568, 0.0009676536
        %v3508 = vmul.f32 %v2569, 0.0009676536
        %v3509 = vmul.f32 %v2570, 0.0009676536
        %v3510 = vmul.f32 %v2571, 0.0009676536
        %v3511 = vmul.f32 %v2572, 0.0009676536
        %v3512 = vmul.f32 %v2573, 0.0009676536
        %v3513 = vmul.f32 %v2574, 0.0009676536
        %v3514 = vmul.f32 %v2575, 0.0009676536
        %v3515 = vmul.f32 %v2576, 0.0009676536
        %v3516 = vmul.f32 %v2577, 0.0009676536
        %v3517 = vmul.f32 %v2578, 0.0009676536
        %v3518 = vmul.f32 %v2579, 0.0009676536
        %v3519 = vmul.f32 %v2580, 0.0009676536
        %v3520 = vmul.f32 %v2581, 0.0009676536
        %v3521 = vmul.f32 %v2582, 0.0009676536
        %v3522 = vmul.f32 %v2583, 0.0009676536
        %v3523 = vmul.f32 %v2584, 0.0009676536
        %v3524 = vmul.f32 %v2585, 0.0009676536
        %v3525 = vmul.f32 %v2586, 0.0009676536
        %v3526 = vmul.f32 %v2587, 0.0009676536
        %v3527 = vmul.f32 %v2588, 0.0009676536
        %v3528 = vmul.f32 %v2589, 0.0009676536
        %v3529 = vmul.f32 %v2590, 0.0009676536
        %v3530 = vmul.f32 %v2591, 0.0009676536
        %v3531 = vmul.f32 %v2592, 0.0009676536
        %v3532 = vmul.f32 %v2593, 0.0009676536
        %v3533 = vmul.f32 %v2594, 0.0009676536
        %v3534 = vmul.f32 %v2595, 0.0009676536
        %v3535 = vmul.f32 %v2596, 0.0009676536
        %v3536 = vmul.f32 %v2597, 0.0009676536
        %v3537 = vmul.f32 %v2598, 0.0009676536
        %v3538 = vmul.f32 %v2599, 0.0009676536
        %v3539 = vmul.f32 %v2600, 0.0009676536
        %v3540 = vmul.f32 %v2601, 0.0009676536
        %v3541 = vmul.f32 %v2602, 0.0009676536
        %v3542 = vmul.f32 %v2603, 0.0009676536
        %v3543 = vmul.f32 %v2604, 0.0009676536
        %v3544 = vmul.f32 %v2605, 0.0009676536
        %v3545 = vmul.f32 %v2606, 0.0009676536
        %v3546 = vmul.f32 %v2607, 0.0009676536
        %v3547 = vmul.f32 %v2608, 0.0009676536
        %v3548 = vmul.f32 %v2609, 0.0009676536
        %v3549 = vmul.f32 %v2610, 0.0009676536
        %v3550 = vmul.f32 %v2611, 0.0009676536
        %v3551 = vmul.f32 %v2612, 0.0009676536
        %v3552 = vmul.f32 %v2613, 0.0009676536
        %v3553 = vmul.f32 %v2614, 0.0009676536
        %v3554 = vmul.f32 %v2615, 0.0009676536
        %v3555 = vmul.f32 %v2616, 0.0009676536
        %v3556 = vmul.f32 %v2617, 0.0009676536
        %v3557 = vmul.f32 %v2618, 0.0009676536
        %v3558 = vmul.f32 %v2619, 0.0009676536
        %v3559 = vmul.f32 %v2620, 0.0009676536
        %v3560 = vmul.f32 %v2621, 0.0009676536
        %v3561 = vmul.f32 %v2622, 0.0009676536
        %v3562 = vmul.f32 %v2623, 0.0009676536
        %v3563 = vmul.f32 %v2624, 0.0009676536
        %v3564 = vmul.f32 %v2625, 0.0009676536
        %v3565 = vmul.f32 %v2626, 0.0009676536
        %v3566 = vmul.f32 %v2627, 0.0009676536
        %v3567 = vmul.f32 %v2628, 0.0009676536
        %v3568 = vmul.f32 %v2629, 0.0009676536
        %v3569 = vmul.f32 %v2630, 0.0009676536
        %v3570 = vmul.f32 %v2631, 0.0009676536
        %v3571 = vmul.f32 %v2632, 0.0009676536
        %v3572 = vmul.f32 %v2633, 0.0009676536
        %v3573 = vmul.f32 %v2634, 0.0009676536
        %v3574 = vmul.f32 %v2635, 0.0009676536
        %v3575 = vmul.f32 %v2636, 0.0009676536
        %v3576 = vmul.f32 %v2637, 0.0009676536
        %v3577 = vmul.f32 %v2638, 0.0009676536
        %v3578 = vmul.f32 %v2639, 0.0009676536
        %v3579 = vmul.f32 %v2640, 0.0009676536
        %v3580 = vmul.f32 %v2641, 0.0009676536
        %v3581 = vmul.f32 %v2642, 0.0009676536
        %v3582 = vmul.f32 %v2643, 0.0009676536
        %v3583 = vmul.f32 %v2644, 0.0009676536
        %v3584 = vmul.f32 %v2645, 0.0009676536
        %v3585 = vmul.f32 %v2646, 0.0009676536
        %v3586 = vmul.f32 %v2647, 0.0009676536
        %v3587 = vmul.f32 %v2648, 0.0009676536
        %v3588 = vmul.f32 %v2649, 0.0009676536
        %v3589 = vmul.f32 %v2650, 0.0009676536
        %v3590 = vmul.f32 %v2651, 0.0009676536
        %v3591 = vmul.f32 %v2652, 0.0009676536
        %v3592 = vmul.f32 %v2653, 0.0009676536
        %v3593 = vmul.f32 %v2654, 0.0009676536
        %v3594 = vmul.f32 %v2655, 0.0009676536
        %v3595 = vmul.f32 %v2656, 0.0009676536
        %v3596 = vmul.f32 %v2657, 0.0009676536
        %v3597 = vmul.f32 %v2658, 0.0009676536
        %v3598 = vmul.f32 %v2659, 0.0009676536
        %v3599 = vmul.f32 %v2660, 0.0009676536
        %v3600 = vmul.f32 %v2661, 0.0009676536
        %v3601 = vmul.f32 %v2662, 0.0009676536
        %v3602 = vmul.f32 %v2663, 0.0009676536
        %v3603 = vmul.f32 %v2664, 0.0009676536
        %v3604 = vmul.f32 %v2665, 0.0009676536
        %v3605 = vmul.f32 %v2666, 0.0009676536
        %v3606 = vmul.f32 %v2667, 0.0009676536
        %v3607 = vmul.f32 %v2668, 0.0009676536
        %v3608 = vmul.f32 %v2669, 0.0009676536
        %v3609 = vmul.f32 %v2670, 0.0009676536
        %v3610 = vmul.f32 %v2671, 0.0009676536
        %v3611 = vmul.f32 %v2672, 0.0009676536
        %v3612 = vmul.f32 %v2673, 0.0009676536
        %v3613 = vmul.f32 %v2674, 0.0009676536
        %v3614 = vmul.f32 %v2675, 0.0009676536
        %v3615 = vmul.f32 %v2676, 0.0009676536
        %v3616 = vmul.f32 %v2677, 0.0009676536
        %v3617 = vmul.f32 %v2678, 0.0009676536
        %v3618 = vmul.f32 %v2679, 0.0009676536
        %v3619 = vmul.f32 %v2680, 0.0009676536
        %v3620 = vmul.f32 %v2681, 0.0009676536
        %v3621 = vmul.f32 %v2682, 0.0009676536
        %v3622 = vmul.f32 %v2683, 0.0009676536
        %v3623 = vmul.f32 %v2684, 0.0009676536
        %v3624 = vmul.f32 %v2685, 0.0009676536
        %v3625 = vmul.f32 %v2686, 0.0009676536
        %v3626 = vmul.f32 %v2687, 0.0009676536
        %v3627 = vmul.f32 %v2688, 0.0009676536
        %v3628 = vmul.f32 %v2689, 0.0009676536
        %v3629 = vmul.f32 %v2690, 0.0009676536
        %v3630 = vmul.f32 %v2691, 0.0009676536
        %v3631 = vmul.f32 %v2692, 0.0009676536
        %v3632 = vmul.f32 %v2693, 0.0009676536
        %v3633 = vmul.f32 %v2694, 0.0009676536
        %v3634 = vmul.f32 %v2695, 0.0009676536
        %v3635 = vmul.f32 %v2696, 0.0009676536
        %v3636 = vmul.f32 %v2697, 0.0009676536
        %v3637 = vmul.f32 %v2698, 0.0009676536
        %v3638 = vmul.f32 %v2699, 0.0009676536
        %v3639 = vmul.f32 %v2700, 0.0009676536
        %v3640 = vmul.f32 %v2701, 0.0009676536
        %v3641 = vmul.f32 %v2702, 0.0009676536
        %v3642 = vmul.f32 %v2703, 0.0009676536
        %v3643 = vmul.f32 %v2704, 0.0009676536
        %v3644 = vmul.f32 %v2705, 0.0009676536
        %v3645 = vmul.f32 %v2706, 0.0009676536
        %v3646 = vmul.f32 %v2707, 0.0009676536
        %v3647 = vmul.f32 %v2708, 0.0009676536
        %v3648 = vmul.f32 %v2709, 0.0009676536
        %v3649 = vmul.f32 %v2710, 0.0009676536
        %v3650 = vmul.f32 %v2711, 0.0009676536
        %v3651 = vmul.f32 %v2712, 0.0009676536
        %v3652 = vsub.f32 %v3026, %v3339
        %v3653 = vsub.f32 %v3027, %v3340
        %v3654 = vsub.f32 %v3028, %v3341
        %v3655 = vsub.f32 %v3029, %v3342
        %v3656 = vsub.f32 %v3030, %v3343
        %v3657 = vsub.f32 %v3031, %v3344
        %v3658 = vsub.f32 %v3032, %v3345
        %v3659 = vsub.f32 %v3033, %v3346
        %v3660 = vsub.f32 %v3034, %v3347
        %v3661 = vsub.f32 %v3035, %v3348
        %v3662 = vsub.f32 %v3036, %v3349
        %v3663 = vsub.f32 %v3037, %v3350
        %v3664 = vsub.f32 %v3038, %v3351
        %v3665 = vsub.f32 %v3039, %v3352
        %v3666 = vsub.f32 %v3040, %v3353
        %v3667 = vsub.f32 %v3041, %v3354
        %v3668 = vsub.f32 %v3042, %v3355
        %v3669 = vsub.f32 %v3043, %v3356
        %v3670 = vsub.f32 %v3044, %v3357
        %v3671 = vsub.f32 %v3045, %v3358
        %v3672 = vsub.f32 %v3046, %v3359
        %v3673 = vsub.f32 %v3047, %v3360
        %v3674 = vsub.f32 %v3048, %v3361
        %v3675 = vsub.f32 %v3049, %v3362
        %v3676 = vsub.f32 %v3050, %v3363
        %v3677 = vsub.f32 %v3051, %v3364
        %v3678 = vsub.f32 %v3052, %v3365
        %v3679 = vsub.f32 %v3053, %v3366
        %v3680 = vsub.f32 %v3054, %v3367
        %v3681 = vsub.f32 %v3055, %v3368
        %v3682 = vsub.f32 %v3056, %v3369
        %v3683 = vsub.f32 %v3057, %v3370
        %v3684 = vsub.f32 %v3058, %v3371
        %v3685 = vsub.f32 %v3059, %v3372
        %v3686 = vsub.f32 %v3060, %v3373
        %v3687 = vsub.f32 %v3061, %v3374
        %v3688 = vsub.f32 %v3062, %v3375
        %v3689 = vsub.f32 %v3063, %v3376
        %v3690 = vsub.f32 %v3064, %v3377
        %v3691 = vsub.f32 %v3065, %v3378
        %v3692 = vsub.f32 %v3066, %v3379
        %v3693 = vsub.f32 %v3067, %v3380
        %v3694 = vsub.f32 %v3068, %v3381
        %v3695 = vsub.f32 %v3069, %v3382
        %v3696 = vsub.f32 %v3070, %v3383
        %v3697 = vsub.f32 %v3071, %v3384
        %v3698 = vsub.f32 %v3072, %v3385
        %v3699 = vsub.f32 %v3073, %v3386
        %v3700 = vsub.f32 %v3074, %v3387
        %v3701 = vsub.f32 %v3075, %v3388
        %v3702 = vsub.f32 %v3076, %v3389
        %v3703 = vsub.f32 %v3077, %v3390
        %v3704 = vsub.f32 %v3078, %v3391
        %v3705 = vsub.f32 %v3079, %v3392
        %v3706 = vsub.f32 %v3080, %v3393
        %v3707 = vsub.f32 %v3081, %v3394
        %v3708 = vsub.f32 %v3082, %v3395
        %v3709 = vsub.f32 %v3083, %v3396
        %v3710 = vsub.f32 %v3084, %v3397
        %v3711 = vsub.f32 %v3085, %v3398
        %v3712 = vsub.f32 %v3086, %v3399
        %v3713 = vsub.f32 %v3087, %v3400
        %v3714 = vsub.f32 %v3088, %v3401
        %v3715 = vsub.f32 %v3089, %v3402
        %v3716 = vsub.f32 %v3090, %v3403
        %v3717 = vsub.f32 %v3091, %v3404
        %v3718 = vsub.f32 %v3092, %v3405
        %v3719 = vsub.f32 %v3093, %v3406
        %v3720 = vsub.f32 %v3094, %v3407
        %v3721 = vsub.f32 %v3095, %v3408
        %v3722 = vsub.f32 %v3096, %v3409
        %v3723 = vsub.f32 %v3097, %v3410
        %v3724 = vsub.f32 %v3098, %v3411
        %v3725 = vsub.f32 %v3099, %v3412
        %v3726 = vsub.f32 %v3100, %v3413
        %v3727 = vsub.f32 %v3101, %v3414
        %v3728 = vsub.f32 %v3102, %v3415
        %v3729 = vsub.f32 %v3103, %v3416
        %v3730 = vsub.f32 %v3104, %v3417
        %v3731 = vsub.f32 %v3105, %v3418
        %v3732 = vsub.f32 %v3106, %v3419
        %v3733 = vsub.f32 %v3107, %v3420
        %v3734 = vsub.f32 %v3108, %v3421
        %v3735 = vsub.f32 %v3109, %v3422
        %v3736 = vsub.f32 %v3110, %v3423
        %v3737 = vsub.f32 %v3111, %v3424
        %v3738 = vsub.f32 %v3112, %v3425
        %v3739 = vsub.f32 %v3113, %v3426
        %v3740 = vsub.f32 %v3114, %v3427
        %v3741 = vsub.f32 %v3115, %v3428
        %v3742 = vsub.f32 %v3116, %v3429
        %v3743 = vsub.f32 %v3117, %v3430
        %v3744 = vsub.f32 %v3118, %v3431
        %v3745 = vsub.f32 %v3119, %v3432
        %v3746 = vsub.f32 %v3120, %v3433
        %v3747 = vsub.f32 %v3121, %v3434
        %v3748 = vsub.f32 %v3122, %v3435
        %v3749 = vsub.f32 %v3123, %v3436
        %v3750 = vsub.f32 %v3124, %v3437
        %v3751 = vsub.f32 %v3125, %v3438
        %v3752 = vsub.f32 %v3126, %v3439
        %v3753 = vsub.f32 %v3127, %v3440
        %v3754 = vsub.f32 %v3128, %v3441
        %v3755 = vsub.f32 %v3129, %v3442
        %v3756 = vsub.f32 %v3130, %v3443
        %v3757 = vsub.f32 %v3131, %v3444
        %v3758 = vsub.f32 %v3132, %v3445
        %v3759 = vsub.f32 %v3133, %v3446
        %v3760 = vsub.f32 %v3134, %v3447
        %v3761 = vsub.f32 %v3135, %v3448
        %v3762 = vsub.f32 %v3136, %v3449
        %v3763 = vsub.f32 %v3137, %v3450
        %v3764 = vsub.f32 %v3138, %v3451
        %v3765 = vsub.f32 %v3139, %v3452
        %v3766 = vsub.f32 %v3140, %v3453
        %v3767 = vsub.f32 %v3141, %v3454
        %v3768 = vsub.f32 %v3142, %v3455
        %v3769 = vsub.f32 %v3143, %v3456
        %v3770 = vsub.f32 %v3144, %v3457
        %v3771 = vsub.f32 %v3145, %v3458
        %v3772 = vsub.f32 %v3146, %v3459
        %v3773 = vsub.f32 %v3147, %v3460
        %v3774 = vsub.f32 %v3148, %v3461
        %v3775 = vsub.f32 %v3149, %v3462
        %v3776 = vsub.f32 %v3150, %v3463
        %v3777 = vsub.f32 %v3151, %v3464
        %v3778 = vsub.f32 %v3152, %v3465
        %v3779 = vsub.f32 %v3153, %v3466
        %v3780 = vsub.f32 %v3154, %v3467
        %v3781 = vsub.f32 %v3155, %v3468
        %v3782 = vsub.f32 %v3156, %v3469
        %v3783 = vsub.f32 %v3157, %v3470
        %v3784 = vsub.f32 %v3158, %v3471
        %v3785 = vsub.f32 %v3159, %v3472
        %v3786 = vsub.f32 %v3160, %v3473
        %v3787 = vsub.f32 %v3161, %v3474
        %v3788 = vsub.f32 %v3162, %v3475
        %v3789 = vsub.f32 %v3163, %v3476
        %v3790 = vsub.f32 %v3164, %v3477
        %v3791 = vsub.f32 %v3165, %v3478
        %v3792 = vsub.f32 %v3166, %v3479
        %v3793 = vsub.f32 %v3167, %v3480
        %v3794 = vsub.f32 %v3168, %v3481
        %v3795 = vsub.f32 %v3169, %v3482
        %v3796 = vsub.f32 %v3170, %v3483
        %v3797 = vsub.f32 %v3171, %v3484
        %v3798 = vsub.f32 %v3172, %v3485
        %v3799 = vsub.f32 %v3173, %v3486
        %v3800 = vsub.f32 %v3174, %v3487
        %v3801 = vsub.f32 %v3175, %v3488
        %v3802 = vsub.f32 %v3176, %v3489
        %v3803 = vsub.f32 %v3177, %v3490
        %v3804 = vsub.f32 %v3178, %v3491
        %v3805 = vsub.f32 %v3179, %v3492
        %v3806 = vsub.f32 %v3180, %v3493
        %v3807 = vsub.f32 %v3181, %v3494
        %v3808 = vsub.f32 %v3182, %v3495
        %v3809 = vsub.f32 %v3183, %v3496
        %v3810 = vsub.f32 %v3184, %v3497
        %v3811 = vsub.f32 %v3185, %v3498
        %v3812 = vsub.f32 %v3186, %v3499
        %v3813 = vsub.f32 %v3187, %v3500
        %v3814 = vsub.f32 %v3188, %v3501
        %v3815 = vsub.f32 %v3189, %v3502
        %v3816 = vsub.f32 %v3190, %v3503
        %v3817 = vsub.f32 %v3191, %v3504
        %v3818 = vsub.f32 %v3192, %v3505
        %v3819 = vsub.f32 %v3193, %v3506
        %v3820 = vsub.f32 %v3194, %v3507
        %v3821 = vsub.f32 %v3195, %v3508
        %v3822 = vsub.f32 %v3196, %v3509
        %v3823 = vsub.f32 %v3197, %v3510
        %v3824 = vsub.f32 %v3198, %v3511
        %v3825 = vsub.f32 %v3199, %v3512
        %v3826 = vsub.f32 %v3200, %v3513
        %v3827 = vsub.f32 %v3201, %v3514
        %v3828 = vsub.f32 %v3202, %v3515
        %v3829 = vsub.f32 %v3203, %v3516
        %v3830 = vsub.f32 %v3204, %v3517
        %v3831 = vsub.f32 %v3205, %v3518
        %v3832 = vsub.f32 %v3206, %v3519
        %v3833 = vsub.f32 %v3207, %v3520
        %v3834 = vsub.f32 %v3208, %v3521
        %v3835 = vsub.f32 %v3209, %v3522
        %v3836 = vsub.f32 %v3210, %v3523
        %v3837 = vsub.f32 %v3211, %v3524
        %v3838 = vsub.f32 %v3212, %v3525
        %v3839 = vsub.f32 %v3213, %v3526
        %v3840 = vsub.f32 %v3214, %v3527
        %v3841 = vsub.f32 %v3215, %v3528
        %v3842 = vsub.f32 %v3216, %v3529
        %v3843 = vsub.f32 %v3217, %v3530
        %v3844 = vsub.f32 %v3218, %v3531
        %v3845 = vsub.f32 %v3219, %v3532
        %v3846 = vsub.f32 %v3220, %v3533
        %v3847 = vsub.f32 %v3221, %v3534
        %v3848 = vsub.f32 %v3222, %v3535
        %v3849 = vsub.f32 %v3223, %v3536
        %v3850 = vsub.f32 %v3224, %v3537
        %v3851 = vsub.f32 %v3225, %v3538
        %v3852 = vsub.f32 %v3226, %v3539
        %v3853 = vsub.f32 %v3227, %v3540
        %v3854 = vsub.f32 %v3228, %v3541
        %v3855 = vsub.f32 %v3229, %v3542
        %v3856 = vsub.f32 %v3230, %v3543
        %v3857 = vsub.f32 %v3231, %v3544
        %v3858 = vsub.f32 %v3232, %v3545
        %v3859 = vsub.f32 %v3233, %v3546
        %v3860 = vsub.f32 %v3234, %v3547
        %v3861 = vsub.f32 %v3235, %v3548
        %v3862 = vsub.f32 %v3236, %v3549
        %v3863 = vsub.f32 %v3237, %v3550
        %v3864 = vsub.f32 %v3238, %v3551
        %v3865 = vsub.f32 %v3239, %v3552
        %v3866 = vsub.f32 %v3240, %v3553
        %v3867 = vsub.f32 %v3241, %v3554
        %v3868 = vsub.f32 %v3242, %v3555
        %v3869 = vsub.f32 %v3243, %v3556
        %v3870 = vsub.f32 %v3244, %v3557
        %v3871 = vsub.f32 %v3245, %v3558
        %v3872 = vsub.f32 %v3246, %v3559
        %v3873 = vsub.f32 %v3247, %v3560
        %v3874 = vsub.f32 %v3248, %v3561
        %v3875 = vsub.f32 %v3249, %v3562
        %v3876 = vsub.f32 %v3250, %v3563
        %v3877 = vsub.f32 %v3251, %v3564
        %v3878 = vsub.f32 %v3252, %v3565
        %v3879 = vsub.f32 %v3253, %v3566
        %v3880 = vsub.f32 %v3254, %v3567
        %v3881 = vsub.f32 %v3255, %v3568
        %v3882 = vsub.f32 %v3256, %v3569
        %v3883 = vsub.f32 %v3257, %v3570
        %v3884 = vsub.f32 %v3258, %v3571
        %v3885 = vsub.f32 %v3259, %v3572
        %v3886 = vsub.f32 %v3260, %v3573
        %v3887 = vsub.f32 %v3261, %v3574
        %v3888 = vsub.f32 %v3262, %v3575
        %v3889 = vsub.f32 %v3263, %v3576
        %v3890 = vsub.f32 %v3264, %v3577
        %v3891 = vsub.f32 %v3265, %v3578
        %v3892 = vsub.f32 %v3266, %v3579
        %v3893 = vsub.f32 %v3267, %v3580
        %v3894 = vsub.f32 %v3268, %v3581
        %v3895 = vsub.f32 %v3269, %v3582
        %v3896 = vsub.f32 %v3270, %v3583
        %v3897 = vsub.f32 %v3271, %v3584
        %v3898 = vsub.f32 %v3272, %v3585
        %v3899 = vsub.f32 %v3273, %v3586
        %v3900 = vsub.f32 %v3274, %v3587
        %v3901 = vsub.f32 %v3275, %v3588
        %v3902 = vsub.f32 %v3276, %v3589
        %v3903 = vsub.f32 %v3277, %v3590
        %v3904 = vsub.f32 %v3278, %v3591
        %v3905 = vsub.f32 %v3279, %v3592
        %v3906 = vsub.f32 %v3280, %v3593
        %v3907 = vsub.f32 %v3281, %v3594
        %v3908 = vsub.f32 %v3282, %v3595
        %v3909 = vsub.f32 %v3283, %v3596
        %v3910 = vsub.f32 %v3284, %v3597
        %v3911 = vsub.f32 %v3285, %v3598
        %v3912 = vsub.f32 %v3286, %v3599
        %v3913 = vsub.f32 %v3287, %v3600
        %v3914 = vsub.f32 %v3288, %v3601
        %v3915 = vsub.f32 %v3289, %v3602
        %v3916 = vsub.f32 %v3290, %v3603
        %v3917 = vsub.f32 %v3291, %v3604
        %v3918 = vsub.f32 %v3292, %v3605
        %v3919 = vsub.f32 %v3293, %v3606
        %v3920 = vsub.f32 %v3294, %v3607
        %v3921 = vsub.f32 %v3295, %v3608
        %v3922 = vsub.f32 %v3296, %v3609
        %v3923 = vsub.f32 %v3297, %v3610
        %v3924 = vsub.f32 %v3298, %v3611
        %v3925 = vsub.f32 %v3299, %v3612
        %v3926 = vsub.f32 %v3300, %v3613
        %v3927 = vsub.f32 %v3301, %v3614
        %v3928 = vsub.f32 %v3302, %v3615
        %v3929 = vsub.f32 %v3303, %v3616
        %v3930 = vsub.f32 %v3304, %v3617
        %v3931 = vsub.f32 %v3305, %v3618
        %v3932 = vsub.f32 %v3306, %v3619
        %v3933 = vsub.f32 %v3307, %v3620
        %v3934 = vsub.f32 %v3308, %v3621
        %v3935 = vsub.f32 %v3309, %v3622
        %v3936 = vsub.f32 %v3310, %v3623
        %v3937 = vsub.f32 %v3311, %v3624
        %v3938 = vsub.f32 %v3312, %v3625
        %v3939 = vsub.f32 %v3313, %v3626
        %v3940 = vsub.f32 %v3314, %v3627
        %v3941 = vsub.f32 %v3315, %v3628
        %v3942 = vsub.f32 %v3316, %v3629
        %v3943 = vsub.f32 %v3317, %v3630
        %v3944 = vsub.f32 %v3318, %v3631
        %v3945 = vsub.f32 %v3319, %v3632
        %v3946 = vsub.f32 %v3320, %v3633
        %v3947 = vsub.f32 %v3321, %v3634
        %v3948 = vsub.f32 %v3322, %v3635
        %v3949 = vsub.f32 %v3323, %v3636
        %v3950 = vsub.f32 %v3324, %v3637
        %v3951 = vsub.f32 %v3325, %v3638
        %v3952 = vsub.f32 %v3326, %v3639
        %v3953 = vsub.f32 %v3327, %v3640
        %v3954 = vsub.f32 %v3328, %v3641
        %v3955 = vsub.f32 %v3329, %v3642
        %v3956 = vsub.f32 %v3330, %v3643
        %v3957 = vsub.f32 %v3331, %v3644
        %v3958 = vsub.f32 %v3332, %v3645
        %v3959 = vsub.f32 %v3333, %v3646
        %v3960 = vsub.f32 %v3334, %v3647
        %v3961 = vsub.f32 %v3335, %v3648
        %v3962 = vsub.f32 %v3336, %v3649
        %v3963 = vsub.f32 %v3337, %v3650
        %v3964 = vsub.f32 %v3338, %v3651
        %v3965 = vld [vmem:[#allocation7] sm:$0x1]
        %v3967 = vlaneseq
        %v3968 = vshrl.u32 %v3967, 7
        %v3969 = vsub.s32 0, %v3968
        %v3970 = vrot.slane %v3965, %v3969
        %v3972 = vadd.f32 %v3652, %v3970
        %v3973 = vadd.f32 %v3653, %v3970
        %v3974 = vadd.f32 %v3654, %v3970
        %v3975 = vadd.f32 %v3655, %v3970
        %v3976 = vadd.f32 %v3656, %v3970
        %v3977 = vadd.f32 %v3657, %v3970
        %v3978 = vadd.f32 %v3658, %v3970
        %v3979 = vadd.f32 %v3659, %v3970
        %v3980 = vadd.f32 %v3660, %v3970
        %v3981 = vadd.f32 %v3661, %v3970
        %v3982 = vadd.f32 %v3662, %v3970
        %v3983 = vadd.f32 %v3663, %v3970
        %v3984 = vadd.f32 %v3664, %v3970
        %v3985 = vadd.f32 %v3665, %v3970
        %v3986 = vadd.f32 %v3666, %v3970
        %v3987 = vadd.f32 %v3667, %v3970
        %v3988 = vadd.f32 %v3668, %v3970
        %v3989 = vadd.f32 %v3669, %v3970
        %v3990 = vadd.f32 %v3670, %v3970
        %v3991 = vadd.f32 %v3671, %v3970
        %v3992 = vadd.f32 %v3672, %v3970
        %v3993 = vadd.f32 %v3673, %v3970
        %v3994 = vadd.f32 %v3674, %v3970
        %v3995 = vadd.f32 %v3675, %v3970
        %v3996 = vadd.f32 %v3676, %v3970
        %v3997 = vadd.f32 %v3677, %v3970
        %v3998 = vadd.f32 %v3678, %v3970
        %v3999 = vadd.f32 %v3679, %v3970
        %v4000 = vadd.f32 %v3680, %v3970
        %v4001 = vadd.f32 %v3681, %v3970
        %v4002 = vadd.f32 %v3682, %v3970
        %v4003 = vadd.f32 %v3683, %v3970
        %v4004 = vadd.f32 %v3684, %v3970
        %v4005 = vadd.f32 %v3685, %v3970
        %v4006 = vadd.f32 %v3686, %v3970
        %v4007 = vadd.f32 %v3687, %v3970
        %v4008 = vadd.f32 %v3688, %v3970
        %v4009 = vadd.f32 %v3689, %v3970
        %v4010 = vadd.f32 %v3690, %v3970
        %v4011 = vadd.f32 %v3691, %v3970
        %v4012 = vadd.f32 %v3692, %v3970
        %v4013 = vadd.f32 %v3693, %v3970
        %v4014 = vadd.f32 %v3694, %v3970
        %v4015 = vadd.f32 %v3695, %v3970
        %v4016 = vadd.f32 %v3696, %v3970
        %v4017 = vadd.f32 %v3697, %v3970
        %v4018 = vadd.f32 %v3698, %v3970
        %v4019 = vadd.f32 %v3699, %v3970
        %v4020 = vadd.f32 %v3700, %v3970
        %v4021 = vadd.f32 %v3701, %v3970
        %v4022 = vadd.f32 %v3702, %v3970
        %v4023 = vadd.f32 %v3703, %v3970
        %v4024 = vadd.f32 %v3704, %v3970
        %v4025 = vadd.f32 %v3705, %v3970
        %v4026 = vadd.f32 %v3706, %v3970
        %v4027 = vadd.f32 %v3707, %v3970
        %v4028 = vadd.f32 %v3708, %v3970
        %v4029 = vadd.f32 %v3709, %v3970
        %v4030 = vadd.f32 %v3710, %v3970
        %v4031 = vadd.f32 %v3711, %v3970
        %v4032 = vadd.f32 %v3712, %v3970
        %v4033 = vadd.f32 %v3713, %v3970
        %v4034 = vadd.f32 %v3714, %v3970
        %v4035 = vadd.f32 %v3715, %v3970
        %v4036 = vadd.f32 %v3716, %v3970
        %v4037 = vadd.f32 %v3717, %v3970
        %v4038 = vadd.f32 %v3718, %v3970
        %v4039 = vadd.f32 %v3719, %v3970
        %v4040 = vadd.f32 %v3720, %v3970
        %v4041 = vadd.f32 %v3721, %v3970
        %v4042 = vadd.f32 %v3722, %v3970
        %v4043 = vadd.f32 %v3723, %v3970
        %v4044 = vadd.f32 %v3724, %v3970
        %v4045 = vadd.f32 %v3725, %v3970
        %v4046 = vadd.f32 %v3726, %v3970
        %v4047 = vadd.f32 %v3727, %v3970
        %v4048 = vadd.f32 %v3728, %v3970
        %v4049 = vadd.f32 %v3729, %v3970
        %v4050 = vadd.f32 %v3730, %v3970
        %v4051 = vadd.f32 %v3731, %v3970
        %v4052 = vadd.f32 %v3732, %v3970
        %v4053 = vadd.f32 %v3733, %v3970
        %v4054 = vadd.f32 %v3734, %v3970
        %v4055 = vadd.f32 %v3735, %v3970
        %v4056 = vadd.f32 %v3736, %v3970
        %v4057 = vadd.f32 %v3737, %v3970
        %v4058 = vadd.f32 %v3738, %v3970
        %v4059 = vadd.f32 %v3739, %v3970
        %v4060 = vadd.f32 %v3740, %v3970
        %v4061 = vadd.f32 %v3741, %v3970
        %v4062 = vadd.f32 %v3742, %v3970
        %v4063 = vadd.f32 %v3743, %v3970
        %v4064 = vadd.f32 %v3744, %v3970
        %v4065 = vadd.f32 %v3745, %v3970
        %v4066 = vadd.f32 %v3746, %v3970
        %v4067 = vadd.f32 %v3747, %v3970
        %v4068 = vadd.f32 %v3748, %v3970
        %v4069 = vadd.f32 %v3749, %v3970
        %v4070 = vadd.f32 %v3750, %v3970
        %v4071 = vadd.f32 %v3751, %v3970
        %v4072 = vadd.f32 %v3752, %v3970
        %v4073 = vadd.f32 %v3753, %v3970
        %v4074 = vadd.f32 %v3754, %v3970
        %v4075 = vadd.f32 %v3755, %v3970
        %v4076 = vadd.f32 %v3756, %v3970
        %v4077 = vadd.f32 %v3757, %v3970
        %v4078 = vadd.f32 %v3758, %v3970
        %v4079 = vadd.f32 %v3759, %v3970
        %v4080 = vadd.f32 %v3760, %v3970
        %v4081 = vadd.f32 %v3761, %v3970
        %v4082 = vadd.f32 %v3762, %v3970
        %v4083 = vadd.f32 %v3763, %v3970
        %v4084 = vadd.f32 %v3764, %v3970
        %v4085 = vadd.f32 %v3765, %v3970
        %v4086 = vadd.f32 %v3766, %v3970
        %v4087 = vadd.f32 %v3767, %v3970
        %v4088 = vadd.f32 %v3768, %v3970
        %v4089 = vadd.f32 %v3769, %v3970
        %v4090 = vadd.f32 %v3770, %v3970
        %v4091 = vadd.f32 %v3771, %v3970
        %v4092 = vadd.f32 %v3772, %v3970
        %v4093 = vadd.f32 %v3773, %v3970
        %v4094 = vadd.f32 %v3774, %v3970
        %v4095 = vadd.f32 %v3775, %v3970
        %v4096 = vadd.f32 %v3776, %v3970
        %v4097 = vadd.f32 %v3777, %v3970
        %v4098 = vadd.f32 %v3778, %v3970
        %v4099 = vadd.f32 %v3779, %v3970
        %v4100 = vadd.f32 %v3780, %v3970
        %v4101 = vadd.f32 %v3781, %v3970
        %v4102 = vadd.f32 %v3782, %v3970
        %v4103 = vadd.f32 %v3783, %v3970
        %v4104 = vadd.f32 %v3784, %v3970
        %v4105 = vadd.f32 %v3785, %v3970
        %v4106 = vadd.f32 %v3786, %v3970
        %v4107 = vadd.f32 %v3787, %v3970
        %v4108 = vadd.f32 %v3788, %v3970
        %v4109 = vadd.f32 %v3789, %v3970
        %v4110 = vadd.f32 %v3790, %v3970
        %v4111 = vadd.f32 %v3791, %v3970
        %v4112 = vadd.f32 %v3792, %v3970
        %v4113 = vadd.f32 %v3793, %v3970
        %v4114 = vadd.f32 %v3794, %v3970
        %v4115 = vadd.f32 %v3795, %v3970
        %v4116 = vadd.f32 %v3796, %v3970
        %v4117 = vadd.f32 %v3797, %v3970
        %v4118 = vadd.f32 %v3798, %v3970
        %v4119 = vadd.f32 %v3799, %v3970
        %v4120 = vadd.f32 %v3800, %v3970
        %v4121 = vadd.f32 %v3801, %v3970
        %v4122 = vadd.f32 %v3802, %v3970
        %v4123 = vadd.f32 %v3803, %v3970
        %v4124 = vadd.f32 %v3804, %v3970
        %v4125 = vadd.f32 %v3805, %v3970
        %v4126 = vadd.f32 %v3806, %v3970
        %v4127 = vadd.f32 %v3807, %v3970
        %v4128 = vadd.f32 %v3808, %v3970
        %v4129 = vadd.f32 %v3809, %v3970
        %v4130 = vadd.f32 %v3810, %v3970
        %v4131 = vadd.f32 %v3811, %v3970
        %v4132 = vadd.f32 %v3812, %v3970
        %v4133 = vadd.f32 %v3813, %v3970
        %v4134 = vadd.f32 %v3814, %v3970
        %v4135 = vadd.f32 %v3815, %v3970
        %v4136 = vadd.f32 %v3816, %v3970
        %v4137 = vadd.f32 %v3817, %v3970
        %v4138 = vadd.f32 %v3818, %v3970
        %v4139 = vadd.f32 %v3819, %v3970
        %v4140 = vadd.f32 %v3820, %v3970
        %v4141 = vadd.f32 %v3821, %v3970
        %v4142 = vadd.f32 %v3822, %v3970
        %v4143 = vadd.f32 %v3823, %v3970
        %v4144 = vadd.f32 %v3824, %v3970
        %v4145 = vadd.f32 %v3825, %v3970
        %v4146 = vadd.f32 %v3826, %v3970
        %v4147 = vadd.f32 %v3827, %v3970
        %v4148 = vadd.f32 %v3828, %v3970
        %v4149 = vadd.f32 %v3829, %v3970
        %v4150 = vadd.f32 %v3830, %v3970
        %v4151 = vadd.f32 %v3831, %v3970
        %v4152 = vadd.f32 %v3832, %v3970
        %v4153 = vadd.f32 %v3833, %v3970
        %v4154 = vadd.f32 %v3834, %v3970
        %v4155 = vadd.f32 %v3835, %v3970
        %v4156 = vadd.f32 %v3836, %v3970
        %v4157 = vadd.f32 %v3837, %v3970
        %v4158 = vadd.f32 %v3838, %v3970
        %v4159 = vadd.f32 %v3839, %v3970
        %v4160 = vadd.f32 %v3840, %v3970
        %v4161 = vadd.f32 %v3841, %v3970
        %v4162 = vadd.f32 %v3842, %v3970
        %v4163 = vadd.f32 %v3843, %v3970
        %v4164 = vadd.f32 %v3844, %v3970
        %v4165 = vadd.f32 %v3845, %v3970
        %v4166 = vadd.f32 %v3846, %v3970
        %v4167 = vadd.f32 %v3847, %v3970
        %v4168 = vadd.f32 %v3848, %v3970
        %v4169 = vadd.f32 %v3849, %v3970
        %v4170 = vadd.f32 %v3850, %v3970
        %v4171 = vadd.f32 %v3851, %v3970
        %v4172 = vadd.f32 %v3852, %v3970
        %v4173 = vadd.f32 %v3853, %v3970
        %v4174 = vadd.f32 %v3854, %v3970
        %v4175 = vadd.f32 %v3855, %v3970
        %v4176 = vadd.f32 %v3856, %v3970
        %v4177 = vadd.f32 %v3857, %v3970
        %v4178 = vadd.f32 %v3858, %v3970
        %v4179 = vadd.f32 %v3859, %v3970
        %v4180 = vadd.f32 %v3860, %v3970
        %v4181 = vadd.f32 %v3861, %v3970
        %v4182 = vadd.f32 %v3862, %v3970
        %v4183 = vadd.f32 %v3863, %v3970
        %v4184 = vadd.f32 %v3864, %v3970
        %v4185 = vadd.f32 %v3865, %v3970
        %v4186 = vadd.f32 %v3866, %v3970
        %v4187 = vadd.f32 %v3867, %v3970
        %v4188 = vadd.f32 %v3868, %v3970
        %v4189 = vadd.f32 %v3869, %v3970
        %v4190 = vadd.f32 %v3870, %v3970
        %v4191 = vadd.f32 %v3871, %v3970
        %v4192 = vadd.f32 %v3872, %v3970
        %v4193 = vadd.f32 %v3873, %v3970
        %v4194 = vadd.f32 %v3874, %v3970
        %v4195 = vadd.f32 %v3875, %v3970
        %v4196 = vadd.f32 %v3876, %v3970
        %v4197 = vadd.f32 %v3877, %v3970
        %v4198 = vadd.f32 %v3878, %v3970
        %v4199 = vadd.f32 %v3879, %v3970
        %v4200 = vadd.f32 %v3880, %v3970
        %v4201 = vadd.f32 %v3881, %v3970
        %v4202 = vadd.f32 %v3882, %v3970
        %v4203 = vadd.f32 %v3883, %v3970
        %v4204 = vadd.f32 %v3884, %v3970
        %v4205 = vadd.f32 %v3885, %v3970
        %v4206 = vadd.f32 %v3886, %v3970
        %v4207 = vadd.f32 %v3887, %v3970
        %v4208 = vadd.f32 %v3888, %v3970
        %v4209 = vadd.f32 %v3889, %v3970
        %v4210 = vadd.f32 %v3890, %v3970
        %v4211 = vadd.f32 %v3891, %v3970
        %v4212 = vadd.f32 %v3892, %v3970
        %v4213 = vadd.f32 %v3893, %v3970
        %v4214 = vadd.f32 %v3894, %v3970
        %v4215 = vadd.f32 %v3895, %v3970
        %v4216 = vadd.f32 %v3896, %v3970
        %v4217 = vadd.f32 %v3897, %v3970
        %v4218 = vadd.f32 %v3898, %v3970
        %v4219 = vadd.f32 %v3899, %v3970
        %v4220 = vadd.f32 %v3900, %v3970
        %v4221 = vadd.f32 %v3901, %v3970
        %v4222 = vadd.f32 %v3902, %v3970
        %v4223 = vadd.f32 %v3903, %v3970
        %v4224 = vadd.f32 %v3904, %v3970
        %v4225 = vadd.f32 %v3905, %v3970
        %v4226 = vadd.f32 %v3906, %v3970
        %v4227 = vadd.f32 %v3907, %v3970
        %v4228 = vadd.f32 %v3908, %v3970
        %v4229 = vadd.f32 %v3909, %v3970
        %v4230 = vadd.f32 %v3910, %v3970
        %v4231 = vadd.f32 %v3911, %v3970
        %v4232 = vadd.f32 %v3912, %v3970
        %v4233 = vadd.f32 %v3913, %v3970
        %v4234 = vadd.f32 %v3914, %v3970
        %v4235 = vadd.f32 %v3915, %v3970
        %v4236 = vadd.f32 %v3916, %v3970
        %v4237 = vadd.f32 %v3917, %v3970
        %v4238 = vadd.f32 %v3918, %v3970
        %v4239 = vadd.f32 %v3919, %v3970
        %v4240 = vadd.f32 %v3920, %v3970
        %v4241 = vadd.f32 %v3921, %v3970
        %v4242 = vadd.f32 %v3922, %v3970
        %v4243 = vadd.f32 %v3923, %v3970
        %v4244 = vadd.f32 %v3924, %v3970
        %v4245 = vadd.f32 %v3925, %v3970
        %v4246 = vadd.f32 %v3926, %v3970
        %v4247 = vadd.f32 %v3927, %v3970
        %v4248 = vadd.f32 %v3928, %v3970
        %v4249 = vadd.f32 %v3929, %v3970
        %v4250 = vadd.f32 %v3930, %v3970
        %v4251 = vadd.f32 %v3931, %v3970
        %v4252 = vadd.f32 %v3932, %v3970
        %v4253 = vadd.f32 %v3933, %v3970
        %v4254 = vadd.f32 %v3934, %v3970
        %v4255 = vadd.f32 %v3935, %v3970
        %v4256 = vadd.f32 %v3936, %v3970
        %v4257 = vadd.f32 %v3937, %v3970
        %v4258 = vadd.f32 %v3938, %v3970
        %v4259 = vadd.f32 %v3939, %v3970
        %v4260 = vadd.f32 %v3940, %v3970
        %v4261 = vadd.f32 %v3941, %v3970
        %v4262 = vadd.f32 %v3942, %v3970
        %v4263 = vadd.f32 %v3943, %v3970
        %v4264 = vadd.f32 %v3944, %v3970
        %v4265 = vadd.f32 %v3945, %v3970
        %v4266 = vadd.f32 %v3946, %v3970
        %v4267 = vadd.f32 %v3947, %v3970
        %v4268 = vadd.f32 %v3948, %v3970
        %v4269 = vadd.f32 %v3949, %v3970
        %v4270 = vadd.f32 %v3950, %v3970
        %v4271 = vadd.f32 %v3951, %v3970
        %v4272 = vadd.f32 %v3952, %v3970
        %v4273 = vadd.f32 %v3953, %v3970
        %v4274 = vadd.f32 %v3954, %v3970
        %v4275 = vadd.f32 %v3955, %v3970
        %v4276 = vadd.f32 %v3956, %v3970
        %v4277 = vadd.f32 %v3957, %v3970
        %v4278 = vadd.f32 %v3958, %v3970
        %v4279 = vadd.f32 %v3959, %v3970
        %v4280 = vadd.f32 %v3960, %v3970
        %v4281 = vadd.f32 %v3961, %v3970
        %v4282 = vadd.f32 %v3962, %v3970
        %v4283 = vadd.f32 %v3963, %v3970
        %v4284 = vadd.f32 %v3964, %v3970
        %v4285 = vmul.f32 %v2400, 0.5
        %v4286 = vmul.f32 %v2401, 0.5
        %v4287 = vmul.f32 %v2402, 0.5
        %v4288 = vmul.f32 %v2403, 0.5
        %v4289 = vmul.f32 %v2404, 0.5
        %v4290 = vmul.f32 %v2405, 0.5
        %v4291 = vmul.f32 %v2406, 0.5
        %v4292 = vmul.f32 %v2407, 0.5
        %v4293 = vmul.f32 %v2408, 0.5
        %v4294 = vmul.f32 %v2409, 0.5
        %v4295 = vmul.f32 %v2410, 0.5
        %v4296 = vmul.f32 %v2411, 0.5
        %v4297 = vmul.f32 %v2412, 0.5
        %v4298 = vmul.f32 %v2413, 0.5
        %v4299 = vmul.f32 %v2414, 0.5
        %v4300 = vmul.f32 %v2415, 0.5
        %v4301 = vmul.f32 %v2416, 0.5
        %v4302 = vmul.f32 %v2417, 0.5
        %v4303 = vmul.f32 %v2418, 0.5
        %v4304 = vmul.f32 %v2419, 0.5
        %v4305 = vmul.f32 %v2420, 0.5
        %v4306 = vmul.f32 %v2421, 0.5
        %v4307 = vmul.f32 %v2422, 0.5
        %v4308 = vmul.f32 %v2423, 0.5
        %v4309 = vmul.f32 %v2424, 0.5
        %v4310 = vmul.f32 %v2425, 0.5
        %v4311 = vmul.f32 %v2426, 0.5
        %v4312 = vmul.f32 %v2427, 0.5
        %v4313 = vmul.f32 %v2428, 0.5
        %v4314 = vmul.f32 %v2429, 0.5
        %v4315 = vmul.f32 %v2430, 0.5
        %v4316 = vmul.f32 %v2431, 0.5
        %v4317 = vmul.f32 %v2432, 0.5
        %v4318 = vmul.f32 %v2433, 0.5
        %v4319 = vmul.f32 %v2434, 0.5
        %v4320 = vmul.f32 %v2435, 0.5
        %v4321 = vmul.f32 %v2436, 0.5
        %v4322 = vmul.f32 %v2437, 0.5
        %v4323 = vmul.f32 %v2438, 0.5
        %v4324 = vmul.f32 %v2439, 0.5
        %v4325 = vmul.f32 %v2440, 0.5
        %v4326 = vmul.f32 %v2441, 0.5
        %v4327 = vmul.f32 %v2442, 0.5
        %v4328 = vmul.f32 %v2443, 0.5
        %v4329 = vmul.f32 %v2444, 0.5
        %v4330 = vmul.f32 %v2445, 0.5
        %v4331 = vmul.f32 %v2446, 0.5
        %v4332 = vmul.f32 %v2447, 0.5
        %v4333 = vmul.f32 %v2448, 0.5
        %v4334 = vmul.f32 %v2449, 0.5
        %v4335 = vmul.f32 %v2450, 0.5
        %v4336 = vmul.f32 %v2451, 0.5
        %v4337 = vmul.f32 %v2452, 0.5
        %v4338 = vmul.f32 %v2453, 0.5
        %v4339 = vmul.f32 %v2454, 0.5
        %v4340 = vmul.f32 %v2455, 0.5
        %v4341 = vmul.f32 %v2456, 0.5
        %v4342 = vmul.f32 %v2457, 0.5
        %v4343 = vmul.f32 %v2458, 0.5
        %v4344 = vmul.f32 %v2459, 0.5
        %v4345 = vmul.f32 %v2460, 0.5
        %v4346 = vmul.f32 %v2461, 0.5
        %v4347 = vmul.f32 %v2462, 0.5
        %v4348 = vmul.f32 %v2463, 0.5
        %v4349 = vmul.f32 %v2464, 0.5
        %v4350 = vmul.f32 %v2465, 0.5
        %v4351 = vmul.f32 %v2466, 0.5
        %v4352 = vmul.f32 %v2467, 0.5
        %v4353 = vmul.f32 %v2468, 0.5
        %v4354 = vmul.f32 %v2469, 0.5
        %v4355 = vmul.f32 %v2470, 0.5
        %v4356 = vmul.f32 %v2471, 0.5
        %v4357 = vmul.f32 %v2472, 0.5
        %v4358 = vmul.f32 %v2473, 0.5
        %v4359 = vmul.f32 %v2474, 0.5
        %v4360 = vmul.f32 %v2475, 0.5
        %v4361 = vmul.f32 %v2476, 0.5
        %v4362 = vmul.f32 %v2477, 0.5
        %v4363 = vmul.f32 %v2478, 0.5
        %v4364 = vmul.f32 %v2479, 0.5
        %v4365 = vmul.f32 %v2480, 0.5
        %v4366 = vmul.f32 %v2481, 0.5
        %v4367 = vmul.f32 %v2482, 0.5
        %v4368 = vmul.f32 %v2483, 0.5
        %v4369 = vmul.f32 %v2484, 0.5
        %v4370 = vmul.f32 %v2485, 0.5
        %v4371 = vmul.f32 %v2486, 0.5
        %v4372 = vmul.f32 %v2487, 0.5
        %v4373 = vmul.f32 %v2488, 0.5
        %v4374 = vmul.f32 %v2489, 0.5
        %v4375 = vmul.f32 %v2490, 0.5
        %v4376 = vmul.f32 %v2491, 0.5
        %v4377 = vmul.f32 %v2492, 0.5
        %v4378 = vmul.f32 %v2493, 0.5
        %v4379 = vmul.f32 %v2494, 0.5
        %v4380 = vmul.f32 %v2495, 0.5
        %v4381 = vmul.f32 %v2496, 0.5
        %v4382 = vmul.f32 %v2497, 0.5
        %v4383 = vmul.f32 %v2498, 0.5
        %v4384 = vmul.f32 %v2499, 0.5
        %v4385 = vmul.f32 %v2500, 0.5
        %v4386 = vmul.f32 %v2501, 0.5
        %v4387 = vmul.f32 %v2502, 0.5
        %v4388 = vmul.f32 %v2503, 0.5
        %v4389 = vmul.f32 %v2504, 0.5
        %v4390 = vmul.f32 %v2505, 0.5
        %v4391 = vmul.f32 %v2506, 0.5
        %v4392 = vmul.f32 %v2507, 0.5
        %v4393 = vmul.f32 %v2508, 0.5
        %v4394 = vmul.f32 %v2509, 0.5
        %v4395 = vmul.f32 %v2510, 0.5
        %v4396 = vmul.f32 %v2511, 0.5
        %v4397 = vmul.f32 %v2512, 0.5
        %v4398 = vmul.f32 %v2513, 0.5
        %v4399 = vmul.f32 %v2514, 0.5
        %v4400 = vmul.f32 %v2515, 0.5
        %v4401 = vmul.f32 %v2516, 0.5
        %v4402 = vmul.f32 %v2517, 0.5
        %v4403 = vmul.f32 %v2518, 0.5
        %v4404 = vmul.f32 %v2519, 0.5
        %v4405 = vmul.f32 %v2520, 0.5
        %v4406 = vmul.f32 %v2521, 0.5
        %v4407 = vmul.f32 %v2522, 0.5
        %v4408 = vmul.f32 %v2523, 0.5
        %v4409 = vmul.f32 %v2524, 0.5
        %v4410 = vmul.f32 %v2525, 0.5
        %v4411 = vmul.f32 %v2526, 0.5
        %v4412 = vmul.f32 %v2527, 0.5
        %v4413 = vmul.f32 %v2528, 0.5
        %v4414 = vmul.f32 %v2529, 0.5
        %v4415 = vmul.f32 %v2530, 0.5
        %v4416 = vmul.f32 %v2531, 0.5
        %v4417 = vmul.f32 %v2532, 0.5
        %v4418 = vmul.f32 %v2533, 0.5
        %v4419 = vmul.f32 %v2534, 0.5
        %v4420 = vmul.f32 %v2535, 0.5
        %v4421 = vmul.f32 %v2536, 0.5
        %v4422 = vmul.f32 %v2537, 0.5
        %v4423 = vmul.f32 %v2538, 0.5
        %v4424 = vmul.f32 %v2539, 0.5
        %v4425 = vmul.f32 %v2540, 0.5
        %v4426 = vmul.f32 %v2541, 0.5
        %v4427 = vmul.f32 %v2542, 0.5
        %v4428 = vmul.f32 %v2543, 0.5
        %v4429 = vmul.f32 %v2544, 0.5
        %v4430 = vmul.f32 %v2545, 0.5
        %v4431 = vmul.f32 %v2546, 0.5
        %v4432 = vmul.f32 %v2547, 0.5
        %v4433 = vmul.f32 %v2548, 0.5
        %v4434 = vmul.f32 %v2549, 0.5
        %v4435 = vmul.f32 %v2550, 0.5
        %v4436 = vmul.f32 %v2551, 0.5
        %v4437 = vmul.f32 %v2552, 0.5
        %v4438 = vmul.f32 %v2553, 0.5
        %v4439 = vmul.f32 %v2554, 0.5
        %v4440 = vmul.f32 %v2555, 0.5
        %v4441 = vmul.f32 %v2556, 0.5
        %v4442 = vmul.f32 %v2557, 0.5
        %v4443 = vmul.f32 %v2558, 0.5
        %v4444 = vmul.f32 %v2559, 0.5
        %v4445 = vmul.f32 %v2560, 0.5
        %v4446 = vmul.f32 %v2561, 0.5
        %v4447 = vmul.f32 %v2562, 0.5
        %v4448 = vmul.f32 %v2563, 0.5
        %v4449 = vmul.f32 %v2564, 0.5
        %v4450 = vmul.f32 %v2565, 0.5
        %v4451 = vmul.f32 %v2566, 0.5
        %v4452 = vmul.f32 %v2567, 0.5
        %v4453 = vmul.f32 %v2568, 0.5
        %v4454 = vmul.f32 %v2569, 0.5
        %v4455 = vmul.f32 %v2570, 0.5
        %v4456 = vmul.f32 %v2571, 0.5
        %v4457 = vmul.f32 %v2572, 0.5
        %v4458 = vmul.f32 %v2573, 0.5
        %v4459 = vmul.f32 %v2574, 0.5
        %v4460 = vmul.f32 %v2575, 0.5
        %v4461 = vmul.f32 %v2576, 0.5
        %v4462 = vmul.f32 %v2577, 0.5
        %v4463 = vmul.f32 %v2578, 0.5
        %v4464 = vmul.f32 %v2579, 0.5
        %v4465 = vmul.f32 %v2580, 0.5
        %v4466 = vmul.f32 %v2581, 0.5
        %v4467 = vmul.f32 %v2582, 0.5
        %v4468 = vmul.f32 %v2583, 0.5
        %v4469 = vmul.f32 %v2584, 0.5
        %v4470 = vmul.f32 %v2585, 0.5
        %v4471 = vmul.f32 %v2586, 0.5
        %v4472 = vmul.f32 %v2587, 0.5
        %v4473 = vmul.f32 %v2588, 0.5
        %v4474 = vmul.f32 %v2589, 0.5
        %v4475 = vmul.f32 %v2590, 0.5
        %v4476 = vmul.f32 %v2591, 0.5
        %v4477 = vmul.f32 %v2592, 0.5
        %v4478 = vmul.f32 %v2593, 0.5
        %v4479 = vmul.f32 %v2594, 0.5
        %v4480 = vmul.f32 %v2595, 0.5
        %v4481 = vmul.f32 %v2596, 0.5
        %v4482 = vmul.f32 %v2597, 0.5
        %v4483 = vmul.f32 %v2598, 0.5
        %v4484 = vmul.f32 %v2599, 0.5
        %v4485 = vmul.f32 %v2600, 0.5
        %v4486 = vmul.f32 %v2601, 0.5
        %v4487 = vmul.f32 %v2602, 0.5
        %v4488 = vmul.f32 %v2603, 0.5
        %v4489 = vmul.f32 %v2604, 0.5
        %v4490 = vmul.f32 %v2605, 0.5
        %v4491 = vmul.f32 %v2606, 0.5
        %v4492 = vmul.f32 %v2607, 0.5
        %v4493 = vmul.f32 %v2608, 0.5
        %v4494 = vmul.f32 %v2609, 0.5
        %v4495 = vmul.f32 %v2610, 0.5
        %v4496 = vmul.f32 %v2611, 0.5
        %v4497 = vmul.f32 %v2612, 0.5
        %v4498 = vmul.f32 %v2613, 0.5
        %v4499 = vmul.f32 %v2614, 0.5
        %v4500 = vmul.f32 %v2615, 0.5
        %v4501 = vmul.f32 %v2616, 0.5
        %v4502 = vmul.f32 %v2617, 0.5
        %v4503 = vmul.f32 %v2618, 0.5
        %v4504 = vmul.f32 %v2619, 0.5
        %v4505 = vmul.f32 %v2620, 0.5
        %v4506 = vmul.f32 %v2621, 0.5
        %v4507 = vmul.f32 %v2622, 0.5
        %v4508 = vmul.f32 %v2623, 0.5
        %v4509 = vmul.f32 %v2624, 0.5
        %v4510 = vmul.f32 %v2625, 0.5
        %v4511 = vmul.f32 %v2626, 0.5
        %v4512 = vmul.f32 %v2627, 0.5
        %v4513 = vmul.f32 %v2628, 0.5
        %v4514 = vmul.f32 %v2629, 0.5
        %v4515 = vmul.f32 %v2630, 0.5
        %v4516 = vmul.f32 %v2631, 0.5
        %v4517 = vmul.f32 %v2632, 0.5
        %v4518 = vmul.f32 %v2633, 0.5
        %v4519 = vmul.f32 %v2634, 0.5
        %v4520 = vmul.f32 %v2635, 0.5
        %v4521 = vmul.f32 %v2636, 0.5
        %v4522 = vmul.f32 %v2637, 0.5
        %v4523 = vmul.f32 %v2638, 0.5
        %v4524 = vmul.f32 %v2639, 0.5
        %v4525 = vmul.f32 %v2640, 0.5
        %v4526 = vmul.f32 %v2641, 0.5
        %v4527 = vmul.f32 %v2642, 0.5
        %v4528 = vmul.f32 %v2643, 0.5
        %v4529 = vmul.f32 %v2644, 0.5
        %v4530 = vmul.f32 %v2645, 0.5
        %v4531 = vmul.f32 %v2646, 0.5
        %v4532 = vmul.f32 %v2647, 0.5
        %v4533 = vmul.f32 %v2648, 0.5
        %v4534 = vmul.f32 %v2649, 0.5
        %v4535 = vmul.f32 %v2650, 0.5
        %v4536 = vmul.f32 %v2651, 0.5
        %v4537 = vmul.f32 %v2652, 0.5
        %v4538 = vmul.f32 %v2653, 0.5
        %v4539 = vmul.f32 %v2654, 0.5
        %v4540 = vmul.f32 %v2655, 0.5
        %v4541 = vmul.f32 %v2656, 0.5
        %v4542 = vmul.f32 %v2657, 0.5
        %v4543 = vmul.f32 %v2658, 0.5
        %v4544 = vmul.f32 %v2659, 0.5
        %v4545 = vmul.f32 %v2660, 0.5
        %v4546 = vmul.f32 %v2661, 0.5
        %v4547 = vmul.f32 %v2662, 0.5
        %v4548 = vmul.f32 %v2663, 0.5
        %v4549 = vmul.f32 %v2664, 0.5
        %v4550 = vmul.f32 %v2665, 0.5
        %v4551 = vmul.f32 %v2666, 0.5
        %v4552 = vmul.f32 %v2667, 0.5
        %v4553 = vmul.f32 %v2668, 0.5
        %v4554 = vmul.f32 %v2669, 0.5
        %v4555 = vmul.f32 %v2670, 0.5
        %v4556 = vmul.f32 %v2671, 0.5
        %v4557 = vmul.f32 %v2672, 0.5
        %v4558 = vmul.f32 %v2673, 0.5
        %v4559 = vmul.f32 %v2674, 0.5
        %v4560 = vmul.f32 %v2675, 0.5
        %v4561 = vmul.f32 %v2676, 0.5
        %v4562 = vmul.f32 %v2677, 0.5
        %v4563 = vmul.f32 %v2678, 0.5
        %v4564 = vmul.f32 %v2679, 0.5
        %v4565 = vmul.f32 %v2680, 0.5
        %v4566 = vmul.f32 %v2681, 0.5
        %v4567 = vmul.f32 %v2682, 0.5
        %v4568 = vmul.f32 %v2683, 0.5
        %v4569 = vmul.f32 %v2684, 0.5
        %v4570 = vmul.f32 %v2685, 0.5
        %v4571 = vmul.f32 %v2686, 0.5
        %v4572 = vmul.f32 %v2687, 0.5
        %v4573 = vmul.f32 %v2688, 0.5
        %v4574 = vmul.f32 %v2689, 0.5
        %v4575 = vmul.f32 %v2690, 0.5
        %v4576 = vmul.f32 %v2691, 0.5
        %v4577 = vmul.f32 %v2692, 0.5
        %v4578 = vmul.f32 %v2693, 0.5
        %v4579 = vmul.f32 %v2694, 0.5
        %v4580 = vmul.f32 %v2695, 0.5
        %v4581 = vmul.f32 %v2696, 0.5
        %v4582 = vmul.f32 %v2697, 0.5
        %v4583 = vmul.f32 %v2698, 0.5
        %v4584 = vmul.f32 %v2699, 0.5
        %v4585 = vmul.f32 %v2700, 0.5
        %v4586 = vmul.f32 %v2701, 0.5
        %v4587 = vmul.f32 %v2702, 0.5
        %v4588 = vmul.f32 %v2703, 0.5
        %v4589 = vmul.f32 %v2704, 0.5
        %v4590 = vmul.f32 %v2705, 0.5
        %v4591 = vmul.f32 %v2706, 0.5
        %v4592 = vmul.f32 %v2707, 0.5
        %v4593 = vmul.f32 %v2708, 0.5
        %v4594 = vmul.f32 %v2709, 0.5
        %v4595 = vmul.f32 %v2710, 0.5
        %v4596 = vmul.f32 %v2711, 0.5
        %v4597 = vmul.f32 %v2712, 0.5
        %v4598 = vfloor.f32 %v4285
        %v4599 = vfloor.f32 %v4286
        %v4600 = vfloor.f32 %v4287
        %v4601 = vfloor.f32 %v4288
        %v4602 = vfloor.f32 %v4289
        %v4603 = vfloor.f32 %v4290
        %v4604 = vfloor.f32 %v4291
        %v4605 = vfloor.f32 %v4292
        %v4606 = vfloor.f32 %v4293
        %v4607 = vfloor.f32 %v4294
        %v4608 = vfloor.f32 %v4295
        %v4609 = vfloor.f32 %v4296
        %v4610 = vfloor.f32 %v4297
        %v4611 = vfloor.f32 %v4298
        %v4612 = vfloor.f32 %v4299
        %v4613 = vfloor.f32 %v4300
        %v4614 = vfloor.f32 %v4301
        %v4615 = vfloor.f32 %v4302
        %v4616 = vfloor.f32 %v4303
        %v4617 = vfloor.f32 %v4304
        %v4618 = vfloor.f32 %v4305
        %v4619 = vfloor.f32 %v4306
        %v4620 = vfloor.f32 %v4307
        %v4621 = vfloor.f32 %v4308
        %v4622 = vfloor.f32 %v4309
        %v4623 = vfloor.f32 %v4310
        %v4624 = vfloor.f32 %v4311
        %v4625 = vfloor.f32 %v4312
        %v4626 = vfloor.f32 %v4313
        %v4627 = vfloor.f32 %v4314
        %v4628 = vfloor.f32 %v4315
        %v4629 = vfloor.f32 %v4316
        %v4630 = vfloor.f32 %v4317
        %v4631 = vfloor.f32 %v4318
        %v4632 = vfloor.f32 %v4319
        %v4633 = vfloor.f32 %v4320
        %v4634 = vfloor.f32 %v4321
        %v4635 = vfloor.f32 %v4322
        %v4636 = vfloor.f32 %v4323
        %v4637 = vfloor.f32 %v4324
        %v4638 = vfloor.f32 %v4325
        %v4639 = vfloor.f32 %v4326
        %v4640 = vfloor.f32 %v4327
        %v4641 = vfloor.f32 %v4328
        %v4642 = vfloor.f32 %v4329
        %v4643 = vfloor.f32 %v4330
        %v4644 = vfloor.f32 %v4331
        %v4645 = vfloor.f32 %v4332
        %v4646 = vfloor.f32 %v4333
        %v4647 = vfloor.f32 %v4334
        %v4648 = vfloor.f32 %v4335
        %v4649 = vfloor.f32 %v4336
        %v4650 = vfloor.f32 %v4337
        %v4651 = vfloor.f32 %v4338
        %v4652 = vfloor.f32 %v4339
        %v4653 = vfloor.f32 %v4340
        %v4654 = vfloor.f32 %v4341
        %v4655 = vfloor.f32 %v4342
        %v4656 = vfloor.f32 %v4343
        %v4657 = vfloor.f32 %v4344
        %v4658 = vfloor.f32 %v4345
        %v4659 = vfloor.f32 %v4346
        %v4660 = vfloor.f32 %v4347
        %v4661 = vfloor.f32 %v4348
        %v4662 = vfloor.f32 %v4349
        %v4663 = vfloor.f32 %v4350
        %v4664 = vfloor.f32 %v4351
        %v4665 = vfloor.f32 %v4352
        %v4666 = vfloor.f32 %v4353
        %v4667 = vfloor.f32 %v4354
        %v4668 = vfloor.f32 %v4355
        %v4669 = vfloor.f32 %v4356
        %v4670 = vfloor.f32 %v4357
        %v4671 = vfloor.f32 %v4358
        %v4672 = vfloor.f32 %v4359
        %v4673 = vfloor.f32 %v4360
        %v4674 = vfloor.f32 %v4361
        %v4675 = vfloor.f32 %v4362
        %v4676 = vfloor.f32 %v4363
        %v4677 = vfloor.f32 %v4364
        %v4678 = vfloor.f32 %v4365
        %v4679 = vfloor.f32 %v4366
        %v4680 = vfloor.f32 %v4367
        %v4681 = vfloor.f32 %v4368
        %v4682 = vfloor.f32 %v4369
        %v4683 = vfloor.f32 %v4370
        %v4684 = vfloor.f32 %v4371
        %v4685 = vfloor.f32 %v4372
        %v4686 = vfloor.f32 %v4373
        %v4687 = vfloor.f32 %v4374
        %v4688 = vfloor.f32 %v4375
        %v4689 = vfloor.f32 %v4376
        %v4690 = vfloor.f32 %v4377
        %v4691 = vfloor.f32 %v4378
        %v4692 = vfloor.f32 %v4379
        %v4693 = vfloor.f32 %v4380
        %v4694 = vfloor.f32 %v4381
        %v4695 = vfloor.f32 %v4382
        %v4696 = vfloor.f32 %v4383
        %v4697 = vfloor.f32 %v4384
        %v4698 = vfloor.f32 %v4385
        %v4699 = vfloor.f32 %v4386
        %v4700 = vfloor.f32 %v4387
        %v4701 = vfloor.f32 %v4388
        %v4702 = vfloor.f32 %v4389
        %v4703 = vfloor.f32 %v4390
        %v4704 = vfloor.f32 %v4391
        %v4705 = vfloor.f32 %v4392
        %v4706 = vfloor.f32 %v4393
        %v4707 = vfloor.f32 %v4394
        %v4708 = vfloor.f32 %v4395
        %v4709 = vfloor.f32 %v4396
        %v4710 = vfloor.f32 %v4397
        %v4711 = vfloor.f32 %v4398
        %v4712 = vfloor.f32 %v4399
        %v4713 = vfloor.f32 %v4400
        %v4714 = vfloor.f32 %v4401
        %v4715 = vfloor.f32 %v4402
        %v4716 = vfloor.f32 %v4403
        %v4717 = vfloor.f32 %v4404
        %v4718 = vfloor.f32 %v4405
        %v4719 = vfloor.f32 %v4406
        %v4720 = vfloor.f32 %v4407
        %v4721 = vfloor.f32 %v4408
        %v4722 = vfloor.f32 %v4409
        %v4723 = vfloor.f32 %v4410
        %v4724 = vfloor.f32 %v4411
        %v4725 = vfloor.f32 %v4412
        %v4726 = vfloor.f32 %v4413
        %v4727 = vfloor.f32 %v4414
        %v4728 = vfloor.f32 %v4415
        %v4729 = vfloor.f32 %v4416
        %v4730 = vfloor.f32 %v4417
        %v4731 = vfloor.f32 %v4418
        %v4732 = vfloor.f32 %v4419
        %v4733 = vfloor.f32 %v4420
        %v4734 = vfloor.f32 %v4421
        %v4735 = vfloor.f32 %v4422
        %v4736 = vfloor.f32 %v4423
        %v4737 = vfloor.f32 %v4424
        %v4738 = vfloor.f32 %v4425
        %v4739 = vfloor.f32 %v4426
        %v4740 = vfloor.f32 %v4427
        %v4741 = vfloor.f32 %v4428
        %v4742 = vfloor.f32 %v4429
        %v4743 = vfloor.f32 %v4430
        %v4744 = vfloor.f32 %v4431
        %v4745 = vfloor.f32 %v4432
        %v4746 = vfloor.f32 %v4433
        %v4747 = vfloor.f32 %v4434
        %v4748 = vfloor.f32 %v4435
        %v4749 = vfloor.f32 %v4436
        %v4750 = vfloor.f32 %v4437
        %v4751 = vfloor.f32 %v4438
        %v4752 = vfloor.f32 %v4439
        %v4753 = vfloor.f32 %v4440
        %v4754 = vfloor.f32 %v4441
        %v4755 = vfloor.f32 %v4442
        %v4756 = vfloor.f32 %v4443
        %v4757 = vfloor.f32 %v4444
        %v4758 = vfloor.f32 %v4445
        %v4759 = vfloor.f32 %v4446
        %v4760 = vfloor.f32 %v4447
        %v4761 = vfloor.f32 %v4448
        %v4762 = vfloor.f32 %v4449
        %v4763 = vfloor.f32 %v4450
        %v4764 = vfloor.f32 %v4451
        %v4765 = vfloor.f32 %v4452
        %v4766 = vfloor.f32 %v4453
        %v4767 = vfloor.f32 %v4454
        %v4768 = vfloor.f32 %v4455
        %v4769 = vfloor.f32 %v4456
        %v4770 = vfloor.f32 %v4457
        %v4771 = vfloor.f32 %v4458
        %v4772 = vfloor.f32 %v4459
        %v4773 = vfloor.f32 %v4460
        %v4774 = vfloor.f32 %v4461
        %v4775 = vfloor.f32 %v4462
        %v4776 = vfloor.f32 %v4463
        %v4777 = vfloor.f32 %v4464
        %v4778 = vfloor.f32 %v4465
        %v4779 = vfloor.f32 %v4466
        %v4780 = vfloor.f32 %v4467
        %v4781 = vfloor.f32 %v4468
        %v4782 = vfloor.f32 %v4469
        %v4783 = vfloor.f32 %v4470
        %v4784 = vfloor.f32 %v4471
        %v4785 = vfloor.f32 %v4472
        %v4786 = vfloor.f32 %v4473
        %v4787 = vfloor.f32 %v4474
        %v4788 = vfloor.f32 %v4475
        %v4789 = vfloor.f32 %v4476
        %v4790 = vfloor.f32 %v4477
        %v4791 = vfloor.f32 %v4478
        %v4792 = vfloor.f32 %v4479
        %v4793 = vfloor.f32 %v4480
        %v4794 = vfloor.f32 %v4481
        %v4795 = vfloor.f32 %v4482
        %v4796 = vfloor.f32 %v4483
        %v4797 = vfloor.f32 %v4484
        %v4798 = vfloor.f32 %v4485
        %v4799 = vfloor.f32 %v4486
        %v4800 = vfloor.f32 %v4487
        %v4801 = vfloor.f32 %v4488
        %v4802 = vfloor.f32 %v4489
        %v4803 = vfloor.f32 %v4490
        %v4804 = vfloor.f32 %v4491
        %v4805 = vfloor.f32 %v4492
        %v4806 = vfloor.f32 %v4493
        %v4807 = vfloor.f32 %v4494
        %v4808 = vfloor.f32 %v4495
        %v4809 = vfloor.f32 %v4496
        %v4810 = vfloor.f32 %v4497
        %v4811 = vfloor.f32 %v4498
        %v4812 = vfloor.f32 %v4499
        %v4813 = vfloor.f32 %v4500
        %v4814 = vfloor.f32 %v4501
        %v4815 = vfloor.f32 %v4502
        %v4816 = vfloor.f32 %v4503
        %v4817 = vfloor.f32 %v4504
        %v4818 = vfloor.f32 %v4505
        %v4819 = vfloor.f32 %v4506
        %v4820 = vfloor.f32 %v4507
        %v4821 = vfloor.f32 %v4508
        %v4822 = vfloor.f32 %v4509
        %v4823 = vfloor.f32 %v4510
        %v4824 = vfloor.f32 %v4511
        %v4825 = vfloor.f32 %v4512
        %v4826 = vfloor.f32 %v4513
        %v4827 = vfloor.f32 %v4514
        %v4828 = vfloor.f32 %v4515
        %v4829 = vfloor.f32 %v4516
        %v4830 = vfloor.f32 %v4517
        %v4831 = vfloor.f32 %v4518
        %v4832 = vfloor.f32 %v4519
        %v4833 = vfloor.f32 %v4520
        %v4834 = vfloor.f32 %v4521
        %v4835 = vfloor.f32 %v4522
        %v4836 = vfloor.f32 %v4523
        %v4837 = vfloor.f32 %v4524
        %v4838 = vfloor.f32 %v4525
        %v4839 = vfloor.f32 %v4526
        %v4840 = vfloor.f32 %v4527
        %v4841 = vfloor.f32 %v4528
        %v4842 = vfloor.f32 %v4529
        %v4843 = vfloor.f32 %v4530
        %v4844 = vfloor.f32 %v4531
        %v4845 = vfloor.f32 %v4532
        %v4846 = vfloor.f32 %v4533
        %v4847 = vfloor.f32 %v4534
        %v4848 = vfloor.f32 %v4535
        %v4849 = vfloor.f32 %v4536
        %v4850 = vfloor.f32 %v4537
        %v4851 = vfloor.f32 %v4538
        %v4852 = vfloor.f32 %v4539
        %v4853 = vfloor.f32 %v4540
        %v4854 = vfloor.f32 %v4541
        %v4855 = vfloor.f32 %v4542
        %v4856 = vfloor.f32 %v4543
        %v4857 = vfloor.f32 %v4544
        %v4858 = vfloor.f32 %v4545
        %v4859 = vfloor.f32 %v4546
        %v4860 = vfloor.f32 %v4547
        %v4861 = vfloor.f32 %v4548
        %v4862 = vfloor.f32 %v4549
        %v4863 = vfloor.f32 %v4550
        %v4864 = vfloor.f32 %v4551
        %v4865 = vfloor.f32 %v4552
        %v4866 = vfloor.f32 %v4553
        %v4867 = vfloor.f32 %v4554
        %v4868 = vfloor.f32 %v4555
        %v4869 = vfloor.f32 %v4556
        %v4870 = vfloor.f32 %v4557
        %v4871 = vfloor.f32 %v4558
        %v4872 = vfloor.f32 %v4559
        %v4873 = vfloor.f32 %v4560
        %v4874 = vfloor.f32 %v4561
        %v4875 = vfloor.f32 %v4562
        %v4876 = vfloor.f32 %v4563
        %v4877 = vfloor.f32 %v4564
        %v4878 = vfloor.f32 %v4565
        %v4879 = vfloor.f32 %v4566
        %v4880 = vfloor.f32 %v4567
        %v4881 = vfloor.f32 %v4568
        %v4882 = vfloor.f32 %v4569
        %v4883 = vfloor.f32 %v4570
        %v4884 = vfloor.f32 %v4571
        %v4885 = vfloor.f32 %v4572
        %v4886 = vfloor.f32 %v4573
        %v4887 = vfloor.f32 %v4574
        %v4888 = vfloor.f32 %v4575
        %v4889 = vfloor.f32 %v4576
        %v4890 = vfloor.f32 %v4577
        %v4891 = vfloor.f32 %v4578
        %v4892 = vfloor.f32 %v4579
        %v4893 = vfloor.f32 %v4580
        %v4894 = vfloor.f32 %v4581
        %v4895 = vfloor.f32 %v4582
        %v4896 = vfloor.f32 %v4583
        %v4897 = vfloor.f32 %v4584
        %v4898 = vfloor.f32 %v4585
        %v4899 = vfloor.f32 %v4586
        %v4900 = vfloor.f32 %v4587
        %v4901 = vfloor.f32 %v4588
        %v4902 = vfloor.f32 %v4589
        %v4903 = vfloor.f32 %v4590
        %v4904 = vfloor.f32 %v4591
        %v4905 = vfloor.f32 %v4592
        %v4906 = vfloor.f32 %v4593
        %v4907 = vfloor.f32 %v4594
        %v4908 = vfloor.f32 %v4595
        %v4909 = vfloor.f32 %v4596
        %v4910 = vfloor.f32 %v4597
        %v4911 = vsub.f32 %v4285, %v4598
        %v4912 = vsub.f32 %v4286, %v4599
        %v4913 = vsub.f32 %v4287, %v4600
        %v4914 = vsub.f32 %v4288, %v4601
        %v4915 = vsub.f32 %v4289, %v4602
        %v4916 = vsub.f32 %v4290, %v4603
        %v4917 = vsub.f32 %v4291, %v4604
        %v4918 = vsub.f32 %v4292, %v4605
        %v4919 = vsub.f32 %v4293, %v4606
        %v4920 = vsub.f32 %v4294, %v4607
        %v4921 = vsub.f32 %v4295, %v4608
        %v4922 = vsub.f32 %v4296, %v4609
        %v4923 = vsub.f32 %v4297, %v4610
        %v4924 = vsub.f32 %v4298, %v4611
        %v4925 = vsub.f32 %v4299, %v4612
        %v4926 = vsub.f32 %v4300, %v4613
        %v4927 = vsub.f32 %v4301, %v4614
        %v4928 = vsub.f32 %v4302, %v4615
        %v4929 = vsub.f32 %v4303, %v4616
        %v4930 = vsub.f32 %v4304, %v4617
        %v4931 = vsub.f32 %v4305, %v4618
        %v4932 = vsub.f32 %v4306, %v4619
        %v4933 = vsub.f32 %v4307, %v4620
        %v4934 = vsub.f32 %v4308, %v4621
        %v4935 = vsub.f32 %v4309, %v4622
        %v4936 = vsub.f32 %v4310, %v4623
        %v4937 = vsub.f32 %v4311, %v4624
        %v4938 = vsub.f32 %v4312, %v4625
        %v4939 = vsub.f32 %v4313, %v4626
        %v4940 = vsub.f32 %v4314, %v4627
        %v4941 = vsub.f32 %v4315, %v4628
        %v4942 = vsub.f32 %v4316, %v4629
        %v4943 = vsub.f32 %v4317, %v4630
        %v4944 = vsub.f32 %v4318, %v4631
        %v4945 = vsub.f32 %v4319, %v4632
        %v4946 = vsub.f32 %v4320, %v4633
        %v4947 = vsub.f32 %v4321, %v4634
        %v4948 = vsub.f32 %v4322, %v4635
        %v4949 = vsub.f32 %v4323, %v4636
        %v4950 = vsub.f32 %v4324, %v4637
        %v4951 = vsub.f32 %v4325, %v4638
        %v4952 = vsub.f32 %v4326, %v4639
        %v4953 = vsub.f32 %v4327, %v4640
        %v4954 = vsub.f32 %v4328, %v4641
        %v4955 = vsub.f32 %v4329, %v4642
        %v4956 = vsub.f32 %v4330, %v4643
        %v4957 = vsub.f32 %v4331, %v4644
        %v4958 = vsub.f32 %v4332, %v4645
        %v4959 = vsub.f32 %v4333, %v4646
        %v4960 = vsub.f32 %v4334, %v4647
        %v4961 = vsub.f32 %v4335, %v4648
        %v4962 = vsub.f32 %v4336, %v4649
        %v4963 = vsub.f32 %v4337, %v4650
        %v4964 = vsub.f32 %v4338, %v4651
        %v4965 = vsub.f32 %v4339, %v4652
        %v4966 = vsub.f32 %v4340, %v4653
        %v4967 = vsub.f32 %v4341, %v4654
        %v4968 = vsub.f32 %v4342, %v4655
        %v4969 = vsub.f32 %v4343, %v4656
        %v4970 = vsub.f32 %v4344, %v4657
        %v4971 = vsub.f32 %v4345, %v4658
        %v4972 = vsub.f32 %v4346, %v4659
        %v4973 = vsub.f32 %v4347, %v4660
        %v4974 = vsub.f32 %v4348, %v4661
        %v4975 = vsub.f32 %v4349, %v4662
        %v4976 = vsub.f32 %v4350, %v4663
        %v4977 = vsub.f32 %v4351, %v4664
        %v4978 = vsub.f32 %v4352, %v4665
        %v4979 = vsub.f32 %v4353, %v4666
        %v4980 = vsub.f32 %v4354, %v4667
        %v4981 = vsub.f32 %v4355, %v4668
        %v4982 = vsub.f32 %v4356, %v4669
        %v4983 = vsub.f32 %v4357, %v4670
        %v4984 = vsub.f32 %v4358, %v4671
        %v4985 = vsub.f32 %v4359, %v4672
        %v4986 = vsub.f32 %v4360, %v4673
        %v4987 = vsub.f32 %v4361, %v4674
        %v4988 = vsub.f32 %v4362, %v4675
        %v4989 = vsub.f32 %v4363, %v4676
        %v4990 = vsub.f32 %v4364, %v4677
        %v4991 = vsub.f32 %v4365, %v4678
        %v4992 = vsub.f32 %v4366, %v4679
        %v4993 = vsub.f32 %v4367, %v4680
        %v4994 = vsub.f32 %v4368, %v4681
        %v4995 = vsub.f32 %v4369, %v4682
        %v4996 = vsub.f32 %v4370, %v4683
        %v4997 = vsub.f32 %v4371, %v4684
        %v4998 = vsub.f32 %v4372, %v4685
        %v4999 = vsub.f32 %v4373, %v4686
        %v5000 = vsub.f32 %v4374, %v4687
        %v5001 = vsub.f32 %v4375, %v4688
        %v5002 = vsub.f32 %v4376, %v4689
        %v5003 = vsub.f32 %v4377, %v4690
        %v5004 = vsub.f32 %v4378, %v4691
        %v5005 = vsub.f32 %v4379, %v4692
        %v5006 = vsub.f32 %v4380, %v4693
        %v5007 = vsub.f32 %v4381, %v4694
        %v5008 = vsub.f32 %v4382, %v4695
        %v5009 = vsub.f32 %v4383, %v4696
        %v5010 = vsub.f32 %v4384, %v4697
        %v5011 = vsub.f32 %v4385, %v4698
        %v5012 = vsub.f32 %v4386, %v4699
        %v5013 = vsub.f32 %v4387, %v4700
        %v5014 = vsub.f32 %v4388, %v4701
        %v5015 = vsub.f32 %v4389, %v4702
        %v5016 = vsub.f32 %v4390, %v4703
        %v5017 = vsub.f32 %v4391, %v4704
        %v5018 = vsub.f32 %v4392, %v4705
        %v5019 = vsub.f32 %v4393, %v4706
        %v5020 = vsub.f32 %v4394, %v4707
        %v5021 = vsub.f32 %v4395, %v4708
        %v5022 = vsub.f32 %v4396, %v4709
        %v5023 = vsub.f32 %v4397, %v4710
        %v5024 = vsub.f32 %v4398, %v4711
        %v5025 = vsub.f32 %v4399, %v4712
        %v5026 = vsub.f32 %v4400, %v4713
        %v5027 = vsub.f32 %v4401, %v4714
        %v5028 = vsub.f32 %v4402, %v4715
        %v5029 = vsub.f32 %v4403, %v4716
        %v5030 = vsub.f32 %v4404, %v4717
        %v5031 = vsub.f32 %v4405, %v4718
        %v5032 = vsub.f32 %v4406, %v4719
        %v5033 = vsub.f32 %v4407, %v4720
        %v5034 = vsub.f32 %v4408, %v4721
        %v5035 = vsub.f32 %v4409, %v4722
        %v5036 = vsub.f32 %v4410, %v4723
        %v5037 = vsub.f32 %v4411, %v4724
        %v5038 = vsub.f32 %v4412, %v4725
        %v5039 = vsub.f32 %v4413, %v4726
        %v5040 = vsub.f32 %v4414, %v4727
        %v5041 = vsub.f32 %v4415, %v4728
        %v5042 = vsub.f32 %v4416, %v4729
        %v5043 = vsub.f32 %v4417, %v4730
        %v5044 = vsub.f32 %v4418, %v4731
        %v5045 = vsub.f32 %v4419, %v4732
        %v5046 = vsub.f32 %v4420, %v4733
        %v5047 = vsub.f32 %v4421, %v4734
        %v5048 = vsub.f32 %v4422, %v4735
        %v5049 = vsub.f32 %v4423, %v4736
        %v5050 = vsub.f32 %v4424, %v4737
        %v5051 = vsub.f32 %v4425, %v4738
        %v5052 = vsub.f32 %v4426, %v4739
        %v5053 = vsub.f32 %v4427, %v4740
        %v5054 = vsub.f32 %v4428, %v4741
        %v5055 = vsub.f32 %v4429, %v4742
        %v5056 = vsub.f32 %v4430, %v4743
        %v5057 = vsub.f32 %v4431, %v4744
        %v5058 = vsub.f32 %v4432, %v4745
        %v5059 = vsub.f32 %v4433, %v4746
        %v5060 = vsub.f32 %v4434, %v4747
        %v5061 = vsub.f32 %v4435, %v4748
        %v5062 = vsub.f32 %v4436, %v4749
        %v5063 = vsub.f32 %v4437, %v4750
        %v5064 = vsub.f32 %v4438, %v4751
        %v5065 = vsub.f32 %v4439, %v4752
        %v5066 = vsub.f32 %v4440, %v4753
        %v5067 = vsub.f32 %v4441, %v4754
        %v5068 = vsub.f32 %v4442, %v4755
        %v5069 = vsub.f32 %v4443, %v4756
        %v5070 = vsub.f32 %v4444, %v4757
        %v5071 = vsub.f32 %v4445, %v4758
        %v5072 = vsub.f32 %v4446, %v4759
        %v5073 = vsub.f32 %v4447, %v4760
        %v5074 = vsub.f32 %v4448, %v4761
        %v5075 = vsub.f32 %v4449, %v4762
        %v5076 = vsub.f32 %v4450, %v4763
        %v5077 = vsub.f32 %v4451, %v4764
        %v5078 = vsub.f32 %v4452, %v4765
        %v5079 = vsub.f32 %v4453, %v4766
        %v5080 = vsub.f32 %v4454, %v4767
        %v5081 = vsub.f32 %v4455, %v4768
        %v5082 = vsub.f32 %v4456, %v4769
        %v5083 = vsub.f32 %v4457, %v4770
        %v5084 = vsub.f32 %v4458, %v4771
        %v5085 = vsub.f32 %v4459, %v4772
        %v5086 = vsub.f32 %v4460, %v4773
        %v5087 = vsub.f32 %v4461, %v4774
        %v5088 = vsub.f32 %v4462, %v4775
        %v5089 = vsub.f32 %v4463, %v4776
        %v5090 = vsub.f32 %v4464, %v4777
        %v5091 = vsub.f32 %v4465, %v4778
        %v5092 = vsub.f32 %v4466, %v4779
        %v5093 = vsub.f32 %v4467, %v4780
        %v5094 = vsub.f32 %v4468, %v4781
        %v5095 = vsub.f32 %v4469, %v4782
        %v5096 = vsub.f32 %v4470, %v4783
        %v5097 = vsub.f32 %v4471, %v4784
        %v5098 = vsub.f32 %v4472, %v4785
        %v5099 = vsub.f32 %v4473, %v4786
        %v5100 = vsub.f32 %v4474, %v4787
        %v5101 = vsub.f32 %v4475, %v4788
        %v5102 = vsub.f32 %v4476, %v4789
        %v5103 = vsub.f32 %v4477, %v4790
        %v5104 = vsub.f32 %v4478, %v4791
        %v5105 = vsub.f32 %v4479, %v4792
        %v5106 = vsub.f32 %v4480, %v4793
        %v5107 = vsub.f32 %v4481, %v4794
        %v5108 = vsub.f32 %v4482, %v4795
        %v5109 = vsub.f32 %v4483, %v4796
        %v5110 = vsub.f32 %v4484, %v4797
        %v5111 = vsub.f32 %v4485, %v4798
        %v5112 = vsub.f32 %v4486, %v4799
        %v5113 = vsub.f32 %v4487, %v4800
        %v5114 = vsub.f32 %v4488, %v4801
        %v5115 = vsub.f32 %v4489, %v4802
        %v5116 = vsub.f32 %v4490, %v4803
        %v5117 = vsub.f32 %v4491, %v4804
        %v5118 = vsub.f32 %v4492, %v4805
        %v5119 = vsub.f32 %v4493, %v4806
        %v5120 = vsub.f32 %v4494, %v4807
        %v5121 = vsub.f32 %v4495, %v4808
        %v5122 = vsub.f32 %v4496, %v4809
        %v5123 = vsub.f32 %v4497, %v4810
        %v5124 = vsub.f32 %v4498, %v4811
        %v5125 = vsub.f32 %v4499, %v4812
        %v5126 = vsub.f32 %v4500, %v4813
        %v5127 = vsub.f32 %v4501, %v4814
        %v5128 = vsub.f32 %v4502, %v4815
        %v5129 = vsub.f32 %v4503, %v4816
        %v5130 = vsub.f32 %v4504, %v4817
        %v5131 = vsub.f32 %v4505, %v4818
        %v5132 = vsub.f32 %v4506, %v4819
        %v5133 = vsub.f32 %v4507, %v4820
        %v5134 = vsub.f32 %v4508, %v4821
        %v5135 = vsub.f32 %v4509, %v4822
        %v5136 = vsub.f32 %v4510, %v4823
        %v5137 = vsub.f32 %v4511, %v4824
        %v5138 = vsub.f32 %v4512, %v4825
        %v5139 = vsub.f32 %v4513, %v4826
        %v5140 = vsub.f32 %v4514, %v4827
        %v5141 = vsub.f32 %v4515, %v4828
        %v5142 = vsub.f32 %v4516, %v4829
        %v5143 = vsub.f32 %v4517, %v4830
        %v5144 = vsub.f32 %v4518, %v4831
        %v5145 = vsub.f32 %v4519, %v4832
        %v5146 = vsub.f32 %v4520, %v4833
        %v5147 = vsub.f32 %v4521, %v4834
        %v5148 = vsub.f32 %v4522, %v4835
        %v5149 = vsub.f32 %v4523, %v4836
        %v5150 = vsub.f32 %v4524, %v4837
        %v5151 = vsub.f32 %v4525, %v4838
        %v5152 = vsub.f32 %v4526, %v4839
        %v5153 = vsub.f32 %v4527, %v4840
        %v5154 = vsub.f32 %v4528, %v4841
        %v5155 = vsub.f32 %v4529, %v4842
        %v5156 = vsub.f32 %v4530, %v4843
        %v5157 = vsub.f32 %v4531, %v4844
        %v5158 = vsub.f32 %v4532, %v4845
        %v5159 = vsub.f32 %v4533, %v4846
        %v5160 = vsub.f32 %v4534, %v4847
        %v5161 = vsub.f32 %v4535, %v4848
        %v5162 = vsub.f32 %v4536, %v4849
        %v5163 = vsub.f32 %v4537, %v4850
        %v5164 = vsub.f32 %v4538, %v4851
        %v5165 = vsub.f32 %v4539, %v4852
        %v5166 = vsub.f32 %v4540, %v4853
        %v5167 = vsub.f32 %v4541, %v4854
        %v5168 = vsub.f32 %v4542, %v4855
        %v5169 = vsub.f32 %v4543, %v4856
        %v5170 = vsub.f32 %v4544, %v4857
        %v5171 = vsub.f32 %v4545, %v4858
        %v5172 = vsub.f32 %v4546, %v4859
        %v5173 = vsub.f32 %v4547, %v4860
        %v5174 = vsub.f32 %v4548, %v4861
        %v5175 = vsub.f32 %v4549, %v4862
        %v5176 = vsub.f32 %v4550, %v4863
        %v5177 = vsub.f32 %v4551, %v4864
        %v5178 = vsub.f32 %v4552, %v4865
        %v5179 = vsub.f32 %v4553, %v4866
        %v5180 = vsub.f32 %v4554, %v4867
        %v5181 = vsub.f32 %v4555, %v4868
        %v5182 = vsub.f32 %v4556, %v4869
        %v5183 = vsub.f32 %v4557, %v4870
        %v5184 = vsub.f32 %v4558, %v4871
        %v5185 = vsub.f32 %v4559, %v4872
        %v5186 = vsub.f32 %v4560, %v4873
        %v5187 = vsub.f32 %v4561, %v4874
        %v5188 = vsub.f32 %v4562, %v4875
        %v5189 = vsub.f32 %v4563, %v4876
        %v5190 = vsub.f32 %v4564, %v4877
        %v5191 = vsub.f32 %v4565, %v4878
        %v5192 = vsub.f32 %v4566, %v4879
        %v5193 = vsub.f32 %v4567, %v4880
        %v5194 = vsub.f32 %v4568, %v4881
        %v5195 = vsub.f32 %v4569, %v4882
        %v5196 = vsub.f32 %v4570, %v4883
        %v5197 = vsub.f32 %v4571, %v4884
        %v5198 = vsub.f32 %v4572, %v4885
        %v5199 = vsub.f32 %v4573, %v4886
        %v5200 = vsub.f32 %v4574, %v4887
        %v5201 = vsub.f32 %v4575, %v4888
        %v5202 = vsub.f32 %v4576, %v4889
        %v5203 = vsub.f32 %v4577, %v4890
        %v5204 = vsub.f32 %v4578, %v4891
        %v5205 = vsub.f32 %v4579, %v4892
        %v5206 = vsub.f32 %v4580, %v4893
        %v5207 = vsub.f32 %v4581, %v4894
        %v5208 = vsub.f32 %v4582, %v4895
        %v5209 = vsub.f32 %v4583, %v4896
        %v5210 = vsub.f32 %v4584, %v4897
        %v5211 = vsub.f32 %v4585, %v4898
        %v5212 = vsub.f32 %v4586, %v4899
        %v5213 = vsub.f32 %v4587, %v4900
        %v5214 = vsub.f32 %v4588, %v4901
        %v5215 = vsub.f32 %v4589, %v4902
        %v5216 = vsub.f32 %v4590, %v4903
        %v5217 = vsub.f32 %v4591, %v4904
        %v5218 = vsub.f32 %v4592, %v4905
        %v5219 = vsub.f32 %v4593, %v4906
        %v5220 = vsub.f32 %v4594, %v4907
        %v5221 = vsub.f32 %v4595, %v4908
        %v5222 = vsub.f32 %v4596, %v4909
        %v5223 = vsub.f32 %v4597, %v4910
        %v5224 = vmul.f32 %v4911, 4.0
        %v5225 = vmul.f32 %v4912, 4.0
        %v5226 = vmul.f32 %v4913, 4.0
        %v5227 = vmul.f32 %v4914, 4.0
        %v5228 = vmul.f32 %v4915, 4.0
        %v5229 = vmul.f32 %v4916, 4.0
        %v5230 = vmul.f32 %v4917, 4.0
        %v5231 = vmul.f32 %v4918, 4.0
        %v5232 = vmul.f32 %v4919, 4.0
        %v5233 = vmul.f32 %v4920, 4.0
        %v5234 = vmul.f32 %v4921, 4.0
        %v5235 = vmul.f32 %v4922, 4.0
        %v5236 = vmul.f32 %v4923, 4.0
        %v5237 = vmul.f32 %v4924, 4.0
        %v5238 = vmul.f32 %v4925, 4.0
        %v5239 = vmul.f32 %v4926, 4.0
        %v5240 = vmul.f32 %v4927, 4.0
        %v5241 = vmul.f32 %v4928, 4.0
        %v5242 = vmul.f32 %v4929, 4.0
        %v5243 = vmul.f32 %v4930, 4.0
        %v5244 = vmul.f32 %v4931, 4.0
        %v5245 = vmul.f32 %v4932, 4.0
        %v5246 = vmul.f32 %v4933, 4.0
        %v5247 = vmul.f32 %v4934, 4.0
        %v5248 = vmul.f32 %v4935, 4.0
        %v5249 = vmul.f32 %v4936, 4.0
        %v5250 = vmul.f32 %v4937, 4.0
        %v5251 = vmul.f32 %v4938, 4.0
        %v5252 = vmul.f32 %v4939, 4.0
        %v5253 = vmul.f32 %v4940, 4.0
        %v5254 = vmul.f32 %v4941, 4.0
        %v5255 = vmul.f32 %v4942, 4.0
        %v5256 = vmul.f32 %v4943, 4.0
        %v5257 = vmul.f32 %v4944, 4.0
        %v5258 = vmul.f32 %v4945, 4.0
        %v5259 = vmul.f32 %v4946, 4.0
        %v5260 = vmul.f32 %v4947, 4.0
        %v5261 = vmul.f32 %v4948, 4.0
        %v5262 = vmul.f32 %v4949, 4.0
        %v5263 = vmul.f32 %v4950, 4.0
        %v5264 = vmul.f32 %v4951, 4.0
        %v5265 = vmul.f32 %v4952, 4.0
        %v5266 = vmul.f32 %v4953, 4.0
        %v5267 = vmul.f32 %v4954, 4.0
        %v5268 = vmul.f32 %v4955, 4.0
        %v5269 = vmul.f32 %v4956, 4.0
        %v5270 = vmul.f32 %v4957, 4.0
        %v5271 = vmul.f32 %v4958, 4.0
        %v5272 = vmul.f32 %v4959, 4.0
        %v5273 = vmul.f32 %v4960, 4.0
        %v5274 = vmul.f32 %v4961, 4.0
        %v5275 = vmul.f32 %v4962, 4.0
        %v5276 = vmul.f32 %v4963, 4.0
        %v5277 = vmul.f32 %v4964, 4.0
        %v5278 = vmul.f32 %v4965, 4.0
        %v5279 = vmul.f32 %v4966, 4.0
        %v5280 = vmul.f32 %v4967, 4.0
        %v5281 = vmul.f32 %v4968, 4.0
        %v5282 = vmul.f32 %v4969, 4.0
        %v5283 = vmul.f32 %v4970, 4.0
        %v5284 = vmul.f32 %v4971, 4.0
        %v5285 = vmul.f32 %v4972, 4.0
        %v5286 = vmul.f32 %v4973, 4.0
        %v5287 = vmul.f32 %v4974, 4.0
        %v5288 = vmul.f32 %v4975, 4.0
        %v5289 = vmul.f32 %v4976, 4.0
        %v5290 = vmul.f32 %v4977, 4.0
        %v5291 = vmul.f32 %v4978, 4.0
        %v5292 = vmul.f32 %v4979, 4.0
        %v5293 = vmul.f32 %v4980, 4.0
        %v5294 = vmul.f32 %v4981, 4.0
        %v5295 = vmul.f32 %v4982, 4.0
        %v5296 = vmul.f32 %v4983, 4.0
        %v5297 = vmul.f32 %v4984, 4.0
        %v5298 = vmul.f32 %v4985, 4.0
        %v5299 = vmul.f32 %v4986, 4.0
        %v5300 = vmul.f32 %v4987, 4.0
        %v5301 = vmul.f32 %v4988, 4.0
        %v5302 = vmul.f32 %v4989, 4.0
        %v5303 = vmul.f32 %v4990, 4.0
        %v5304 = vmul.f32 %v4991, 4.0
        %v5305 = vmul.f32 %v4992, 4.0
        %v5306 = vmul.f32 %v4993, 4.0
        %v5307 = vmul.f32 %v4994, 4.0
        %v5308 = vmul.f32 %v4995, 4.0
        %v5309 = vmul.f32 %v4996, 4.0
        %v5310 = vmul.f32 %v4997, 4.0
        %v5311 = vmul.f32 %v4998, 4.0
        %v5312 = vmul.f32 %v4999, 4.0
        %v5313 = vmul.f32 %v5000, 4.0
        %v5314 = vmul.f32 %v5001, 4.0
        %v5315 = vmul.f32 %v5002, 4.0
        %v5316 = vmul.f32 %v5003, 4.0
        %v5317 = vmul.f32 %v5004, 4.0
        %v5318 = vmul.f32 %v5005, 4.0
        %v5319 = vmul.f32 %v5006, 4.0
        %v5320 = vmul.f32 %v5007, 4.0
        %v5321 = vmul.f32 %v5008, 4.0
        %v5322 = vmul.f32 %v5009, 4.0
        %v5323 = vmul.f32 %v5010, 4.0
        %v5324 = vmul.f32 %v5011, 4.0
        %v5325 = vmul.f32 %v5012, 4.0
        %v5326 = vmul.f32 %v5013, 4.0
        %v5327 = vmul.f32 %v5014, 4.0
        %v5328 = vmul.f32 %v5015, 4.0
        %v5329 = vmul.f32 %v5016, 4.0
        %v5330 = vmul.f32 %v5017, 4.0
        %v5331 = vmul.f32 %v5018, 4.0
        %v5332 = vmul.f32 %v5019, 4.0
        %v5333 = vmul.f32 %v5020, 4.0
        %v5334 = vmul.f32 %v5021, 4.0
        %v5335 = vmul.f32 %v5022, 4.0
        %v5336 = vmul.f32 %v5023, 4.0
        %v5337 = vmul.f32 %v5024, 4.0
        %v5338 = vmul.f32 %v5025, 4.0
        %v5339 = vmul.f32 %v5026, 4.0
        %v5340 = vmul.f32 %v5027, 4.0
        %v5341 = vmul.f32 %v5028, 4.0
        %v5342 = vmul.f32 %v5029, 4.0
        %v5343 = vmul.f32 %v5030, 4.0
        %v5344 = vmul.f32 %v5031, 4.0
        %v5345 = vmul.f32 %v5032, 4.0
        %v5346 = vmul.f32 %v5033, 4.0
        %v5347 = vmul.f32 %v5034, 4.0
        %v5348 = vmul.f32 %v5035, 4.0
        %v5349 = vmul.f32 %v5036, 4.0
        %v5350 = vmul.f32 %v5037, 4.0
        %v5351 = vmul.f32 %v5038, 4.0
        %v5352 = vmul.f32 %v5039, 4.0
        %v5353 = vmul.f32 %v5040, 4.0
        %v5354 = vmul.f32 %v5041, 4.0
        %v5355 = vmul.f32 %v5042, 4.0
        %v5356 = vmul.f32 %v5043, 4.0
        %v5357 = vmul.f32 %v5044, 4.0
        %v5358 = vmul.f32 %v5045, 4.0
        %v5359 = vmul.f32 %v5046, 4.0
        %v5360 = vmul.f32 %v5047, 4.0
        %v5361 = vmul.f32 %v5048, 4.0
        %v5362 = vmul.f32 %v5049, 4.0
        %v5363 = vmul.f32 %v5050, 4.0
        %v5364 = vmul.f32 %v5051, 4.0
        %v5365 = vmul.f32 %v5052, 4.0
        %v5366 = vmul.f32 %v5053, 4.0
        %v5367 = vmul.f32 %v5054, 4.0
        %v5368 = vmul.f32 %v5055, 4.0
        %v5369 = vmul.f32 %v5056, 4.0
        %v5370 = vmul.f32 %v5057, 4.0
        %v5371 = vmul.f32 %v5058, 4.0
        %v5372 = vmul.f32 %v5059, 4.0
        %v5373 = vmul.f32 %v5060, 4.0
        %v5374 = vmul.f32 %v5061, 4.0
        %v5375 = vmul.f32 %v5062, 4.0
        %v5376 = vmul.f32 %v5063, 4.0
        %v5377 = vmul.f32 %v5064, 4.0
        %v5378 = vmul.f32 %v5065, 4.0
        %v5379 = vmul.f32 %v5066, 4.0
        %v5380 = vmul.f32 %v5067, 4.0
        %v5381 = vmul.f32 %v5068, 4.0
        %v5382 = vmul.f32 %v5069, 4.0
        %v5383 = vmul.f32 %v5070, 4.0
        %v5384 = vmul.f32 %v5071, 4.0
        %v5385 = vmul.f32 %v5072, 4.0
        %v5386 = vmul.f32 %v5073, 4.0
        %v5387 = vmul.f32 %v5074, 4.0
        %v5388 = vmul.f32 %v5075, 4.0
        %v5389 = vmul.f32 %v5076, 4.0
        %v5390 = vmul.f32 %v5077, 4.0
        %v5391 = vmul.f32 %v5078, 4.0
        %v5392 = vmul.f32 %v5079, 4.0
        %v5393 = vmul.f32 %v5080, 4.0
        %v5394 = vmul.f32 %v5081, 4.0
        %v5395 = vmul.f32 %v5082, 4.0
        %v5396 = vmul.f32 %v5083, 4.0
        %v5397 = vmul.f32 %v5084, 4.0
        %v5398 = vmul.f32 %v5085, 4.0
        %v5399 = vmul.f32 %v5086, 4.0
        %v5400 = vmul.f32 %v5087, 4.0
        %v5401 = vmul.f32 %v5088, 4.0
        %v5402 = vmul.f32 %v5089, 4.0
        %v5403 = vmul.f32 %v5090, 4.0
        %v5404 = vmul.f32 %v5091, 4.0
        %v5405 = vmul.f32 %v5092, 4.0
        %v5406 = vmul.f32 %v5093, 4.0
        %v5407 = vmul.f32 %v5094, 4.0
        %v5408 = vmul.f32 %v5095, 4.0
        %v5409 = vmul.f32 %v5096, 4.0
        %v5410 = vmul.f32 %v5097, 4.0
        %v5411 = vmul.f32 %v5098, 4.0
        %v5412 = vmul.f32 %v5099, 4.0
        %v5413 = vmul.f32 %v5100, 4.0
        %v5414 = vmul.f32 %v5101, 4.0
        %v5415 = vmul.f32 %v5102, 4.0
        %v5416 = vmul.f32 %v5103, 4.0
        %v5417 = vmul.f32 %v5104, 4.0
        %v5418 = vmul.f32 %v5105, 4.0
        %v5419 = vmul.f32 %v5106, 4.0
        %v5420 = vmul.f32 %v5107, 4.0
        %v5421 = vmul.f32 %v5108, 4.0
        %v5422 = vmul.f32 %v5109, 4.0
        %v5423 = vmul.f32 %v5110, 4.0
        %v5424 = vmul.f32 %v5111, 4.0
        %v5425 = vmul.f32 %v5112, 4.0
        %v5426 = vmul.f32 %v5113, 4.0
        %v5427 = vmul.f32 %v5114, 4.0
        %v5428 = vmul.f32 %v5115, 4.0
        %v5429 = vmul.f32 %v5116, 4.0
        %v5430 = vmul.f32 %v5117, 4.0
        %v5431 = vmul.f32 %v5118, 4.0
        %v5432 = vmul.f32 %v5119, 4.0
        %v5433 = vmul.f32 %v5120, 4.0
        %v5434 = vmul.f32 %v5121, 4.0
        %v5435 = vmul.f32 %v5122, 4.0
        %v5436 = vmul.f32 %v5123, 4.0
        %v5437 = vmul.f32 %v5124, 4.0
        %v5438 = vmul.f32 %v5125, 4.0
        %v5439 = vmul.f32 %v5126, 4.0
        %v5440 = vmul.f32 %v5127, 4.0
        %v5441 = vmul.f32 %v5128, 4.0
        %v5442 = vmul.f32 %v5129, 4.0
        %v5443 = vmul.f32 %v5130, 4.0
        %v5444 = vmul.f32 %v5131, 4.0
        %v5445 = vmul.f32 %v5132, 4.0
        %v5446 = vmul.f32 %v5133, 4.0
        %v5447 = vmul.f32 %v5134, 4.0
        %v5448 = vmul.f32 %v5135, 4.0
        %v5449 = vmul.f32 %v5136, 4.0
        %v5450 = vmul.f32 %v5137, 4.0
        %v5451 = vmul.f32 %v5138, 4.0
        %v5452 = vmul.f32 %v5139, 4.0
        %v5453 = vmul.f32 %v5140, 4.0
        %v5454 = vmul.f32 %v5141, 4.0
        %v5455 = vmul.f32 %v5142, 4.0
        %v5456 = vmul.f32 %v5143, 4.0
        %v5457 = vmul.f32 %v5144, 4.0
        %v5458 = vmul.f32 %v5145, 4.0
        %v5459 = vmul.f32 %v5146, 4.0
        %v5460 = vmul.f32 %v5147, 4.0
        %v5461 = vmul.f32 %v5148, 4.0
        %v5462 = vmul.f32 %v5149, 4.0
        %v5463 = vmul.f32 %v5150, 4.0
        %v5464 = vmul.f32 %v5151, 4.0
        %v5465 = vmul.f32 %v5152, 4.0
        %v5466 = vmul.f32 %v5153, 4.0
        %v5467 = vmul.f32 %v5154, 4.0
        %v5468 = vmul.f32 %v5155, 4.0
        %v5469 = vmul.f32 %v5156, 4.0
        %v5470 = vmul.f32 %v5157, 4.0
        %v5471 = vmul.f32 %v5158, 4.0
        %v5472 = vmul.f32 %v5159, 4.0
        %v5473 = vmul.f32 %v5160, 4.0
        %v5474 = vmul.f32 %v5161, 4.0
        %v5475 = vmul.f32 %v5162, 4.0
        %v5476 = vmul.f32 %v5163, 4.0
        %v5477 = vmul.f32 %v5164, 4.0
        %v5478 = vmul.f32 %v5165, 4.0
        %v5479 = vmul.f32 %v5166, 4.0
        %v5480 = vmul.f32 %v5167, 4.0
        %v5481 = vmul.f32 %v5168, 4.0
        %v5482 = vmul.f32 %v5169, 4.0
        %v5483 = vmul.f32 %v5170, 4.0
        %v5484 = vmul.f32 %v5171, 4.0
        %v5485 = vmul.f32 %v5172, 4.0
        %v5486 = vmul.f32 %v5173, 4.0
        %v5487 = vmul.f32 %v5174, 4.0
        %v5488 = vmul.f32 %v5175, 4.0
        %v5489 = vmul.f32 %v5176, 4.0
        %v5490 = vmul.f32 %v5177, 4.0
        %v5491 = vmul.f32 %v5178, 4.0
        %v5492 = vmul.f32 %v5179, 4.0
        %v5493 = vmul.f32 %v5180, 4.0
        %v5494 = vmul.f32 %v5181, 4.0
        %v5495 = vmul.f32 %v5182, 4.0
        %v5496 = vmul.f32 %v5183, 4.0
        %v5497 = vmul.f32 %v5184, 4.0
        %v5498 = vmul.f32 %v5185, 4.0
        %v5499 = vmul.f32 %v5186, 4.0
        %v5500 = vmul.f32 %v5187, 4.0
        %v5501 = vmul.f32 %v5188, 4.0
        %v5502 = vmul.f32 %v5189, 4.0
        %v5503 = vmul.f32 %v5190, 4.0
        %v5504 = vmul.f32 %v5191, 4.0
        %v5505 = vmul.f32 %v5192, 4.0
        %v5506 = vmul.f32 %v5193, 4.0
        %v5507 = vmul.f32 %v5194, 4.0
        %v5508 = vmul.f32 %v5195, 4.0
        %v5509 = vmul.f32 %v5196, 4.0
        %v5510 = vmul.f32 %v5197, 4.0
        %v5511 = vmul.f32 %v5198, 4.0
        %v5512 = vmul.f32 %v5199, 4.0
        %v5513 = vmul.f32 %v5200, 4.0
        %v5514 = vmul.f32 %v5201, 4.0
        %v5515 = vmul.f32 %v5202, 4.0
        %v5516 = vmul.f32 %v5203, 4.0
        %v5517 = vmul.f32 %v5204, 4.0
        %v5518 = vmul.f32 %v5205, 4.0
        %v5519 = vmul.f32 %v5206, 4.0
        %v5520 = vmul.f32 %v5207, 4.0
        %v5521 = vmul.f32 %v5208, 4.0
        %v5522 = vmul.f32 %v5209, 4.0
        %v5523 = vmul.f32 %v5210, 4.0
        %v5524 = vmul.f32 %v5211, 4.0
        %v5525 = vmul.f32 %v5212, 4.0
        %v5526 = vmul.f32 %v5213, 4.0
        %v5527 = vmul.f32 %v5214, 4.0
        %v5528 = vmul.f32 %v5215, 4.0
        %v5529 = vmul.f32 %v5216, 4.0
        %v5530 = vmul.f32 %v5217, 4.0
        %v5531 = vmul.f32 %v5218, 4.0
        %v5532 = vmul.f32 %v5219, 4.0
        %v5533 = vmul.f32 %v5220, 4.0
        %v5534 = vmul.f32 %v5221, 4.0
        %v5535 = vmul.f32 %v5222, 4.0
        %v5536 = vmul.f32 %v5223, 4.0
        %v5537 = vsub.f32 1.0, %v5224
        %v5538 = vsub.f32 1.0, %v5225
        %v5539 = vsub.f32 1.0, %v5226
        %v5540 = vsub.f32 1.0, %v5227
        %v5541 = vsub.f32 1.0, %v5228
        %v5542 = vsub.f32 1.0, %v5229
        %v5543 = vsub.f32 1.0, %v5230
        %v5544 = vsub.f32 1.0, %v5231
        %v5545 = vsub.f32 1.0, %v5232
        %v5546 = vsub.f32 1.0, %v5233
        %v5547 = vsub.f32 1.0, %v5234
        %v5548 = vsub.f32 1.0, %v5235
        %v5549 = vsub.f32 1.0, %v5236
        %v5550 = vsub.f32 1.0, %v5237
        %v5551 = vsub.f32 1.0, %v5238
        %v5552 = vsub.f32 1.0, %v5239
        %v5553 = vsub.f32 1.0, %v5240
        %v5554 = vsub.f32 1.0, %v5241
        %v5555 = vsub.f32 1.0, %v5242
        %v5556 = vsub.f32 1.0, %v5243
        %v5557 = vsub.f32 1.0, %v5244
        %v5558 = vsub.f32 1.0, %v5245
        %v5559 = vsub.f32 1.0, %v5246
        %v5560 = vsub.f32 1.0, %v5247
        %v5561 = vsub.f32 1.0, %v5248
        %v5562 = vsub.f32 1.0, %v5249
        %v5563 = vsub.f32 1.0, %v5250
        %v5564 = vsub.f32 1.0, %v5251
        %v5565 = vsub.f32 1.0, %v5252
        %v5566 = vsub.f32 1.0, %v5253
        %v5567 = vsub.f32 1.0, %v5254
        %v5568 = vsub.f32 1.0, %v5255
        %v5569 = vsub.f32 1.0, %v5256
        %v5570 = vsub.f32 1.0, %v5257
        %v5571 = vsub.f32 1.0, %v5258
        %v5572 = vsub.f32 1.0, %v5259
        %v5573 = vsub.f32 1.0, %v5260
        %v5574 = vsub.f32 1.0, %v5261
        %v5575 = vsub.f32 1.0, %v5262
        %v5576 = vsub.f32 1.0, %v5263
        %v5577 = vsub.f32 1.0, %v5264
        %v5578 = vsub.f32 1.0, %v5265
        %v5579 = vsub.f32 1.0, %v5266
        %v5580 = vsub.f32 1.0, %v5267
        %v5581 = vsub.f32 1.0, %v5268
        %v5582 = vsub.f32 1.0, %v5269
        %v5583 = vsub.f32 1.0, %v5270
        %v5584 = vsub.f32 1.0, %v5271
        %v5585 = vsub.f32 1.0, %v5272
        %v5586 = vsub.f32 1.0, %v5273
        %v5587 = vsub.f32 1.0, %v5274
        %v5588 = vsub.f32 1.0, %v5275
        %v5589 = vsub.f32 1.0, %v5276
        %v5590 = vsub.f32 1.0, %v5277
        %v5591 = vsub.f32 1.0, %v5278
        %v5592 = vsub.f32 1.0, %v5279
        %v5593 = vsub.f32 1.0, %v5280
        %v5594 = vsub.f32 1.0, %v5281
        %v5595 = vsub.f32 1.0, %v5282
        %v5596 = vsub.f32 1.0, %v5283
        %v5597 = vsub.f32 1.0, %v5284
        %v5598 = vsub.f32 1.0, %v5285
        %v5599 = vsub.f32 1.0, %v5286
        %v5600 = vsub.f32 1.0, %v5287
        %v5601 = vsub.f32 1.0, %v5288
        %v5602 = vsub.f32 1.0, %v5289
        %v5603 = vsub.f32 1.0, %v5290
        %v5604 = vsub.f32 1.0, %v5291
        %v5605 = vsub.f32 1.0, %v5292
        %v5606 = vsub.f32 1.0, %v5293
        %v5607 = vsub.f32 1.0, %v5294
        %v5608 = vsub.f32 1.0, %v5295
        %v5609 = vsub.f32 1.0, %v5296
        %v5610 = vsub.f32 1.0, %v5297
        %v5611 = vsub.f32 1.0, %v5298
        %v5612 = vsub.f32 1.0, %v5299
        %v5613 = vsub.f32 1.0, %v5300
        %v5614 = vsub.f32 1.0, %v5301
        %v5615 = vsub.f32 1.0, %v5302
        %v5616 = vsub.f32 1.0, %v5303
        %v5617 = vsub.f32 1.0, %v5304
        %v5618 = vsub.f32 1.0, %v5305
        %v5619 = vsub.f32 1.0, %v5306
        %v5620 = vsub.f32 1.0, %v5307
        %v5621 = vsub.f32 1.0, %v5308
        %v5622 = vsub.f32 1.0, %v5309
        %v5623 = vsub.f32 1.0, %v5310
        %v5624 = vsub.f32 1.0, %v5311
        %v5625 = vsub.f32 1.0, %v5312
        %v5626 = vsub.f32 1.0, %v5313
        %v5627 = vsub.f32 1.0, %v5314
        %v5628 = vsub.f32 1.0, %v5315
        %v5629 = vsub.f32 1.0, %v5316
        %v5630 = vsub.f32 1.0, %v5317
        %v5631 = vsub.f32 1.0, %v5318
        %v5632 = vsub.f32 1.0, %v5319
        %v5633 = vsub.f32 1.0, %v5320
        %v5634 = vsub.f32 1.0, %v5321
        %v5635 = vsub.f32 1.0, %v5322
        %v5636 = vsub.f32 1.0, %v5323
        %v5637 = vsub.f32 1.0, %v5324
        %v5638 = vsub.f32 1.0, %v5325
        %v5639 = vsub.f32 1.0, %v5326
        %v5640 = vsub.f32 1.0, %v5327
        %v5641 = vsub.f32 1.0, %v5328
        %v5642 = vsub.f32 1.0, %v5329
        %v5643 = vsub.f32 1.0, %v5330
        %v5644 = vsub.f32 1.0, %v5331
        %v5645 = vsub.f32 1.0, %v5332
        %v5646 = vsub.f32 1.0, %v5333
        %v5647 = vsub.f32 1.0, %v5334
        %v5648 = vsub.f32 1.0, %v5335
        %v5649 = vsub.f32 1.0, %v5336
        %v5650 = vsub.f32 1.0, %v5337
        %v5651 = vsub.f32 1.0, %v5338
        %v5652 = vsub.f32 1.0, %v5339
        %v5653 = vsub.f32 1.0, %v5340
        %v5654 = vsub.f32 1.0, %v5341
        %v5655 = vsub.f32 1.0, %v5342
        %v5656 = vsub.f32 1.0, %v5343
        %v5657 = vsub.f32 1.0, %v5344
        %v5658 = vsub.f32 1.0, %v5345
        %v5659 = vsub.f32 1.0, %v5346
        %v5660 = vsub.f32 1.0, %v5347
        %v5661 = vsub.f32 1.0, %v5348
        %v5662 = vsub.f32 1.0, %v5349
        %v5663 = vsub.f32 1.0, %v5350
        %v5664 = vsub.f32 1.0, %v5351
        %v5665 = vsub.f32 1.0, %v5352
        %v5666 = vsub.f32 1.0, %v5353
        %v5667 = vsub.f32 1.0, %v5354
        %v5668 = vsub.f32 1.0, %v5355
        %v5669 = vsub.f32 1.0, %v5356
        %v5670 = vsub.f32 1.0, %v5357
        %v5671 = vsub.f32 1.0, %v5358
        %v5672 = vsub.f32 1.0, %v5359
        %v5673 = vsub.f32 1.0, %v5360
        %v5674 = vsub.f32 1.0, %v5361
        %v5675 = vsub.f32 1.0, %v5362
        %v5676 = vsub.f32 1.0, %v5363
        %v5677 = vsub.f32 1.0, %v5364
        %v5678 = vsub.f32 1.0, %v5365
        %v5679 = vsub.f32 1.0, %v5366
        %v5680 = vsub.f32 1.0, %v5367
        %v5681 = vsub.f32 1.0, %v5368
        %v5682 = vsub.f32 1.0, %v5369
        %v5683 = vsub.f32 1.0, %v5370
        %v5684 = vsub.f32 1.0, %v5371
        %v5685 = vsub.f32 1.0, %v5372
        %v5686 = vsub.f32 1.0, %v5373
        %v5687 = vsub.f32 1.0, %v5374
        %v5688 = vsub.f32 1.0, %v5375
        %v5689 = vsub.f32 1.0, %v5376
        %v5690 = vsub.f32 1.0, %v5377
        %v5691 = vsub.f32 1.0, %v5378
        %v5692 = vsub.f32 1.0, %v5379
        %v5693 = vsub.f32 1.0, %v5380
        %v5694 = vsub.f32 1.0, %v5381
        %v5695 = vsub.f32 1.0, %v5382
        %v5696 = vsub.f32 1.0, %v5383
        %v5697 = vsub.f32 1.0, %v5384
        %v5698 = vsub.f32 1.0, %v5385
        %v5699 = vsub.f32 1.0, %v5386
        %v5700 = vsub.f32 1.0, %v5387
        %v5701 = vsub.f32 1.0, %v5388
        %v5702 = vsub.f32 1.0, %v5389
        %v5703 = vsub.f32 1.0, %v5390
        %v5704 = vsub.f32 1.0, %v5391
        %v5705 = vsub.f32 1.0, %v5392
        %v5706 = vsub.f32 1.0, %v5393
        %v5707 = vsub.f32 1.0, %v5394
        %v5708 = vsub.f32 1.0, %v5395
        %v5709 = vsub.f32 1.0, %v5396
        %v5710 = vsub.f32 1.0, %v5397
        %v5711 = vsub.f32 1.0, %v5398
        %v5712 = vsub.f32 1.0, %v5399
        %v5713 = vsub.f32 1.0, %v5400
        %v5714 = vsub.f32 1.0, %v5401
        %v5715 = vsub.f32 1.0, %v5402
        %v5716 = vsub.f32 1.0, %v5403
        %v5717 = vsub.f32 1.0, %v5404
        %v5718 = vsub.f32 1.0, %v5405
        %v5719 = vsub.f32 1.0, %v5406
        %v5720 = vsub.f32 1.0, %v5407
        %v5721 = vsub.f32 1.0, %v5408
        %v5722 = vsub.f32 1.0, %v5409
        %v5723 = vsub.f32 1.0, %v5410
        %v5724 = vsub.f32 1.0, %v5411
        %v5725 = vsub.f32 1.0, %v5412
        %v5726 = vsub.f32 1.0, %v5413
        %v5727 = vsub.f32 1.0, %v5414
        %v5728 = vsub.f32 1.0, %v5415
        %v5729 = vsub.f32 1.0, %v5416
        %v5730 = vsub.f32 1.0, %v5417
        %v5731 = vsub.f32 1.0, %v5418
        %v5732 = vsub.f32 1.0, %v5419
        %v5733 = vsub.f32 1.0, %v5420
        %v5734 = vsub.f32 1.0, %v5421
        %v5735 = vsub.f32 1.0, %v5422
        %v5736 = vsub.f32 1.0, %v5423
        %v5737 = vsub.f32 1.0, %v5424
        %v5738 = vsub.f32 1.0, %v5425
        %v5739 = vsub.f32 1.0, %v5426
        %v5740 = vsub.f32 1.0, %v5427
        %v5741 = vsub.f32 1.0, %v5428
        %v5742 = vsub.f32 1.0, %v5429
        %v5743 = vsub.f32 1.0, %v5430
        %v5744 = vsub.f32 1.0, %v5431
        %v5745 = vsub.f32 1.0, %v5432
        %v5746 = vsub.f32 1.0, %v5433
        %v5747 = vsub.f32 1.0, %v5434
        %v5748 = vsub.f32 1.0, %v5435
        %v5749 = vsub.f32 1.0, %v5436
        %v5750 = vsub.f32 1.0, %v5437
        %v5751 = vsub.f32 1.0, %v5438
        %v5752 = vsub.f32 1.0, %v5439
        %v5753 = vsub.f32 1.0, %v5440
        %v5754 = vsub.f32 1.0, %v5441
        %v5755 = vsub.f32 1.0, %v5442
        %v5756 = vsub.f32 1.0, %v5443
        %v5757 = vsub.f32 1.0, %v5444
        %v5758 = vsub.f32 1.0, %v5445
        %v5759 = vsub.f32 1.0, %v5446
        %v5760 = vsub.f32 1.0, %v5447
        %v5761 = vsub.f32 1.0, %v5448
        %v5762 = vsub.f32 1.0, %v5449
        %v5763 = vsub.f32 1.0, %v5450
        %v5764 = vsub.f32 1.0, %v5451
        %v5765 = vsub.f32 1.0, %v5452
        %v5766 = vsub.f32 1.0, %v5453
        %v5767 = vsub.f32 1.0, %v5454
        %v5768 = vsub.f32 1.0, %v5455
        %v5769 = vsub.f32 1.0, %v5456
        %v5770 = vsub.f32 1.0, %v5457
        %v5771 = vsub.f32 1.0, %v5458
        %v5772 = vsub.f32 1.0, %v5459
        %v5773 = vsub.f32 1.0, %v5460
        %v5774 = vsub.f32 1.0, %v5461
        %v5775 = vsub.f32 1.0, %v5462
        %v5776 = vsub.f32 1.0, %v5463
        %v5777 = vsub.f32 1.0, %v5464
        %v5778 = vsub.f32 1.0, %v5465
        %v5779 = vsub.f32 1.0, %v5466
        %v5780 = vsub.f32 1.0, %v5467
        %v5781 = vsub.f32 1.0, %v5468
        %v5782 = vsub.f32 1.0, %v5469
        %v5783 = vsub.f32 1.0, %v5470
        %v5784 = vsub.f32 1.0, %v5471
        %v5785 = vsub.f32 1.0, %v5472
        %v5786 = vsub.f32 1.0, %v5473
        %v5787 = vsub.f32 1.0, %v5474
        %v5788 = vsub.f32 1.0, %v5475
        %v5789 = vsub.f32 1.0, %v5476
        %v5790 = vsub.f32 1.0, %v5477
        %v5791 = vsub.f32 1.0, %v5478
        %v5792 = vsub.f32 1.0, %v5479
        %v5793 = vsub.f32 1.0, %v5480
        %v5794 = vsub.f32 1.0, %v5481
        %v5795 = vsub.f32 1.0, %v5482
        %v5796 = vsub.f32 1.0, %v5483
        %v5797 = vsub.f32 1.0, %v5484
        %v5798 = vsub.f32 1.0, %v5485
        %v5799 = vsub.f32 1.0, %v5486
        %v5800 = vsub.f32 1.0, %v5487
        %v5801 = vsub.f32 1.0, %v5488
        %v5802 = vsub.f32 1.0, %v5489
        %v5803 = vsub.f32 1.0, %v5490
        %v5804 = vsub.f32 1.0, %v5491
        %v5805 = vsub.f32 1.0, %v5492
        %v5806 = vsub.f32 1.0, %v5493
        %v5807 = vsub.f32 1.0, %v5494
        %v5808 = vsub.f32 1.0, %v5495
        %v5809 = vsub.f32 1.0, %v5496
        %v5810 = vsub.f32 1.0, %v5497
        %v5811 = vsub.f32 1.0, %v5498
        %v5812 = vsub.f32 1.0, %v5499
        %v5813 = vsub.f32 1.0, %v5500
        %v5814 = vsub.f32 1.0, %v5501
        %v5815 = vsub.f32 1.0, %v5502
        %v5816 = vsub.f32 1.0, %v5503
        %v5817 = vsub.f32 1.0, %v5504
        %v5818 = vsub.f32 1.0, %v5505
        %v5819 = vsub.f32 1.0, %v5506
        %v5820 = vsub.f32 1.0, %v5507
        %v5821 = vsub.f32 1.0, %v5508
        %v5822 = vsub.f32 1.0, %v5509
        %v5823 = vsub.f32 1.0, %v5510
        %v5824 = vsub.f32 1.0, %v5511
        %v5825 = vsub.f32 1.0, %v5512
        %v5826 = vsub.f32 1.0, %v5513
        %v5827 = vsub.f32 1.0, %v5514
        %v5828 = vsub.f32 1.0, %v5515
        %v5829 = vsub.f32 1.0, %v5516
        %v5830 = vsub.f32 1.0, %v5517
        %v5831 = vsub.f32 1.0, %v5518
        %v5832 = vsub.f32 1.0, %v5519
        %v5833 = vsub.f32 1.0, %v5520
        %v5834 = vsub.f32 1.0, %v5521
        %v5835 = vsub.f32 1.0, %v5522
        %v5836 = vsub.f32 1.0, %v5523
        %v5837 = vsub.f32 1.0, %v5524
        %v5838 = vsub.f32 1.0, %v5525
        %v5839 = vsub.f32 1.0, %v5526
        %v5840 = vsub.f32 1.0, %v5527
        %v5841 = vsub.f32 1.0, %v5528
        %v5842 = vsub.f32 1.0, %v5529
        %v5843 = vsub.f32 1.0, %v5530
        %v5844 = vsub.f32 1.0, %v5531
        %v5845 = vsub.f32 1.0, %v5532
        %v5846 = vsub.f32 1.0, %v5533
        %v5847 = vsub.f32 1.0, %v5534
        %v5848 = vsub.f32 1.0, %v5535
        %v5849 = vsub.f32 1.0, %v5536
        %v5850 = vmul.f32 %v3972, %v3972
        %v5851 = vmul.f32 %v3973, %v3973
        %v5852 = vmul.f32 %v3974, %v3974
        %v5853 = vmul.f32 %v3975, %v3975
        %v5854 = vmul.f32 %v3976, %v3976
        %v5855 = vmul.f32 %v3977, %v3977
        %v5856 = vmul.f32 %v3978, %v3978
        %v5857 = vmul.f32 %v3979, %v3979
        %v5858 = vmul.f32 %v3980, %v3980
        %v5859 = vmul.f32 %v3981, %v3981
        %v5860 = vmul.f32 %v3982, %v3982
        %v5861 = vmul.f32 %v3983, %v3983
        %v5862 = vmul.f32 %v3984, %v3984
        %v5863 = vmul.f32 %v3985, %v3985
        %v5864 = vmul.f32 %v3986, %v3986
        %v5865 = vmul.f32 %v3987, %v3987
        %v5866 = vmul.f32 %v3988, %v3988
        %v5867 = vmul.f32 %v3989, %v3989
        %v5868 = vmul.f32 %v3990, %v3990
        %v5869 = vmul.f32 %v3991, %v3991
        %v5870 = vmul.f32 %v3992, %v3992
        %v5871 = vmul.f32 %v3993, %v3993
        %v5872 = vmul.f32 %v3994, %v3994
        %v5873 = vmul.f32 %v3995, %v3995
        %v5874 = vmul.f32 %v3996, %v3996
        %v5875 = vmul.f32 %v3997, %v3997
        %v5876 = vmul.f32 %v3998, %v3998
        %v5877 = vmul.f32 %v3999, %v3999
        %v5878 = vmul.f32 %v4000, %v4000
        %v5879 = vmul.f32 %v4001, %v4001
        %v5880 = vmul.f32 %v4002, %v4002
        %v5881 = vmul.f32 %v4003, %v4003
        %v5882 = vmul.f32 %v4004, %v4004
        %v5883 = vmul.f32 %v4005, %v4005
        %v5884 = vmul.f32 %v4006, %v4006
        %v5885 = vmul.f32 %v4007, %v4007
        %v5886 = vmul.f32 %v4008, %v4008
        %v5887 = vmul.f32 %v4009, %v4009
        %v5888 = vmul.f32 %v4010, %v4010
        %v5889 = vmul.f32 %v4011, %v4011
        %v5890 = vmul.f32 %v4012, %v4012
        %v5891 = vmul.f32 %v4013, %v4013
        %v5892 = vmul.f32 %v4014, %v4014
        %v5893 = vmul.f32 %v4015, %v4015
        %v5894 = vmul.f32 %v4016, %v4016
        %v5895 = vmul.f32 %v4017, %v4017
        %v5896 = vmul.f32 %v4018, %v4018
        %v5897 = vmul.f32 %v4019, %v4019
        %v5898 = vmul.f32 %v4020, %v4020
        %v5899 = vmul.f32 %v4021, %v4021
        %v5900 = vmul.f32 %v4022, %v4022
        %v5901 = vmul.f32 %v4023, %v4023
        %v5902 = vmul.f32 %v4024, %v4024
        %v5903 = vmul.f32 %v4025, %v4025
        %v5904 = vmul.f32 %v4026, %v4026
        %v5905 = vmul.f32 %v4027, %v4027
        %v5906 = vmul.f32 %v4028, %v4028
        %v5907 = vmul.f32 %v4029, %v4029
        %v5908 = vmul.f32 %v4030, %v4030
        %v5909 = vmul.f32 %v4031, %v4031
        %v5910 = vmul.f32 %v4032, %v4032
        %v5911 = vmul.f32 %v4033, %v4033
        %v5912 = vmul.f32 %v4034, %v4034
        %v5913 = vmul.f32 %v4035, %v4035
        %v5914 = vmul.f32 %v4036, %v4036
        %v5915 = vmul.f32 %v4037, %v4037
        %v5916 = vmul.f32 %v4038, %v4038
        %v5917 = vmul.f32 %v4039, %v4039
        %v5918 = vmul.f32 %v4040, %v4040
        %v5919 = vmul.f32 %v4041, %v4041
        %v5920 = vmul.f32 %v4042, %v4042
        %v5921 = vmul.f32 %v4043, %v4043
        %v5922 = vmul.f32 %v4044, %v4044
        %v5923 = vmul.f32 %v4045, %v4045
        %v5924 = vmul.f32 %v4046, %v4046
        %v5925 = vmul.f32 %v4047, %v4047
        %v5926 = vmul.f32 %v4048, %v4048
        %v5927 = vmul.f32 %v4049, %v4049
        %v5928 = vmul.f32 %v4050, %v4050
        %v5929 = vmul.f32 %v4051, %v4051
        %v5930 = vmul.f32 %v4052, %v4052
        %v5931 = vmul.f32 %v4053, %v4053
        %v5932 = vmul.f32 %v4054, %v4054
        %v5933 = vmul.f32 %v4055, %v4055
        %v5934 = vmul.f32 %v4056, %v4056
        %v5935 = vmul.f32 %v4057, %v4057
        %v5936 = vmul.f32 %v4058, %v4058
        %v5937 = vmul.f32 %v4059, %v4059
        %v5938 = vmul.f32 %v4060, %v4060
        %v5939 = vmul.f32 %v4061, %v4061
        %v5940 = vmul.f32 %v4062, %v4062
        %v5941 = vmul.f32 %v4063, %v4063
        %v5942 = vmul.f32 %v4064, %v4064
        %v5943 = vmul.f32 %v4065, %v4065
        %v5944 = vmul.f32 %v4066, %v4066
        %v5945 = vmul.f32 %v4067, %v4067
        %v5946 = vmul.f32 %v4068, %v4068
        %v5947 = vmul.f32 %v4069, %v4069
        %v5948 = vmul.f32 %v4070, %v4070
        %v5949 = vmul.f32 %v4071, %v4071
        %v5950 = vmul.f32 %v4072, %v4072
        %v5951 = vmul.f32 %v4073, %v4073
        %v5952 = vmul.f32 %v4074, %v4074
        %v5953 = vmul.f32 %v4075, %v4075
        %v5954 = vmul.f32 %v4076, %v4076
        %v5955 = vmul.f32 %v4077, %v4077
        %v5956 = vmul.f32 %v4078, %v4078
        %v5957 = vmul.f32 %v4079, %v4079
        %v5958 = vmul.f32 %v4080, %v4080
        %v5959 = vmul.f32 %v4081, %v4081
        %v5960 = vmul.f32 %v4082, %v4082
        %v5961 = vmul.f32 %v4083, %v4083
        %v5962 = vmul.f32 %v4084, %v4084
        %v5963 = vmul.f32 %v4085, %v4085
        %v5964 = vmul.f32 %v4086, %v4086
        %v5965 = vmul.f32 %v4087, %v4087
        %v5966 = vmul.f32 %v4088, %v4088
        %v5967 = vmul.f32 %v4089, %v4089
        %v5968 = vmul.f32 %v4090, %v4090
        %v5969 = vmul.f32 %v4091, %v4091
        %v5970 = vmul.f32 %v4092, %v4092
        %v5971 = vmul.f32 %v4093, %v4093
        %v5972 = vmul.f32 %v4094, %v4094
        %v5973 = vmul.f32 %v4095, %v4095
        %v5974 = vmul.f32 %v4096, %v4096
        %v5975 = vmul.f32 %v4097, %v4097
        %v5976 = vmul.f32 %v4098, %v4098
        %v5977 = vmul.f32 %v4099, %v4099
        %v5978 = vmul.f32 %v4100, %v4100
        %v5979 = vmul.f32 %v4101, %v4101
        %v5980 = vmul.f32 %v4102, %v4102
        %v5981 = vmul.f32 %v4103, %v4103
        %v5982 = vmul.f32 %v4104, %v4104
        %v5983 = vmul.f32 %v4105, %v4105
        %v5984 = vmul.f32 %v4106, %v4106
        %v5985 = vmul.f32 %v4107, %v4107
        %v5986 = vmul.f32 %v4108, %v4108
        %v5987 = vmul.f32 %v4109, %v4109
        %v5988 = vmul.f32 %v4110, %v4110
        %v5989 = vmul.f32 %v4111, %v4111
        %v5990 = vmul.f32 %v4112, %v4112
        %v5991 = vmul.f32 %v4113, %v4113
        %v5992 = vmul.f32 %v4114, %v4114
        %v5993 = vmul.f32 %v4115, %v4115
        %v5994 = vmul.f32 %v4116, %v4116
        %v5995 = vmul.f32 %v4117, %v4117
        %v5996 = vmul.f32 %v4118, %v4118
        %v5997 = vmul.f32 %v4119, %v4119
        %v5998 = vmul.f32 %v4120, %v4120
        %v5999 = vmul.f32 %v4121, %v4121
        %v6000 = vmul.f32 %v4122, %v4122
        %v6001 = vmul.f32 %v4123, %v4123
        %v6002 = vmul.f32 %v4124, %v4124
        %v6003 = vmul.f32 %v4125, %v4125
        %v6004 = vmul.f32 %v4126, %v4126
        %v6005 = vmul.f32 %v4127, %v4127
        %v6006 = vmul.f32 %v4128, %v4128
        %v6007 = vmul.f32 %v4129, %v4129
        %v6008 = vmul.f32 %v4130, %v4130
        %v6009 = vmul.f32 %v4131, %v4131
        %v6010 = vmul.f32 %v4132, %v4132
        %v6011 = vmul.f32 %v4133, %v4133
        %v6012 = vmul.f32 %v4134, %v4134
        %v6013 = vmul.f32 %v4135, %v4135
        %v6014 = vmul.f32 %v4136, %v4136
        %v6015 = vmul.f32 %v4137, %v4137
        %v6016 = vmul.f32 %v4138, %v4138
        %v6017 = vmul.f32 %v4139, %v4139
        %v6018 = vmul.f32 %v4140, %v4140
        %v6019 = vmul.f32 %v4141, %v4141
        %v6020 = vmul.f32 %v4142, %v4142
        %v6021 = vmul.f32 %v4143, %v4143
        %v6022 = vmul.f32 %v4144, %v4144
        %v6023 = vmul.f32 %v4145, %v4145
        %v6024 = vmul.f32 %v4146, %v4146
        %v6025 = vmul.f32 %v4147, %v4147
        %v6026 = vmul.f32 %v4148, %v4148
        %v6027 = vmul.f32 %v4149, %v4149
        %v6028 = vmul.f32 %v4150, %v4150
        %v6029 = vmul.f32 %v4151, %v4151
        %v6030 = vmul.f32 %v4152, %v4152
        %v6031 = vmul.f32 %v4153, %v4153
        %v6032 = vmul.f32 %v4154, %v4154
        %v6033 = vmul.f32 %v4155, %v4155
        %v6034 = vmul.f32 %v4156, %v4156
        %v6035 = vmul.f32 %v4157, %v4157
        %v6036 = vmul.f32 %v4158, %v4158
        %v6037 = vmul.f32 %v4159, %v4159
        %v6038 = vmul.f32 %v4160, %v4160
        %v6039 = vmul.f32 %v4161, %v4161
        %v6040 = vmul.f32 %v4162, %v4162
        %v6041 = vmul.f32 %v4163, %v4163
        %v6042 = vmul.f32 %v4164, %v4164
        %v6043 = vmul.f32 %v4165, %v4165
        %v6044 = vmul.f32 %v4166, %v4166
        %v6045 = vmul.f32 %v4167, %v4167
        %v6046 = vmul.f32 %v4168, %v4168
        %v6047 = vmul.f32 %v4169, %v4169
        %v6048 = vmul.f32 %v4170, %v4170
        %v6049 = vmul.f32 %v4171, %v4171
        %v6050 = vmul.f32 %v4172, %v4172
        %v6051 = vmul.f32 %v4173, %v4173
        %v6052 = vmul.f32 %v4174, %v4174
        %v6053 = vmul.f32 %v4175, %v4175
        %v6054 = vmul.f32 %v4176, %v4176
        %v6055 = vmul.f32 %v4177, %v4177
        %v6056 = vmul.f32 %v4178, %v4178
        %v6057 = vmul.f32 %v4179, %v4179
        %v6058 = vmul.f32 %v4180, %v4180
        %v6059 = vmul.f32 %v4181, %v4181
        %v6060 = vmul.f32 %v4182, %v4182
        %v6061 = vmul.f32 %v4183, %v4183
        %v6062 = vmul.f32 %v4184, %v4184
        %v6063 = vmul.f32 %v4185, %v4185
        %v6064 = vmul.f32 %v4186, %v4186
        %v6065 = vmul.f32 %v4187, %v4187
        %v6066 = vmul.f32 %v4188, %v4188
        %v6067 = vmul.f32 %v4189, %v4189
        %v6068 = vmul.f32 %v4190, %v4190
        %v6069 = vmul.f32 %v4191, %v4191
        %v6070 = vmul.f32 %v4192, %v4192
        %v6071 = vmul.f32 %v4193, %v4193
        %v6072 = vmul.f32 %v4194, %v4194
        %v6073 = vmul.f32 %v4195, %v4195
        %v6074 = vmul.f32 %v4196, %v4196
        %v6075 = vmul.f32 %v4197, %v4197
        %v6076 = vmul.f32 %v4198, %v4198
        %v6077 = vmul.f32 %v4199, %v4199
        %v6078 = vmul.f32 %v4200, %v4200
        %v6079 = vmul.f32 %v4201, %v4201
        %v6080 = vmul.f32 %v4202, %v4202
        %v6081 = vmul.f32 %v4203, %v4203
        %v6082 = vmul.f32 %v4204, %v4204
        %v6083 = vmul.f32 %v4205, %v4205
        %v6084 = vmul.f32 %v4206, %v4206
        %v6085 = vmul.f32 %v4207, %v4207
        %v6086 = vmul.f32 %v4208, %v4208
        %v6087 = vmul.f32 %v4209, %v4209
        %v6088 = vmul.f32 %v4210, %v4210
        %v6089 = vmul.f32 %v4211, %v4211
        %v6090 = vmul.f32 %v4212, %v4212
        %v6091 = vmul.f32 %v4213, %v4213
        %v6092 = vmul.f32 %v4214, %v4214
        %v6093 = vmul.f32 %v4215, %v4215
        %v6094 = vmul.f32 %v4216, %v4216
        %v6095 = vmul.f32 %v4217, %v4217
        %v6096 = vmul.f32 %v4218, %v4218
        %v6097 = vmul.f32 %v4219, %v4219
        %v6098 = vmul.f32 %v4220, %v4220
        %v6099 = vmul.f32 %v4221, %v4221
        %v6100 = vmul.f32 %v4222, %v4222
        %v6101 = vmul.f32 %v4223, %v4223
        %v6102 = vmul.f32 %v4224, %v4224
        %v6103 = vmul.f32 %v4225, %v4225
        %v6104 = vmul.f32 %v4226, %v4226
        %v6105 = vmul.f32 %v4227, %v4227
        %v6106 = vmul.f32 %v4228, %v4228
        %v6107 = vmul.f32 %v4229, %v4229
        %v6108 = vmul.f32 %v4230, %v4230
        %v6109 = vmul.f32 %v4231, %v4231
        %v6110 = vmul.f32 %v4232, %v4232
        %v6111 = vmul.f32 %v4233, %v4233
        %v6112 = vmul.f32 %v4234, %v4234
        %v6113 = vmul.f32 %v4235, %v4235
        %v6114 = vmul.f32 %v4236, %v4236
        %v6115 = vmul.f32 %v4237, %v4237
        %v6116 = vmul.f32 %v4238, %v4238
        %v6117 = vmul.f32 %v4239, %v4239
        %v6118 = vmul.f32 %v4240, %v4240
        %v6119 = vmul.f32 %v4241, %v4241
        %v6120 = vmul.f32 %v4242, %v4242
        %v6121 = vmul.f32 %v4243, %v4243
        %v6122 = vmul.f32 %v4244, %v4244
        %v6123 = vmul.f32 %v4245, %v4245
        %v6124 = vmul.f32 %v4246, %v4246
        %v6125 = vmul.f32 %v4247, %v4247
        %v6126 = vmul.f32 %v4248, %v4248
        %v6127 = vmul.f32 %v4249, %v4249
        %v6128 = vmul.f32 %v4250, %v4250
        %v6129 = vmul.f32 %v4251, %v4251
        %v6130 = vmul.f32 %v4252, %v4252
        %v6131 = vmul.f32 %v4253, %v4253
        %v6132 = vmul.f32 %v4254, %v4254
        %v6133 = vmul.f32 %v4255, %v4255
        %v6134 = vmul.f32 %v4256, %v4256
        %v6135 = vmul.f32 %v4257, %v4257
        %v6136 = vmul.f32 %v4258, %v4258
        %v6137 = vmul.f32 %v4259, %v4259
        %v6138 = vmul.f32 %v4260, %v4260
        %v6139 = vmul.f32 %v4261, %v4261
        %v6140 = vmul.f32 %v4262, %v4262
        %v6141 = vmul.f32 %v4263, %v4263
        %v6142 = vmul.f32 %v4264, %v4264
        %v6143 = vmul.f32 %v4265, %v4265
        %v6144 = vmul.f32 %v4266, %v4266
        %v6145 = vmul.f32 %v4267, %v4267
        %v6146 = vmul.f32 %v4268, %v4268
        %v6147 = vmul.f32 %v4269, %v4269
        %v6148 = vmul.f32 %v4270, %v4270
        %v6149 = vmul.f32 %v4271, %v4271
        %v6150 = vmul.f32 %v4272, %v4272
        %v6151 = vmul.f32 %v4273, %v4273
        %v6152 = vmul.f32 %v4274, %v4274
        %v6153 = vmul.f32 %v4275, %v4275
        %v6154 = vmul.f32 %v4276, %v4276
        %v6155 = vmul.f32 %v4277, %v4277
        %v6156 = vmul.f32 %v4278, %v4278
        %v6157 = vmul.f32 %v4279, %v4279
        %v6158 = vmul.f32 %v4280, %v4280
        %v6159 = vmul.f32 %v4281, %v4281
        %v6160 = vmul.f32 %v4282, %v4282
        %v6161 = vmul.f32 %v4283, %v4283
        %v6162 = vmul.f32 %v4284, %v4284
        %v6163 = vmul.f32 %v5850, -2.5052108e-08
        %v6164 = vmul.f32 %v5851, -2.5052108e-08
        %v6165 = vmul.f32 %v5852, -2.5052108e-08
        %v6166 = vmul.f32 %v5853, -2.5052108e-08
        %v6167 = vmul.f32 %v5854, -2.5052108e-08
        %v6168 = vmul.f32 %v5855, -2.5052108e-08
        %v6169 = vmul.f32 %v5856, -2.5052108e-08
        %v6170 = vmul.f32 %v5857, -2.5052108e-08
        %v6171 = vmul.f32 %v5858, -2.5052108e-08
        %v6172 = vmul.f32 %v5859, -2.5052108e-08
        %v6173 = vmul.f32 %v5860, -2.5052108e-08
        %v6174 = vmul.f32 %v5861, -2.5052108e-08
        %v6175 = vmul.f32 %v5862, -2.5052108e-08
        %v6176 = vmul.f32 %v5863, -2.5052108e-08
        %v6177 = vmul.f32 %v5864, -2.5052108e-08
        %v6178 = vmul.f32 %v5865, -2.5052108e-08
        %v6179 = vmul.f32 %v5866, -2.5052108e-08
        %v6180 = vmul.f32 %v5867, -2.5052108e-08
        %v6181 = vmul.f32 %v5868, -2.5052108e-08
        %v6182 = vmul.f32 %v5869, -2.5052108e-08
        %v6183 = vmul.f32 %v5870, -2.5052108e-08
        %v6184 = vmul.f32 %v5871, -2.5052108e-08
        %v6185 = vmul.f32 %v5872, -2.5052108e-08
        %v6186 = vmul.f32 %v5873, -2.5052108e-08
        %v6187 = vmul.f32 %v5874, -2.5052108e-08
        %v6188 = vmul.f32 %v5875, -2.5052108e-08
        %v6189 = vmul.f32 %v5876, -2.5052108e-08
        %v6190 = vmul.f32 %v5877, -2.5052108e-08
        %v6191 = vmul.f32 %v5878, -2.5052108e-08
        %v6192 = vmul.f32 %v5879, -2.5052108e-08
        %v6193 = vmul.f32 %v5880, -2.5052108e-08
        %v6194 = vmul.f32 %v5881, -2.5052108e-08
        %v6195 = vmul.f32 %v5882, -2.5052108e-08
        %v6196 = vmul.f32 %v5883, -2.5052108e-08
        %v6197 = vmul.f32 %v5884, -2.5052108e-08
        %v6198 = vmul.f32 %v5885, -2.5052108e-08
        %v6199 = vmul.f32 %v5886, -2.5052108e-08
        %v6200 = vmul.f32 %v5887, -2.5052108e-08
        %v6201 = vmul.f32 %v5888, -2.5052108e-08
        %v6202 = vmul.f32 %v5889, -2.5052108e-08
        %v6203 = vmul.f32 %v5890, -2.5052108e-08
        %v6204 = vmul.f32 %v5891, -2.5052108e-08
        %v6205 = vmul.f32 %v5892, -2.5052108e-08
        %v6206 = vmul.f32 %v5893, -2.5052108e-08
        %v6207 = vmul.f32 %v5894, -2.5052108e-08
        %v6208 = vmul.f32 %v5895, -2.5052108e-08
        %v6209 = vmul.f32 %v5896, -2.5052108e-08
        %v6210 = vmul.f32 %v5897, -2.5052108e-08
        %v6211 = vmul.f32 %v5898, -2.5052108e-08
        %v6212 = vmul.f32 %v5899, -2.5052108e-08
        %v6213 = vmul.f32 %v5900, -2.5052108e-08
        %v6214 = vmul.f32 %v5901, -2.5052108e-08
        %v6215 = vmul.f32 %v5902, -2.5052108e-08
        %v6216 = vmul.f32 %v5903, -2.5052108e-08
        %v6217 = vmul.f32 %v5904, -2.5052108e-08
        %v6218 = vmul.f32 %v5905, -2.5052108e-08
        %v6219 = vmul.f32 %v5906, -2.5052108e-08
        %v6220 = vmul.f32 %v5907, -2.5052108e-08
        %v6221 = vmul.f32 %v5908, -2.5052108e-08
        %v6222 = vmul.f32 %v5909, -2.5052108e-08
        %v6223 = vmul.f32 %v5910, -2.5052108e-08
        %v6224 = vmul.f32 %v5911, -2.5052108e-08
        %v6225 = vmul.f32 %v5912, -2.5052108e-08
        %v6226 = vmul.f32 %v5913, -2.5052108e-08
        %v6227 = vmul.f32 %v5914, -2.5052108e-08
        %v6228 = vmul.f32 %v5915, -2.5052108e-08
        %v6229 = vmul.f32 %v5916, -2.5052108e-08
        %v6230 = vmul.f32 %v5917, -2.5052108e-08
        %v6231 = vmul.f32 %v5918, -2.5052108e-08
        %v6232 = vmul.f32 %v5919, -2.5052108e-08
        %v6233 = vmul.f32 %v5920, -2.5052108e-08
        %v6234 = vmul.f32 %v5921, -2.5052108e-08
        %v6235 = vmul.f32 %v5922, -2.5052108e-08
        %v6236 = vmul.f32 %v5923, -2.5052108e-08
        %v6237 = vmul.f32 %v5924, -2.5052108e-08
        %v6238 = vmul.f32 %v5925, -2.5052108e-08
        %v6239 = vmul.f32 %v5926, -2.5052108e-08
        %v6240 = vmul.f32 %v5927, -2.5052108e-08
        %v6241 = vmul.f32 %v5928, -2.5052108e-08
        %v6242 = vmul.f32 %v5929, -2.5052108e-08
        %v6243 = vmul.f32 %v5930, -2.5052108e-08
        %v6244 = vmul.f32 %v5931, -2.5052108e-08
        %v6245 = vmul.f32 %v5932, -2.5052108e-08
        %v6246 = vmul.f32 %v5933, -2.5052108e-08
        %v6247 = vmul.f32 %v5934, -2.5052108e-08
        %v6248 = vmul.f32 %v5935, -2.5052108e-08
        %v6249 = vmul.f32 %v5936, -2.5052108e-08
        %v6250 = vmul.f32 %v5937, -2.5052108e-08
        %v6251 = vmul.f32 %v5938, -2.5052108e-08
        %v6252 = vmul.f32 %v5939, -2.5052108e-08
        %v6253 = vmul.f32 %v5940, -2.5052108e-08
        %v6254 = vmul.f32 %v5941, -2.5052108e-08
        %v6255 = vmul.f32 %v5942, -2.5052108e-08
        %v6256 = vmul.f32 %v5943, -2.5052108e-08
        %v6257 = vmul.f32 %v5944, -2.5052108e-08
        %v6258 = vmul.f32 %v5945, -2.5052108e-08
        %v6259 = vmul.f32 %v5946, -2.5052108e-08
        %v6260 = vmul.f32 %v5947, -2.5052108e-08
        %v6261 = vmul.f32 %v5948, -2.5052108e-08
        %v6262 = vmul.f32 %v5949, -2.5052108e-08
        %v6263 = vmul.f32 %v5950, -2.5052108e-08
        %v6264 = vmul.f32 %v5951, -2.5052108e-08
        %v6265 = vmul.f32 %v5952, -2.5052108e-08
        %v6266 = vmul.f32 %v5953, -2.5052108e-08
        %v6267 = vmul.f32 %v5954, -2.5052108e-08
        %v6268 = vmul.f32 %v5955, -2.5052108e-08
        %v6269 = vmul.f32 %v5956, -2.5052108e-08
        %v6270 = vmul.f32 %v5957, -2.5052108e-08
        %v6271 = vmul.f32 %v5958, -2.5052108e-08
        %v6272 = vmul.f32 %v5959, -2.5052108e-08
        %v6273 = vmul.f32 %v5960, -2.5052108e-08
        %v6274 = vmul.f32 %v5961, -2.5052108e-08
        %v6275 = vmul.f32 %v5962, -2.5052108e-08
        %v6276 = vmul.f32 %v5963, -2.5052108e-08
        %v6277 = vmul.f32 %v5964, -2.5052108e-08
        %v6278 = vmul.f32 %v5965, -2.5052108e-08
        %v6279 = vmul.f32 %v5966, -2.5052108e-08
        %v6280 = vmul.f32 %v5967, -2.5052108e-08
        %v6281 = vmul.f32 %v5968, -2.5052108e-08
        %v6282 = vmul.f32 %v5969, -2.5052108e-08
        %v6283 = vmul.f32 %v5970, -2.5052108e-08
        %v6284 = vmul.f32 %v5971, -2.5052108e-08
        %v6285 = vmul.f32 %v5972, -2.5052108e-08
        %v6286 = vmul.f32 %v5973, -2.5052108e-08
        %v6287 = vmul.f32 %v5974, -2.5052108e-08
        %v6288 = vmul.f32 %v5975, -2.5052108e-08
        %v6289 = vmul.f32 %v5976, -2.5052108e-08
        %v6290 = vmul.f32 %v5977, -2.5052108e-08
        %v6291 = vmul.f32 %v5978, -2.5052108e-08
        %v6292 = vmul.f32 %v5979, -2.5052108e-08
        %v6293 = vmul.f32 %v5980, -2.5052108e-08
        %v6294 = vmul.f32 %v5981, -2.5052108e-08
        %v6295 = vmul.f32 %v5982, -2.5052108e-08
        %v6296 = vmul.f32 %v5983, -2.5052108e-08
        %v6297 = vmul.f32 %v5984, -2.5052108e-08
        %v6298 = vmul.f32 %v5985, -2.5052108e-08
        %v6299 = vmul.f32 %v5986, -2.5052108e-08
        %v6300 = vmul.f32 %v5987, -2.5052108e-08
        %v6301 = vmul.f32 %v5988, -2.5052108e-08
        %v6302 = vmul.f32 %v5989, -2.5052108e-08
        %v6303 = vmul.f32 %v5990, -2.5052108e-08
        %v6304 = vmul.f32 %v5991, -2.5052108e-08
        %v6305 = vmul.f32 %v5992, -2.5052108e-08
        %v6306 = vmul.f32 %v5993, -2.5052108e-08
        %v6307 = vmul.f32 %v5994, -2.5052108e-08
        %v6308 = vmul.f32 %v5995, -2.5052108e-08
        %v6309 = vmul.f32 %v5996, -2.5052108e-08
        %v6310 = vmul.f32 %v5997, -2.5052108e-08
        %v6311 = vmul.f32 %v5998, -2.5052108e-08
        %v6312 = vmul.f32 %v5999, -2.5052108e-08
        %v6313 = vmul.f32 %v6000, -2.5052108e-08
        %v6314 = vmul.f32 %v6001, -2.5052108e-08
        %v6315 = vmul.f32 %v6002, -2.5052108e-08
        %v6316 = vmul.f32 %v6003, -2.5052108e-08
        %v6317 = vmul.f32 %v6004, -2.5052108e-08
        %v6318 = vmul.f32 %v6005, -2.5052108e-08
        %v6319 = vmul.f32 %v6006, -2.5052108e-08
        %v6320 = vmul.f32 %v6007, -2.5052108e-08
        %v6321 = vmul.f32 %v6008, -2.5052108e-08
        %v6322 = vmul.f32 %v6009, -2.5052108e-08
        %v6323 = vmul.f32 %v6010, -2.5052108e-08
        %v6324 = vmul.f32 %v6011, -2.5052108e-08
        %v6325 = vmul.f32 %v6012, -2.5052108e-08
        %v6326 = vmul.f32 %v6013, -2.5052108e-08
        %v6327 = vmul.f32 %v6014, -2.5052108e-08
        %v6328 = vmul.f32 %v6015, -2.5052108e-08
        %v6329 = vmul.f32 %v6016, -2.5052108e-08
        %v6330 = vmul.f32 %v6017, -2.5052108e-08
        %v6331 = vmul.f32 %v6018, -2.5052108e-08
        %v6332 = vmul.f32 %v6019, -2.5052108e-08
        %v6333 = vmul.f32 %v6020, -2.5052108e-08
        %v6334 = vmul.f32 %v6021, -2.5052108e-08
        %v6335 = vmul.f32 %v6022, -2.5052108e-08
        %v6336 = vmul.f32 %v6023, -2.5052108e-08
        %v6337 = vmul.f32 %v6024, -2.5052108e-08
        %v6338 = vmul.f32 %v6025, -2.5052108e-08
        %v6339 = vmul.f32 %v6026, -2.5052108e-08
        %v6340 = vmul.f32 %v6027, -2.5052108e-08
        %v6341 = vmul.f32 %v6028, -2.5052108e-08
        %v6342 = vmul.f32 %v6029, -2.5052108e-08
        %v6343 = vmul.f32 %v6030, -2.5052108e-08
        %v6344 = vmul.f32 %v6031, -2.5052108e-08
        %v6345 = vmul.f32 %v6032, -2.5052108e-08
        %v6346 = vmul.f32 %v6033, -2.5052108e-08
        %v6347 = vmul.f32 %v6034, -2.5052108e-08
        %v6348 = vmul.f32 %v6035, -2.5052108e-08
        %v6349 = vmul.f32 %v6036, -2.5052108e-08
        %v6350 = vmul.f32 %v6037, -2.5052108e-08
        %v6351 = vmul.f32 %v6038, -2.5052108e-08
        %v6352 = vmul.f32 %v6039, -2.5052108e-08
        %v6353 = vmul.f32 %v6040, -2.5052108e-08
        %v6354 = vmul.f32 %v6041, -2.5052108e-08
        %v6355 = vmul.f32 %v6042, -2.5052108e-08
        %v6356 = vmul.f32 %v6043, -2.5052108e-08
        %v6357 = vmul.f32 %v6044, -2.5052108e-08
        %v6358 = vmul.f32 %v6045, -2.5052108e-08
        %v6359 = vmul.f32 %v6046, -2.5052108e-08
        %v6360 = vmul.f32 %v6047, -2.5052108e-08
        %v6361 = vmul.f32 %v6048, -2.5052108e-08
        %v6362 = vmul.f32 %v6049, -2.5052108e-08
        %v6363 = vmul.f32 %v6050, -2.5052108e-08
        %v6364 = vmul.f32 %v6051, -2.5052108e-08
        %v6365 = vmul.f32 %v6052, -2.5052108e-08
        %v6366 = vmul.f32 %v6053, -2.5052108e-08
        %v6367 = vmul.f32 %v6054, -2.5052108e-08
        %v6368 = vmul.f32 %v6055, -2.5052108e-08
        %v6369 = vmul.f32 %v6056, -2.5052108e-08
        %v6370 = vmul.f32 %v6057, -2.5052108e-08
        %v6371 = vmul.f32 %v6058, -2.5052108e-08
        %v6372 = vmul.f32 %v6059, -2.5052108e-08
        %v6373 = vmul.f32 %v6060, -2.5052108e-08
        %v6374 = vmul.f32 %v6061, -2.5052108e-08
        %v6375 = vmul.f32 %v6062, -2.5052108e-08
        %v6376 = vmul.f32 %v6063, -2.5052108e-08
        %v6377 = vmul.f32 %v6064, -2.5052108e-08
        %v6378 = vmul.f32 %v6065, -2.5052108e-08
        %v6379 = vmul.f32 %v6066, -2.5052108e-08
        %v6380 = vmul.f32 %v6067, -2.5052108e-08
        %v6381 = vmul.f32 %v6068, -2.5052108e-08
        %v6382 = vmul.f32 %v6069, -2.5052108e-08
        %v6383 = vmul.f32 %v6070, -2.5052108e-08
        %v6384 = vmul.f32 %v6071, -2.5052108e-08
        %v6385 = vmul.f32 %v6072, -2.5052108e-08
        %v6386 = vmul.f32 %v6073, -2.5052108e-08
        %v6387 = vmul.f32 %v6074, -2.5052108e-08
        %v6388 = vmul.f32 %v6075, -2.5052108e-08
        %v6389 = vmul.f32 %v6076, -2.5052108e-08
        %v6390 = vmul.f32 %v6077, -2.5052108e-08
        %v6391 = vmul.f32 %v6078, -2.5052108e-08
        %v6392 = vmul.f32 %v6079, -2.5052108e-08
        %v6393 = vmul.f32 %v6080, -2.5052108e-08
        %v6394 = vmul.f32 %v6081, -2.5052108e-08
        %v6395 = vmul.f32 %v6082, -2.5052108e-08
        %v6396 = vmul.f32 %v6083, -2.5052108e-08
        %v6397 = vmul.f32 %v6084, -2.5052108e-08
        %v6398 = vmul.f32 %v6085, -2.5052108e-08
        %v6399 = vmul.f32 %v6086, -2.5052108e-08
        %v6400 = vmul.f32 %v6087, -2.5052108e-08
        %v6401 = vmul.f32 %v6088, -2.5052108e-08
        %v6402 = vmul.f32 %v6089, -2.5052108e-08
        %v6403 = vmul.f32 %v6090, -2.5052108e-08
        %v6404 = vmul.f32 %v6091, -2.5052108e-08
        %v6405 = vmul.f32 %v6092, -2.5052108e-08
        %v6406 = vmul.f32 %v6093, -2.5052108e-08
        %v6407 = vmul.f32 %v6094, -2.5052108e-08
        %v6408 = vmul.f32 %v6095, -2.5052108e-08
        %v6409 = vmul.f32 %v6096, -2.5052108e-08
        %v6410 = vmul.f32 %v6097, -2.5052108e-08
        %v6411 = vmul.f32 %v6098, -2.5052108e-08
        %v6412 = vmul.f32 %v6099, -2.5052108e-08
        %v6413 = vmul.f32 %v6100, -2.5052108e-08
        %v6414 = vmul.f32 %v6101, -2.5052108e-08
        %v6415 = vmul.f32 %v6102, -2.5052108e-08
        %v6416 = vmul.f32 %v6103, -2.5052108e-08
        %v6417 = vmul.f32 %v6104, -2.5052108e-08
        %v6418 = vmul.f32 %v6105, -2.5052108e-08
        %v6419 = vmul.f32 %v6106, -2.5052108e-08
        %v6420 = vmul.f32 %v6107, -2.5052108e-08
        %v6421 = vmul.f32 %v6108, -2.5052108e-08
        %v6422 = vmul.f32 %v6109, -2.5052108e-08
        %v6423 = vmul.f32 %v6110, -2.5052108e-08
        %v6424 = vmul.f32 %v6111, -2.5052108e-08
        %v6425 = vmul.f32 %v6112, -2.5052108e-08
        %v6426 = vmul.f32 %v6113, -2.5052108e-08
        %v6427 = vmul.f32 %v6114, -2.5052108e-08
        %v6428 = vmul.f32 %v6115, -2.5052108e-08
        %v6429 = vmul.f32 %v6116, -2.5052108e-08
        %v6430 = vmul.f32 %v6117, -2.5052108e-08
        %v6431 = vmul.f32 %v6118, -2.5052108e-08
        %v6432 = vmul.f32 %v6119, -2.5052108e-08
        %v6433 = vmul.f32 %v6120, -2.5052108e-08
        %v6434 = vmul.f32 %v6121, -2.5052108e-08
        %v6435 = vmul.f32 %v6122, -2.5052108e-08
        %v6436 = vmul.f32 %v6123, -2.5052108e-08
        %v6437 = vmul.f32 %v6124, -2.5052108e-08
        %v6438 = vmul.f32 %v6125, -2.5052108e-08
        %v6439 = vmul.f32 %v6126, -2.5052108e-08
        %v6440 = vmul.f32 %v6127, -2.5052108e-08
        %v6441 = vmul.f32 %v6128, -2.5052108e-08
        %v6442 = vmul.f32 %v6129, -2.5052108e-08
        %v6443 = vmul.f32 %v6130, -2.5052108e-08
        %v6444 = vmul.f32 %v6131, -2.5052108e-08
        %v6445 = vmul.f32 %v6132, -2.5052108e-08
        %v6446 = vmul.f32 %v6133, -2.5052108e-08
        %v6447 = vmul.f32 %v6134, -2.5052108e-08
        %v6448 = vmul.f32 %v6135, -2.5052108e-08
        %v6449 = vmul.f32 %v6136, -2.5052108e-08
        %v6450 = vmul.f32 %v6137, -2.5052108e-08
        %v6451 = vmul.f32 %v6138, -2.5052108e-08
        %v6452 = vmul.f32 %v6139, -2.5052108e-08
        %v6453 = vmul.f32 %v6140, -2.5052108e-08
        %v6454 = vmul.f32 %v6141, -2.5052108e-08
        %v6455 = vmul.f32 %v6142, -2.5052108e-08
        %v6456 = vmul.f32 %v6143, -2.5052108e-08
        %v6457 = vmul.f32 %v6144, -2.5052108e-08
        %v6458 = vmul.f32 %v6145, -2.5052108e-08
        %v6459 = vmul.f32 %v6146, -2.5052108e-08
        %v6460 = vmul.f32 %v6147, -2.5052108e-08
        %v6461 = vmul.f32 %v6148, -2.5052108e-08
        %v6462 = vmul.f32 %v6149, -2.5052108e-08
        %v6463 = vmul.f32 %v6150, -2.5052108e-08
        %v6464 = vmul.f32 %v6151, -2.5052108e-08
        %v6465 = vmul.f32 %v6152, -2.5052108e-08
        %v6466 = vmul.f32 %v6153, -2.5052108e-08
        %v6467 = vmul.f32 %v6154, -2.5052108e-08
        %v6468 = vmul.f32 %v6155, -2.5052108e-08
        %v6469 = vmul.f32 %v6156, -2.5052108e-08
        %v6470 = vmul.f32 %v6157, -2.5052108e-08
        %v6471 = vmul.f32 %v6158, -2.5052108e-08
        %v6472 = vmul.f32 %v6159, -2.5052108e-08
        %v6473 = vmul.f32 %v6160, -2.5052108e-08
        %v6474 = vmul.f32 %v6161, -2.5052108e-08
        %v6475 = vmul.f32 %v6162, -2.5052108e-08
        %v6476 = vadd.f32 %v6163, 2.7557319e-06
        %v6477 = vadd.f32 %v6164, 2.7557319e-06
        %v6478 = vadd.f32 %v6165, 2.7557319e-06
        %v6479 = vadd.f32 %v6166, 2.7557319e-06
        %v6480 = vadd.f32 %v6167, 2.7557319e-06
        %v6481 = vadd.f32 %v6168, 2.7557319e-06
        %v6482 = vadd.f32 %v6169, 2.7557319e-06
        %v6483 = vadd.f32 %v6170, 2.7557319e-06
        %v6484 = vadd.f32 %v6171, 2.7557319e-06
        %v6485 = vadd.f32 %v6172, 2.7557319e-06
        %v6486 = vadd.f32 %v6173, 2.7557319e-06
        %v6487 = vadd.f32 %v6174, 2.7557319e-06
        %v6488 = vadd.f32 %v6175, 2.7557319e-06
        %v6489 = vadd.f32 %v6176, 2.7557319e-06
        %v6490 = vadd.f32 %v6177, 2.7557319e-06
        %v6491 = vadd.f32 %v6178, 2.7557319e-06
        %v6492 = vadd.f32 %v6179, 2.7557319e-06
        %v6493 = vadd.f32 %v6180, 2.7557319e-06
        %v6494 = vadd.f32 %v6181, 2.7557319e-06
        %v6495 = vadd.f32 %v6182, 2.7557319e-06
        %v6496 = vadd.f32 %v6183, 2.7557319e-06
        %v6497 = vadd.f32 %v6184, 2.7557319e-06
        %v6498 = vadd.f32 %v6185, 2.7557319e-06
        %v6499 = vadd.f32 %v6186, 2.7557319e-06
        %v6500 = vadd.f32 %v6187, 2.7557319e-06
        %v6501 = vadd.f32 %v6188, 2.7557319e-06
        %v6502 = vadd.f32 %v6189, 2.7557319e-06
        %v6503 = vadd.f32 %v6190, 2.7557319e-06
        %v6504 = vadd.f32 %v6191, 2.7557319e-06
        %v6505 = vadd.f32 %v6192, 2.7557319e-06
        %v6506 = vadd.f32 %v6193, 2.7557319e-06
        %v6507 = vadd.f32 %v6194, 2.7557319e-06
        %v6508 = vadd.f32 %v6195, 2.7557319e-06
        %v6509 = vadd.f32 %v6196, 2.7557319e-06
        %v6510 = vadd.f32 %v6197, 2.7557319e-06
        %v6511 = vadd.f32 %v6198, 2.7557319e-06
        %v6512 = vadd.f32 %v6199, 2.7557319e-06
        %v6513 = vadd.f32 %v6200, 2.7557319e-06
        %v6514 = vadd.f32 %v6201, 2.7557319e-06
        %v6515 = vadd.f32 %v6202, 2.7557319e-06
        %v6516 = vadd.f32 %v6203, 2.7557319e-06
        %v6517 = vadd.f32 %v6204, 2.7557319e-06
        %v6518 = vadd.f32 %v6205, 2.7557319e-06
        %v6519 = vadd.f32 %v6206, 2.7557319e-06
        %v6520 = vadd.f32 %v6207, 2.7557319e-06
        %v6521 = vadd.f32 %v6208, 2.7557319e-06
        %v6522 = vadd.f32 %v6209, 2.7557319e-06
        %v6523 = vadd.f32 %v6210, 2.7557319e-06
        %v6524 = vadd.f32 %v6211, 2.7557319e-06
        %v6525 = vadd.f32 %v6212, 2.7557319e-06
        %v6526 = vadd.f32 %v6213, 2.7557319e-06
        %v6527 = vadd.f32 %v6214, 2.7557319e-06
        %v6528 = vadd.f32 %v6215, 2.7557319e-06
        %v6529 = vadd.f32 %v6216, 2.7557319e-06
        %v6530 = vadd.f32 %v6217, 2.7557319e-06
        %v6531 = vadd.f32 %v6218, 2.7557319e-06
        %v6532 = vadd.f32 %v6219, 2.7557319e-06
        %v6533 = vadd.f32 %v6220, 2.7557319e-06
        %v6534 = vadd.f32 %v6221, 2.7557319e-06
        %v6535 = vadd.f32 %v6222, 2.7557319e-06
        %v6536 = vadd.f32 %v6223, 2.7557319e-06
        %v6537 = vadd.f32 %v6224, 2.7557319e-06
        %v6538 = vadd.f32 %v6225, 2.7557319e-06
        %v6539 = vadd.f32 %v6226, 2.7557319e-06
        %v6540 = vadd.f32 %v6227, 2.7557319e-06
        %v6541 = vadd.f32 %v6228, 2.7557319e-06
        %v6542 = vadd.f32 %v6229, 2.7557319e-06
        %v6543 = vadd.f32 %v6230, 2.7557319e-06
        %v6544 = vadd.f32 %v6231, 2.7557319e-06
        %v6545 = vadd.f32 %v6232, 2.7557319e-06
        %v6546 = vadd.f32 %v6233, 2.7557319e-06
        %v6547 = vadd.f32 %v6234, 2.7557319e-06
        %v6548 = vadd.f32 %v6235, 2.7557319e-06
        %v6549 = vadd.f32 %v6236, 2.7557319e-06
        %v6550 = vadd.f32 %v6237, 2.7557319e-06
        %v6551 = vadd.f32 %v6238, 2.7557319e-06
        %v6552 = vadd.f32 %v6239, 2.7557319e-06
        %v6553 = vadd.f32 %v6240, 2.7557319e-06
        %v6554 = vadd.f32 %v6241, 2.7557319e-06
        %v6555 = vadd.f32 %v6242, 2.7557319e-06
        %v6556 = vadd.f32 %v6243, 2.7557319e-06
        %v6557 = vadd.f32 %v6244, 2.7557319e-06
        %v6558 = vadd.f32 %v6245, 2.7557319e-06
        %v6559 = vadd.f32 %v6246, 2.7557319e-06
        %v6560 = vadd.f32 %v6247, 2.7557319e-06
        %v6561 = vadd.f32 %v6248, 2.7557319e-06
        %v6562 = vadd.f32 %v6249, 2.7557319e-06
        %v6563 = vadd.f32 %v6250, 2.7557319e-06
        %v6564 = vadd.f32 %v6251, 2.7557319e-06
        %v6565 = vadd.f32 %v6252, 2.7557319e-06
        %v6566 = vadd.f32 %v6253, 2.7557319e-06
        %v6567 = vadd.f32 %v6254, 2.7557319e-06
        %v6568 = vadd.f32 %v6255, 2.7557319e-06
        %v6569 = vadd.f32 %v6256, 2.7557319e-06
        %v6570 = vadd.f32 %v6257, 2.7557319e-06
        %v6571 = vadd.f32 %v6258, 2.7557319e-06
        %v6572 = vadd.f32 %v6259, 2.7557319e-06
        %v6573 = vadd.f32 %v6260, 2.7557319e-06
        %v6574 = vadd.f32 %v6261, 2.7557319e-06
        %v6575 = vadd.f32 %v6262, 2.7557319e-06
        %v6576 = vadd.f32 %v6263, 2.7557319e-06
        %v6577 = vadd.f32 %v6264, 2.7557319e-06
        %v6578 = vadd.f32 %v6265, 2.7557319e-06
        %v6579 = vadd.f32 %v6266, 2.7557319e-06
        %v6580 = vadd.f32 %v6267, 2.7557319e-06
        %v6581 = vadd.f32 %v6268, 2.7557319e-06
        %v6582 = vadd.f32 %v6269, 2.7557319e-06
        %v6583 = vadd.f32 %v6270, 2.7557319e-06
        %v6584 = vadd.f32 %v6271, 2.7557319e-06
        %v6585 = vadd.f32 %v6272, 2.7557319e-06
        %v6586 = vadd.f32 %v6273, 2.7557319e-06
        %v6587 = vadd.f32 %v6274, 2.7557319e-06
        %v6588 = vadd.f32 %v6275, 2.7557319e-06
        %v6589 = vadd.f32 %v6276, 2.7557319e-06
        %v6590 = vadd.f32 %v6277, 2.7557319e-06
        %v6591 = vadd.f32 %v6278, 2.7557319e-06
        %v6592 = vadd.f32 %v6279, 2.7557319e-06
        %v6593 = vadd.f32 %v6280, 2.7557319e-06
        %v6594 = vadd.f32 %v6281, 2.7557319e-06
        %v6595 = vadd.f32 %v6282, 2.7557319e-06
        %v6596 = vadd.f32 %v6283, 2.7557319e-06
        %v6597 = vadd.f32 %v6284, 2.7557319e-06
        %v6598 = vadd.f32 %v6285, 2.7557319e-06
        %v6599 = vadd.f32 %v6286, 2.7557319e-06
        %v6600 = vadd.f32 %v6287, 2.7557319e-06
        %v6601 = vadd.f32 %v6288, 2.7557319e-06
        %v6602 = vadd.f32 %v6289, 2.7557319e-06
        %v6603 = vadd.f32 %v6290, 2.7557319e-06
        %v6604 = vadd.f32 %v6291, 2.7557319e-06
        %v6605 = vadd.f32 %v6292, 2.7557319e-06
        %v6606 = vadd.f32 %v6293, 2.7557319e-06
        %v6607 = vadd.f32 %v6294, 2.7557319e-06
        %v6608 = vadd.f32 %v6295, 2.7557319e-06
        %v6609 = vadd.f32 %v6296, 2.7557319e-06
        %v6610 = vadd.f32 %v6297, 2.7557319e-06
        %v6611 = vadd.f32 %v6298, 2.7557319e-06
        %v6612 = vadd.f32 %v6299, 2.7557319e-06
        %v6613 = vadd.f32 %v6300, 2.7557319e-06
        %v6614 = vadd.f32 %v6301, 2.7557319e-06
        %v6615 = vadd.f32 %v6302, 2.7557319e-06
        %v6616 = vadd.f32 %v6303, 2.7557319e-06
        %v6617 = vadd.f32 %v6304, 2.7557319e-06
        %v6618 = vadd.f32 %v6305, 2.7557319e-06
        %v6619 = vadd.f32 %v6306, 2.7557319e-06
        %v6620 = vadd.f32 %v6307, 2.7557319e-06
        %v6621 = vadd.f32 %v6308, 2.7557319e-06
        %v6622 = vadd.f32 %v6309, 2.7557319e-06
        %v6623 = vadd.f32 %v6310, 2.7557319e-06
        %v6624 = vadd.f32 %v6311, 2.7557319e-06
        %v6625 = vadd.f32 %v6312, 2.7557319e-06
        %v6626 = vadd.f32 %v6313, 2.7557319e-06
        %v6627 = vadd.f32 %v6314, 2.7557319e-06
        %v6628 = vadd.f32 %v6315, 2.7557319e-06
        %v6629 = vadd.f32 %v6316, 2.7557319e-06
        %v6630 = vadd.f32 %v6317, 2.7557319e-06
        %v6631 = vadd.f32 %v6318, 2.7557319e-06
        %v6632 = vadd.f32 %v6319, 2.7557319e-06
        %v6633 = vadd.f32 %v6320, 2.7557319e-06
        %v6634 = vadd.f32 %v6321, 2.7557319e-06
        %v6635 = vadd.f32 %v6322, 2.7557319e-06
        %v6636 = vadd.f32 %v6323, 2.7557319e-06
        %v6637 = vadd.f32 %v6324, 2.7557319e-06
        %v6638 = vadd.f32 %v6325, 2.7557319e-06
        %v6639 = vadd.f32 %v6326, 2.7557319e-06
        %v6640 = vadd.f32 %v6327, 2.7557319e-06
        %v6641 = vadd.f32 %v6328, 2.7557319e-06
        %v6642 = vadd.f32 %v6329, 2.7557319e-06
        %v6643 = vadd.f32 %v6330, 2.7557319e-06
        %v6644 = vadd.f32 %v6331, 2.7557319e-06
        %v6645 = vadd.f32 %v6332, 2.7557319e-06
        %v6646 = vadd.f32 %v6333, 2.7557319e-06
        %v6647 = vadd.f32 %v6334, 2.7557319e-06
        %v6648 = vadd.f32 %v6335, 2.7557319e-06
        %v6649 = vadd.f32 %v6336, 2.7557319e-06
        %v6650 = vadd.f32 %v6337, 2.7557319e-06
        %v6651 = vadd.f32 %v6338, 2.7557319e-06
        %v6652 = vadd.f32 %v6339, 2.7557319e-06
        %v6653 = vadd.f32 %v6340, 2.7557319e-06
        %v6654 = vadd.f32 %v6341, 2.7557319e-06
        %v6655 = vadd.f32 %v6342, 2.7557319e-06
        %v6656 = vadd.f32 %v6343, 2.7557319e-06
        %v6657 = vadd.f32 %v6344, 2.7557319e-06
        %v6658 = vadd.f32 %v6345, 2.7557319e-06
        %v6659 = vadd.f32 %v6346, 2.7557319e-06
        %v6660 = vadd.f32 %v6347, 2.7557319e-06
        %v6661 = vadd.f32 %v6348, 2.7557319e-06
        %v6662 = vadd.f32 %v6349, 2.7557319e-06
        %v6663 = vadd.f32 %v6350, 2.7557319e-06
        %v6664 = vadd.f32 %v6351, 2.7557319e-06
        %v6665 = vadd.f32 %v6352, 2.7557319e-06
        %v6666 = vadd.f32 %v6353, 2.7557319e-06
        %v6667 = vadd.f32 %v6354, 2.7557319e-06
        %v6668 = vadd.f32 %v6355, 2.7557319e-06
        %v6669 = vadd.f32 %v6356, 2.7557319e-06
        %v6670 = vadd.f32 %v6357, 2.7557319e-06
        %v6671 = vadd.f32 %v6358, 2.7557319e-06
        %v6672 = vadd.f32 %v6359, 2.7557319e-06
        %v6673 = vadd.f32 %v6360, 2.7557319e-06
        %v6674 = vadd.f32 %v6361, 2.7557319e-06
        %v6675 = vadd.f32 %v6362, 2.7557319e-06
        %v6676 = vadd.f32 %v6363, 2.7557319e-06
        %v6677 = vadd.f32 %v6364, 2.7557319e-06
        %v6678 = vadd.f32 %v6365, 2.7557319e-06
        %v6679 = vadd.f32 %v6366, 2.7557319e-06
        %v6680 = vadd.f32 %v6367, 2.7557319e-06
        %v6681 = vadd.f32 %v6368, 2.7557319e-06
        %v6682 = vadd.f32 %v6369, 2.7557319e-06
        %v6683 = vadd.f32 %v6370, 2.7557319e-06
        %v6684 = vadd.f32 %v6371, 2.7557319e-06
        %v6685 = vadd.f32 %v6372, 2.7557319e-06
        %v6686 = vadd.f32 %v6373, 2.7557319e-06
        %v6687 = vadd.f32 %v6374, 2.7557319e-06
        %v6688 = vadd.f32 %v6375, 2.7557319e-06
        %v6689 = vadd.f32 %v6376, 2.7557319e-06
        %v6690 = vadd.f32 %v6377, 2.7557319e-06
        %v6691 = vadd.f32 %v6378, 2.7557319e-06
        %v6692 = vadd.f32 %v6379, 2.7557319e-06
        %v6693 = vadd.f32 %v6380, 2.7557319e-06
        %v6694 = vadd.f32 %v6381, 2.7557319e-06
        %v6695 = vadd.f32 %v6382, 2.7557319e-06
        %v6696 = vadd.f32 %v6383, 2.7557319e-06
        %v6697 = vadd.f32 %v6384, 2.7557319e-06
        %v6698 = vadd.f32 %v6385, 2.7557319e-06
        %v6699 = vadd.f32 %v6386, 2.7557319e-06
        %v6700 = vadd.f32 %v6387, 2.7557319e-06
        %v6701 = vadd.f32 %v6388, 2.7557319e-06
        %v6702 = vadd.f32 %v6389, 2.7557319e-06
        %v6703 = vadd.f32 %v6390, 2.7557319e-06
        %v6704 = vadd.f32 %v6391, 2.7557319e-06
        %v6705 = vadd.f32 %v6392, 2.7557319e-06
        %v6706 = vadd.f32 %v6393, 2.7557319e-06
        %v6707 = vadd.f32 %v6394, 2.7557319e-06
        %v6708 = vadd.f32 %v6395, 2.7557319e-06
        %v6709 = vadd.f32 %v6396, 2.7557319e-06
        %v6710 = vadd.f32 %v6397, 2.7557319e-06
        %v6711 = vadd.f32 %v6398, 2.7557319e-06
        %v6712 = vadd.f32 %v6399, 2.7557319e-06
        %v6713 = vadd.f32 %v6400, 2.7557319e-06
        %v6714 = vadd.f32 %v6401, 2.7557319e-06
        %v6715 = vadd.f32 %v6402, 2.7557319e-06
        %v6716 = vadd.f32 %v6403, 2.7557319e-06
        %v6717 = vadd.f32 %v6404, 2.7557319e-06
        %v6718 = vadd.f32 %v6405, 2.7557319e-06
        %v6719 = vadd.f32 %v6406, 2.7557319e-06
        %v6720 = vadd.f32 %v6407, 2.7557319e-06
        %v6721 = vadd.f32 %v6408, 2.7557319e-06
        %v6722 = vadd.f32 %v6409, 2.7557319e-06
        %v6723 = vadd.f32 %v6410, 2.7557319e-06
        %v6724 = vadd.f32 %v6411, 2.7557319e-06
        %v6725 = vadd.f32 %v6412, 2.7557319e-06
        %v6726 = vadd.f32 %v6413, 2.7557319e-06
        %v6727 = vadd.f32 %v6414, 2.7557319e-06
        %v6728 = vadd.f32 %v6415, 2.7557319e-06
        %v6729 = vadd.f32 %v6416, 2.7557319e-06
        %v6730 = vadd.f32 %v6417, 2.7557319e-06
        %v6731 = vadd.f32 %v6418, 2.7557319e-06
        %v6732 = vadd.f32 %v6419, 2.7557319e-06
        %v6733 = vadd.f32 %v6420, 2.7557319e-06
        %v6734 = vadd.f32 %v6421, 2.7557319e-06
        %v6735 = vadd.f32 %v6422, 2.7557319e-06
        %v6736 = vadd.f32 %v6423, 2.7557319e-06
        %v6737 = vadd.f32 %v6424, 2.7557319e-06
        %v6738 = vadd.f32 %v6425, 2.7557319e-06
        %v6739 = vadd.f32 %v6426, 2.7557319e-06
        %v6740 = vadd.f32 %v6427, 2.7557319e-06
        %v6741 = vadd.f32 %v6428, 2.7557319e-06
        %v6742 = vadd.f32 %v6429, 2.7557319e-06
        %v6743 = vadd.f32 %v6430, 2.7557319e-06
        %v6744 = vadd.f32 %v6431, 2.7557319e-06
        %v6745 = vadd.f32 %v6432, 2.7557319e-06
        %v6746 = vadd.f32 %v6433, 2.7557319e-06
        %v6747 = vadd.f32 %v6434, 2.7557319e-06
        %v6748 = vadd.f32 %v6435, 2.7557319e-06
        %v6749 = vadd.f32 %v6436, 2.7557319e-06
        %v6750 = vadd.f32 %v6437, 2.7557319e-06
        %v6751 = vadd.f32 %v6438, 2.7557319e-06
        %v6752 = vadd.f32 %v6439, 2.7557319e-06
        %v6753 = vadd.f32 %v6440, 2.7557319e-06
        %v6754 = vadd.f32 %v6441, 2.7557319e-06
        %v6755 = vadd.f32 %v6442, 2.7557319e-06
        %v6756 = vadd.f32 %v6443, 2.7557319e-06
        %v6757 = vadd.f32 %v6444, 2.7557319e-06
        %v6758 = vadd.f32 %v6445, 2.7557319e-06
        %v6759 = vadd.f32 %v6446, 2.7557319e-06
        %v6760 = vadd.f32 %v6447, 2.7557319e-06
        %v6761 = vadd.f32 %v6448, 2.7557319e-06
        %v6762 = vadd.f32 %v6449, 2.7557319e-06
        %v6763 = vadd.f32 %v6450, 2.7557319e-06
        %v6764 = vadd.f32 %v6451, 2.7557319e-06
        %v6765 = vadd.f32 %v6452, 2.7557319e-06
        %v6766 = vadd.f32 %v6453, 2.7557319e-06
        %v6767 = vadd.f32 %v6454, 2.7557319e-06
        %v6768 = vadd.f32 %v6455, 2.7557319e-06
        %v6769 = vadd.f32 %v6456, 2.7557319e-06
        %v6770 = vadd.f32 %v6457, 2.7557319e-06
        %v6771 = vadd.f32 %v6458, 2.7557319e-06
        %v6772 = vadd.f32 %v6459, 2.7557319e-06
        %v6773 = vadd.f32 %v6460, 2.7557319e-06
        %v6774 = vadd.f32 %v6461, 2.7557319e-06
        %v6775 = vadd.f32 %v6462, 2.7557319e-06
        %v6776 = vadd.f32 %v6463, 2.7557319e-06
        %v6777 = vadd.f32 %v6464, 2.7557319e-06
        %v6778 = vadd.f32 %v6465, 2.7557319e-06
        %v6779 = vadd.f32 %v6466, 2.7557319e-06
        %v6780 = vadd.f32 %v6467, 2.7557319e-06
        %v6781 = vadd.f32 %v6468, 2.7557319e-06
        %v6782 = vadd.f32 %v6469, 2.7557319e-06
        %v6783 = vadd.f32 %v6470, 2.7557319e-06
        %v6784 = vadd.f32 %v6471, 2.7557319e-06
        %v6785 = vadd.f32 %v6472, 2.7557319e-06
        %v6786 = vadd.f32 %v6473, 2.7557319e-06
        %v6787 = vadd.f32 %v6474, 2.7557319e-06
        %v6788 = vadd.f32 %v6475, 2.7557319e-06
        %v6789 = vmul.f32 %v6476, %v5850
        %v6790 = vmul.f32 %v6477, %v5851
        %v6791 = vmul.f32 %v6478, %v5852
        %v6792 = vmul.f32 %v6479, %v5853
        %v6793 = vmul.f32 %v6480, %v5854
        %v6794 = vmul.f32 %v6481, %v5855
        %v6795 = vmul.f32 %v6482, %v5856
        %v6796 = vmul.f32 %v6483, %v5857
        %v6797 = vmul.f32 %v6484, %v5858
        %v6798 = vmul.f32 %v6485, %v5859
        %v6799 = vmul.f32 %v6486, %v5860
        %v6800 = vmul.f32 %v6487, %v5861
        %v6801 = vmul.f32 %v6488, %v5862
        %v6802 = vmul.f32 %v6489, %v5863
        %v6803 = vmul.f32 %v6490, %v5864
        %v6804 = vmul.f32 %v6491, %v5865
        %v6805 = vmul.f32 %v6492, %v5866
        %v6806 = vmul.f32 %v6493, %v5867
        %v6807 = vmul.f32 %v6494, %v5868
        %v6808 = vmul.f32 %v6495, %v5869
        %v6809 = vmul.f32 %v6496, %v5870
        %v6810 = vmul.f32 %v6497, %v5871
        %v6811 = vmul.f32 %v6498, %v5872
        %v6812 = vmul.f32 %v6499, %v5873
        %v6813 = vmul.f32 %v6500, %v5874
        %v6814 = vmul.f32 %v6501, %v5875
        %v6815 = vmul.f32 %v6502, %v5876
        %v6816 = vmul.f32 %v6503, %v5877
        %v6817 = vmul.f32 %v6504, %v5878
        %v6818 = vmul.f32 %v6505, %v5879
        %v6819 = vmul.f32 %v6506, %v5880
        %v6820 = vmul.f32 %v6507, %v5881
        %v6821 = vmul.f32 %v6508, %v5882
        %v6822 = vmul.f32 %v6509, %v5883
        %v6823 = vmul.f32 %v6510, %v5884
        %v6824 = vmul.f32 %v6511, %v5885
        %v6825 = vmul.f32 %v6512, %v5886
        %v6826 = vmul.f32 %v6513, %v5887
        %v6827 = vmul.f32 %v6514, %v5888
        %v6828 = vmul.f32 %v6515, %v5889
        %v6829 = vmul.f32 %v6516, %v5890
        %v6830 = vmul.f32 %v6517, %v5891
        %v6831 = vmul.f32 %v6518, %v5892
        %v6832 = vmul.f32 %v6519, %v5893
        %v6833 = vmul.f32 %v6520, %v5894
        %v6834 = vmul.f32 %v6521, %v5895
        %v6835 = vmul.f32 %v6522, %v5896
        %v6836 = vmul.f32 %v6523, %v5897
        %v6837 = vmul.f32 %v6524, %v5898
        %v6838 = vmul.f32 %v6525, %v5899
        %v6839 = vmul.f32 %v6526, %v5900
        %v6840 = vmul.f32 %v6527, %v5901
        %v6841 = vmul.f32 %v6528, %v5902
        %v6842 = vmul.f32 %v6529, %v5903
        %v6843 = vmul.f32 %v6530, %v5904
        %v6844 = vmul.f32 %v6531, %v5905
        %v6845 = vmul.f32 %v6532, %v5906
        %v6846 = vmul.f32 %v6533, %v5907
        %v6847 = vmul.f32 %v6534, %v5908
        %v6848 = vmul.f32 %v6535, %v5909
        %v6849 = vmul.f32 %v6536, %v5910
        %v6850 = vmul.f32 %v6537, %v5911
        %v6851 = vmul.f32 %v6538, %v5912
        %v6852 = vmul.f32 %v6539, %v5913
        %v6853 = vmul.f32 %v6540, %v5914
        %v6854 = vmul.f32 %v6541, %v5915
        %v6855 = vmul.f32 %v6542, %v5916
        %v6856 = vmul.f32 %v6543, %v5917
        %v6857 = vmul.f32 %v6544, %v5918
        %v6858 = vmul.f32 %v6545, %v5919
        %v6859 = vmul.f32 %v6546, %v5920
        %v6860 = vmul.f32 %v6547, %v5921
        %v6861 = vmul.f32 %v6548, %v5922
        %v6862 = vmul.f32 %v6549, %v5923
        %v6863 = vmul.f32 %v6550, %v5924
        %v6864 = vmul.f32 %v6551, %v5925
        %v6865 = vmul.f32 %v6552, %v5926
        %v6866 = vmul.f32 %v6553, %v5927
        %v6867 = vmul.f32 %v6554, %v5928
        %v6868 = vmul.f32 %v6555, %v5929
        %v6869 = vmul.f32 %v6556, %v5930
        %v6870 = vmul.f32 %v6557, %v5931
        %v6871 = vmul.f32 %v6558, %v5932
        %v6872 = vmul.f32 %v6559, %v5933
        %v6873 = vmul.f32 %v6560, %v5934
        %v6874 = vmul.f32 %v6561, %v5935
        %v6875 = vmul.f32 %v6562, %v5936
        %v6876 = vmul.f32 %v6563, %v5937
        %v6877 = vmul.f32 %v6564, %v5938
        %v6878 = vmul.f32 %v6565, %v5939
        %v6879 = vmul.f32 %v6566, %v5940
        %v6880 = vmul.f32 %v6567, %v5941
        %v6881 = vmul.f32 %v6568, %v5942
        %v6882 = vmul.f32 %v6569, %v5943
        %v6883 = vmul.f32 %v6570, %v5944
        %v6884 = vmul.f32 %v6571, %v5945
        %v6885 = vmul.f32 %v6572, %v5946
        %v6886 = vmul.f32 %v6573, %v5947
        %v6887 = vmul.f32 %v6574, %v5948
        %v6888 = vmul.f32 %v6575, %v5949
        %v6889 = vmul.f32 %v6576, %v5950
        %v6890 = vmul.f32 %v6577, %v5951
        %v6891 = vmul.f32 %v6578, %v5952
        %v6892 = vmul.f32 %v6579, %v5953
        %v6893 = vmul.f32 %v6580, %v5954
        %v6894 = vmul.f32 %v6581, %v5955
        %v6895 = vmul.f32 %v6582, %v5956
        %v6896 = vmul.f32 %v6583, %v5957
        %v6897 = vmul.f32 %v6584, %v5958
        %v6898 = vmul.f32 %v6585, %v5959
        %v6899 = vmul.f32 %v6586, %v5960
        %v6900 = vmul.f32 %v6587, %v5961
        %v6901 = vmul.f32 %v6588, %v5962
        %v6902 = vmul.f32 %v6589, %v5963
        %v6903 = vmul.f32 %v6590, %v5964
        %v6904 = vmul.f32 %v6591, %v5965
        %v6905 = vmul.f32 %v6592, %v5966
        %v6906 = vmul.f32 %v6593, %v5967
        %v6907 = vmul.f32 %v6594, %v5968
        %v6908 = vmul.f32 %v6595, %v5969
        %v6909 = vmul.f32 %v6596, %v5970
        %v6910 = vmul.f32 %v6597, %v5971
        %v6911 = vmul.f32 %v6598, %v5972
        %v6912 = vmul.f32 %v6599, %v5973
        %v6913 = vmul.f32 %v6600, %v5974
        %v6914 = vmul.f32 %v6601, %v5975
        %v6915 = vmul.f32 %v6602, %v5976
        %v6916 = vmul.f32 %v6603, %v5977
        %v6917 = vmul.f32 %v6604, %v5978
        %v6918 = vmul.f32 %v6605, %v5979
        %v6919 = vmul.f32 %v6606, %v5980
        %v6920 = vmul.f32 %v6607, %v5981
        %v6921 = vmul.f32 %v6608, %v5982
        %v6922 = vmul.f32 %v6609, %v5983
        %v6923 = vmul.f32 %v6610, %v5984
        %v6924 = vmul.f32 %v6611, %v5985
        %v6925 = vmul.f32 %v6612, %v5986
        %v6926 = vmul.f32 %v6613, %v5987
        %v6927 = vmul.f32 %v6614, %v5988
        %v6928 = vmul.f32 %v6615, %v5989
        %v6929 = vmul.f32 %v6616, %v5990
        %v6930 = vmul.f32 %v6617, %v5991
        %v6931 = vmul.f32 %v6618, %v5992
        %v6932 = vmul.f32 %v6619, %v5993
        %v6933 = vmul.f32 %v6620, %v5994
        %v6934 = vmul.f32 %v6621, %v5995
        %v6935 = vmul.f32 %v6622, %v5996
        %v6936 = vmul.f32 %v6623, %v5997
        %v6937 = vmul.f32 %v6624, %v5998
        %v6938 = vmul.f32 %v6625, %v5999
        %v6939 = vmul.f32 %v6626, %v6000
        %v6940 = vmul.f32 %v6627, %v6001
        %v6941 = vmul.f32 %v6628, %v6002
        %v6942 = vmul.f32 %v6629, %v6003
        %v6943 = vmul.f32 %v6630, %v6004
        %v6944 = vmul.f32 %v6631, %v6005
        %v6945 = vmul.f32 %v6632, %v6006
        %v6946 = vmul.f32 %v6633, %v6007
        %v6947 = vmul.f32 %v6634, %v6008
        %v6948 = vmul.f32 %v6635, %v6009
        %v6949 = vmul.f32 %v6636, %v6010
        %v6950 = vmul.f32 %v6637, %v6011
        %v6951 = vmul.f32 %v6638, %v6012
        %v6952 = vmul.f32 %v6639, %v6013
        %v6953 = vmul.f32 %v6640, %v6014
        %v6954 = vmul.f32 %v6641, %v6015
        %v6955 = vmul.f32 %v6642, %v6016
        %v6956 = vmul.f32 %v6643, %v6017
        %v6957 = vmul.f32 %v6644, %v6018
        %v6958 = vmul.f32 %v6645, %v6019
        %v6959 = vmul.f32 %v6646, %v6020
        %v6960 = vmul.f32 %v6647, %v6021
        %v6961 = vmul.f32 %v6648, %v6022
        %v6962 = vmul.f32 %v6649, %v6023
        %v6963 = vmul.f32 %v6650, %v6024
        %v6964 = vmul.f32 %v6651, %v6025
        %v6965 = vmul.f32 %v6652, %v6026
        %v6966 = vmul.f32 %v6653, %v6027
        %v6967 = vmul.f32 %v6654, %v6028
        %v6968 = vmul.f32 %v6655, %v6029
        %v6969 = vmul.f32 %v6656, %v6030
        %v6970 = vmul.f32 %v6657, %v6031
        %v6971 = vmul.f32 %v6658, %v6032
        %v6972 = vmul.f32 %v6659, %v6033
        %v6973 = vmul.f32 %v6660, %v6034
        %v6974 = vmul.f32 %v6661, %v6035
        %v6975 = vmul.f32 %v6662, %v6036
        %v6976 = vmul.f32 %v6663, %v6037
        %v6977 = vmul.f32 %v6664, %v6038
        %v6978 = vmul.f32 %v6665, %v6039
        %v6979 = vmul.f32 %v6666, %v6040
        %v6980 = vmul.f32 %v6667, %v6041
        %v6981 = vmul.f32 %v6668, %v6042
        %v6982 = vmul.f32 %v6669, %v6043
        %v6983 = vmul.f32 %v6670, %v6044
        %v6984 = vmul.f32 %v6671, %v6045
        %v6985 = vmul.f32 %v6672, %v6046
        %v6986 = vmul.f32 %v6673, %v6047
        %v6987 = vmul.f32 %v6674, %v6048
        %v6988 = vmul.f32 %v6675, %v6049
        %v6989 = vmul.f32 %v6676, %v6050
        %v6990 = vmul.f32 %v6677, %v6051
        %v6991 = vmul.f32 %v6678, %v6052
        %v6992 = vmul.f32 %v6679, %v6053
        %v6993 = vmul.f32 %v6680, %v6054
        %v6994 = vmul.f32 %v6681, %v6055
        %v6995 = vmul.f32 %v6682, %v6056
        %v6996 = vmul.f32 %v6683, %v6057
        %v6997 = vmul.f32 %v6684, %v6058
        %v6998 = vmul.f32 %v6685, %v6059
        %v6999 = vmul.f32 %v6686, %v6060
        %v7000 = vmul.f32 %v6687, %v6061
        %v7001 = vmul.f32 %v6688, %v6062
        %v7002 = vmul.f32 %v6689, %v6063
        %v7003 = vmul.f32 %v6690, %v6064
        %v7004 = vmul.f32 %v6691, %v6065
        %v7005 = vmul.f32 %v6692, %v6066
        %v7006 = vmul.f32 %v6693, %v6067
        %v7007 = vmul.f32 %v6694, %v6068
        %v7008 = vmul.f32 %v6695, %v6069
        %v7009 = vmul.f32 %v6696, %v6070
        %v7010 = vmul.f32 %v6697, %v6071
        %v7011 = vmul.f32 %v6698, %v6072
        %v7012 = vmul.f32 %v6699, %v6073
        %v7013 = vmul.f32 %v6700, %v6074
        %v7014 = vmul.f32 %v6701, %v6075
        %v7015 = vmul.f32 %v6702, %v6076
        %v7016 = vmul.f32 %v6703, %v6077
        %v7017 = vmul.f32 %v6704, %v6078
        %v7018 = vmul.f32 %v6705, %v6079
        %v7019 = vmul.f32 %v6706, %v6080
        %v7020 = vmul.f32 %v6707, %v6081
        %v7021 = vmul.f32 %v6708, %v6082
        %v7022 = vmul.f32 %v6709, %v6083
        %v7023 = vmul.f32 %v6710, %v6084
        %v7024 = vmul.f32 %v6711, %v6085
        %v7025 = vmul.f32 %v6712, %v6086
        %v7026 = vmul.f32 %v6713, %v6087
        %v7027 = vmul.f32 %v6714, %v6088
        %v7028 = vmul.f32 %v6715, %v6089
        %v7029 = vmul.f32 %v6716, %v6090
        %v7030 = vmul.f32 %v6717, %v6091
        %v7031 = vmul.f32 %v6718, %v6092
        %v7032 = vmul.f32 %v6719, %v6093
        %v7033 = vmul.f32 %v6720, %v6094
        %v7034 = vmul.f32 %v6721, %v6095
        %v7035 = vmul.f32 %v6722, %v6096
        %v7036 = vmul.f32 %v6723, %v6097
        %v7037 = vmul.f32 %v6724, %v6098
        %v7038 = vmul.f32 %v6725, %v6099
        %v7039 = vmul.f32 %v6726, %v6100
        %v7040 = vmul.f32 %v6727, %v6101
        %v7041 = vmul.f32 %v6728, %v6102
        %v7042 = vmul.f32 %v6729, %v6103
        %v7043 = vmul.f32 %v6730, %v6104
        %v7044 = vmul.f32 %v6731, %v6105
        %v7045 = vmul.f32 %v6732, %v6106
        %v7046 = vmul.f32 %v6733, %v6107
        %v7047 = vmul.f32 %v6734, %v6108
        %v7048 = vmul.f32 %v6735, %v6109
        %v7049 = vmul.f32 %v6736, %v6110
        %v7050 = vmul.f32 %v6737, %v6111
        %v7051 = vmul.f32 %v6738, %v6112
        %v7052 = vmul.f32 %v6739, %v6113
        %v7053 = vmul.f32 %v6740, %v6114
        %v7054 = vmul.f32 %v6741, %v6115
        %v7055 = vmul.f32 %v6742, %v6116
        %v7056 = vmul.f32 %v6743, %v6117
        %v7057 = vmul.f32 %v6744, %v6118
        %v7058 = vmul.f32 %v6745, %v6119
        %v7059 = vmul.f32 %v6746, %v6120
        %v7060 = vmul.f32 %v6747, %v6121
        %v7061 = vmul.f32 %v6748, %v6122
        %v7062 = vmul.f32 %v6749, %v6123
        %v7063 = vmul.f32 %v6750, %v6124
        %v7064 = vmul.f32 %v6751, %v6125
        %v7065 = vmul.f32 %v6752, %v6126
        %v7066 = vmul.f32 %v6753, %v6127
        %v7067 = vmul.f32 %v6754, %v6128
        %v7068 = vmul.f32 %v6755, %v6129
        %v7069 = vmul.f32 %v6756, %v6130
        %v7070 = vmul.f32 %v6757, %v6131
        %v7071 = vmul.f32 %v6758, %v6132
        %v7072 = vmul.f32 %v6759, %v6133
        %v7073 = vmul.f32 %v6760, %v6134
        %v7074 = vmul.f32 %v6761, %v6135
        %v7075 = vmul.f32 %v6762, %v6136
        %v7076 = vmul.f32 %v6763, %v6137
        %v7077 = vmul.f32 %v6764, %v6138
        %v7078 = vmul.f32 %v6765, %v6139
        %v7079 = vmul.f32 %v6766, %v6140
        %v7080 = vmul.f32 %v6767, %v6141
        %v7081 = vmul.f32 %v6768, %v6142
        %v7082 = vmul.f32 %v6769, %v6143
        %v7083 = vmul.f32 %v6770, %v6144
        %v7084 = vmul.f32 %v6771, %v6145
        %v7085 = vmul.f32 %v6772, %v6146
        %v7086 = vmul.f32 %v6773, %v6147
        %v7087 = vmul.f32 %v6774, %v6148
        %v7088 = vmul.f32 %v6775, %v6149
        %v7089 = vmul.f32 %v6776, %v6150
        %v7090 = vmul.f32 %v6777, %v6151
        %v7091 = vmul.f32 %v6778, %v6152
        %v7092 = vmul.f32 %v6779, %v6153
        %v7093 = vmul.f32 %v6780, %v6154
        %v7094 = vmul.f32 %v6781, %v6155
        %v7095 = vmul.f32 %v6782, %v6156
        %v7096 = vmul.f32 %v6783, %v6157
        %v7097 = vmul.f32 %v6784, %v6158
        %v7098 = vmul.f32 %v6785, %v6159
        %v7099 = vmul.f32 %v6786, %v6160
        %v7100 = vmul.f32 %v6787, %v6161
        %v7101 = vmul.f32 %v6788, %v6162
        %v7102 = vadd.f32 %v6789, -0.0001984127
        %v7103 = vadd.f32 %v6790, -0.0001984127
        %v7104 = vadd.f32 %v6791, -0.0001984127
        %v7105 = vadd.f32 %v6792, -0.0001984127
        %v7106 = vadd.f32 %v6793, -0.0001984127
        %v7107 = vadd.f32 %v6794, -0.0001984127
        %v7108 = vadd.f32 %v6795, -0.0001984127
        %v7109 = vadd.f32 %v6796, -0.0001984127
        %v7110 = vadd.f32 %v6797, -0.0001984127
        %v7111 = vadd.f32 %v6798, -0.0001984127
        %v7112 = vadd.f32 %v6799, -0.0001984127
        %v7113 = vadd.f32 %v6800, -0.0001984127
        %v7114 = vadd.f32 %v6801, -0.0001984127
        %v7115 = vadd.f32 %v6802, -0.0001984127
        %v7116 = vadd.f32 %v6803, -0.0001984127
        %v7117 = vadd.f32 %v6804, -0.0001984127
        %v7118 = vadd.f32 %v6805, -0.0001984127
        %v7119 = vadd.f32 %v6806, -0.0001984127
        %v7120 = vadd.f32 %v6807, -0.0001984127
        %v7121 = vadd.f32 %v6808, -0.0001984127
        %v7122 = vadd.f32 %v6809, -0.0001984127
        %v7123 = vadd.f32 %v6810, -0.0001984127
        %v7124 = vadd.f32 %v6811, -0.0001984127
        %v7125 = vadd.f32 %v6812, -0.0001984127
        %v7126 = vadd.f32 %v6813, -0.0001984127
        %v7127 = vadd.f32 %v6814, -0.0001984127
        %v7128 = vadd.f32 %v6815, -0.0001984127
        %v7129 = vadd.f32 %v6816, -0.0001984127
        %v7130 = vadd.f32 %v6817, -0.0001984127
        %v7131 = vadd.f32 %v6818, -0.0001984127
        %v7132 = vadd.f32 %v6819, -0.0001984127
        %v7133 = vadd.f32 %v6820, -0.0001984127
        %v7134 = vadd.f32 %v6821, -0.0001984127
        %v7135 = vadd.f32 %v6822, -0.0001984127
        %v7136 = vadd.f32 %v6823, -0.0001984127
        %v7137 = vadd.f32 %v6824, -0.0001984127
        %v7138 = vadd.f32 %v6825, -0.0001984127
        %v7139 = vadd.f32 %v6826, -0.0001984127
        %v7140 = vadd.f32 %v6827, -0.0001984127
        %v7141 = vadd.f32 %v6828, -0.0001984127
        %v7142 = vadd.f32 %v6829, -0.0001984127
        %v7143 = vadd.f32 %v6830, -0.0001984127
        %v7144 = vadd.f32 %v6831, -0.0001984127
        %v7145 = vadd.f32 %v6832, -0.0001984127
        %v7146 = vadd.f32 %v6833, -0.0001984127
        %v7147 = vadd.f32 %v6834, -0.0001984127
        %v7148 = vadd.f32 %v6835, -0.0001984127
        %v7149 = vadd.f32 %v6836, -0.0001984127
        %v7150 = vadd.f32 %v6837, -0.0001984127
        %v7151 = vadd.f32 %v6838, -0.0001984127
        %v7152 = vadd.f32 %v6839, -0.0001984127
        %v7153 = vadd.f32 %v6840, -0.0001984127
        %v7154 = vadd.f32 %v6841, -0.0001984127
        %v7155 = vadd.f32 %v6842, -0.0001984127
        %v7156 = vadd.f32 %v6843, -0.0001984127
        %v7157 = vadd.f32 %v6844, -0.0001984127
        %v7158 = vadd.f32 %v6845, -0.0001984127
        %v7159 = vadd.f32 %v6846, -0.0001984127
        %v7160 = vadd.f32 %v6847, -0.0001984127
        %v7161 = vadd.f32 %v6848, -0.0001984127
        %v7162 = vadd.f32 %v6849, -0.0001984127
        %v7163 = vadd.f32 %v6850, -0.0001984127
        %v7164 = vadd.f32 %v6851, -0.0001984127
        %v7165 = vadd.f32 %v6852, -0.0001984127
        %v7166 = vadd.f32 %v6853, -0.0001984127
        %v7167 = vadd.f32 %v6854, -0.0001984127
        %v7168 = vadd.f32 %v6855, -0.0001984127
        %v7169 = vadd.f32 %v6856, -0.0001984127
        %v7170 = vadd.f32 %v6857, -0.0001984127
        %v7171 = vadd.f32 %v6858, -0.0001984127
        %v7172 = vadd.f32 %v6859, -0.0001984127
        %v7173 = vadd.f32 %v6860, -0.0001984127
        %v7174 = vadd.f32 %v6861, -0.0001984127
        %v7175 = vadd.f32 %v6862, -0.0001984127
        %v7176 = vadd.f32 %v6863, -0.0001984127
        %v7177 = vadd.f32 %v6864, -0.0001984127
        %v7178 = vadd.f32 %v6865, -0.0001984127
        %v7179 = vadd.f32 %v6866, -0.0001984127
        %v7180 = vadd.f32 %v6867, -0.0001984127
        %v7181 = vadd.f32 %v6868, -0.0001984127
        %v7182 = vadd.f32 %v6869, -0.0001984127
        %v7183 = vadd.f32 %v6870, -0.0001984127
        %v7184 = vadd.f32 %v6871, -0.0001984127
        %v7185 = vadd.f32 %v6872, -0.0001984127
        %v7186 = vadd.f32 %v6873, -0.0001984127
        %v7187 = vadd.f32 %v6874, -0.0001984127
        %v7188 = vadd.f32 %v6875, -0.0001984127
        %v7189 = vadd.f32 %v6876, -0.0001984127
        %v7190 = vadd.f32 %v6877, -0.0001984127
        %v7191 = vadd.f32 %v6878, -0.0001984127
        %v7192 = vadd.f32 %v6879, -0.0001984127
        %v7193 = vadd.f32 %v6880, -0.0001984127
        %v7194 = vadd.f32 %v6881, -0.0001984127
        %v7195 = vadd.f32 %v6882, -0.0001984127
        %v7196 = vadd.f32 %v6883, -0.0001984127
        %v7197 = vadd.f32 %v6884, -0.0001984127
        %v7198 = vadd.f32 %v6885, -0.0001984127
        %v7199 = vadd.f32 %v6886, -0.0001984127
        %v7200 = vadd.f32 %v6887, -0.0001984127
        %v7201 = vadd.f32 %v6888, -0.0001984127
        %v7202 = vadd.f32 %v6889, -0.0001984127
        %v7203 = vadd.f32 %v6890, -0.0001984127
        %v7204 = vadd.f32 %v6891, -0.0001984127
        %v7205 = vadd.f32 %v6892, -0.0001984127
        %v7206 = vadd.f32 %v6893, -0.0001984127
        %v7207 = vadd.f32 %v6894, -0.0001984127
        %v7208 = vadd.f32 %v6895, -0.0001984127
        %v7209 = vadd.f32 %v6896, -0.0001984127
        %v7210 = vadd.f32 %v6897, -0.0001984127
        %v7211 = vadd.f32 %v6898, -0.0001984127
        %v7212 = vadd.f32 %v6899, -0.0001984127
        %v7213 = vadd.f32 %v6900, -0.0001984127
        %v7214 = vadd.f32 %v6901, -0.0001984127
        %v7215 = vadd.f32 %v6902, -0.0001984127
        %v7216 = vadd.f32 %v6903, -0.0001984127
        %v7217 = vadd.f32 %v6904, -0.0001984127
        %v7218 = vadd.f32 %v6905, -0.0001984127
        %v7219 = vadd.f32 %v6906, -0.0001984127
        %v7220 = vadd.f32 %v6907, -0.0001984127
        %v7221 = vadd.f32 %v6908, -0.0001984127
        %v7222 = vadd.f32 %v6909, -0.0001984127
        %v7223 = vadd.f32 %v6910, -0.0001984127
        %v7224 = vadd.f32 %v6911, -0.0001984127
        %v7225 = vadd.f32 %v6912, -0.0001984127
        %v7226 = vadd.f32 %v6913, -0.0001984127
        %v7227 = vadd.f32 %v6914, -0.0001984127
        %v7228 = vadd.f32 %v6915, -0.0001984127
        %v7229 = vadd.f32 %v6916, -0.0001984127
        %v7230 = vadd.f32 %v6917, -0.0001984127
        %v7231 = vadd.f32 %v6918, -0.0001984127
        %v7232 = vadd.f32 %v6919, -0.0001984127
        %v7233 = vadd.f32 %v6920, -0.0001984127
        %v7234 = vadd.f32 %v6921, -0.0001984127
        %v7235 = vadd.f32 %v6922, -0.0001984127
        %v7236 = vadd.f32 %v6923, -0.0001984127
        %v7237 = vadd.f32 %v6924, -0.0001984127
        %v7238 = vadd.f32 %v6925, -0.0001984127
        %v7239 = vadd.f32 %v6926, -0.0001984127
        %v7240 = vadd.f32 %v6927, -0.0001984127
        %v7241 = vadd.f32 %v6928, -0.0001984127
        %v7242 = vadd.f32 %v6929, -0.0001984127
        %v7243 = vadd.f32 %v6930, -0.0001984127
        %v7244 = vadd.f32 %v6931, -0.0001984127
        %v7245 = vadd.f32 %v6932, -0.0001984127
        %v7246 = vadd.f32 %v6933, -0.0001984127
        %v7247 = vadd.f32 %v6934, -0.0001984127
        %v7248 = vadd.f32 %v6935, -0.0001984127
        %v7249 = vadd.f32 %v6936, -0.0001984127
        %v7250 = vadd.f32 %v6937, -0.0001984127
        %v7251 = vadd.f32 %v6938, -0.0001984127
        %v7252 = vadd.f32 %v6939, -0.0001984127
        %v7253 = vadd.f32 %v6940, -0.0001984127
        %v7254 = vadd.f32 %v6941, -0.0001984127
        %v7255 = vadd.f32 %v6942, -0.0001984127
        %v7256 = vadd.f32 %v6943, -0.0001984127
        %v7257 = vadd.f32 %v6944, -0.0001984127
        %v7258 = vadd.f32 %v6945, -0.0001984127
        %v7259 = vadd.f32 %v6946, -0.0001984127
        %v7260 = vadd.f32 %v6947, -0.0001984127
        %v7261 = vadd.f32 %v6948, -0.0001984127
        %v7262 = vadd.f32 %v6949, -0.0001984127
        %v7263 = vadd.f32 %v6950, -0.0001984127
        %v7264 = vadd.f32 %v6951, -0.0001984127
        %v7265 = vadd.f32 %v6952, -0.0001984127
        %v7266 = vadd.f32 %v6953, -0.0001984127
        %v7267 = vadd.f32 %v6954, -0.0001984127
        %v7268 = vadd.f32 %v6955, -0.0001984127
        %v7269 = vadd.f32 %v6956, -0.0001984127
        %v7270 = vadd.f32 %v6957, -0.0001984127
        %v7271 = vadd.f32 %v6958, -0.0001984127
        %v7272 = vadd.f32 %v6959, -0.0001984127
        %v7273 = vadd.f32 %v6960, -0.0001984127
        %v7274 = vadd.f32 %v6961, -0.0001984127
        %v7275 = vadd.f32 %v6962, -0.0001984127
        %v7276 = vadd.f32 %v6963, -0.0001984127
        %v7277 = vadd.f32 %v6964, -0.0001984127
        %v7278 = vadd.f32 %v6965, -0.0001984127
        %v7279 = vadd.f32 %v6966, -0.0001984127
        %v7280 = vadd.f32 %v6967, -0.0001984127
        %v7281 = vadd.f32 %v6968, -0.0001984127
        %v7282 = vadd.f32 %v6969, -0.0001984127
        %v7283 = vadd.f32 %v6970, -0.0001984127
        %v7284 = vadd.f32 %v6971, -0.0001984127
        %v7285 = vadd.f32 %v6972, -0.0001984127
        %v7286 = vadd.f32 %v6973, -0.0001984127
        %v7287 = vadd.f32 %v6974, -0.0001984127
        %v7288 = vadd.f32 %v6975, -0.0001984127
        %v7289 = vadd.f32 %v6976, -0.0001984127
        %v7290 = vadd.f32 %v6977, -0.0001984127
        %v7291 = vadd.f32 %v6978, -0.0001984127
        %v7292 = vadd.f32 %v6979, -0.0001984127
        %v7293 = vadd.f32 %v6980, -0.0001984127
        %v7294 = vadd.f32 %v6981, -0.0001984127
        %v7295 = vadd.f32 %v6982, -0.0001984127
        %v7296 = vadd.f32 %v6983, -0.0001984127
        %v7297 = vadd.f32 %v6984, -0.0001984127
        %v7298 = vadd.f32 %v6985, -0.0001984127
        %v7299 = vadd.f32 %v6986, -0.0001984127
        %v7300 = vadd.f32 %v6987, -0.0001984127
        %v7301 = vadd.f32 %v6988, -0.0001984127
        %v7302 = vadd.f32 %v6989, -0.0001984127
        %v7303 = vadd.f32 %v6990, -0.0001984127
        %v7304 = vadd.f32 %v6991, -0.0001984127
        %v7305 = vadd.f32 %v6992, -0.0001984127
        %v7306 = vadd.f32 %v6993, -0.0001984127
        %v7307 = vadd.f32 %v6994, -0.0001984127
        %v7308 = vadd.f32 %v6995, -0.0001984127
        %v7309 = vadd.f32 %v6996, -0.0001984127
        %v7310 = vadd.f32 %v6997, -0.0001984127
        %v7311 = vadd.f32 %v6998, -0.0001984127
        %v7312 = vadd.f32 %v6999, -0.0001984127
        %v7313 = vadd.f32 %v7000, -0.0001984127
        %v7314 = vadd.f32 %v7001, -0.0001984127
        %v7315 = vadd.f32 %v7002, -0.0001984127
        %v7316 = vadd.f32 %v7003, -0.0001984127
        %v7317 = vadd.f32 %v7004, -0.0001984127
        %v7318 = vadd.f32 %v7005, -0.0001984127
        %v7319 = vadd.f32 %v7006, -0.0001984127
        %v7320 = vadd.f32 %v7007, -0.0001984127
        %v7321 = vadd.f32 %v7008, -0.0001984127
        %v7322 = vadd.f32 %v7009, -0.0001984127
        %v7323 = vadd.f32 %v7010, -0.0001984127
        %v7324 = vadd.f32 %v7011, -0.0001984127
        %v7325 = vadd.f32 %v7012, -0.0001984127
        %v7326 = vadd.f32 %v7013, -0.0001984127
        %v7327 = vadd.f32 %v7014, -0.0001984127
        %v7328 = vadd.f32 %v7015, -0.0001984127
        %v7329 = vadd.f32 %v7016, -0.0001984127
        %v7330 = vadd.f32 %v7017, -0.0001984127
        %v7331 = vadd.f32 %v7018, -0.0001984127
        %v7332 = vadd.f32 %v7019, -0.0001984127
        %v7333 = vadd.f32 %v7020, -0.0001984127
        %v7334 = vadd.f32 %v7021, -0.0001984127
        %v7335 = vadd.f32 %v7022, -0.0001984127
        %v7336 = vadd.f32 %v7023, -0.0001984127
        %v7337 = vadd.f32 %v7024, -0.0001984127
        %v7338 = vadd.f32 %v7025, -0.0001984127
        %v7339 = vadd.f32 %v7026, -0.0001984127
        %v7340 = vadd.f32 %v7027, -0.0001984127
        %v7341 = vadd.f32 %v7028, -0.0001984127
        %v7342 = vadd.f32 %v7029, -0.0001984127
        %v7343 = vadd.f32 %v7030, -0.0001984127
        %v7344 = vadd.f32 %v7031, -0.0001984127
        %v7345 = vadd.f32 %v7032, -0.0001984127
        %v7346 = vadd.f32 %v7033, -0.0001984127
        %v7347 = vadd.f32 %v7034, -0.0001984127
        %v7348 = vadd.f32 %v7035, -0.0001984127
        %v7349 = vadd.f32 %v7036, -0.0001984127
        %v7350 = vadd.f32 %v7037, -0.0001984127
        %v7351 = vadd.f32 %v7038, -0.0001984127
        %v7352 = vadd.f32 %v7039, -0.0001984127
        %v7353 = vadd.f32 %v7040, -0.0001984127
        %v7354 = vadd.f32 %v7041, -0.0001984127
        %v7355 = vadd.f32 %v7042, -0.0001984127
        %v7356 = vadd.f32 %v7043, -0.0001984127
        %v7357 = vadd.f32 %v7044, -0.0001984127
        %v7358 = vadd.f32 %v7045, -0.0001984127
        %v7359 = vadd.f32 %v7046, -0.0001984127
        %v7360 = vadd.f32 %v7047, -0.0001984127
        %v7361 = vadd.f32 %v7048, -0.0001984127
        %v7362 = vadd.f32 %v7049, -0.0001984127
        %v7363 = vadd.f32 %v7050, -0.0001984127
        %v7364 = vadd.f32 %v7051, -0.0001984127
        %v7365 = vadd.f32 %v7052, -0.0001984127
        %v7366 = vadd.f32 %v7053, -0.0001984127
        %v7367 = vadd.f32 %v7054, -0.0001984127
        %v7368 = vadd.f32 %v7055, -0.0001984127
        %v7369 = vadd.f32 %v7056, -0.0001984127
        %v7370 = vadd.f32 %v7057, -0.0001984127
        %v7371 = vadd.f32 %v7058, -0.0001984127
        %v7372 = vadd.f32 %v7059, -0.0001984127
        %v7373 = vadd.f32 %v7060, -0.0001984127
        %v7374 = vadd.f32 %v7061, -0.0001984127
        %v7375 = vadd.f32 %v7062, -0.0001984127
        %v7376 = vadd.f32 %v7063, -0.0001984127
        %v7377 = vadd.f32 %v7064, -0.0001984127
        %v7378 = vadd.f32 %v7065, -0.0001984127
        %v7379 = vadd.f32 %v7066, -0.0001984127
        %v7380 = vadd.f32 %v7067, -0.0001984127
        %v7381 = vadd.f32 %v7068, -0.0001984127
        %v7382 = vadd.f32 %v7069, -0.0001984127
        %v7383 = vadd.f32 %v7070, -0.0001984127
        %v7384 = vadd.f32 %v7071, -0.0001984127
        %v7385 = vadd.f32 %v7072, -0.0001984127
        %v7386 = vadd.f32 %v7073, -0.0001984127
        %v7387 = vadd.f32 %v7074, -0.0001984127
        %v7388 = vadd.f32 %v7075, -0.0001984127
        %v7389 = vadd.f32 %v7076, -0.0001984127
        %v7390 = vadd.f32 %v7077, -0.0001984127
        %v7391 = vadd.f32 %v7078, -0.0001984127
        %v7392 = vadd.f32 %v7079, -0.0001984127
        %v7393 = vadd.f32 %v7080, -0.0001984127
        %v7394 = vadd.f32 %v7081, -0.0001984127
        %v7395 = vadd.f32 %v7082, -0.0001984127
        %v7396 = vadd.f32 %v7083, -0.0001984127
        %v7397 = vadd.f32 %v7084, -0.0001984127
        %v7398 = vadd.f32 %v7085, -0.0001984127
        %v7399 = vadd.f32 %v7086, -0.0001984127
        %v7400 = vadd.f32 %v7087, -0.0001984127
        %v7401 = vadd.f32 %v7088, -0.0001984127
        %v7402 = vadd.f32 %v7089, -0.0001984127
        %v7403 = vadd.f32 %v7090, -0.0001984127
        %v7404 = vadd.f32 %v7091, -0.0001984127
        %v7405 = vadd.f32 %v7092, -0.0001984127
        %v7406 = vadd.f32 %v7093, -0.0001984127
        %v7407 = vadd.f32 %v7094, -0.0001984127
        %v7408 = vadd.f32 %v7095, -0.0001984127
        %v7409 = vadd.f32 %v7096, -0.0001984127
        %v7410 = vadd.f32 %v7097, -0.0001984127
        %v7411 = vadd.f32 %v7098, -0.0001984127
        %v7412 = vadd.f32 %v7099, -0.0001984127
        %v7413 = vadd.f32 %v7100, -0.0001984127
        %v7414 = vadd.f32 %v7101, -0.0001984127
        %v7415 = vmul.f32 %v7102, %v5850
        %v7416 = vmul.f32 %v7103, %v5851
        %v7417 = vmul.f32 %v7104, %v5852
        %v7418 = vmul.f32 %v7105, %v5853
        %v7419 = vmul.f32 %v7106, %v5854
        %v7420 = vmul.f32 %v7107, %v5855
        %v7421 = vmul.f32 %v7108, %v5856
        %v7422 = vmul.f32 %v7109, %v5857
        %v7423 = vmul.f32 %v7110, %v5858
        %v7424 = vmul.f32 %v7111, %v5859
        %v7425 = vmul.f32 %v7112, %v5860
        %v7426 = vmul.f32 %v7113, %v5861
        %v7427 = vmul.f32 %v7114, %v5862
        %v7428 = vmul.f32 %v7115, %v5863
        %v7429 = vmul.f32 %v7116, %v5864
        %v7430 = vmul.f32 %v7117, %v5865
        %v7431 = vmul.f32 %v7118, %v5866
        %v7432 = vmul.f32 %v7119, %v5867
        %v7433 = vmul.f32 %v7120, %v5868
        %v7434 = vmul.f32 %v7121, %v5869
        %v7435 = vmul.f32 %v7122, %v5870
        %v7436 = vmul.f32 %v7123, %v5871
        %v7437 = vmul.f32 %v7124, %v5872
        %v7438 = vmul.f32 %v7125, %v5873
        %v7439 = vmul.f32 %v7126, %v5874
        %v7440 = vmul.f32 %v7127, %v5875
        %v7441 = vmul.f32 %v7128, %v5876
        %v7442 = vmul.f32 %v7129, %v5877
        %v7443 = vmul.f32 %v7130, %v5878
        %v7444 = vmul.f32 %v7131, %v5879
        %v7445 = vmul.f32 %v7132, %v5880
        %v7446 = vmul.f32 %v7133, %v5881
        %v7447 = vmul.f32 %v7134, %v5882
        %v7448 = vmul.f32 %v7135, %v5883
        %v7449 = vmul.f32 %v7136, %v5884
        %v7450 = vmul.f32 %v7137, %v5885
        %v7451 = vmul.f32 %v7138, %v5886
        %v7452 = vmul.f32 %v7139, %v5887
        %v7453 = vmul.f32 %v7140, %v5888
        %v7454 = vmul.f32 %v7141, %v5889
        %v7455 = vmul.f32 %v7142, %v5890
        %v7456 = vmul.f32 %v7143, %v5891
        %v7457 = vmul.f32 %v7144, %v5892
        %v7458 = vmul.f32 %v7145, %v5893
        %v7459 = vmul.f32 %v7146, %v5894
        %v7460 = vmul.f32 %v7147, %v5895
        %v7461 = vmul.f32 %v7148, %v5896
        %v7462 = vmul.f32 %v7149, %v5897
        %v7463 = vmul.f32 %v7150, %v5898
        %v7464 = vmul.f32 %v7151, %v5899
        %v7465 = vmul.f32 %v7152, %v5900
        %v7466 = vmul.f32 %v7153, %v5901
        %v7467 = vmul.f32 %v7154, %v5902
        %v7468 = vmul.f32 %v7155, %v5903
        %v7469 = vmul.f32 %v7156, %v5904
        %v7470 = vmul.f32 %v7157, %v5905
        %v7471 = vmul.f32 %v7158, %v5906
        %v7472 = vmul.f32 %v7159, %v5907
        %v7473 = vmul.f32 %v7160, %v5908
        %v7474 = vmul.f32 %v7161, %v5909
        %v7475 = vmul.f32 %v7162, %v5910
        %v7476 = vmul.f32 %v7163, %v5911
        %v7477 = vmul.f32 %v7164, %v5912
        %v7478 = vmul.f32 %v7165, %v5913
        %v7479 = vmul.f32 %v7166, %v5914
        %v7480 = vmul.f32 %v7167, %v5915
        %v7481 = vmul.f32 %v7168, %v5916
        %v7482 = vmul.f32 %v7169, %v5917
        %v7483 = vmul.f32 %v7170, %v5918
        %v7484 = vmul.f32 %v7171, %v5919
        %v7485 = vmul.f32 %v7172, %v5920
        %v7486 = vmul.f32 %v7173, %v5921
        %v7487 = vmul.f32 %v7174, %v5922
        %v7488 = vmul.f32 %v7175, %v5923
        %v7489 = vmul.f32 %v7176, %v5924
        %v7490 = vmul.f32 %v7177, %v5925
        %v7491 = vmul.f32 %v7178, %v5926
        %v7492 = vmul.f32 %v7179, %v5927
        %v7493 = vmul.f32 %v7180, %v5928
        %v7494 = vmul.f32 %v7181, %v5929
        %v7495 = vmul.f32 %v7182, %v5930
        %v7496 = vmul.f32 %v7183, %v5931
        %v7497 = vmul.f32 %v7184, %v5932
        %v7498 = vmul.f32 %v7185, %v5933
        %v7499 = vmul.f32 %v7186, %v5934
        %v7500 = vmul.f32 %v7187, %v5935
        %v7501 = vmul.f32 %v7188, %v5936
        %v7502 = vmul.f32 %v7189, %v5937
        %v7503 = vmul.f32 %v7190, %v5938
        %v7504 = vmul.f32 %v7191, %v5939
        %v7505 = vmul.f32 %v7192, %v5940
        %v7506 = vmul.f32 %v7193, %v5941
        %v7507 = vmul.f32 %v7194, %v5942
        %v7508 = vmul.f32 %v7195, %v5943
        %v7509 = vmul.f32 %v7196, %v5944
        %v7510 = vmul.f32 %v7197, %v5945
        %v7511 = vmul.f32 %v7198, %v5946
        %v7512 = vmul.f32 %v7199, %v5947
        %v7513 = vmul.f32 %v7200, %v5948
        %v7514 = vmul.f32 %v7201, %v5949
        %v7515 = vmul.f32 %v7202, %v5950
        %v7516 = vmul.f32 %v7203, %v5951
        %v7517 = vmul.f32 %v7204, %v5952
        %v7518 = vmul.f32 %v7205, %v5953
        %v7519 = vmul.f32 %v7206, %v5954
        %v7520 = vmul.f32 %v7207, %v5955
        %v7521 = vmul.f32 %v7208, %v5956
        %v7522 = vmul.f32 %v7209, %v5957
        %v7523 = vmul.f32 %v7210, %v5958
        %v7524 = vmul.f32 %v7211, %v5959
        %v7525 = vmul.f32 %v7212, %v5960
        %v7526 = vmul.f32 %v7213, %v5961
        %v7527 = vmul.f32 %v7214, %v5962
        %v7528 = vmul.f32 %v7215, %v5963
        %v7529 = vmul.f32 %v7216, %v5964
        %v7530 = vmul.f32 %v7217, %v5965
        %v7531 = vmul.f32 %v7218, %v5966
        %v7532 = vmul.f32 %v7219, %v5967
        %v7533 = vmul.f32 %v7220, %v5968
        %v7534 = vmul.f32 %v7221, %v5969
        %v7535 = vmul.f32 %v7222, %v5970
        %v7536 = vmul.f32 %v7223, %v5971
        %v7537 = vmul.f32 %v7224, %v5972
        %v7538 = vmul.f32 %v7225, %v5973
        %v7539 = vmul.f32 %v7226, %v5974
        %v7540 = vmul.f32 %v7227, %v5975
        %v7541 = vmul.f32 %v7228, %v5976
        %v7542 = vmul.f32 %v7229, %v5977
        %v7543 = vmul.f32 %v7230, %v5978
        %v7544 = vmul.f32 %v7231, %v5979
        %v7545 = vmul.f32 %v7232, %v5980
        %v7546 = vmul.f32 %v7233, %v5981
        %v7547 = vmul.f32 %v7234, %v5982
        %v7548 = vmul.f32 %v7235, %v5983
        %v7549 = vmul.f32 %v7236, %v5984
        %v7550 = vmul.f32 %v7237, %v5985
        %v7551 = vmul.f32 %v7238, %v5986
        %v7552 = vmul.f32 %v7239, %v5987
        %v7553 = vmul.f32 %v7240, %v5988
        %v7554 = vmul.f32 %v7241, %v5989
        %v7555 = vmul.f32 %v7242, %v5990
        %v7556 = vmul.f32 %v7243, %v5991
        %v7557 = vmul.f32 %v7244, %v5992
        %v7558 = vmul.f32 %v7245, %v5993
        %v7559 = vmul.f32 %v7246, %v5994
        %v7560 = vmul.f32 %v7247, %v5995
        %v7561 = vmul.f32 %v7248, %v5996
        %v7562 = vmul.f32 %v7249, %v5997
        %v7563 = vmul.f32 %v7250, %v5998
        %v7564 = vmul.f32 %v7251, %v5999
        %v7565 = vmul.f32 %v7252, %v6000
        %v7566 = vmul.f32 %v7253, %v6001
        %v7567 = vmul.f32 %v7254, %v6002
        %v7568 = vmul.f32 %v7255, %v6003
        %v7569 = vmul.f32 %v7256, %v6004
        %v7570 = vmul.f32 %v7257, %v6005
        %v7571 = vmul.f32 %v7258, %v6006
        %v7572 = vmul.f32 %v7259, %v6007
        %v7573 = vmul.f32 %v7260, %v6008
        %v7574 = vmul.f32 %v7261, %v6009
        %v7575 = vmul.f32 %v7262, %v6010
        %v7576 = vmul.f32 %v7263, %v6011
        %v7577 = vmul.f32 %v7264, %v6012
        %v7578 = vmul.f32 %v7265, %v6013
        %v7579 = vmul.f32 %v7266, %v6014
        %v7580 = vmul.f32 %v7267, %v6015
        %v7581 = vmul.f32 %v7268, %v6016
        %v7582 = vmul.f32 %v7269, %v6017
        %v7583 = vmul.f32 %v7270, %v6018
        %v7584 = vmul.f32 %v7271, %v6019
        %v7585 = vmul.f32 %v7272, %v6020
        %v7586 = vmul.f32 %v7273, %v6021
        %v7587 = vmul.f32 %v7274, %v6022
        %v7588 = vmul.f32 %v7275, %v6023
        %v7589 = vmul.f32 %v7276, %v6024
        %v7590 = vmul.f32 %v7277, %v6025
        %v7591 = vmul.f32 %v7278, %v6026
        %v7592 = vmul.f32 %v7279, %v6027
        %v7593 = vmul.f32 %v7280, %v6028
        %v7594 = vmul.f32 %v7281, %v6029
        %v7595 = vmul.f32 %v7282, %v6030
        %v7596 = vmul.f32 %v7283, %v6031
        %v7597 = vmul.f32 %v7284, %v6032
        %v7598 = vmul.f32 %v7285, %v6033
        %v7599 = vmul.f32 %v7286, %v6034
        %v7600 = vmul.f32 %v7287, %v6035
        %v7601 = vmul.f32 %v7288, %v6036
        %v7602 = vmul.f32 %v7289, %v6037
        %v7603 = vmul.f32 %v7290, %v6038
        %v7604 = vmul.f32 %v7291, %v6039
        %v7605 = vmul.f32 %v7292, %v6040
        %v7606 = vmul.f32 %v7293, %v6041
        %v7607 = vmul.f32 %v7294, %v6042
        %v7608 = vmul.f32 %v7295, %v6043
        %v7609 = vmul.f32 %v7296, %v6044
        %v7610 = vmul.f32 %v7297, %v6045
        %v7611 = vmul.f32 %v7298, %v6046
        %v7612 = vmul.f32 %v7299, %v6047
        %v7613 = vmul.f32 %v7300, %v6048
        %v7614 = vmul.f32 %v7301, %v6049
        %v7615 = vmul.f32 %v7302, %v6050
        %v7616 = vmul.f32 %v7303, %v6051
        %v7617 = vmul.f32 %v7304, %v6052
        %v7618 = vmul.f32 %v7305, %v6053
        %v7619 = vmul.f32 %v7306, %v6054
        %v7620 = vmul.f32 %v7307, %v6055
        %v7621 = vmul.f32 %v7308, %v6056
        %v7622 = vmul.f32 %v7309, %v6057
        %v7623 = vmul.f32 %v7310, %v6058
        %v7624 = vmul.f32 %v7311, %v6059
        %v7625 = vmul.f32 %v7312, %v6060
        %v7626 = vmul.f32 %v7313, %v6061
        %v7627 = vmul.f32 %v7314, %v6062
        %v7628 = vmul.f32 %v7315, %v6063
        %v7629 = vmul.f32 %v7316, %v6064
        %v7630 = vmul.f32 %v7317, %v6065
        %v7631 = vmul.f32 %v7318, %v6066
        %v7632 = vmul.f32 %v7319, %v6067
        %v7633 = vmul.f32 %v7320, %v6068
        %v7634 = vmul.f32 %v7321, %v6069
        %v7635 = vmul.f32 %v7322, %v6070
        %v7636 = vmul.f32 %v7323, %v6071
        %v7637 = vmul.f32 %v7324, %v6072
        %v7638 = vmul.f32 %v7325, %v6073
        %v7639 = vmul.f32 %v7326, %v6074
        %v7640 = vmul.f32 %v7327, %v6075
        %v7641 = vmul.f32 %v7328, %v6076
        %v7642 = vmul.f32 %v7329, %v6077
        %v7643 = vmul.f32 %v7330, %v6078
        %v7644 = vmul.f32 %v7331, %v6079
        %v7645 = vmul.f32 %v7332, %v6080
        %v7646 = vmul.f32 %v7333, %v6081
        %v7647 = vmul.f32 %v7334, %v6082
        %v7648 = vmul.f32 %v7335, %v6083
        %v7649 = vmul.f32 %v7336, %v6084
        %v7650 = vmul.f32 %v7337, %v6085
        %v7651 = vmul.f32 %v7338, %v6086
        %v7652 = vmul.f32 %v7339, %v6087
        %v7653 = vmul.f32 %v7340, %v6088
        %v7654 = vmul.f32 %v7341, %v6089
        %v7655 = vmul.f32 %v7342, %v6090
        %v7656 = vmul.f32 %v7343, %v6091
        %v7657 = vmul.f32 %v7344, %v6092
        %v7658 = vmul.f32 %v7345, %v6093
        %v7659 = vmul.f32 %v7346, %v6094
        %v7660 = vmul.f32 %v7347, %v6095
        %v7661 = vmul.f32 %v7348, %v6096
        %v7662 = vmul.f32 %v7349, %v6097
        %v7663 = vmul.f32 %v7350, %v6098
        %v7664 = vmul.f32 %v7351, %v6099
        %v7665 = vmul.f32 %v7352, %v6100
        %v7666 = vmul.f32 %v7353, %v6101
        %v7667 = vmul.f32 %v7354, %v6102
        %v7668 = vmul.f32 %v7355, %v6103
        %v7669 = vmul.f32 %v7356, %v6104
        %v7670 = vmul.f32 %v7357, %v6105
        %v7671 = vmul.f32 %v7358, %v6106
        %v7672 = vmul.f32 %v7359, %v6107
        %v7673 = vmul.f32 %v7360, %v6108
        %v7674 = vmul.f32 %v7361, %v6109
        %v7675 = vmul.f32 %v7362, %v6110
        %v7676 = vmul.f32 %v7363, %v6111
        %v7677 = vmul.f32 %v7364, %v6112
        %v7678 = vmul.f32 %v7365, %v6113
        %v7679 = vmul.f32 %v7366, %v6114
        %v7680 = vmul.f32 %v7367, %v6115
        %v7681 = vmul.f32 %v7368, %v6116
        %v7682 = vmul.f32 %v7369, %v6117
        %v7683 = vmul.f32 %v7370, %v6118
        %v7684 = vmul.f32 %v7371, %v6119
        %v7685 = vmul.f32 %v7372, %v6120
        %v7686 = vmul.f32 %v7373, %v6121
        %v7687 = vmul.f32 %v7374, %v6122
        %v7688 = vmul.f32 %v7375, %v6123
        %v7689 = vmul.f32 %v7376, %v6124
        %v7690 = vmul.f32 %v7377, %v6125
        %v7691 = vmul.f32 %v7378, %v6126
        %v7692 = vmul.f32 %v7379, %v6127
        %v7693 = vmul.f32 %v7380, %v6128
        %v7694 = vmul.f32 %v7381, %v6129
        %v7695 = vmul.f32 %v7382, %v6130
        %v7696 = vmul.f32 %v7383, %v6131
        %v7697 = vmul.f32 %v7384, %v6132
        %v7698 = vmul.f32 %v7385, %v6133
        %v7699 = vmul.f32 %v7386, %v6134
        %v7700 = vmul.f32 %v7387, %v6135
        %v7701 = vmul.f32 %v7388, %v6136
        %v7702 = vmul.f32 %v7389, %v6137
        %v7703 = vmul.f32 %v7390, %v6138
        %v7704 = vmul.f32 %v7391, %v6139
        %v7705 = vmul.f32 %v7392, %v6140
        %v7706 = vmul.f32 %v7393, %v6141
        %v7707 = vmul.f32 %v7394, %v6142
        %v7708 = vmul.f32 %v7395, %v6143
        %v7709 = vmul.f32 %v7396, %v6144
        %v7710 = vmul.f32 %v7397, %v6145
        %v7711 = vmul.f32 %v7398, %v6146
        %v7712 = vmul.f32 %v7399, %v6147
        %v7713 = vmul.f32 %v7400, %v6148
        %v7714 = vmul.f32 %v7401, %v6149
        %v7715 = vmul.f32 %v7402, %v6150
        %v7716 = vmul.f32 %v7403, %v6151
        %v7717 = vmul.f32 %v7404, %v6152
        %v7718 = vmul.f32 %v7405, %v6153
        %v7719 = vmul.f32 %v7406, %v6154
        %v7720 = vmul.f32 %v7407, %v6155
        %v7721 = vmul.f32 %v7408, %v6156
        %v7722 = vmul.f32 %v7409, %v6157
        %v7723 = vmul.f32 %v7410, %v6158
        %v7724 = vmul.f32 %v7411, %v6159
        %v7725 = vmul.f32 %v7412, %v6160
        %v7726 = vmul.f32 %v7413, %v6161
        %v7727 = vmul.f32 %v7414, %v6162
        %v7728 = vadd.f32 %v7415, 0.008333333
        %v7729 = vadd.f32 %v7416, 0.008333333
        %v7730 = vadd.f32 %v7417, 0.008333333
        %v7731 = vadd.f32 %v7418, 0.008333333
        %v7732 = vadd.f32 %v7419, 0.008333333
        %v7733 = vadd.f32 %v7420, 0.008333333
        %v7734 = vadd.f32 %v7421, 0.008333333
        %v7735 = vadd.f32 %v7422, 0.008333333
        %v7736 = vadd.f32 %v7423, 0.008333333
        %v7737 = vadd.f32 %v7424, 0.008333333
        %v7738 = vadd.f32 %v7425, 0.008333333
        %v7739 = vadd.f32 %v7426, 0.008333333
        %v7740 = vadd.f32 %v7427, 0.008333333
        %v7741 = vadd.f32 %v7428, 0.008333333
        %v7742 = vadd.f32 %v7429, 0.008333333
        %v7743 = vadd.f32 %v7430, 0.008333333
        %v7744 = vadd.f32 %v7431, 0.008333333
        %v7745 = vadd.f32 %v7432, 0.008333333
        %v7746 = vadd.f32 %v7433, 0.008333333
        %v7747 = vadd.f32 %v7434, 0.008333333
        %v7748 = vadd.f32 %v7435, 0.008333333
        %v7749 = vadd.f32 %v7436, 0.008333333
        %v7750 = vadd.f32 %v7437, 0.008333333
        %v7751 = vadd.f32 %v7438, 0.008333333
        %v7752 = vadd.f32 %v7439, 0.008333333
        %v7753 = vadd.f32 %v7440, 0.008333333
        %v7754 = vadd.f32 %v7441, 0.008333333
        %v7755 = vadd.f32 %v7442, 0.008333333
        %v7756 = vadd.f32 %v7443, 0.008333333
        %v7757 = vadd.f32 %v7444, 0.008333333
        %v7758 = vadd.f32 %v7445, 0.008333333
        %v7759 = vadd.f32 %v7446, 0.008333333
        %v7760 = vadd.f32 %v7447, 0.008333333
        %v7761 = vadd.f32 %v7448, 0.008333333
        %v7762 = vadd.f32 %v7449, 0.008333333
        %v7763 = vadd.f32 %v7450, 0.008333333
        %v7764 = vadd.f32 %v7451, 0.008333333
        %v7765 = vadd.f32 %v7452, 0.008333333
        %v7766 = vadd.f32 %v7453, 0.008333333
        %v7767 = vadd.f32 %v7454, 0.008333333
        %v7768 = vadd.f32 %v7455, 0.008333333
        %v7769 = vadd.f32 %v7456, 0.008333333
        %v7770 = vadd.f32 %v7457, 0.008333333
        %v7771 = vadd.f32 %v7458, 0.008333333
        %v7772 = vadd.f32 %v7459, 0.008333333
        %v7773 = vadd.f32 %v7460, 0.008333333
        %v7774 = vadd.f32 %v7461, 0.008333333
        %v7775 = vadd.f32 %v7462, 0.008333333
        %v7776 = vadd.f32 %v7463, 0.008333333
        %v7777 = vadd.f32 %v7464, 0.008333333
        %v7778 = vadd.f32 %v7465, 0.008333333
        %v7779 = vadd.f32 %v7466, 0.008333333
        %v7780 = vadd.f32 %v7467, 0.008333333
        %v7781 = vadd.f32 %v7468, 0.008333333
        %v7782 = vadd.f32 %v7469, 0.008333333
        %v7783 = vadd.f32 %v7470, 0.008333333
        %v7784 = vadd.f32 %v7471, 0.008333333
        %v7785 = vadd.f32 %v7472, 0.008333333
        %v7786 = vadd.f32 %v7473, 0.008333333
        %v7787 = vadd.f32 %v7474, 0.008333333
        %v7788 = vadd.f32 %v7475, 0.008333333
        %v7789 = vadd.f32 %v7476, 0.008333333
        %v7790 = vadd.f32 %v7477, 0.008333333
        %v7791 = vadd.f32 %v7478, 0.008333333
        %v7792 = vadd.f32 %v7479, 0.008333333
        %v7793 = vadd.f32 %v7480, 0.008333333
        %v7794 = vadd.f32 %v7481, 0.008333333
        %v7795 = vadd.f32 %v7482, 0.008333333
        %v7796 = vadd.f32 %v7483, 0.008333333
        %v7797 = vadd.f32 %v7484, 0.008333333
        %v7798 = vadd.f32 %v7485, 0.008333333
        %v7799 = vadd.f32 %v7486, 0.008333333
        %v7800 = vadd.f32 %v7487, 0.008333333
        %v7801 = vadd.f32 %v7488, 0.008333333
        %v7802 = vadd.f32 %v7489, 0.008333333
        %v7803 = vadd.f32 %v7490, 0.008333333
        %v7804 = vadd.f32 %v7491, 0.008333333
        %v7805 = vadd.f32 %v7492, 0.008333333
        %v7806 = vadd.f32 %v7493, 0.008333333
        %v7807 = vadd.f32 %v7494, 0.008333333
        %v7808 = vadd.f32 %v7495, 0.008333333
        %v7809 = vadd.f32 %v7496, 0.008333333
        %v7810 = vadd.f32 %v7497, 0.008333333
        %v7811 = vadd.f32 %v7498, 0.008333333
        %v7812 = vadd.f32 %v7499, 0.008333333
        %v7813 = vadd.f32 %v7500, 0.008333333
        %v7814 = vadd.f32 %v7501, 0.008333333
        %v7815 = vadd.f32 %v7502, 0.008333333
        %v7816 = vadd.f32 %v7503, 0.008333333
        %v7817 = vadd.f32 %v7504, 0.008333333
        %v7818 = vadd.f32 %v7505, 0.008333333
        %v7819 = vadd.f32 %v7506, 0.008333333
        %v7820 = vadd.f32 %v7507, 0.008333333
        %v7821 = vadd.f32 %v7508, 0.008333333
        %v7822 = vadd.f32 %v7509, 0.008333333
        %v7823 = vadd.f32 %v7510, 0.008333333
        %v7824 = vadd.f32 %v7511, 0.008333333
        %v7825 = vadd.f32 %v7512, 0.008333333
        %v7826 = vadd.f32 %v7513, 0.008333333
        %v7827 = vadd.f32 %v7514, 0.008333333
        %v7828 = vadd.f32 %v7515, 0.008333333
        %v7829 = vadd.f32 %v7516, 0.008333333
        %v7830 = vadd.f32 %v7517, 0.008333333
        %v7831 = vadd.f32 %v7518, 0.008333333
        %v7832 = vadd.f32 %v7519, 0.008333333
        %v7833 = vadd.f32 %v7520, 0.008333333
        %v7834 = vadd.f32 %v7521, 0.008333333
        %v7835 = vadd.f32 %v7522, 0.008333333
        %v7836 = vadd.f32 %v7523, 0.008333333
        %v7837 = vadd.f32 %v7524, 0.008333333
        %v7838 = vadd.f32 %v7525, 0.008333333
        %v7839 = vadd.f32 %v7526, 0.008333333
        %v7840 = vadd.f32 %v7527, 0.008333333
        %v7841 = vadd.f32 %v7528, 0.008333333
        %v7842 = vadd.f32 %v7529, 0.008333333
        %v7843 = vadd.f32 %v7530, 0.008333333
        %v7844 = vadd.f32 %v7531, 0.008333333
        %v7845 = vadd.f32 %v7532, 0.008333333
        %v7846 = vadd.f32 %v7533, 0.008333333
        %v7847 = vadd.f32 %v7534, 0.008333333
        %v7848 = vadd.f32 %v7535, 0.008333333
        %v7849 = vadd.f32 %v7536, 0.008333333
        %v7850 = vadd.f32 %v7537, 0.008333333
        %v7851 = vadd.f32 %v7538, 0.008333333
        %v7852 = vadd.f32 %v7539, 0.008333333
        %v7853 = vadd.f32 %v7540, 0.008333333
        %v7854 = vadd.f32 %v7541, 0.008333333
        %v7855 = vadd.f32 %v7542, 0.008333333
        %v7856 = vadd.f32 %v7543, 0.008333333
        %v7857 = vadd.f32 %v7544, 0.008333333
        %v7858 = vadd.f32 %v7545, 0.008333333
        %v7859 = vadd.f32 %v7546, 0.008333333
        %v7860 = vadd.f32 %v7547, 0.008333333
        %v7861 = vadd.f32 %v7548, 0.008333333
        %v7862 = vadd.f32 %v7549, 0.008333333
        %v7863 = vadd.f32 %v7550, 0.008333333
        %v7864 = vadd.f32 %v7551, 0.008333333
        %v7865 = vadd.f32 %v7552, 0.008333333
        %v7866 = vadd.f32 %v7553, 0.008333333
        %v7867 = vadd.f32 %v7554, 0.008333333
        %v7868 = vadd.f32 %v7555, 0.008333333
        %v7869 = vadd.f32 %v7556, 0.008333333
        %v7870 = vadd.f32 %v7557, 0.008333333
        %v7871 = vadd.f32 %v7558, 0.008333333
        %v7872 = vadd.f32 %v7559, 0.008333333
        %v7873 = vadd.f32 %v7560, 0.008333333
        %v7874 = vadd.f32 %v7561, 0.008333333
        %v7875 = vadd.f32 %v7562, 0.008333333
        %v7876 = vadd.f32 %v7563, 0.008333333
        %v7877 = vadd.f32 %v7564, 0.008333333
        %v7878 = vadd.f32 %v7565, 0.008333333
        %v7879 = vadd.f32 %v7566, 0.008333333
        %v7880 = vadd.f32 %v7567, 0.008333333
        %v7881 = vadd.f32 %v7568, 0.008333333
        %v7882 = vadd.f32 %v7569, 0.008333333
        %v7883 = vadd.f32 %v7570, 0.008333333
        %v7884 = vadd.f32 %v7571, 0.008333333
        %v7885 = vadd.f32 %v7572, 0.008333333
        %v7886 = vadd.f32 %v7573, 0.008333333
        %v7887 = vadd.f32 %v7574, 0.008333333
        %v7888 = vadd.f32 %v7575, 0.008333333
        %v7889 = vadd.f32 %v7576, 0.008333333
        %v7890 = vadd.f32 %v7577, 0.008333333
        %v7891 = vadd.f32 %v7578, 0.008333333
        %v7892 = vadd.f32 %v7579, 0.008333333
        %v7893 = vadd.f32 %v7580, 0.008333333
        %v7894 = vadd.f32 %v7581, 0.008333333
        %v7895 = vadd.f32 %v7582, 0.008333333
        %v7896 = vadd.f32 %v7583, 0.008333333
        %v7897 = vadd.f32 %v7584, 0.008333333
        %v7898 = vadd.f32 %v7585, 0.008333333
        %v7899 = vadd.f32 %v7586, 0.008333333
        %v7900 = vadd.f32 %v7587, 0.008333333
        %v7901 = vadd.f32 %v7588, 0.008333333
        %v7902 = vadd.f32 %v7589, 0.008333333
        %v7903 = vadd.f32 %v7590, 0.008333333
        %v7904 = vadd.f32 %v7591, 0.008333333
        %v7905 = vadd.f32 %v7592, 0.008333333
        %v7906 = vadd.f32 %v7593, 0.008333333
        %v7907 = vadd.f32 %v7594, 0.008333333
        %v7908 = vadd.f32 %v7595, 0.008333333
        %v7909 = vadd.f32 %v7596, 0.008333333
        %v7910 = vadd.f32 %v7597, 0.008333333
        %v7911 = vadd.f32 %v7598, 0.008333333
        %v7912 = vadd.f32 %v7599, 0.008333333
        %v7913 = vadd.f32 %v7600, 0.008333333
        %v7914 = vadd.f32 %v7601, 0.008333333
        %v7915 = vadd.f32 %v7602, 0.008333333
        %v7916 = vadd.f32 %v7603, 0.008333333
        %v7917 = vadd.f32 %v7604, 0.008333333
        %v7918 = vadd.f32 %v7605, 0.008333333
        %v7919 = vadd.f32 %v7606, 0.008333333
        %v7920 = vadd.f32 %v7607, 0.008333333
        %v7921 = vadd.f32 %v7608, 0.008333333
        %v7922 = vadd.f32 %v7609, 0.008333333
        %v7923 = vadd.f32 %v7610, 0.008333333
        %v7924 = vadd.f32 %v7611, 0.008333333
        %v7925 = vadd.f32 %v7612, 0.008333333
        %v7926 = vadd.f32 %v7613, 0.008333333
        %v7927 = vadd.f32 %v7614, 0.008333333
        %v7928 = vadd.f32 %v7615, 0.008333333
        %v7929 = vadd.f32 %v7616, 0.008333333
        %v7930 = vadd.f32 %v7617, 0.008333333
        %v7931 = vadd.f32 %v7618, 0.008333333
        %v7932 = vadd.f32 %v7619, 0.008333333
        %v7933 = vadd.f32 %v7620, 0.008333333
        %v7934 = vadd.f32 %v7621, 0.008333333
        %v7935 = vadd.f32 %v7622, 0.008333333
        %v7936 = vadd.f32 %v7623, 0.008333333
        %v7937 = vadd.f32 %v7624, 0.008333333
        %v7938 = vadd.f32 %v7625, 0.008333333
        %v7939 = vadd.f32 %v7626, 0.008333333
        %v7940 = vadd.f32 %v7627, 0.008333333
        %v7941 = vadd.f32 %v7628, 0.008333333
        %v7942 = vadd.f32 %v7629, 0.008333333
        %v7943 = vadd.f32 %v7630, 0.008333333
        %v7944 = vadd.f32 %v7631, 0.008333333
        %v7945 = vadd.f32 %v7632, 0.008333333
        %v7946 = vadd.f32 %v7633, 0.008333333
        %v7947 = vadd.f32 %v7634, 0.008333333
        %v7948 = vadd.f32 %v7635, 0.008333333
        %v7949 = vadd.f32 %v7636, 0.008333333
        %v7950 = vadd.f32 %v7637, 0.008333333
        %v7951 = vadd.f32 %v7638, 0.008333333
        %v7952 = vadd.f32 %v7639, 0.008333333
        %v7953 = vadd.f32 %v7640, 0.008333333
        %v7954 = vadd.f32 %v7641, 0.008333333
        %v7955 = vadd.f32 %v7642, 0.008333333
        %v7956 = vadd.f32 %v7643, 0.008333333
        %v7957 = vadd.f32 %v7644, 0.008333333
        %v7958 = vadd.f32 %v7645, 0.008333333
        %v7959 = vadd.f32 %v7646, 0.008333333
        %v7960 = vadd.f32 %v7647, 0.008333333
        %v7961 = vadd.f32 %v7648, 0.008333333
        %v7962 = vadd.f32 %v7649, 0.008333333
        %v7963 = vadd.f32 %v7650, 0.008333333
        %v7964 = vadd.f32 %v7651, 0.008333333
        %v7965 = vadd.f32 %v7652, 0.008333333
        %v7966 = vadd.f32 %v7653, 0.008333333
        %v7967 = vadd.f32 %v7654, 0.008333333
        %v7968 = vadd.f32 %v7655, 0.008333333
        %v7969 = vadd.f32 %v7656, 0.008333333
        %v7970 = vadd.f32 %v7657, 0.008333333
        %v7971 = vadd.f32 %v7658, 0.008333333
        %v7972 = vadd.f32 %v7659, 0.008333333
        %v7973 = vadd.f32 %v7660, 0.008333333
        %v7974 = vadd.f32 %v7661, 0.008333333
        %v7975 = vadd.f32 %v7662, 0.008333333
        %v7976 = vadd.f32 %v7663, 0.008333333
        %v7977 = vadd.f32 %v7664, 0.008333333
        %v7978 = vadd.f32 %v7665, 0.008333333
        %v7979 = vadd.f32 %v7666, 0.008333333
        %v7980 = vadd.f32 %v7667, 0.008333333
        %v7981 = vadd.f32 %v7668, 0.008333333
        %v7982 = vadd.f32 %v7669, 0.008333333
        %v7983 = vadd.f32 %v7670, 0.008333333
        %v7984 = vadd.f32 %v7671, 0.008333333
        %v7985 = vadd.f32 %v7672, 0.008333333
        %v7986 = vadd.f32 %v7673, 0.008333333
        %v7987 = vadd.f32 %v7674, 0.008333333
        %v7988 = vadd.f32 %v7675, 0.008333333
        %v7989 = vadd.f32 %v7676, 0.008333333
        %v7990 = vadd.f32 %v7677, 0.008333333
        %v7991 = vadd.f32 %v7678, 0.008333333
        %v7992 = vadd.f32 %v7679, 0.008333333
        %v7993 = vadd.f32 %v7680, 0.008333333
        %v7994 = vadd.f32 %v7681, 0.008333333
        %v7995 = vadd.f32 %v7682, 0.008333333
        %v7996 = vadd.f32 %v7683, 0.008333333
        %v7997 = vadd.f32 %v7684, 0.008333333
        %v7998 = vadd.f32 %v7685, 0.008333333
        %v7999 = vadd.f32 %v7686, 0.008333333
        %v8000 = vadd.f32 %v7687, 0.008333333
        %v8001 = vadd.f32 %v7688, 0.008333333
        %v8002 = vadd.f32 %v7689, 0.008333333
        %v8003 = vadd.f32 %v7690, 0.008333333
        %v8004 = vadd.f32 %v7691, 0.008333333
        %v8005 = vadd.f32 %v7692, 0.008333333
        %v8006 = vadd.f32 %v7693, 0.008333333
        %v8007 = vadd.f32 %v7694, 0.008333333
        %v8008 = vadd.f32 %v7695, 0.008333333
        %v8009 = vadd.f32 %v7696, 0.008333333
        %v8010 = vadd.f32 %v7697, 0.008333333
        %v8011 = vadd.f32 %v7698, 0.008333333
        %v8012 = vadd.f32 %v7699, 0.008333333
        %v8013 = vadd.f32 %v7700, 0.008333333
        %v8014 = vadd.f32 %v7701, 0.008333333
        %v8015 = vadd.f32 %v7702, 0.008333333
        %v8016 = vadd.f32 %v7703, 0.008333333
        %v8017 = vadd.f32 %v7704, 0.008333333
        %v8018 = vadd.f32 %v7705, 0.008333333
        %v8019 = vadd.f32 %v7706, 0.008333333
        %v8020 = vadd.f32 %v7707, 0.008333333
        %v8021 = vadd.f32 %v7708, 0.008333333
        %v8022 = vadd.f32 %v7709, 0.008333333
        %v8023 = vadd.f32 %v7710, 0.008333333
        %v8024 = vadd.f32 %v7711, 0.008333333
        %v8025 = vadd.f32 %v7712, 0.008333333
        %v8026 = vadd.f32 %v7713, 0.008333333
        %v8027 = vadd.f32 %v7714, 0.008333333
        %v8028 = vadd.f32 %v7715, 0.008333333
        %v8029 = vadd.f32 %v7716, 0.008333333
        %v8030 = vadd.f32 %v7717, 0.008333333
        %v8031 = vadd.f32 %v7718, 0.008333333
        %v8032 = vadd.f32 %v7719, 0.008333333
        %v8033 = vadd.f32 %v7720, 0.008333333
        %v8034 = vadd.f32 %v7721, 0.008333333
        %v8035 = vadd.f32 %v7722, 0.008333333
        %v8036 = vadd.f32 %v7723, 0.008333333
        %v8037 = vadd.f32 %v7724, 0.008333333
        %v8038 = vadd.f32 %v7725, 0.008333333
        %v8039 = vadd.f32 %v7726, 0.008333333
        %v8040 = vadd.f32 %v7727, 0.008333333
        %v8041 = vmul.f32 %v7728, %v5850
        %v8042 = vmul.f32 %v7729, %v5851
        %v8043 = vmul.f32 %v7730, %v5852
        %v8044 = vmul.f32 %v7731, %v5853
        %v8045 = vmul.f32 %v7732, %v5854
        %v8046 = vmul.f32 %v7733, %v5855
        %v8047 = vmul.f32 %v7734, %v5856
        %v8048 = vmul.f32 %v7735, %v5857
        %v8049 = vmul.f32 %v7736, %v5858
        %v8050 = vmul.f32 %v7737, %v5859
        %v8051 = vmul.f32 %v7738, %v5860
        %v8052 = vmul.f32 %v7739, %v5861
        %v8053 = vmul.f32 %v7740, %v5862
        %v8054 = vmul.f32 %v7741, %v5863
        %v8055 = vmul.f32 %v7742, %v5864
        %v8056 = vmul.f32 %v7743, %v5865
        %v8057 = vmul.f32 %v7744, %v5866
        %v8058 = vmul.f32 %v7745, %v5867
        %v8059 = vmul.f32 %v7746, %v5868
        %v8060 = vmul.f32 %v7747, %v5869
        %v8061 = vmul.f32 %v7748, %v5870
        %v8062 = vmul.f32 %v7749, %v5871
        %v8063 = vmul.f32 %v7750, %v5872
        %v8064 = vmul.f32 %v7751, %v5873
        %v8065 = vmul.f32 %v7752, %v5874
        %v8066 = vmul.f32 %v7753, %v5875
        %v8067 = vmul.f32 %v7754, %v5876
        %v8068 = vmul.f32 %v7755, %v5877
        %v8069 = vmul.f32 %v7756, %v5878
        %v8070 = vmul.f32 %v7757, %v5879
        %v8071 = vmul.f32 %v7758, %v5880
        %v8072 = vmul.f32 %v7759, %v5881
        %v8073 = vmul.f32 %v7760, %v5882
        %v8074 = vmul.f32 %v7761, %v5883
        %v8075 = vmul.f32 %v7762, %v5884
        %v8076 = vmul.f32 %v7763, %v5885
        %v8077 = vmul.f32 %v7764, %v5886
        %v8078 = vmul.f32 %v7765, %v5887
        %v8079 = vmul.f32 %v7766, %v5888
        %v8080 = vmul.f32 %v7767, %v5889
        %v8081 = vmul.f32 %v7768, %v5890
        %v8082 = vmul.f32 %v7769, %v5891
        %v8083 = vmul.f32 %v7770, %v5892
        %v8084 = vmul.f32 %v7771, %v5893
        %v8085 = vmul.f32 %v7772, %v5894
        %v8086 = vmul.f32 %v7773, %v5895
        %v8087 = vmul.f32 %v7774, %v5896
        %v8088 = vmul.f32 %v7775, %v5897
        %v8089 = vmul.f32 %v7776, %v5898
        %v8090 = vmul.f32 %v7777, %v5899
        %v8091 = vmul.f32 %v7778, %v5900
        %v8092 = vmul.f32 %v7779, %v5901
        %v8093 = vmul.f32 %v7780, %v5902
        %v8094 = vmul.f32 %v7781, %v5903
        %v8095 = vmul.f32 %v7782, %v5904
        %v8096 = vmul.f32 %v7783, %v5905
        %v8097 = vmul.f32 %v7784, %v5906
        %v8098 = vmul.f32 %v7785, %v5907
        %v8099 = vmul.f32 %v7786, %v5908
        %v8100 = vmul.f32 %v7787, %v5909
        %v8101 = vmul.f32 %v7788, %v5910
        %v8102 = vmul.f32 %v7789, %v5911
        %v8103 = vmul.f32 %v7790, %v5912
        %v8104 = vmul.f32 %v7791, %v5913
        %v8105 = vmul.f32 %v7792, %v5914
        %v8106 = vmul.f32 %v7793, %v5915
        %v8107 = vmul.f32 %v7794, %v5916
        %v8108 = vmul.f32 %v7795, %v5917
        %v8109 = vmul.f32 %v7796, %v5918
        %v8110 = vmul.f32 %v7797, %v5919
        %v8111 = vmul.f32 %v7798, %v5920
        %v8112 = vmul.f32 %v7799, %v5921
        %v8113 = vmul.f32 %v7800, %v5922
        %v8114 = vmul.f32 %v7801, %v5923
        %v8115 = vmul.f32 %v7802, %v5924
        %v8116 = vmul.f32 %v7803, %v5925
        %v8117 = vmul.f32 %v7804, %v5926
        %v8118 = vmul.f32 %v7805, %v5927
        %v8119 = vmul.f32 %v7806, %v5928
        %v8120 = vmul.f32 %v7807, %v5929
        %v8121 = vmul.f32 %v7808, %v5930
        %v8122 = vmul.f32 %v7809, %v5931
        %v8123 = vmul.f32 %v7810, %v5932
        %v8124 = vmul.f32 %v7811, %v5933
        %v8125 = vmul.f32 %v7812, %v5934
        %v8126 = vmul.f32 %v7813, %v5935
        %v8127 = vmul.f32 %v7814, %v5936
        %v8128 = vmul.f32 %v7815, %v5937
        %v8129 = vmul.f32 %v7816, %v5938
        %v8130 = vmul.f32 %v7817, %v5939
        %v8131 = vmul.f32 %v7818, %v5940
        %v8132 = vmul.f32 %v7819, %v5941
        %v8133 = vmul.f32 %v7820, %v5942
        %v8134 = vmul.f32 %v7821, %v5943
        %v8135 = vmul.f32 %v7822, %v5944
        %v8136 = vmul.f32 %v7823, %v5945
        %v8137 = vmul.f32 %v7824, %v5946
        %v8138 = vmul.f32 %v7825, %v5947
        %v8139 = vmul.f32 %v7826, %v5948
        %v8140 = vmul.f32 %v7827, %v5949
        %v8141 = vmul.f32 %v7828, %v5950
        %v8142 = vmul.f32 %v7829, %v5951
        %v8143 = vmul.f32 %v7830, %v5952
        %v8144 = vmul.f32 %v7831, %v5953
        %v8145 = vmul.f32 %v7832, %v5954
        %v8146 = vmul.f32 %v7833, %v5955
        %v8147 = vmul.f32 %v7834, %v5956
        %v8148 = vmul.f32 %v7835, %v5957
        %v8149 = vmul.f32 %v7836, %v5958
        %v8150 = vmul.f32 %v7837, %v5959
        %v8151 = vmul.f32 %v7838, %v5960
        %v8152 = vmul.f32 %v7839, %v5961
        %v8153 = vmul.f32 %v7840, %v5962
        %v8154 = vmul.f32 %v7841, %v5963
        %v8155 = vmul.f32 %v7842, %v5964
        %v8156 = vmul.f32 %v7843, %v5965
        %v8157 = vmul.f32 %v7844, %v5966
        %v8158 = vmul.f32 %v7845, %v5967
        %v8159 = vmul.f32 %v7846, %v5968
        %v8160 = vmul.f32 %v7847, %v5969
        %v8161 = vmul.f32 %v7848, %v5970
        %v8162 = vmul.f32 %v7849, %v5971
        %v8163 = vmul.f32 %v7850, %v5972
        %v8164 = vmul.f32 %v7851, %v5973
        %v8165 = vmul.f32 %v7852, %v5974
        %v8166 = vmul.f32 %v7853, %v5975
        %v8167 = vmul.f32 %v7854, %v5976
        %v8168 = vmul.f32 %v7855, %v5977
        %v8169 = vmul.f32 %v7856, %v5978
        %v8170 = vmul.f32 %v7857, %v5979
        %v8171 = vmul.f32 %v7858, %v5980
        %v8172 = vmul.f32 %v7859, %v5981
        %v8173 = vmul.f32 %v7860, %v5982
        %v8174 = vmul.f32 %v7861, %v5983
        %v8175 = vmul.f32 %v7862, %v5984
        %v8176 = vmul.f32 %v7863, %v5985
        %v8177 = vmul.f32 %v7864, %v5986
        %v8178 = vmul.f32 %v7865, %v5987
        %v8179 = vmul.f32 %v7866, %v5988
        %v8180 = vmul.f32 %v7867, %v5989
        %v8181 = vmul.f32 %v7868, %v5990
        %v8182 = vmul.f32 %v7869, %v5991
        %v8183 = vmul.f32 %v7870, %v5992
        %v8184 = vmul.f32 %v7871, %v5993
        %v8185 = vmul.f32 %v7872, %v5994
        %v8186 = vmul.f32 %v7873, %v5995
        %v8187 = vmul.f32 %v7874, %v5996
        %v8188 = vmul.f32 %v7875, %v5997
        %v8189 = vmul.f32 %v7876, %v5998
        %v8190 = vmul.f32 %v7877, %v5999
        %v8191 = vmul.f32 %v7878, %v6000
        %v8192 = vmul.f32 %v7879, %v6001
        %v8193 = vmul.f32 %v7880, %v6002
        %v8194 = vmul.f32 %v7881, %v6003
        %v8195 = vmul.f32 %v7882, %v6004
        %v8196 = vmul.f32 %v7883, %v6005
        %v8197 = vmul.f32 %v7884, %v6006
        %v8198 = vmul.f32 %v7885, %v6007
        %v8199 = vmul.f32 %v7886, %v6008
        %v8200 = vmul.f32 %v7887, %v6009
        %v8201 = vmul.f32 %v7888, %v6010
        %v8202 = vmul.f32 %v7889, %v6011
        %v8203 = vmul.f32 %v7890, %v6012
        %v8204 = vmul.f32 %v7891, %v6013
        %v8205 = vmul.f32 %v7892, %v6014
        %v8206 = vmul.f32 %v7893, %v6015
        %v8207 = vmul.f32 %v7894, %v6016
        %v8208 = vmul.f32 %v7895, %v6017
        %v8209 = vmul.f32 %v7896, %v6018
        %v8210 = vmul.f32 %v7897, %v6019
        %v8211 = vmul.f32 %v7898, %v6020
        %v8212 = vmul.f32 %v7899, %v6021
        %v8213 = vmul.f32 %v7900, %v6022
        %v8214 = vmul.f32 %v7901, %v6023
        %v8215 = vmul.f32 %v7902, %v6024
        %v8216 = vmul.f32 %v7903, %v6025
        %v8217 = vmul.f32 %v7904, %v6026
        %v8218 = vmul.f32 %v7905, %v6027
        %v8219 = vmul.f32 %v7906, %v6028
        %v8220 = vmul.f32 %v7907, %v6029
        %v8221 = vmul.f32 %v7908, %v6030
        %v8222 = vmul.f32 %v7909, %v6031
        %v8223 = vmul.f32 %v7910, %v6032
        %v8224 = vmul.f32 %v7911, %v6033
        %v8225 = vmul.f32 %v7912, %v6034
        %v8226 = vmul.f32 %v7913, %v6035
        %v8227 = vmul.f32 %v7914, %v6036
        %v8228 = vmul.f32 %v7915, %v6037
        %v8229 = vmul.f32 %v7916, %v6038
        %v8230 = vmul.f32 %v7917, %v6039
        %v8231 = vmul.f32 %v7918, %v6040
        %v8232 = vmul.f32 %v7919, %v6041
        %v8233 = vmul.f32 %v7920, %v6042
        %v8234 = vmul.f32 %v7921, %v6043
        %v8235 = vmul.f32 %v7922, %v6044
        %v8236 = vmul.f32 %v7923, %v6045
        %v8237 = vmul.f32 %v7924, %v6046
        %v8238 = vmul.f32 %v7925, %v6047
        %v8239 = vmul.f32 %v7926, %v6048
        %v8240 = vmul.f32 %v7927, %v6049
        %v8241 = vmul.f32 %v7928, %v6050
        %v8242 = vmul.f32 %v7929, %v6051
        %v8243 = vmul.f32 %v7930, %v6052
        %v8244 = vmul.f32 %v7931, %v6053
        %v8245 = vmul.f32 %v7932, %v6054
        %v8246 = vmul.f32 %v7933, %v6055
        %v8247 = vmul.f32 %v7934, %v6056
        %v8248 = vmul.f32 %v7935, %v6057
        %v8249 = vmul.f32 %v7936, %v6058
        %v8250 = vmul.f32 %v7937, %v6059
        %v8251 = vmul.f32 %v7938, %v6060
        %v8252 = vmul.f32 %v7939, %v6061
        %v8253 = vmul.f32 %v7940, %v6062
        %v8254 = vmul.f32 %v7941, %v6063
        %v8255 = vmul.f32 %v7942, %v6064
        %v8256 = vmul.f32 %v7943, %v6065
        %v8257 = vmul.f32 %v7944, %v6066
        %v8258 = vmul.f32 %v7945, %v6067
        %v8259 = vmul.f32 %v7946, %v6068
        %v8260 = vmul.f32 %v7947, %v6069
        %v8261 = vmul.f32 %v7948, %v6070
        %v8262 = vmul.f32 %v7949, %v6071
        %v8263 = vmul.f32 %v7950, %v6072
        %v8264 = vmul.f32 %v7951, %v6073
        %v8265 = vmul.f32 %v7952, %v6074
        %v8266 = vmul.f32 %v7953, %v6075
        %v8267 = vmul.f32 %v7954, %v6076
        %v8268 = vmul.f32 %v7955, %v6077
        %v8269 = vmul.f32 %v7956, %v6078
        %v8270 = vmul.f32 %v7957, %v6079
        %v8271 = vmul.f32 %v7958, %v6080
        %v8272 = vmul.f32 %v7959, %v6081
        %v8273 = vmul.f32 %v7960, %v6082
        %v8274 = vmul.f32 %v7961, %v6083
        %v8275 = vmul.f32 %v7962, %v6084
        %v8276 = vmul.f32 %v7963, %v6085
        %v8277 = vmul.f32 %v7964, %v6086
        %v8278 = vmul.f32 %v7965, %v6087
        %v8279 = vmul.f32 %v7966, %v6088
        %v8280 = vmul.f32 %v7967, %v6089
        %v8281 = vmul.f32 %v7968, %v6090
        %v8282 = vmul.f32 %v7969, %v6091
        %v8283 = vmul.f32 %v7970, %v6092
        %v8284 = vmul.f32 %v7971, %v6093
        %v8285 = vmul.f32 %v7972, %v6094
        %v8286 = vmul.f32 %v7973, %v6095
        %v8287 = vmul.f32 %v7974, %v6096
        %v8288 = vmul.f32 %v7975, %v6097
        %v8289 = vmul.f32 %v7976, %v6098
        %v8290 = vmul.f32 %v7977, %v6099
        %v8291 = vmul.f32 %v7978, %v6100
        %v8292 = vmul.f32 %v7979, %v6101
        %v8293 = vmul.f32 %v7980, %v6102
        %v8294 = vmul.f32 %v7981, %v6103
        %v8295 = vmul.f32 %v7982, %v6104
        %v8296 = vmul.f32 %v7983, %v6105
        %v8297 = vmul.f32 %v7984, %v6106
        %v8298 = vmul.f32 %v7985, %v6107
        %v8299 = vmul.f32 %v7986, %v6108
        %v8300 = vmul.f32 %v7987, %v6109
        %v8301 = vmul.f32 %v7988, %v6110
        %v8302 = vmul.f32 %v7989, %v6111
        %v8303 = vmul.f32 %v7990, %v6112
        %v8304 = vmul.f32 %v7991, %v6113
        %v8305 = vmul.f32 %v7992, %v6114
        %v8306 = vmul.f32 %v7993, %v6115
        %v8307 = vmul.f32 %v7994, %v6116
        %v8308 = vmul.f32 %v7995, %v6117
        %v8309 = vmul.f32 %v7996, %v6118
        %v8310 = vmul.f32 %v7997, %v6119
        %v8311 = vmul.f32 %v7998, %v6120
        %v8312 = vmul.f32 %v7999, %v6121
        %v8313 = vmul.f32 %v8000, %v6122
        %v8314 = vmul.f32 %v8001, %v6123
        %v8315 = vmul.f32 %v8002, %v6124
        %v8316 = vmul.f32 %v8003, %v6125
        %v8317 = vmul.f32 %v8004, %v6126
        %v8318 = vmul.f32 %v8005, %v6127
        %v8319 = vmul.f32 %v8006, %v6128
        %v8320 = vmul.f32 %v8007, %v6129
        %v8321 = vmul.f32 %v8008, %v6130
        %v8322 = vmul.f32 %v8009, %v6131
        %v8323 = vmul.f32 %v8010, %v6132
        %v8324 = vmul.f32 %v8011, %v6133
        %v8325 = vmul.f32 %v8012, %v6134
        %v8326 = vmul.f32 %v8013, %v6135
        %v8327 = vmul.f32 %v8014, %v6136
        %v8328 = vmul.f32 %v8015, %v6137
        %v8329 = vmul.f32 %v8016, %v6138
        %v8330 = vmul.f32 %v8017, %v6139
        %v8331 = vmul.f32 %v8018, %v6140
        %v8332 = vmul.f32 %v8019, %v6141
        %v8333 = vmul.f32 %v8020, %v6142
        %v8334 = vmul.f32 %v8021, %v6143
        %v8335 = vmul.f32 %v8022, %v6144
        %v8336 = vmul.f32 %v8023, %v6145
        %v8337 = vmul.f32 %v8024, %v6146
        %v8338 = vmul.f32 %v8025, %v6147
        %v8339 = vmul.f32 %v8026, %v6148
        %v8340 = vmul.f32 %v8027, %v6149
        %v8341 = vmul.f32 %v8028, %v6150
        %v8342 = vmul.f32 %v8029, %v6151
        %v8343 = vmul.f32 %v8030, %v6152
        %v8344 = vmul.f32 %v8031, %v6153
        %v8345 = vmul.f32 %v8032, %v6154
        %v8346 = vmul.f32 %v8033, %v6155
        %v8347 = vmul.f32 %v8034, %v6156
        %v8348 = vmul.f32 %v8035, %v6157
        %v8349 = vmul.f32 %v8036, %v6158
        %v8350 = vmul.f32 %v8037, %v6159
        %v8351 = vmul.f32 %v8038, %v6160
        %v8352 = vmul.f32 %v8039, %v6161
        %v8353 = vmul.f32 %v8040, %v6162
        %v8354 = vadd.f32 %v8041, -0.16666667
        %v8355 = vadd.f32 %v8042, -0.16666667
        %v8356 = vadd.f32 %v8043, -0.16666667
        %v8357 = vadd.f32 %v8044, -0.16666667
        %v8358 = vadd.f32 %v8045, -0.16666667
        %v8359 = vadd.f32 %v8046, -0.16666667
        %v8360 = vadd.f32 %v8047, -0.16666667
        %v8361 = vadd.f32 %v8048, -0.16666667
        %v8362 = vadd.f32 %v8049, -0.16666667
        %v8363 = vadd.f32 %v8050, -0.16666667
        %v8364 = vadd.f32 %v8051, -0.16666667
        %v8365 = vadd.f32 %v8052, -0.16666667
        %v8366 = vadd.f32 %v8053, -0.16666667
        %v8367 = vadd.f32 %v8054, -0.16666667
        %v8368 = vadd.f32 %v8055, -0.16666667
        %v8369 = vadd.f32 %v8056, -0.16666667
        %v8370 = vadd.f32 %v8057, -0.16666667
        %v8371 = vadd.f32 %v8058, -0.16666667
        %v8372 = vadd.f32 %v8059, -0.16666667
        %v8373 = vadd.f32 %v8060, -0.16666667
        %v8374 = vadd.f32 %v8061, -0.16666667
        %v8375 = vadd.f32 %v8062, -0.16666667
        %v8376 = vadd.f32 %v8063, -0.16666667
        %v8377 = vadd.f32 %v8064, -0.16666667
        %v8378 = vadd.f32 %v8065, -0.16666667
        %v8379 = vadd.f32 %v8066, -0.16666667
        %v8380 = vadd.f32 %v8067, -0.16666667
        %v8381 = vadd.f32 %v8068, -0.16666667
        %v8382 = vadd.f32 %v8069, -0.16666667
        %v8383 = vadd.f32 %v8070, -0.16666667
        %v8384 = vadd.f32 %v8071, -0.16666667
        %v8385 = vadd.f32 %v8072, -0.16666667
        %v8386 = vadd.f32 %v8073, -0.16666667
        %v8387 = vadd.f32 %v8074, -0.16666667
        %v8388 = vadd.f32 %v8075, -0.16666667
        %v8389 = vadd.f32 %v8076, -0.16666667
        %v8390 = vadd.f32 %v8077, -0.16666667
        %v8391 = vadd.f32 %v8078, -0.16666667
        %v8392 = vadd.f32 %v8079, -0.16666667
        %v8393 = vadd.f32 %v8080, -0.16666667
        %v8394 = vadd.f32 %v8081, -0.16666667
        %v8395 = vadd.f32 %v8082, -0.16666667
        %v8396 = vadd.f32 %v8083, -0.16666667
        %v8397 = vadd.f32 %v8084, -0.16666667
        %v8398 = vadd.f32 %v8085, -0.16666667
        %v8399 = vadd.f32 %v8086, -0.16666667
        %v8400 = vadd.f32 %v8087, -0.16666667
        %v8401 = vadd.f32 %v8088, -0.16666667
        %v8402 = vadd.f32 %v8089, -0.16666667
        %v8403 = vadd.f32 %v8090, -0.16666667
        %v8404 = vadd.f32 %v8091, -0.16666667
        %v8405 = vadd.f32 %v8092, -0.16666667
        %v8406 = vadd.f32 %v8093, -0.16666667
        %v8407 = vadd.f32 %v8094, -0.16666667
        %v8408 = vadd.f32 %v8095, -0.16666667
        %v8409 = vadd.f32 %v8096, -0.16666667
        %v8410 = vadd.f32 %v8097, -0.16666667
        %v8411 = vadd.f32 %v8098, -0.16666667
        %v8412 = vadd.f32 %v8099, -0.16666667
        %v8413 = vadd.f32 %v8100, -0.16666667
        %v8414 = vadd.f32 %v8101, -0.16666667
        %v8415 = vadd.f32 %v8102, -0.16666667
        %v8416 = vadd.f32 %v8103, -0.16666667
        %v8417 = vadd.f32 %v8104, -0.16666667
        %v8418 = vadd.f32 %v8105, -0.16666667
        %v8419 = vadd.f32 %v8106, -0.16666667
        %v8420 = vadd.f32 %v8107, -0.16666667
        %v8421 = vadd.f32 %v8108, -0.16666667
        %v8422 = vadd.f32 %v8109, -0.16666667
        %v8423 = vadd.f32 %v8110, -0.16666667
        %v8424 = vadd.f32 %v8111, -0.16666667
        %v8425 = vadd.f32 %v8112, -0.16666667
        %v8426 = vadd.f32 %v8113, -0.16666667
        %v8427 = vadd.f32 %v8114, -0.16666667
        %v8428 = vadd.f32 %v8115, -0.16666667
        %v8429 = vadd.f32 %v8116, -0.16666667
        %v8430 = vadd.f32 %v8117, -0.16666667
        %v8431 = vadd.f32 %v8118, -0.16666667
        %v8432 = vadd.f32 %v8119, -0.16666667
        %v8433 = vadd.f32 %v8120, -0.16666667
        %v8434 = vadd.f32 %v8121, -0.16666667
        %v8435 = vadd.f32 %v8122, -0.16666667
        %v8436 = vadd.f32 %v8123, -0.16666667
        %v8437 = vadd.f32 %v8124, -0.16666667
        %v8438 = vadd.f32 %v8125, -0.16666667
        %v8439 = vadd.f32 %v8126, -0.16666667
        %v8440 = vadd.f32 %v8127, -0.16666667
        %v8441 = vadd.f32 %v8128, -0.16666667
        %v8442 = vadd.f32 %v8129, -0.16666667
        %v8443 = vadd.f32 %v8130, -0.16666667
        %v8444 = vadd.f32 %v8131, -0.16666667
        %v8445 = vadd.f32 %v8132, -0.16666667
        %v8446 = vadd.f32 %v8133, -0.16666667
        %v8447 = vadd.f32 %v8134, -0.16666667
        %v8448 = vadd.f32 %v8135, -0.16666667
        %v8449 = vadd.f32 %v8136, -0.16666667
        %v8450 = vadd.f32 %v8137, -0.16666667
        %v8451 = vadd.f32 %v8138, -0.16666667
        %v8452 = vadd.f32 %v8139, -0.16666667
        %v8453 = vadd.f32 %v8140, -0.16666667
        %v8454 = vadd.f32 %v8141, -0.16666667
        %v8455 = vadd.f32 %v8142, -0.16666667
        %v8456 = vadd.f32 %v8143, -0.16666667
        %v8457 = vadd.f32 %v8144, -0.16666667
        %v8458 = vadd.f32 %v8145, -0.16666667
        %v8459 = vadd.f32 %v8146, -0.16666667
        %v8460 = vadd.f32 %v8147, -0.16666667
        %v8461 = vadd.f32 %v8148, -0.16666667
        %v8462 = vadd.f32 %v8149, -0.16666667
        %v8463 = vadd.f32 %v8150, -0.16666667
        %v8464 = vadd.f32 %v8151, -0.16666667
        %v8465 = vadd.f32 %v8152, -0.16666667
        %v8466 = vadd.f32 %v8153, -0.16666667
        %v8467 = vadd.f32 %v8154, -0.16666667
        %v8468 = vadd.f32 %v8155, -0.16666667
        %v8469 = vadd.f32 %v8156, -0.16666667
        %v8470 = vadd.f32 %v8157, -0.16666667
        %v8471 = vadd.f32 %v8158, -0.16666667
        %v8472 = vadd.f32 %v8159, -0.16666667
        %v8473 = vadd.f32 %v8160, -0.16666667
        %v8474 = vadd.f32 %v8161, -0.16666667
        %v8475 = vadd.f32 %v8162, -0.16666667
        %v8476 = vadd.f32 %v8163, -0.16666667
        %v8477 = vadd.f32 %v8164, -0.16666667
        %v8478 = vadd.f32 %v8165, -0.16666667
        %v8479 = vadd.f32 %v8166, -0.16666667
        %v8480 = vadd.f32 %v8167, -0.16666667
        %v8481 = vadd.f32 %v8168, -0.16666667
        %v8482 = vadd.f32 %v8169, -0.16666667
        %v8483 = vadd.f32 %v8170, -0.16666667
        %v8484 = vadd.f32 %v8171, -0.16666667
        %v8485 = vadd.f32 %v8172, -0.16666667
        %v8486 = vadd.f32 %v8173, -0.16666667
        %v8487 = vadd.f32 %v8174, -0.16666667
        %v8488 = vadd.f32 %v8175, -0.16666667
        %v8489 = vadd.f32 %v8176, -0.16666667
        %v8490 = vadd.f32 %v8177, -0.16666667
        %v8491 = vadd.f32 %v8178, -0.16666667
        %v8492 = vadd.f32 %v8179, -0.16666667
        %v8493 = vadd.f32 %v8180, -0.16666667
        %v8494 = vadd.f32 %v8181, -0.16666667
        %v8495 = vadd.f32 %v8182, -0.16666667
        %v8496 = vadd.f32 %v8183, -0.16666667
        %v8497 = vadd.f32 %v8184, -0.16666667
        %v8498 = vadd.f32 %v8185, -0.16666667
        %v8499 = vadd.f32 %v8186, -0.16666667
        %v8500 = vadd.f32 %v8187, -0.16666667
        %v8501 = vadd.f32 %v8188, -0.16666667
        %v8502 = vadd.f32 %v8189, -0.16666667
        %v8503 = vadd.f32 %v8190, -0.16666667
        %v8504 = vadd.f32 %v8191, -0.16666667
        %v8505 = vadd.f32 %v8192, -0.16666667
        %v8506 = vadd.f32 %v8193, -0.16666667
        %v8507 = vadd.f32 %v8194, -0.16666667
        %v8508 = vadd.f32 %v8195, -0.16666667
        %v8509 = vadd.f32 %v8196, -0.16666667
        %v8510 = vadd.f32 %v8197, -0.16666667
        %v8511 = vadd.f32 %v8198, -0.16666667
        %v8512 = vadd.f32 %v8199, -0.16666667
        %v8513 = vadd.f32 %v8200, -0.16666667
        %v8514 = vadd.f32 %v8201, -0.16666667
        %v8515 = vadd.f32 %v8202, -0.16666667
        %v8516 = vadd.f32 %v8203, -0.16666667
        %v8517 = vadd.f32 %v8204, -0.16666667
        %v8518 = vadd.f32 %v8205, -0.16666667
        %v8519 = vadd.f32 %v8206, -0.16666667
        %v8520 = vadd.f32 %v8207, -0.16666667
        %v8521 = vadd.f32 %v8208, -0.16666667
        %v8522 = vadd.f32 %v8209, -0.16666667
        %v8523 = vadd.f32 %v8210, -0.16666667
        %v8524 = vadd.f32 %v8211, -0.16666667
        %v8525 = vadd.f32 %v8212, -0.16666667
        %v8526 = vadd.f32 %v8213, -0.16666667
        %v8527 = vadd.f32 %v8214, -0.16666667
        %v8528 = vadd.f32 %v8215, -0.16666667
        %v8529 = vadd.f32 %v8216, -0.16666667
        %v8530 = vadd.f32 %v8217, -0.16666667
        %v8531 = vadd.f32 %v8218, -0.16666667
        %v8532 = vadd.f32 %v8219, -0.16666667
        %v8533 = vadd.f32 %v8220, -0.16666667
        %v8534 = vadd.f32 %v8221, -0.16666667
        %v8535 = vadd.f32 %v8222, -0.16666667
        %v8536 = vadd.f32 %v8223, -0.16666667
        %v8537 = vadd.f32 %v8224, -0.16666667
        %v8538 = vadd.f32 %v8225, -0.16666667
        %v8539 = vadd.f32 %v8226, -0.16666667
        %v8540 = vadd.f32 %v8227, -0.16666667
        %v8541 = vadd.f32 %v8228, -0.16666667
        %v8542 = vadd.f32 %v8229, -0.16666667
        %v8543 = vadd.f32 %v8230, -0.16666667
        %v8544 = vadd.f32 %v8231, -0.16666667
        %v8545 = vadd.f32 %v8232, -0.16666667
        %v8546 = vadd.f32 %v8233, -0.16666667
        %v8547 = vadd.f32 %v8234, -0.16666667
        %v8548 = vadd.f32 %v8235, -0.16666667
        %v8549 = vadd.f32 %v8236, -0.16666667
        %v8550 = vadd.f32 %v8237, -0.16666667
        %v8551 = vadd.f32 %v8238, -0.16666667
        %v8552 = vadd.f32 %v8239, -0.16666667
        %v8553 = vadd.f32 %v8240, -0.16666667
        %v8554 = vadd.f32 %v8241, -0.16666667
        %v8555 = vadd.f32 %v8242, -0.16666667
        %v8556 = vadd.f32 %v8243, -0.16666667
        %v8557 = vadd.f32 %v8244, -0.16666667
        %v8558 = vadd.f32 %v8245, -0.16666667
        %v8559 = vadd.f32 %v8246, -0.16666667
        %v8560 = vadd.f32 %v8247, -0.16666667
        %v8561 = vadd.f32 %v8248, -0.16666667
        %v8562 = vadd.f32 %v8249, -0.16666667
        %v8563 = vadd.f32 %v8250, -0.16666667
        %v8564 = vadd.f32 %v8251, -0.16666667
        %v8565 = vadd.f32 %v8252, -0.16666667
        %v8566 = vadd.f32 %v8253, -0.16666667
        %v8567 = vadd.f32 %v8254, -0.16666667
        %v8568 = vadd.f32 %v8255, -0.16666667
        %v8569 = vadd.f32 %v8256, -0.16666667
        %v8570 = vadd.f32 %v8257, -0.16666667
        %v8571 = vadd.f32 %v8258, -0.16666667
        %v8572 = vadd.f32 %v8259, -0.16666667
        %v8573 = vadd.f32 %v8260, -0.16666667
        %v8574 = vadd.f32 %v8261, -0.16666667
        %v8575 = vadd.f32 %v8262, -0.16666667
        %v8576 = vadd.f32 %v8263, -0.16666667
        %v8577 = vadd.f32 %v8264, -0.16666667
        %v8578 = vadd.f32 %v8265, -0.16666667
        %v8579 = vadd.f32 %v8266, -0.16666667
        %v8580 = vadd.f32 %v8267, -0.16666667
        %v8581 = vadd.f32 %v8268, -0.16666667
        %v8582 = vadd.f32 %v8269, -0.16666667
        %v8583 = vadd.f32 %v8270, -0.16666667
        %v8584 = vadd.f32 %v8271, -0.16666667
        %v8585 = vadd.f32 %v8272, -0.16666667
        %v8586 = vadd.f32 %v8273, -0.16666667
        %v8587 = vadd.f32 %v8274, -0.16666667
        %v8588 = vadd.f32 %v8275, -0.16666667
        %v8589 = vadd.f32 %v8276, -0.16666667
        %v8590 = vadd.f32 %v8277, -0.16666667
        %v8591 = vadd.f32 %v8278, -0.16666667
        %v8592 = vadd.f32 %v8279, -0.16666667
        %v8593 = vadd.f32 %v8280, -0.16666667
        %v8594 = vadd.f32 %v8281, -0.16666667
        %v8595 = vadd.f32 %v8282, -0.16666667
        %v8596 = vadd.f32 %v8283, -0.16666667
        %v8597 = vadd.f32 %v8284, -0.16666667
        %v8598 = vadd.f32 %v8285, -0.16666667
        %v8599 = vadd.f32 %v8286, -0.16666667
        %v8600 = vadd.f32 %v8287, -0.16666667
        %v8601 = vadd.f32 %v8288, -0.16666667
        %v8602 = vadd.f32 %v8289, -0.16666667
        %v8603 = vadd.f32 %v8290, -0.16666667
        %v8604 = vadd.f32 %v8291, -0.16666667
        %v8605 = vadd.f32 %v8292, -0.16666667
        %v8606 = vadd.f32 %v8293, -0.16666667
        %v8607 = vadd.f32 %v8294, -0.16666667
        %v8608 = vadd.f32 %v8295, -0.16666667
        %v8609 = vadd.f32 %v8296, -0.16666667
        %v8610 = vadd.f32 %v8297, -0.16666667
        %v8611 = vadd.f32 %v8298, -0.16666667
        %v8612 = vadd.f32 %v8299, -0.16666667
        %v8613 = vadd.f32 %v8300, -0.16666667
        %v8614 = vadd.f32 %v8301, -0.16666667
        %v8615 = vadd.f32 %v8302, -0.16666667
        %v8616 = vadd.f32 %v8303, -0.16666667
        %v8617 = vadd.f32 %v8304, -0.16666667
        %v8618 = vadd.f32 %v8305, -0.16666667
        %v8619 = vadd.f32 %v8306, -0.16666667
        %v8620 = vadd.f32 %v8307, -0.16666667
        %v8621 = vadd.f32 %v8308, -0.16666667
        %v8622 = vadd.f32 %v8309, -0.16666667
        %v8623 = vadd.f32 %v8310, -0.16666667
        %v8624 = vadd.f32 %v8311, -0.16666667
        %v8625 = vadd.f32 %v8312, -0.16666667
        %v8626 = vadd.f32 %v8313, -0.16666667
        %v8627 = vadd.f32 %v8314, -0.16666667
        %v8628 = vadd.f32 %v8315, -0.16666667
        %v8629 = vadd.f32 %v8316, -0.16666667
        %v8630 = vadd.f32 %v8317, -0.16666667
        %v8631 = vadd.f32 %v8318, -0.16666667
        %v8632 = vadd.f32 %v8319, -0.16666667
        %v8633 = vadd.f32 %v8320, -0.16666667
        %v8634 = vadd.f32 %v8321, -0.16666667
        %v8635 = vadd.f32 %v8322, -0.16666667
        %v8636 = vadd.f32 %v8323, -0.16666667
        %v8637 = vadd.f32 %v8324, -0.16666667
        %v8638 = vadd.f32 %v8325, -0.16666667
        %v8639 = vadd.f32 %v8326, -0.16666667
        %v8640 = vadd.f32 %v8327, -0.16666667
        %v8641 = vadd.f32 %v8328, -0.16666667
        %v8642 = vadd.f32 %v8329, -0.16666667
        %v8643 = vadd.f32 %v8330, -0.16666667
        %v8644 = vadd.f32 %v8331, -0.16666667
        %v8645 = vadd.f32 %v8332, -0.16666667
        %v8646 = vadd.f32 %v8333, -0.16666667
        %v8647 = vadd.f32 %v8334, -0.16666667
        %v8648 = vadd.f32 %v8335, -0.16666667
        %v8649 = vadd.f32 %v8336, -0.16666667
        %v8650 = vadd.f32 %v8337, -0.16666667
        %v8651 = vadd.f32 %v8338, -0.16666667
        %v8652 = vadd.f32 %v8339, -0.16666667
        %v8653 = vadd.f32 %v8340, -0.16666667
        %v8654 = vadd.f32 %v8341, -0.16666667
        %v8655 = vadd.f32 %v8342, -0.16666667
        %v8656 = vadd.f32 %v8343, -0.16666667
        %v8657 = vadd.f32 %v8344, -0.16666667
        %v8658 = vadd.f32 %v8345, -0.16666667
        %v8659 = vadd.f32 %v8346, -0.16666667
        %v8660 = vadd.f32 %v8347, -0.16666667
        %v8661 = vadd.f32 %v8348, -0.16666667
        %v8662 = vadd.f32 %v8349, -0.16666667
        %v8663 = vadd.f32 %v8350, -0.16666667
        %v8664 = vadd.f32 %v8351, -0.16666667
        %v8665 = vadd.f32 %v8352, -0.16666667
        %v8666 = vadd.f32 %v8353, -0.16666667
        %v8667 = vmul.f32 %v8354, %v5850
        %v8668 = vmul.f32 %v8355, %v5851
        %v8669 = vmul.f32 %v8356, %v5852
        %v8670 = vmul.f32 %v8357, %v5853
        %v8671 = vmul.f32 %v8358, %v5854
        %v8672 = vmul.f32 %v8359, %v5855
        %v8673 = vmul.f32 %v8360, %v5856
        %v8674 = vmul.f32 %v8361, %v5857
        %v8675 = vmul.f32 %v8362, %v5858
        %v8676 = vmul.f32 %v8363, %v5859
        %v8677 = vmul.f32 %v8364, %v5860
        %v8678 = vmul.f32 %v8365, %v5861
        %v8679 = vmul.f32 %v8366, %v5862
        %v8680 = vmul.f32 %v8367, %v5863
        %v8681 = vmul.f32 %v8368, %v5864
        %v8682 = vmul.f32 %v8369, %v5865
        %v8683 = vmul.f32 %v8370, %v5866
        %v8684 = vmul.f32 %v8371, %v5867
        %v8685 = vmul.f32 %v8372, %v5868
        %v8686 = vmul.f32 %v8373, %v5869
        %v8687 = vmul.f32 %v8374, %v5870
        %v8688 = vmul.f32 %v8375, %v5871
        %v8689 = vmul.f32 %v8376, %v5872
        %v8690 = vmul.f32 %v8377, %v5873
        %v8691 = vmul.f32 %v8378, %v5874
        %v8692 = vmul.f32 %v8379, %v5875
        %v8693 = vmul.f32 %v8380, %v5876
        %v8694 = vmul.f32 %v8381, %v5877
        %v8695 = vmul.f32 %v8382, %v5878
        %v8696 = vmul.f32 %v8383, %v5879
        %v8697 = vmul.f32 %v8384, %v5880
        %v8698 = vmul.f32 %v8385, %v5881
        %v8699 = vmul.f32 %v8386, %v5882
        %v8700 = vmul.f32 %v8387, %v5883
        %v8701 = vmul.f32 %v8388, %v5884
        %v8702 = vmul.f32 %v8389, %v5885
        %v8703 = vmul.f32 %v8390, %v5886
        %v8704 = vmul.f32 %v8391, %v5887
        %v8705 = vmul.f32 %v8392, %v5888
        %v8706 = vmul.f32 %v8393, %v5889
        %v8707 = vmul.f32 %v8394, %v5890
        %v8708 = vmul.f32 %v8395, %v5891
        %v8709 = vmul.f32 %v8396, %v5892
        %v8710 = vmul.f32 %v8397, %v5893
        %v8711 = vmul.f32 %v8398, %v5894
        %v8712 = vmul.f32 %v8399, %v5895
        %v8713 = vmul.f32 %v8400, %v5896
        %v8714 = vmul.f32 %v8401, %v5897
        %v8715 = vmul.f32 %v8402, %v5898
        %v8716 = vmul.f32 %v8403, %v5899
        %v8717 = vmul.f32 %v8404, %v5900
        %v8718 = vmul.f32 %v8405, %v5901
        %v8719 = vmul.f32 %v8406, %v5902
        %v8720 = vmul.f32 %v8407, %v5903
        %v8721 = vmul.f32 %v8408, %v5904
        %v8722 = vmul.f32 %v8409, %v5905
        %v8723 = vmul.f32 %v8410, %v5906
        %v8724 = vmul.f32 %v8411, %v5907
        %v8725 = vmul.f32 %v8412, %v5908
        %v8726 = vmul.f32 %v8413, %v5909
        %v8727 = vmul.f32 %v8414, %v5910
        %v8728 = vmul.f32 %v8415, %v5911
        %v8729 = vmul.f32 %v8416, %v5912
        %v8730 = vmul.f32 %v8417, %v5913
        %v8731 = vmul.f32 %v8418, %v5914
        %v8732 = vmul.f32 %v8419, %v5915
        %v8733 = vmul.f32 %v8420, %v5916
        %v8734 = vmul.f32 %v8421, %v5917
        %v8735 = vmul.f32 %v8422, %v5918
        %v8736 = vmul.f32 %v8423, %v5919
        %v8737 = vmul.f32 %v8424, %v5920
        %v8738 = vmul.f32 %v8425, %v5921
        %v8739 = vmul.f32 %v8426, %v5922
        %v8740 = vmul.f32 %v8427, %v5923
        %v8741 = vmul.f32 %v8428, %v5924
        %v8742 = vmul.f32 %v8429, %v5925
        %v8743 = vmul.f32 %v8430, %v5926
        %v8744 = vmul.f32 %v8431, %v5927
        %v8745 = vmul.f32 %v8432, %v5928
        %v8746 = vmul.f32 %v8433, %v5929
        %v8747 = vmul.f32 %v8434, %v5930
        %v8748 = vmul.f32 %v8435, %v5931
        %v8749 = vmul.f32 %v8436, %v5932
        %v8750 = vmul.f32 %v8437, %v5933
        %v8751 = vmul.f32 %v8438, %v5934
        %v8752 = vmul.f32 %v8439, %v5935
        %v8753 = vmul.f32 %v8440, %v5936
        %v8754 = vmul.f32 %v8441, %v5937
        %v8755 = vmul.f32 %v8442, %v5938
        %v8756 = vmul.f32 %v8443, %v5939
        %v8757 = vmul.f32 %v8444, %v5940
        %v8758 = vmul.f32 %v8445, %v5941
        %v8759 = vmul.f32 %v8446, %v5942
        %v8760 = vmul.f32 %v8447, %v5943
        %v8761 = vmul.f32 %v8448, %v5944
        %v8762 = vmul.f32 %v8449, %v5945
        %v8763 = vmul.f32 %v8450, %v5946
        %v8764 = vmul.f32 %v8451, %v5947
        %v8765 = vmul.f32 %v8452, %v5948
        %v8766 = vmul.f32 %v8453, %v5949
        %v8767 = vmul.f32 %v8454, %v5950
        %v8768 = vmul.f32 %v8455, %v5951
        %v8769 = vmul.f32 %v8456, %v5952
        %v8770 = vmul.f32 %v8457, %v5953
        %v8771 = vmul.f32 %v8458, %v5954
        %v8772 = vmul.f32 %v8459, %v5955
        %v8773 = vmul.f32 %v8460, %v5956
        %v8774 = vmul.f32 %v8461, %v5957
        %v8775 = vmul.f32 %v8462, %v5958
        %v8776 = vmul.f32 %v8463, %v5959
        %v8777 = vmul.f32 %v8464, %v5960
        %v8778 = vmul.f32 %v8465, %v5961
        %v8779 = vmul.f32 %v8466, %v5962
        %v8780 = vmul.f32 %v8467, %v5963
        %v8781 = vmul.f32 %v8468, %v5964
        %v8782 = vmul.f32 %v8469, %v5965
        %v8783 = vmul.f32 %v8470, %v5966
        %v8784 = vmul.f32 %v8471, %v5967
        %v8785 = vmul.f32 %v8472, %v5968
        %v8786 = vmul.f32 %v8473, %v5969
        %v8787 = vmul.f32 %v8474, %v5970
        %v8788 = vmul.f32 %v8475, %v5971
        %v8789 = vmul.f32 %v8476, %v5972
        %v8790 = vmul.f32 %v8477, %v5973
        %v8791 = vmul.f32 %v8478, %v5974
        %v8792 = vmul.f32 %v8479, %v5975
        %v8793 = vmul.f32 %v8480, %v5976
        %v8794 = vmul.f32 %v8481, %v5977
        %v8795 = vmul.f32 %v8482, %v5978
        %v8796 = vmul.f32 %v8483, %v5979
        %v8797 = vmul.f32 %v8484, %v5980
        %v8798 = vmul.f32 %v8485, %v5981
        %v8799 = vmul.f32 %v8486, %v5982
        %v8800 = vmul.f32 %v8487, %v5983
        %v8801 = vmul.f32 %v8488, %v5984
        %v8802 = vmul.f32 %v8489, %v5985
        %v8803 = vmul.f32 %v8490, %v5986
        %v8804 = vmul.f32 %v8491, %v5987
        %v8805 = vmul.f32 %v8492, %v5988
        %v8806 = vmul.f32 %v8493, %v5989
        %v8807 = vmul.f32 %v8494, %v5990
        %v8808 = vmul.f32 %v8495, %v5991
        %v8809 = vmul.f32 %v8496, %v5992
        %v8810 = vmul.f32 %v8497, %v5993
        %v8811 = vmul.f32 %v8498, %v5994
        %v8812 = vmul.f32 %v8499, %v5995
        %v8813 = vmul.f32 %v8500, %v5996
        %v8814 = vmul.f32 %v8501, %v5997
        %v8815 = vmul.f32 %v8502, %v5998
        %v8816 = vmul.f32 %v8503, %v5999
        %v8817 = vmul.f32 %v8504, %v6000
        %v8818 = vmul.f32 %v8505, %v6001
        %v8819 = vmul.f32 %v8506, %v6002
        %v8820 = vmul.f32 %v8507, %v6003
        %v8821 = vmul.f32 %v8508, %v6004
        %v8822 = vmul.f32 %v8509, %v6005
        %v8823 = vmul.f32 %v8510, %v6006
        %v8824 = vmul.f32 %v8511, %v6007
        %v8825 = vmul.f32 %v8512, %v6008
        %v8826 = vmul.f32 %v8513, %v6009
        %v8827 = vmul.f32 %v8514, %v6010
        %v8828 = vmul.f32 %v8515, %v6011
        %v8829 = vmul.f32 %v8516, %v6012
        %v8830 = vmul.f32 %v8517, %v6013
        %v8831 = vmul.f32 %v8518, %v6014
        %v8832 = vmul.f32 %v8519, %v6015
        %v8833 = vmul.f32 %v8520, %v6016
        %v8834 = vmul.f32 %v8521, %v6017
        %v8835 = vmul.f32 %v8522, %v6018
        %v8836 = vmul.f32 %v8523, %v6019
        %v8837 = vmul.f32 %v8524, %v6020
        %v8838 = vmul.f32 %v8525, %v6021
        %v8839 = vmul.f32 %v8526, %v6022
        %v8840 = vmul.f32 %v8527, %v6023
        %v8841 = vmul.f32 %v8528, %v6024
        %v8842 = vmul.f32 %v8529, %v6025
        %v8843 = vmul.f32 %v8530, %v6026
        %v8844 = vmul.f32 %v8531, %v6027
        %v8845 = vmul.f32 %v8532, %v6028
        %v8846 = vmul.f32 %v8533, %v6029
        %v8847 = vmul.f32 %v8534, %v6030
        %v8848 = vmul.f32 %v8535, %v6031
        %v8849 = vmul.f32 %v8536, %v6032
        %v8850 = vmul.f32 %v8537, %v6033
        %v8851 = vmul.f32 %v8538, %v6034
        %v8852 = vmul.f32 %v8539, %v6035
        %v8853 = vmul.f32 %v8540, %v6036
        %v8854 = vmul.f32 %v8541, %v6037
        %v8855 = vmul.f32 %v8542, %v6038
        %v8856 = vmul.f32 %v8543, %v6039
        %v8857 = vmul.f32 %v8544, %v6040
        %v8858 = vmul.f32 %v8545, %v6041
        %v8859 = vmul.f32 %v8546, %v6042
        %v8860 = vmul.f32 %v8547, %v6043
        %v8861 = vmul.f32 %v8548, %v6044
        %v8862 = vmul.f32 %v8549, %v6045
        %v8863 = vmul.f32 %v8550, %v6046
        %v8864 = vmul.f32 %v8551, %v6047
        %v8865 = vmul.f32 %v8552, %v6048
        %v8866 = vmul.f32 %v8553, %v6049
        %v8867 = vmul.f32 %v8554, %v6050
        %v8868 = vmul.f32 %v8555, %v6051
        %v8869 = vmul.f32 %v8556, %v6052
        %v8870 = vmul.f32 %v8557, %v6053
        %v8871 = vmul.f32 %v8558, %v6054
        %v8872 = vmul.f32 %v8559, %v6055
        %v8873 = vmul.f32 %v8560, %v6056
        %v8874 = vmul.f32 %v8561, %v6057
        %v8875 = vmul.f32 %v8562, %v6058
        %v8876 = vmul.f32 %v8563, %v6059
        %v8877 = vmul.f32 %v8564, %v6060
        %v8878 = vmul.f32 %v8565, %v6061
        %v8879 = vmul.f32 %v8566, %v6062
        %v8880 = vmul.f32 %v8567, %v6063
        %v8881 = vmul.f32 %v8568, %v6064
        %v8882 = vmul.f32 %v8569, %v6065
        %v8883 = vmul.f32 %v8570, %v6066
        %v8884 = vmul.f32 %v8571, %v6067
        %v8885 = vmul.f32 %v8572, %v6068
        %v8886 = vmul.f32 %v8573, %v6069
        %v8887 = vmul.f32 %v8574, %v6070
        %v8888 = vmul.f32 %v8575, %v6071
        %v8889 = vmul.f32 %v8576, %v6072
        %v8890 = vmul.f32 %v8577, %v6073
        %v8891 = vmul.f32 %v8578, %v6074
        %v8892 = vmul.f32 %v8579, %v6075
        %v8893 = vmul.f32 %v8580, %v6076
        %v8894 = vmul.f32 %v8581, %v6077
        %v8895 = vmul.f32 %v8582, %v6078
        %v8896 = vmul.f32 %v8583, %v6079
        %v8897 = vmul.f32 %v8584, %v6080
        %v8898 = vmul.f32 %v8585, %v6081
        %v8899 = vmul.f32 %v8586, %v6082
        %v8900 = vmul.f32 %v8587, %v6083
        %v8901 = vmul.f32 %v8588, %v6084
        %v8902 = vmul.f32 %v8589, %v6085
        %v8903 = vmul.f32 %v8590, %v6086
        %v8904 = vmul.f32 %v8591, %v6087
        %v8905 = vmul.f32 %v8592, %v6088
        %v8906 = vmul.f32 %v8593, %v6089
        %v8907 = vmul.f32 %v8594, %v6090
        %v8908 = vmul.f32 %v8595, %v6091
        %v8909 = vmul.f32 %v8596, %v6092
        %v8910 = vmul.f32 %v8597, %v6093
        %v8911 = vmul.f32 %v8598, %v6094
        %v8912 = vmul.f32 %v8599, %v6095
        %v8913 = vmul.f32 %v8600, %v6096
        %v8914 = vmul.f32 %v8601, %v6097
        %v8915 = vmul.f32 %v8602, %v6098
        %v8916 = vmul.f32 %v8603, %v6099
        %v8917 = vmul.f32 %v8604, %v6100
        %v8918 = vmul.f32 %v8605, %v6101
        %v8919 = vmul.f32 %v8606, %v6102
        %v8920 = vmul.f32 %v8607, %v6103
        %v8921 = vmul.f32 %v8608, %v6104
        %v8922 = vmul.f32 %v8609, %v6105
        %v8923 = vmul.f32 %v8610, %v6106
        %v8924 = vmul.f32 %v8611, %v6107
        %v8925 = vmul.f32 %v8612, %v6108
        %v8926 = vmul.f32 %v8613, %v6109
        %v8927 = vmul.f32 %v8614, %v6110
        %v8928 = vmul.f32 %v8615, %v6111
        %v8929 = vmul.f32 %v8616, %v6112
        %v8930 = vmul.f32 %v8617, %v6113
        %v8931 = vmul.f32 %v8618, %v6114
        %v8932 = vmul.f32 %v8619, %v6115
        %v8933 = vmul.f32 %v8620, %v6116
        %v8934 = vmul.f32 %v8621, %v6117
        %v8935 = vmul.f32 %v8622, %v6118
        %v8936 = vmul.f32 %v8623, %v6119
        %v8937 = vmul.f32 %v8624, %v6120
        %v8938 = vmul.f32 %v8625, %v6121
        %v8939 = vmul.f32 %v8626, %v6122
        %v8940 = vmul.f32 %v8627, %v6123
        %v8941 = vmul.f32 %v8628, %v6124
        %v8942 = vmul.f32 %v8629, %v6125
        %v8943 = vmul.f32 %v8630, %v6126
        %v8944 = vmul.f32 %v8631, %v6127
        %v8945 = vmul.f32 %v8632, %v6128
        %v8946 = vmul.f32 %v8633, %v6129
        %v8947 = vmul.f32 %v8634, %v6130
        %v8948 = vmul.f32 %v8635, %v6131
        %v8949 = vmul.f32 %v8636, %v6132
        %v8950 = vmul.f32 %v8637, %v6133
        %v8951 = vmul.f32 %v8638, %v6134
        %v8952 = vmul.f32 %v8639, %v6135
        %v8953 = vmul.f32 %v8640, %v6136
        %v8954 = vmul.f32 %v8641, %v6137
        %v8955 = vmul.f32 %v8642, %v6138
        %v8956 = vmul.f32 %v8643, %v6139
        %v8957 = vmul.f32 %v8644, %v6140
        %v8958 = vmul.f32 %v8645, %v6141
        %v8959 = vmul.f32 %v8646, %v6142
        %v8960 = vmul.f32 %v8647, %v6143
        %v8961 = vmul.f32 %v8648, %v6144
        %v8962 = vmul.f32 %v8649, %v6145
        %v8963 = vmul.f32 %v8650, %v6146
        %v8964 = vmul.f32 %v8651, %v6147
        %v8965 = vmul.f32 %v8652, %v6148
        %v8966 = vmul.f32 %v8653, %v6149
        %v8967 = vmul.f32 %v8654, %v6150
        %v8968 = vmul.f32 %v8655, %v6151
        %v8969 = vmul.f32 %v8656, %v6152
        %v8970 = vmul.f32 %v8657, %v6153
        %v8971 = vmul.f32 %v8658, %v6154
        %v8972 = vmul.f32 %v8659, %v6155
        %v8973 = vmul.f32 %v8660, %v6156
        %v8974 = vmul.f32 %v8661, %v6157
        %v8975 = vmul.f32 %v8662, %v6158
        %v8976 = vmul.f32 %v8663, %v6159
        %v8977 = vmul.f32 %v8664, %v6160
        %v8978 = vmul.f32 %v8665, %v6161
        %v8979 = vmul.f32 %v8666, %v6162
        %v8980 = vmul.f32 %v8667, %v3972
        %v8981 = vmul.f32 %v8668, %v3973
        %v8982 = vmul.f32 %v8669, %v3974
        %v8983 = vmul.f32 %v8670, %v3975
        %v8984 = vmul.f32 %v8671, %v3976
        %v8985 = vmul.f32 %v8672, %v3977
        %v8986 = vmul.f32 %v8673, %v3978
        %v8987 = vmul.f32 %v8674, %v3979
        %v8988 = vmul.f32 %v8675, %v3980
        %v8989 = vmul.f32 %v8676, %v3981
        %v8990 = vmul.f32 %v8677, %v3982
        %v8991 = vmul.f32 %v8678, %v3983
        %v8992 = vmul.f32 %v8679, %v3984
        %v8993 = vmul.f32 %v8680, %v3985
        %v8994 = vmul.f32 %v8681, %v3986
        %v8995 = vmul.f32 %v8682, %v3987
        %v8996 = vmul.f32 %v8683, %v3988
        %v8997 = vmul.f32 %v8684, %v3989
        %v8998 = vmul.f32 %v8685, %v3990
        %v8999 = vmul.f32 %v8686, %v3991
        %v9000 = vmul.f32 %v8687, %v3992
        %v9001 = vmul.f32 %v8688, %v3993
        %v9002 = vmul.f32 %v8689, %v3994
        %v9003 = vmul.f32 %v8690, %v3995
        %v9004 = vmul.f32 %v8691, %v3996
        %v9005 = vmul.f32 %v8692, %v3997
        %v9006 = vmul.f32 %v8693, %v3998
        %v9007 = vmul.f32 %v8694, %v3999
        %v9008 = vmul.f32 %v8695, %v4000
        %v9009 = vmul.f32 %v8696, %v4001
        %v9010 = vmul.f32 %v8697, %v4002
        %v9011 = vmul.f32 %v8698, %v4003
        %v9012 = vmul.f32 %v8699, %v4004
        %v9013 = vmul.f32 %v8700, %v4005
        %v9014 = vmul.f32 %v8701, %v4006
        %v9015 = vmul.f32 %v8702, %v4007
        %v9016 = vmul.f32 %v8703, %v4008
        %v9017 = vmul.f32 %v8704, %v4009
        %v9018 = vmul.f32 %v8705, %v4010
        %v9019 = vmul.f32 %v8706, %v4011
        %v9020 = vmul.f32 %v8707, %v4012
        %v9021 = vmul.f32 %v8708, %v4013
        %v9022 = vmul.f32 %v8709, %v4014
        %v9023 = vmul.f32 %v8710, %v4015
        %v9024 = vmul.f32 %v8711, %v4016
        %v9025 = vmul.f32 %v8712, %v4017
        %v9026 = vmul.f32 %v8713, %v4018
        %v9027 = vmul.f32 %v8714, %v4019
        %v9028 = vmul.f32 %v8715, %v4020
        %v9029 = vmul.f32 %v8716, %v4021
        %v9030 = vmul.f32 %v8717, %v4022
        %v9031 = vmul.f32 %v8718, %v4023
        %v9032 = vmul.f32 %v8719, %v4024
        %v9033 = vmul.f32 %v8720, %v4025
        %v9034 = vmul.f32 %v8721, %v4026
        %v9035 = vmul.f32 %v8722, %v4027
        %v9036 = vmul.f32 %v8723, %v4028
        %v9037 = vmul.f32 %v8724, %v4029
        %v9038 = vmul.f32 %v8725, %v4030
        %v9039 = vmul.f32 %v8726, %v4031
        %v9040 = vmul.f32 %v8727, %v4032
        %v9041 = vmul.f32 %v8728, %v4033
        %v9042 = vmul.f32 %v8729, %v4034
        %v9043 = vmul.f32 %v8730, %v4035
        %v9044 = vmul.f32 %v8731, %v4036
        %v9045 = vmul.f32 %v8732, %v4037
        %v9046 = vmul.f32 %v8733, %v4038
        %v9047 = vmul.f32 %v8734, %v4039
        %v9048 = vmul.f32 %v8735, %v4040
        %v9049 = vmul.f32 %v8736, %v4041
        %v9050 = vmul.f32 %v8737, %v4042
        %v9051 = vmul.f32 %v8738, %v4043
        %v9052 = vmul.f32 %v8739, %v4044
        %v9053 = vmul.f32 %v8740, %v4045
        %v9054 = vmul.f32 %v8741, %v4046
        %v9055 = vmul.f32 %v8742, %v4047
        %v9056 = vmul.f32 %v8743, %v4048
        %v9057 = vmul.f32 %v8744, %v4049
        %v9058 = vmul.f32 %v8745, %v4050
        %v9059 = vmul.f32 %v8746, %v4051
        %v9060 = vmul.f32 %v8747, %v4052
        %v9061 = vmul.f32 %v8748, %v4053
        %v9062 = vmul.f32 %v8749, %v4054
        %v9063 = vmul.f32 %v8750, %v4055
        %v9064 = vmul.f32 %v8751, %v4056
        %v9065 = vmul.f32 %v8752, %v4057
        %v9066 = vmul.f32 %v8753, %v4058
        %v9067 = vmul.f32 %v8754, %v4059
        %v9068 = vmul.f32 %v8755, %v4060
        %v9069 = vmul.f32 %v8756, %v4061
        %v9070 = vmul.f32 %v8757, %v4062
        %v9071 = vmul.f32 %v8758, %v4063
        %v9072 = vmul.f32 %v8759, %v4064
        %v9073 = vmul.f32 %v8760, %v4065
        %v9074 = vmul.f32 %v8761, %v4066
        %v9075 = vmul.f32 %v8762, %v4067
        %v9076 = vmul.f32 %v8763, %v4068
        %v9077 = vmul.f32 %v8764, %v4069
        %v9078 = vmul.f32 %v8765, %v4070
        %v9079 = vmul.f32 %v8766, %v4071
        %v9080 = vmul.f32 %v8767, %v4072
        %v9081 = vmul.f32 %v8768, %v4073
        %v9082 = vmul.f32 %v8769, %v4074
        %v9083 = vmul.f32 %v8770, %v4075
        %v9084 = vmul.f32 %v8771, %v4076
        %v9085 = vmul.f32 %v8772, %v4077
        %v9086 = vmul.f32 %v8773, %v4078
        %v9087 = vmul.f32 %v8774, %v4079
        %v9088 = vmul.f32 %v8775, %v4080
        %v9089 = vmul.f32 %v8776, %v4081
        %v9090 = vmul.f32 %v8777, %v4082
        %v9091 = vmul.f32 %v8778, %v4083
        %v9092 = vmul.f32 %v8779, %v4084
        %v9093 = vmul.f32 %v8780, %v4085
        %v9094 = vmul.f32 %v8781, %v4086
        %v9095 = vmul.f32 %v8782, %v4087
        %v9096 = vmul.f32 %v8783, %v4088
        %v9097 = vmul.f32 %v8784, %v4089
        %v9098 = vmul.f32 %v8785, %v4090
        %v9099 = vmul.f32 %v8786, %v4091
        %v9100 = vmul.f32 %v8787, %v4092
        %v9101 = vmul.f32 %v8788, %v4093
        %v9102 = vmul.f32 %v8789, %v4094
        %v9103 = vmul.f32 %v8790, %v4095
        %v9104 = vmul.f32 %v8791, %v4096
        %v9105 = vmul.f32 %v8792, %v4097
        %v9106 = vmul.f32 %v8793, %v4098
        %v9107 = vmul.f32 %v8794, %v4099
        %v9108 = vmul.f32 %v8795, %v4100
        %v9109 = vmul.f32 %v8796, %v4101
        %v9110 = vmul.f32 %v8797, %v4102
        %v9111 = vmul.f32 %v8798, %v4103
        %v9112 = vmul.f32 %v8799, %v4104
        %v9113 = vmul.f32 %v8800, %v4105
        %v9114 = vmul.f32 %v8801, %v4106
        %v9115 = vmul.f32 %v8802, %v4107
        %v9116 = vmul.f32 %v8803, %v4108
        %v9117 = vmul.f32 %v8804, %v4109
        %v9118 = vmul.f32 %v8805, %v4110
        %v9119 = vmul.f32 %v8806, %v4111
        %v9120 = vmul.f32 %v8807, %v4112
        %v9121 = vmul.f32 %v8808, %v4113
        %v9122 = vmul.f32 %v8809, %v4114
        %v9123 = vmul.f32 %v8810, %v4115
        %v9124 = vmul.f32 %v8811, %v4116
        %v9125 = vmul.f32 %v8812, %v4117
        %v9126 = vmul.f32 %v8813, %v4118
        %v9127 = vmul.f32 %v8814, %v4119
        %v9128 = vmul.f32 %v8815, %v4120
        %v9129 = vmul.f32 %v8816, %v4121
        %v9130 = vmul.f32 %v8817, %v4122
        %v9131 = vmul.f32 %v8818, %v4123
        %v9132 = vmul.f32 %v8819, %v4124
        %v9133 = vmul.f32 %v8820, %v4125
        %v9134 = vmul.f32 %v8821, %v4126
        %v9135 = vmul.f32 %v8822, %v4127
        %v9136 = vmul.f32 %v8823, %v4128
        %v9137 = vmul.f32 %v8824, %v4129
        %v9138 = vmul.f32 %v8825, %v4130
        %v9139 = vmul.f32 %v8826, %v4131
        %v9140 = vmul.f32 %v8827, %v4132
        %v9141 = vmul.f32 %v8828, %v4133
        %v9142 = vmul.f32 %v8829, %v4134
        %v9143 = vmul.f32 %v8830, %v4135
        %v9144 = vmul.f32 %v8831, %v4136
        %v9145 = vmul.f32 %v8832, %v4137
        %v9146 = vmul.f32 %v8833, %v4138
        %v9147 = vmul.f32 %v8834, %v4139
        %v9148 = vmul.f32 %v8835, %v4140
        %v9149 = vmul.f32 %v8836, %v4141
        %v9150 = vmul.f32 %v8837, %v4142
        %v9151 = vmul.f32 %v8838, %v4143
        %v9152 = vmul.f32 %v8839, %v4144
        %v9153 = vmul.f32 %v8840, %v4145
        %v9154 = vmul.f32 %v8841, %v4146
        %v9155 = vmul.f32 %v8842, %v4147
        %v9156 = vmul.f32 %v8843, %v4148
        %v9157 = vmul.f32 %v8844, %v4149
        %v9158 = vmul.f32 %v8845, %v4150
        %v9159 = vmul.f32 %v8846, %v4151
        %v9160 = vmul.f32 %v8847, %v4152
        %v9161 = vmul.f32 %v8848, %v4153
        %v9162 = vmul.f32 %v8849, %v4154
        %v9163 = vmul.f32 %v8850, %v4155
        %v9164 = vmul.f32 %v8851, %v4156
        %v9165 = vmul.f32 %v8852, %v4157
        %v9166 = vmul.f32 %v8853, %v4158
        %v9167 = vmul.f32 %v8854, %v4159
        %v9168 = vmul.f32 %v8855, %v4160
        %v9169 = vmul.f32 %v8856, %v4161
        %v9170 = vmul.f32 %v8857, %v4162
        %v9171 = vmul.f32 %v8858, %v4163
        %v9172 = vmul.f32 %v8859, %v4164
        %v9173 = vmul.f32 %v8860, %v4165
        %v9174 = vmul.f32 %v8861, %v4166
        %v9175 = vmul.f32 %v8862, %v4167
        %v9176 = vmul.f32 %v8863, %v4168
        %v9177 = vmul.f32 %v8864, %v4169
        %v9178 = vmul.f32 %v8865, %v4170
        %v9179 = vmul.f32 %v8866, %v4171
        %v9180 = vmul.f32 %v8867, %v4172
        %v9181 = vmul.f32 %v8868, %v4173
        %v9182 = vmul.f32 %v8869, %v4174
        %v9183 = vmul.f32 %v8870, %v4175
        %v9184 = vmul.f32 %v8871, %v4176
        %v9185 = vmul.f32 %v8872, %v4177
        %v9186 = vmul.f32 %v8873, %v4178
        %v9187 = vmul.f32 %v8874, %v4179
        %v9188 = vmul.f32 %v8875, %v4180
        %v9189 = vmul.f32 %v8876, %v4181
        %v9190 = vmul.f32 %v8877, %v4182
        %v9191 = vmul.f32 %v8878, %v4183
        %v9192 = vmul.f32 %v8879, %v4184
        %v9193 = vmul.f32 %v8880, %v4185
        %v9194 = vmul.f32 %v8881, %v4186
        %v9195 = vmul.f32 %v8882, %v4187
        %v9196 = vmul.f32 %v8883, %v4188
        %v9197 = vmul.f32 %v8884, %v4189
        %v9198 = vmul.f32 %v8885, %v4190
        %v9199 = vmul.f32 %v8886, %v4191
        %v9200 = vmul.f32 %v8887, %v4192
        %v9201 = vmul.f32 %v8888, %v4193
        %v9202 = vmul.f32 %v8889, %v4194
        %v9203 = vmul.f32 %v8890, %v4195
        %v9204 = vmul.f32 %v8891, %v4196
        %v9205 = vmul.f32 %v8892, %v4197
        %v9206 = vmul.f32 %v8893, %v4198
        %v9207 = vmul.f32 %v8894, %v4199
        %v9208 = vmul.f32 %v8895, %v4200
        %v9209 = vmul.f32 %v8896, %v4201
        %v9210 = vmul.f32 %v8897, %v4202
        %v9211 = vmul.f32 %v8898, %v4203
        %v9212 = vmul.f32 %v8899, %v4204
        %v9213 = vmul.f32 %v8900, %v4205
        %v9214 = vmul.f32 %v8901, %v4206
        %v9215 = vmul.f32 %v8902, %v4207
        %v9216 = vmul.f32 %v8903, %v4208
        %v9217 = vmul.f32 %v8904, %v4209
        %v9218 = vmul.f32 %v8905, %v4210
        %v9219 = vmul.f32 %v8906, %v4211
        %v9220 = vmul.f32 %v8907, %v4212
        %v9221 = vmul.f32 %v8908, %v4213
        %v9222 = vmul.f32 %v8909, %v4214
        %v9223 = vmul.f32 %v8910, %v4215
        %v9224 = vmul.f32 %v8911, %v4216
        %v9225 = vmul.f32 %v8912, %v4217
        %v9226 = vmul.f32 %v8913, %v4218
        %v9227 = vmul.f32 %v8914, %v4219
        %v9228 = vmul.f32 %v8915, %v4220
        %v9229 = vmul.f32 %v8916, %v4221
        %v9230 = vmul.f32 %v8917, %v4222
        %v9231 = vmul.f32 %v8918, %v4223
        %v9232 = vmul.f32 %v8919, %v4224
        %v9233 = vmul.f32 %v8920, %v4225
        %v9234 = vmul.f32 %v8921, %v4226
        %v9235 = vmul.f32 %v8922, %v4227
        %v9236 = vmul.f32 %v8923, %v4228
        %v9237 = vmul.f32 %v8924, %v4229
        %v9238 = vmul.f32 %v8925, %v4230
        %v9239 = vmul.f32 %v8926, %v4231
        %v9240 = vmul.f32 %v8927, %v4232
        %v9241 = vmul.f32 %v8928, %v4233
        %v9242 = vmul.f32 %v8929, %v4234
        %v9243 = vmul.f32 %v8930, %v4235
        %v9244 = vmul.f32 %v8931, %v4236
        %v9245 = vmul.f32 %v8932, %v4237
        %v9246 = vmul.f32 %v8933, %v4238
        %v9247 = vmul.f32 %v8934, %v4239
        %v9248 = vmul.f32 %v8935, %v4240
        %v9249 = vmul.f32 %v8936, %v4241
        %v9250 = vmul.f32 %v8937, %v4242
        %v9251 = vmul.f32 %v8938, %v4243
        %v9252 = vmul.f32 %v8939, %v4244
        %v9253 = vmul.f32 %v8940, %v4245
        %v9254 = vmul.f32 %v8941, %v4246
        %v9255 = vmul.f32 %v8942, %v4247
        %v9256 = vmul.f32 %v8943, %v4248
        %v9257 = vmul.f32 %v8944, %v4249
        %v9258 = vmul.f32 %v8945, %v4250
        %v9259 = vmul.f32 %v8946, %v4251
        %v9260 = vmul.f32 %v8947, %v4252
        %v9261 = vmul.f32 %v8948, %v4253
        %v9262 = vmul.f32 %v8949, %v4254
        %v9263 = vmul.f32 %v8950, %v4255
        %v9264 = vmul.f32 %v8951, %v4256
        %v9265 = vmul.f32 %v8952, %v4257
        %v9266 = vmul.f32 %v8953, %v4258
        %v9267 = vmul.f32 %v8954, %v4259
        %v9268 = vmul.f32 %v8955, %v4260
        %v9269 = vmul.f32 %v8956, %v4261
        %v9270 = vmul.f32 %v8957, %v4262
        %v9271 = vmul.f32 %v8958, %v4263
        %v9272 = vmul.f32 %v8959, %v4264
        %v9273 = vmul.f32 %v8960, %v4265
        %v9274 = vmul.f32 %v8961, %v4266
        %v9275 = vmul.f32 %v8962, %v4267
        %v9276 = vmul.f32 %v8963, %v4268
        %v9277 = vmul.f32 %v8964, %v4269
        %v9278 = vmul.f32 %v8965, %v4270
        %v9279 = vmul.f32 %v8966, %v4271
        %v9280 = vmul.f32 %v8967, %v4272
        %v9281 = vmul.f32 %v8968, %v4273
        %v9282 = vmul.f32 %v8969, %v4274
        %v9283 = vmul.f32 %v8970, %v4275
        %v9284 = vmul.f32 %v8971, %v4276
        %v9285 = vmul.f32 %v8972, %v4277
        %v9286 = vmul.f32 %v8973, %v4278
        %v9287 = vmul.f32 %v8974, %v4279
        %v9288 = vmul.f32 %v8975, %v4280
        %v9289 = vmul.f32 %v8976, %v4281
        %v9290 = vmul.f32 %v8977, %v4282
        %v9291 = vmul.f32 %v8978, %v4283
        %v9292 = vmul.f32 %v8979, %v4284
        %v9293 = vadd.f32 %v8980, %v3972
        %v9294 = vadd.f32 %v8981, %v3973
        %v9295 = vadd.f32 %v8982, %v3974
        %v9296 = vadd.f32 %v8983, %v3975
        %v9297 = vadd.f32 %v8984, %v3976
        %v9298 = vadd.f32 %v8985, %v3977
        %v9299 = vadd.f32 %v8986, %v3978
        %v9300 = vadd.f32 %v8987, %v3979
        %v9301 = vadd.f32 %v8988, %v3980
        %v9302 = vadd.f32 %v8989, %v3981
        %v9303 = vadd.f32 %v8990, %v3982
        %v9304 = vadd.f32 %v8991, %v3983
        %v9305 = vadd.f32 %v8992, %v3984
        %v9306 = vadd.f32 %v8993, %v3985
        %v9307 = vadd.f32 %v8994, %v3986
        %v9308 = vadd.f32 %v8995, %v3987
        %v9309 = vadd.f32 %v8996, %v3988
        %v9310 = vadd.f32 %v8997, %v3989
        %v9311 = vadd.f32 %v8998, %v3990
        %v9312 = vadd.f32 %v8999, %v3991
        %v9313 = vadd.f32 %v9000, %v3992
        %v9314 = vadd.f32 %v9001, %v3993
        %v9315 = vadd.f32 %v9002, %v3994
        %v9316 = vadd.f32 %v9003, %v3995
        %v9317 = vadd.f32 %v9004, %v3996
        %v9318 = vadd.f32 %v9005, %v3997
        %v9319 = vadd.f32 %v9006, %v3998
        %v9320 = vadd.f32 %v9007, %v3999
        %v9321 = vadd.f32 %v9008, %v4000
        %v9322 = vadd.f32 %v9009, %v4001
        %v9323 = vadd.f32 %v9010, %v4002
        %v9324 = vadd.f32 %v9011, %v4003
        %v9325 = vadd.f32 %v9012, %v4004
        %v9326 = vadd.f32 %v9013, %v4005
        %v9327 = vadd.f32 %v9014, %v4006
        %v9328 = vadd.f32 %v9015, %v4007
        %v9329 = vadd.f32 %v9016, %v4008
        %v9330 = vadd.f32 %v9017, %v4009
        %v9331 = vadd.f32 %v9018, %v4010
        %v9332 = vadd.f32 %v9019, %v4011
        %v9333 = vadd.f32 %v9020, %v4012
        %v9334 = vadd.f32 %v9021, %v4013
        %v9335 = vadd.f32 %v9022, %v4014
        %v9336 = vadd.f32 %v9023, %v4015
        %v9337 = vadd.f32 %v9024, %v4016
        %v9338 = vadd.f32 %v9025, %v4017
        %v9339 = vadd.f32 %v9026, %v4018
        %v9340 = vadd.f32 %v9027, %v4019
        %v9341 = vadd.f32 %v9028, %v4020
        %v9342 = vadd.f32 %v9029, %v4021
        %v9343 = vadd.f32 %v9030, %v4022
        %v9344 = vadd.f32 %v9031, %v4023
        %v9345 = vadd.f32 %v9032, %v4024
        %v9346 = vadd.f32 %v9033, %v4025
        %v9347 = vadd.f32 %v9034, %v4026
        %v9348 = vadd.f32 %v9035, %v4027
        %v9349 = vadd.f32 %v9036, %v4028
        %v9350 = vadd.f32 %v9037, %v4029
        %v9351 = vadd.f32 %v9038, %v4030
        %v9352 = vadd.f32 %v9039, %v4031
        %v9353 = vadd.f32 %v9040, %v4032
        %v9354 = vadd.f32 %v9041, %v4033
        %v9355 = vadd.f32 %v9042, %v4034
        %v9356 = vadd.f32 %v9043, %v4035
        %v9357 = vadd.f32 %v9044, %v4036
        %v9358 = vadd.f32 %v9045, %v4037
        %v9359 = vadd.f32 %v9046, %v4038
        %v9360 = vadd.f32 %v9047, %v4039
        %v9361 = vadd.f32 %v9048, %v4040
        %v9362 = vadd.f32 %v9049, %v4041
        %v9363 = vadd.f32 %v9050, %v4042
        %v9364 = vadd.f32 %v9051, %v4043
        %v9365 = vadd.f32 %v9052, %v4044
        %v9366 = vadd.f32 %v9053, %v4045
        %v9367 = vadd.f32 %v9054, %v4046
        %v9368 = vadd.f32 %v9055, %v4047
        %v9369 = vadd.f32 %v9056, %v4048
        %v9370 = vadd.f32 %v9057, %v4049
        %v9371 = vadd.f32 %v9058, %v4050
        %v9372 = vadd.f32 %v9059, %v4051
        %v9373 = vadd.f32 %v9060, %v4052
        %v9374 = vadd.f32 %v9061, %v4053
        %v9375 = vadd.f32 %v9062, %v4054
        %v9376 = vadd.f32 %v9063, %v4055
        %v9377 = vadd.f32 %v9064, %v4056
        %v9378 = vadd.f32 %v9065, %v4057
        %v9379 = vadd.f32 %v9066, %v4058
        %v9380 = vadd.f32 %v9067, %v4059
        %v9381 = vadd.f32 %v9068, %v4060
        %v9382 = vadd.f32 %v9069, %v4061
        %v9383 = vadd.f32 %v9070, %v4062
        %v9384 = vadd.f32 %v9071, %v4063
        %v9385 = vadd.f32 %v9072, %v4064
        %v9386 = vadd.f32 %v9073, %v4065
        %v9387 = vadd.f32 %v9074, %v4066
        %v9388 = vadd.f32 %v9075, %v4067
        %v9389 = vadd.f32 %v9076, %v4068
        %v9390 = vadd.f32 %v9077, %v4069
        %v9391 = vadd.f32 %v9078, %v4070
        %v9392 = vadd.f32 %v9079, %v4071
        %v9393 = vadd.f32 %v9080, %v4072
        %v9394 = vadd.f32 %v9081, %v4073
        %v9395 = vadd.f32 %v9082, %v4074
        %v9396 = vadd.f32 %v9083, %v4075
        %v9397 = vadd.f32 %v9084, %v4076
        %v9398 = vadd.f32 %v9085, %v4077
        %v9399 = vadd.f32 %v9086, %v4078
        %v9400 = vadd.f32 %v9087, %v4079
        %v9401 = vadd.f32 %v9088, %v4080
        %v9402 = vadd.f32 %v9089, %v4081
        %v9403 = vadd.f32 %v9090, %v4082
        %v9404 = vadd.f32 %v9091, %v4083
        %v9405 = vadd.f32 %v9092, %v4084
        %v9406 = vadd.f32 %v9093, %v4085
        %v9407 = vadd.f32 %v9094, %v4086
        %v9408 = vadd.f32 %v9095, %v4087
        %v9409 = vadd.f32 %v9096, %v4088
        %v9410 = vadd.f32 %v9097, %v4089
        %v9411 = vadd.f32 %v9098, %v4090
        %v9412 = vadd.f32 %v9099, %v4091
        %v9413 = vadd.f32 %v9100, %v4092
        %v9414 = vadd.f32 %v9101, %v4093
        %v9415 = vadd.f32 %v9102, %v4094
        %v9416 = vadd.f32 %v9103, %v4095
        %v9417 = vadd.f32 %v9104, %v4096
        %v9418 = vadd.f32 %v9105, %v4097
        %v9419 = vadd.f32 %v9106, %v4098
        %v9420 = vadd.f32 %v9107, %v4099
        %v9421 = vadd.f32 %v9108, %v4100
        %v9422 = vadd.f32 %v9109, %v4101
        %v9423 = vadd.f32 %v9110, %v4102
        %v9424 = vadd.f32 %v9111, %v4103
        %v9425 = vadd.f32 %v9112, %v4104
        %v9426 = vadd.f32 %v9113, %v4105
        %v9427 = vadd.f32 %v9114, %v4106
        %v9428 = vadd.f32 %v9115, %v4107
        %v9429 = vadd.f32 %v9116, %v4108
        %v9430 = vadd.f32 %v9117, %v4109
        %v9431 = vadd.f32 %v9118, %v4110
        %v9432 = vadd.f32 %v9119, %v4111
        %v9433 = vadd.f32 %v9120, %v4112
        %v9434 = vadd.f32 %v9121, %v4113
        %v9435 = vadd.f32 %v9122, %v4114
        %v9436 = vadd.f32 %v9123, %v4115
        %v9437 = vadd.f32 %v9124, %v4116
        %v9438 = vadd.f32 %v9125, %v4117
        %v9439 = vadd.f32 %v9126, %v4118
        %v9440 = vadd.f32 %v9127, %v4119
        %v9441 = vadd.f32 %v9128, %v4120
        %v9442 = vadd.f32 %v9129, %v4121
        %v9443 = vadd.f32 %v9130, %v4122
        %v9444 = vadd.f32 %v9131, %v4123
        %v9445 = vadd.f32 %v9132, %v4124
        %v9446 = vadd.f32 %v9133, %v4125
        %v9447 = vadd.f32 %v9134, %v4126
        %v9448 = vadd.f32 %v9135, %v4127
        %v9449 = vadd.f32 %v9136, %v4128
        %v9450 = vadd.f32 %v9137, %v4129
        %v9451 = vadd.f32 %v9138, %v4130
        %v9452 = vadd.f32 %v9139, %v4131
        %v9453 = vadd.f32 %v9140, %v4132
        %v9454 = vadd.f32 %v9141, %v4133
        %v9455 = vadd.f32 %v9142, %v4134
        %v9456 = vadd.f32 %v9143, %v4135
        %v9457 = vadd.f32 %v9144, %v4136
        %v9458 = vadd.f32 %v9145, %v4137
        %v9459 = vadd.f32 %v9146, %v4138
        %v9460 = vadd.f32 %v9147, %v4139
        %v9461 = vadd.f32 %v9148, %v4140
        %v9462 = vadd.f32 %v9149, %v4141
        %v9463 = vadd.f32 %v9150, %v4142
        %v9464 = vadd.f32 %v9151, %v4143
        %v9465 = vadd.f32 %v9152, %v4144
        %v9466 = vadd.f32 %v9153, %v4145
        %v9467 = vadd.f32 %v9154, %v4146
        %v9468 = vadd.f32 %v9155, %v4147
        %v9469 = vadd.f32 %v9156, %v4148
        %v9470 = vadd.f32 %v9157, %v4149
        %v9471 = vadd.f32 %v9158, %v4150
        %v9472 = vadd.f32 %v9159, %v4151
        %v9473 = vadd.f32 %v9160, %v4152
        %v9474 = vadd.f32 %v9161, %v4153
        %v9475 = vadd.f32 %v9162, %v4154
        %v9476 = vadd.f32 %v9163, %v4155
        %v9477 = vadd.f32 %v9164, %v4156
        %v9478 = vadd.f32 %v9165, %v4157
        %v9479 = vadd.f32 %v9166, %v4158
        %v9480 = vadd.f32 %v9167, %v4159
        %v9481 = vadd.f32 %v9168, %v4160
        %v9482 = vadd.f32 %v9169, %v4161
        %v9483 = vadd.f32 %v9170, %v4162
        %v9484 = vadd.f32 %v9171, %v4163
        %v9485 = vadd.f32 %v9172, %v4164
        %v9486 = vadd.f32 %v9173, %v4165
        %v9487 = vadd.f32 %v9174, %v4166
        %v9488 = vadd.f32 %v9175, %v4167
        %v9489 = vadd.f32 %v9176, %v4168
        %v9490 = vadd.f32 %v9177, %v4169
        %v9491 = vadd.f32 %v9178, %v4170
        %v9492 = vadd.f32 %v9179, %v4171
        %v9493 = vadd.f32 %v9180, %v4172
        %v9494 = vadd.f32 %v9181, %v4173
        %v9495 = vadd.f32 %v9182, %v4174
        %v9496 = vadd.f32 %v9183, %v4175
        %v9497 = vadd.f32 %v9184, %v4176
        %v9498 = vadd.f32 %v9185, %v4177
        %v9499 = vadd.f32 %v9186, %v4178
        %v9500 = vadd.f32 %v9187, %v4179
        %v9501 = vadd.f32 %v9188, %v4180
        %v9502 = vadd.f32 %v9189, %v4181
        %v9503 = vadd.f32 %v9190, %v4182
        %v9504 = vadd.f32 %v9191, %v4183
        %v9505 = vadd.f32 %v9192, %v4184
        %v9506 = vadd.f32 %v9193, %v4185
        %v9507 = vadd.f32 %v9194, %v4186
        %v9508 = vadd.f32 %v9195, %v4187
        %v9509 = vadd.f32 %v9196, %v4188
        %v9510 = vadd.f32 %v9197, %v4189
        %v9511 = vadd.f32 %v9198, %v4190
        %v9512 = vadd.f32 %v9199, %v4191
        %v9513 = vadd.f32 %v9200, %v4192
        %v9514 = vadd.f32 %v9201, %v4193
        %v9515 = vadd.f32 %v9202, %v4194
        %v9516 = vadd.f32 %v9203, %v4195
        %v9517 = vadd.f32 %v9204, %v4196
        %v9518 = vadd.f32 %v9205, %v4197
        %v9519 = vadd.f32 %v9206, %v4198
        %v9520 = vadd.f32 %v9207, %v4199
        %v9521 = vadd.f32 %v9208, %v4200
        %v9522 = vadd.f32 %v9209, %v4201
        %v9523 = vadd.f32 %v9210, %v4202
        %v9524 = vadd.f32 %v9211, %v4203
        %v9525 = vadd.f32 %v9212, %v4204
        %v9526 = vadd.f32 %v9213, %v4205
        %v9527 = vadd.f32 %v9214, %v4206
        %v9528 = vadd.f32 %v9215, %v4207
        %v9529 = vadd.f32 %v9216, %v4208
        %v9530 = vadd.f32 %v9217, %v4209
        %v9531 = vadd.f32 %v9218, %v4210
        %v9532 = vadd.f32 %v9219, %v4211
        %v9533 = vadd.f32 %v9220, %v4212
        %v9534 = vadd.f32 %v9221, %v4213
        %v9535 = vadd.f32 %v9222, %v4214
        %v9536 = vadd.f32 %v9223, %v4215
        %v9537 = vadd.f32 %v9224, %v4216
        %v9538 = vadd.f32 %v9225, %v4217
        %v9539 = vadd.f32 %v9226, %v4218
        %v9540 = vadd.f32 %v9227, %v4219
        %v9541 = vadd.f32 %v9228, %v4220
        %v9542 = vadd.f32 %v9229, %v4221
        %v9543 = vadd.f32 %v9230, %v4222
        %v9544 = vadd.f32 %v9231, %v4223
        %v9545 = vadd.f32 %v9232, %v4224
        %v9546 = vadd.f32 %v9233, %v4225
        %v9547 = vadd.f32 %v9234, %v4226
        %v9548 = vadd.f32 %v9235, %v4227
        %v9549 = vadd.f32 %v9236, %v4228
        %v9550 = vadd.f32 %v9237, %v4229
        %v9551 = vadd.f32 %v9238, %v4230
        %v9552 = vadd.f32 %v9239, %v4231
        %v9553 = vadd.f32 %v9240, %v4232
        %v9554 = vadd.f32 %v9241, %v4233
        %v9555 = vadd.f32 %v9242, %v4234
        %v9556 = vadd.f32 %v9243, %v4235
        %v9557 = vadd.f32 %v9244, %v4236
        %v9558 = vadd.f32 %v9245, %v4237
        %v9559 = vadd.f32 %v9246, %v4238
        %v9560 = vadd.f32 %v9247, %v4239
        %v9561 = vadd.f32 %v9248, %v4240
        %v9562 = vadd.f32 %v9249, %v4241
        %v9563 = vadd.f32 %v9250, %v4242
        %v9564 = vadd.f32 %v9251, %v4243
        %v9565 = vadd.f32 %v9252, %v4244
        %v9566 = vadd.f32 %v9253, %v4245
        %v9567 = vadd.f32 %v9254, %v4246
        %v9568 = vadd.f32 %v9255, %v4247
        %v9569 = vadd.f32 %v9256, %v4248
        %v9570 = vadd.f32 %v9257, %v4249
        %v9571 = vadd.f32 %v9258, %v4250
        %v9572 = vadd.f32 %v9259, %v4251
        %v9573 = vadd.f32 %v9260, %v4252
        %v9574 = vadd.f32 %v9261, %v4253
        %v9575 = vadd.f32 %v9262, %v4254
        %v9576 = vadd.f32 %v9263, %v4255
        %v9577 = vadd.f32 %v9264, %v4256
        %v9578 = vadd.f32 %v9265, %v4257
        %v9579 = vadd.f32 %v9266, %v4258
        %v9580 = vadd.f32 %v9267, %v4259
        %v9581 = vadd.f32 %v9268, %v4260
        %v9582 = vadd.f32 %v9269, %v4261
        %v9583 = vadd.f32 %v9270, %v4262
        %v9584 = vadd.f32 %v9271, %v4263
        %v9585 = vadd.f32 %v9272, %v4264
        %v9586 = vadd.f32 %v9273, %v4265
        %v9587 = vadd.f32 %v9274, %v4266
        %v9588 = vadd.f32 %v9275, %v4267
        %v9589 = vadd.f32 %v9276, %v4268
        %v9590 = vadd.f32 %v9277, %v4269
        %v9591 = vadd.f32 %v9278, %v4270
        %v9592 = vadd.f32 %v9279, %v4271
        %v9593 = vadd.f32 %v9280, %v4272
        %v9594 = vadd.f32 %v9281, %v4273
        %v9595 = vadd.f32 %v9282, %v4274
        %v9596 = vadd.f32 %v9283, %v4275
        %v9597 = vadd.f32 %v9284, %v4276
        %v9598 = vadd.f32 %v9285, %v4277
        %v9599 = vadd.f32 %v9286, %v4278
        %v9600 = vadd.f32 %v9287, %v4279
        %v9601 = vadd.f32 %v9288, %v4280
        %v9602 = vadd.f32 %v9289, %v4281
        %v9603 = vadd.f32 %v9290, %v4282
        %v9604 = vadd.f32 %v9291, %v4283
        %v9605 = vadd.f32 %v9292, %v4284
        %v9606 = vmul.f32 %v5537, %v9293
        %v9607 = vmul.f32 %v5538, %v9294
        %v9608 = vmul.f32 %v5539, %v9295
        %v9609 = vmul.f32 %v5540, %v9296
        %v9610 = vmul.f32 %v5541, %v9297
        %v9611 = vmul.f32 %v5542, %v9298
        %v9612 = vmul.f32 %v5543, %v9299
        %v9613 = vmul.f32 %v5544, %v9300
        %v9614 = vmul.f32 %v5545, %v9301
        %v9615 = vmul.f32 %v5546, %v9302
        %v9616 = vmul.f32 %v5547, %v9303
        %v9617 = vmul.f32 %v5548, %v9304
        %v9618 = vmul.f32 %v5549, %v9305
        %v9619 = vmul.f32 %v5550, %v9306
        %v9620 = vmul.f32 %v5551, %v9307
        %v9621 = vmul.f32 %v5552, %v9308
        %v9622 = vmul.f32 %v5553, %v9309
        %v9623 = vmul.f32 %v5554, %v9310
        %v9624 = vmul.f32 %v5555, %v9311
        %v9625 = vmul.f32 %v5556, %v9312
        %v9626 = vmul.f32 %v5557, %v9313
        %v9627 = vmul.f32 %v5558, %v9314
        %v9628 = vmul.f32 %v5559, %v9315
        %v9629 = vmul.f32 %v5560, %v9316
        %v9630 = vmul.f32 %v5561, %v9317
        %v9631 = vmul.f32 %v5562, %v9318
        %v9632 = vmul.f32 %v5563, %v9319
        %v9633 = vmul.f32 %v5564, %v9320
        %v9634 = vmul.f32 %v5565, %v9321
        %v9635 = vmul.f32 %v5566, %v9322
        %v9636 = vmul.f32 %v5567, %v9323
        %v9637 = vmul.f32 %v5568, %v9324
        %v9638 = vmul.f32 %v5569, %v9325
        %v9639 = vmul.f32 %v5570, %v9326
        %v9640 = vmul.f32 %v5571, %v9327
        %v9641 = vmul.f32 %v5572, %v9328
        %v9642 = vmul.f32 %v5573, %v9329
        %v9643 = vmul.f32 %v5574, %v9330
        %v9644 = vmul.f32 %v5575, %v9331
        %v9645 = vmul.f32 %v5576, %v9332
        %v9646 = vmul.f32 %v5577, %v9333
        %v9647 = vmul.f32 %v5578, %v9334
        %v9648 = vmul.f32 %v5579, %v9335
        %v9649 = vmul.f32 %v5580, %v9336
        %v9650 = vmul.f32 %v5581, %v9337
        %v9651 = vmul.f32 %v5582, %v9338
        %v9652 = vmul.f32 %v5583, %v9339
        %v9653 = vmul.f32 %v5584, %v9340
        %v9654 = vmul.f32 %v5585, %v9341
        %v9655 = vmul.f32 %v5586, %v9342
        %v9656 = vmul.f32 %v5587, %v9343
        %v9657 = vmul.f32 %v5588, %v9344
        %v9658 = vmul.f32 %v5589, %v9345
        %v9659 = vmul.f32 %v5590, %v9346
        %v9660 = vmul.f32 %v5591, %v9347
        %v9661 = vmul.f32 %v5592, %v9348
        %v9662 = vmul.f32 %v5593, %v9349
        %v9663 = vmul.f32 %v5594, %v9350
        %v9664 = vmul.f32 %v5595, %v9351
        %v9665 = vmul.f32 %v5596, %v9352
        %v9666 = vmul.f32 %v5597, %v9353
        %v9667 = vmul.f32 %v5598, %v9354
        %v9668 = vmul.f32 %v5599, %v9355
        %v9669 = vmul.f32 %v5600, %v9356
        %v9670 = vmul.f32 %v5601, %v9357
        %v9671 = vmul.f32 %v5602, %v9358
        %v9672 = vmul.f32 %v5603, %v9359
        %v9673 = vmul.f32 %v5604, %v9360
        %v9674 = vmul.f32 %v5605, %v9361
        %v9675 = vmul.f32 %v5606, %v9362
        %v9676 = vmul.f32 %v5607, %v9363
        %v9677 = vmul.f32 %v5608, %v9364
        %v9678 = vmul.f32 %v5609, %v9365
        %v9679 = vmul.f32 %v5610, %v9366
        %v9680 = vmul.f32 %v5611, %v9367
        %v9681 = vmul.f32 %v5612, %v9368
        %v9682 = vmul.f32 %v5613, %v9369
        %v9683 = vmul.f32 %v5614, %v9370
        %v9684 = vmul.f32 %v5615, %v9371
        %v9685 = vmul.f32 %v5616, %v9372
        %v9686 = vmul.f32 %v5617, %v9373
        %v9687 = vmul.f32 %v5618, %v9374
        %v9688 = vmul.f32 %v5619, %v9375
        %v9689 = vmul.f32 %v5620, %v9376
        %v9690 = vmul.f32 %v5621, %v9377
        %v9691 = vmul.f32 %v5622, %v9378
        %v9692 = vmul.f32 %v5623, %v9379
        %v9693 = vmul.f32 %v5624, %v9380
        %v9694 = vmul.f32 %v5625, %v9381
        %v9695 = vmul.f32 %v5626, %v9382
        %v9696 = vmul.f32 %v5627, %v9383
        %v9697 = vmul.f32 %v5628, %v9384
        %v9698 = vmul.f32 %v5629, %v9385
        %v9699 = vmul.f32 %v5630, %v9386
        %v9700 = vmul.f32 %v5631, %v9387
        %v9701 = vmul.f32 %v5632, %v9388
        %v9702 = vmul.f32 %v5633, %v9389
        %v9703 = vmul.f32 %v5634, %v9390
        %v9704 = vmul.f32 %v5635, %v9391
        %v9705 = vmul.f32 %v5636, %v9392
        %v9706 = vmul.f32 %v5637, %v9393
        %v9707 = vmul.f32 %v5638, %v9394
        %v9708 = vmul.f32 %v5639, %v9395
        %v9709 = vmul.f32 %v5640, %v9396
        %v9710 = vmul.f32 %v5641, %v9397
        %v9711 = vmul.f32 %v5642, %v9398
        %v9712 = vmul.f32 %v5643, %v9399
        %v9713 = vmul.f32 %v5644, %v9400
        %v9714 = vmul.f32 %v5645, %v9401
        %v9715 = vmul.f32 %v5646, %v9402
        %v9716 = vmul.f32 %v5647, %v9403
        %v9717 = vmul.f32 %v5648, %v9404
        %v9718 = vmul.f32 %v5649, %v9405
        %v9719 = vmul.f32 %v5650, %v9406
        %v9720 = vmul.f32 %v5651, %v9407
        %v9721 = vmul.f32 %v5652, %v9408
        %v9722 = vmul.f32 %v5653, %v9409
        %v9723 = vmul.f32 %v5654, %v9410
        %v9724 = vmul.f32 %v5655, %v9411
        %v9725 = vmul.f32 %v5656, %v9412
        %v9726 = vmul.f32 %v5657, %v9413
        %v9727 = vmul.f32 %v5658, %v9414
        %v9728 = vmul.f32 %v5659, %v9415
        %v9729 = vmul.f32 %v5660, %v9416
        %v9730 = vmul.f32 %v5661, %v9417
        %v9731 = vmul.f32 %v5662, %v9418
        %v9732 = vmul.f32 %v5663, %v9419
        %v9733 = vmul.f32 %v5664, %v9420
        %v9734 = vmul.f32 %v5665, %v9421
        %v9735 = vmul.f32 %v5666, %v9422
        %v9736 = vmul.f32 %v5667, %v9423
        %v9737 = vmul.f32 %v5668, %v9424
        %v9738 = vmul.f32 %v5669, %v9425
        %v9739 = vmul.f32 %v5670, %v9426
        %v9740 = vmul.f32 %v5671, %v9427
        %v9741 = vmul.f32 %v5672, %v9428
        %v9742 = vmul.f32 %v5673, %v9429
        %v9743 = vmul.f32 %v5674, %v9430
        %v9744 = vmul.f32 %v5675, %v9431
        %v9745 = vmul.f32 %v5676, %v9432
        %v9746 = vmul.f32 %v5677, %v9433
        %v9747 = vmul.f32 %v5678, %v9434
        %v9748 = vmul.f32 %v5679, %v9435
        %v9749 = vmul.f32 %v5680, %v9436
        %v9750 = vmul.f32 %v5681, %v9437
        %v9751 = vmul.f32 %v5682, %v9438
        %v9752 = vmul.f32 %v5683, %v9439
        %v9753 = vmul.f32 %v5684, %v9440
        %v9754 = vmul.f32 %v5685, %v9441
        %v9755 = vmul.f32 %v5686, %v9442
        %v9756 = vmul.f32 %v5687, %v9443
        %v9757 = vmul.f32 %v5688, %v9444
        %v9758 = vmul.f32 %v5689, %v9445
        %v9759 = vmul.f32 %v5690, %v9446
        %v9760 = vmul.f32 %v5691, %v9447
        %v9761 = vmul.f32 %v5692, %v9448
        %v9762 = vmul.f32 %v5693, %v9449
        %v9763 = vmul.f32 %v5694, %v9450
        %v9764 = vmul.f32 %v5695, %v9451
        %v9765 = vmul.f32 %v5696, %v9452
        %v9766 = vmul.f32 %v5697, %v9453
        %v9767 = vmul.f32 %v5698, %v9454
        %v9768 = vmul.f32 %v5699, %v9455
        %v9769 = vmul.f32 %v5700, %v9456
        %v9770 = vmul.f32 %v5701, %v9457
        %v9771 = vmul.f32 %v5702, %v9458
        %v9772 = vmul.f32 %v5703, %v9459
        %v9773 = vmul.f32 %v5704, %v9460
        %v9774 = vmul.f32 %v5705, %v9461
        %v9775 = vmul.f32 %v5706, %v9462
        %v9776 = vmul.f32 %v5707, %v9463
        %v9777 = vmul.f32 %v5708, %v9464
        %v9778 = vmul.f32 %v5709, %v9465
        %v9779 = vmul.f32 %v5710, %v9466
        %v9780 = vmul.f32 %v5711, %v9467
        %v9781 = vmul.f32 %v5712, %v9468
        %v9782 = vmul.f32 %v5713, %v9469
        %v9783 = vmul.f32 %v5714, %v9470
        %v9784 = vmul.f32 %v5715, %v9471
        %v9785 = vmul.f32 %v5716, %v9472
        %v9786 = vmul.f32 %v5717, %v9473
        %v9787 = vmul.f32 %v5718, %v9474
        %v9788 = vmul.f32 %v5719, %v9475
        %v9789 = vmul.f32 %v5720, %v9476
        %v9790 = vmul.f32 %v5721, %v9477
        %v9791 = vmul.f32 %v5722, %v9478
        %v9792 = vmul.f32 %v5723, %v9479
        %v9793 = vmul.f32 %v5724, %v9480
        %v9794 = vmul.f32 %v5725, %v9481
        %v9795 = vmul.f32 %v5726, %v9482
        %v9796 = vmul.f32 %v5727, %v9483
        %v9797 = vmul.f32 %v5728, %v9484
        %v9798 = vmul.f32 %v5729, %v9485
        %v9799 = vmul.f32 %v5730, %v9486
        %v9800 = vmul.f32 %v5731, %v9487
        %v9801 = vmul.f32 %v5732, %v9488
        %v9802 = vmul.f32 %v5733, %v9489
        %v9803 = vmul.f32 %v5734, %v9490
        %v9804 = vmul.f32 %v5735, %v9491
        %v9805 = vmul.f32 %v5736, %v9492
        %v9806 = vmul.f32 %v5737, %v9493
        %v9807 = vmul.f32 %v5738, %v9494
        %v9808 = vmul.f32 %v5739, %v9495
        %v9809 = vmul.f32 %v5740, %v9496
        %v9810 = vmul.f32 %v5741, %v9497
        %v9811 = vmul.f32 %v5742, %v9498
        %v9812 = vmul.f32 %v5743, %v9499
        %v9813 = vmul.f32 %v5744, %v9500
        %v9814 = vmul.f32 %v5745, %v9501
        %v9815 = vmul.f32 %v5746, %v9502
        %v9816 = vmul.f32 %v5747, %v9503
        %v9817 = vmul.f32 %v5748, %v9504
        %v9818 = vmul.f32 %v5749, %v9505
        %v9819 = vmul.f32 %v5750, %v9506
        %v9820 = vmul.f32 %v5751, %v9507
        %v9821 = vmul.f32 %v5752, %v9508
        %v9822 = vmul.f32 %v5753, %v9509
        %v9823 = vmul.f32 %v5754, %v9510
        %v9824 = vmul.f32 %v5755, %v9511
        %v9825 = vmul.f32 %v5756, %v9512
        %v9826 = vmul.f32 %v5757, %v9513
        %v9827 = vmul.f32 %v5758, %v9514
        %v9828 = vmul.f32 %v5759, %v9515
        %v9829 = vmul.f32 %v5760, %v9516
        %v9830 = vmul.f32 %v5761, %v9517
        %v9831 = vmul.f32 %v5762, %v9518
        %v9832 = vmul.f32 %v5763, %v9519
        %v9833 = vmul.f32 %v5764, %v9520
        %v9834 = vmul.f32 %v5765, %v9521
        %v9835 = vmul.f32 %v5766, %v9522
        %v9836 = vmul.f32 %v5767, %v9523
        %v9837 = vmul.f32 %v5768, %v9524
        %v9838 = vmul.f32 %v5769, %v9525
        %v9839 = vmul.f32 %v5770, %v9526
        %v9840 = vmul.f32 %v5771, %v9527
        %v9841 = vmul.f32 %v5772, %v9528
        %v9842 = vmul.f32 %v5773, %v9529
        %v9843 = vmul.f32 %v5774, %v9530
        %v9844 = vmul.f32 %v5775, %v9531
        %v9845 = vmul.f32 %v5776, %v9532
        %v9846 = vmul.f32 %v5777, %v9533
        %v9847 = vmul.f32 %v5778, %v9534
        %v9848 = vmul.f32 %v5779, %v9535
        %v9849 = vmul.f32 %v5780, %v9536
        %v9850 = vmul.f32 %v5781, %v9537
        %v9851 = vmul.f32 %v5782, %v9538
        %v9852 = vmul.f32 %v5783, %v9539
        %v9853 = vmul.f32 %v5784, %v9540
        %v9854 = vmul.f32 %v5785, %v9541
        %v9855 = vmul.f32 %v5786, %v9542
        %v9856 = vmul.f32 %v5787, %v9543
        %v9857 = vmul.f32 %v5788, %v9544
        %v9858 = vmul.f32 %v5789, %v9545
        %v9859 = vmul.f32 %v5790, %v9546
        %v9860 = vmul.f32 %v5791, %v9547
        %v9861 = vmul.f32 %v5792, %v9548
        %v9862 = vmul.f32 %v5793, %v9549
        %v9863 = vmul.f32 %v5794, %v9550
        %v9864 = vmul.f32 %v5795, %v9551
        %v9865 = vmul.f32 %v5796, %v9552
        %v9866 = vmul.f32 %v5797, %v9553
        %v9867 = vmul.f32 %v5798, %v9554
        %v9868 = vmul.f32 %v5799, %v9555
        %v9869 = vmul.f32 %v5800, %v9556
        %v9870 = vmul.f32 %v5801, %v9557
        %v9871 = vmul.f32 %v5802, %v9558
        %v9872 = vmul.f32 %v5803, %v9559
        %v9873 = vmul.f32 %v5804, %v9560
        %v9874 = vmul.f32 %v5805, %v9561
        %v9875 = vmul.f32 %v5806, %v9562
        %v9876 = vmul.f32 %v5807, %v9563
        %v9877 = vmul.f32 %v5808, %v9564
        %v9878 = vmul.f32 %v5809, %v9565
        %v9879 = vmul.f32 %v5810, %v9566
        %v9880 = vmul.f32 %v5811, %v9567
        %v9881 = vmul.f32 %v5812, %v9568
        %v9882 = vmul.f32 %v5813, %v9569
        %v9883 = vmul.f32 %v5814, %v9570
        %v9884 = vmul.f32 %v5815, %v9571
        %v9885 = vmul.f32 %v5816, %v9572
        %v9886 = vmul.f32 %v5817, %v9573
        %v9887 = vmul.f32 %v5818, %v9574
        %v9888 = vmul.f32 %v5819, %v9575
        %v9889 = vmul.f32 %v5820, %v9576
        %v9890 = vmul.f32 %v5821, %v9577
        %v9891 = vmul.f32 %v5822, %v9578
        %v9892 = vmul.f32 %v5823, %v9579
        %v9893 = vmul.f32 %v5824, %v9580
        %v9894 = vmul.f32 %v5825, %v9581
        %v9895 = vmul.f32 %v5826, %v9582
        %v9896 = vmul.f32 %v5827, %v9583
        %v9897 = vmul.f32 %v5828, %v9584
        %v9898 = vmul.f32 %v5829, %v9585
        %v9899 = vmul.f32 %v5830, %v9586
        %v9900 = vmul.f32 %v5831, %v9587
        %v9901 = vmul.f32 %v5832, %v9588
        %v9902 = vmul.f32 %v5833, %v9589
        %v9903 = vmul.f32 %v5834, %v9590
        %v9904 = vmul.f32 %v5835, %v9591
        %v9905 = vmul.f32 %v5836, %v9592
        %v9906 = vmul.f32 %v5837, %v9593
        %v9907 = vmul.f32 %v5838, %v9594
        %v9908 = vmul.f32 %v5839, %v9595
        %v9909 = vmul.f32 %v5840, %v9596
        %v9910 = vmul.f32 %v5841, %v9597
        %v9911 = vmul.f32 %v5842, %v9598
        %v9912 = vmul.f32 %v5843, %v9599
        %v9913 = vmul.f32 %v5844, %v9600
        %v9914 = vmul.f32 %v5845, %v9601
        %v9915 = vmul.f32 %v5846, %v9602
        %v9916 = vmul.f32 %v5847, %v9603
        %v9917 = vmul.f32 %v5848, %v9604
        %v9918 = vmul.f32 %v5849, %v9605
        %9919 = vst [vmem:[%s186] sm:$0xff] %v9606
        %9920 = vst [vmem:[%s186 + $0x8] sm:$0xff] %v9607
        %9921 = vst [vmem:[%s186 + $0x10] sm:$0xff] %v9608
        %9922 = vst [vmem:[%s186 + $0x18] sm:$0xff] %v9609
        %9923 = vst [vmem:[%s186 + $0x20] sm:$0xff] %v9610
        %9924 = vst [vmem:[%s186 + $0x28] sm:$0xff] %v9611
        %9925 = vst [vmem:[%s186 + $0x30] sm:$0xff] %v9612
        %9926 = vst [vmem:[%s186 + $0x38] sm:$0xff] %v9613
        %9927 = vst [vmem:[%s186 + $0x40] sm:$0xff] %v9614
        %9928 = vst [vmem:[%s186 + $0x48] sm:$0xff] %v9615
        %9929 = vst [vmem:[%s186 + $0x50] sm:$0xff] %v9616
        %9930 = vst [vmem:[%s186 + $0x58] sm:$0xff] %v9617
        %9931 = vst [vmem:[%s186 + $0x60] sm:$0xff] %v9618
        %9932 = vst [vmem:[%s186 + $0x68] sm:$0xff] %v9619
        %9933 = vst [vmem:[%s186 + $0x70] sm:$0xff] %v9620
        %9934 = vst [vmem:[%s186 + $0x78] sm:$0xff] %v9621
        %9935 = vst [vmem:[%s186 + $0x80] sm:$0xff] %v9622
        %9936 = vst [vmem:[%s186 + $0x88] sm:$0xff] %v9623
        %9937 = vst [vmem:[%s186 + $0x90] sm:$0xff] %v9624
        %9938 = vst [vmem:[%s186 + $0x98] sm:$0xff] %v9625
        %9939 = vst [vmem:[%s186 + $0xa0] sm:$0xff] %v9626
        %9940 = vst [vmem:[%s186 + $0xa8] sm:$0xff] %v9627
        %9941 = vst [vmem:[%s186 + $0xb0] sm:$0xff] %v9628
        %9942 = vst [vmem:[%s186 + $0xb8] sm:$0xff] %v9629
        %9943 = vst [vmem:[%s186 + $0xc0] sm:$0xff] %v9630
        %9944 = vst [vmem:[%s186 + $0xc8] sm:$0xff] %v9631
        %9945 = vst [vmem:[%s186 + $0xd0] sm:$0xff] %v9632
        %9946 = vst [vmem:[%s186 + $0xd8] sm:$0xff] %v9633
        %9947 = vst [vmem:[%s186 + $0xe0] sm:$0xff] %v9634
        %9948 = vst [vmem:[%s186 + $0xe8] sm:$0xff] %v9635
        %9949 = vst [vmem:[%s186 + $0xf0] sm:$0xff] %v9636
        %9950 = vst [vmem:[%s186 + $0xf8] sm:$0xff] %v9637
        %9951 = vst [vmem:[%s186 + $0x100] sm:$0xff] %v9638
        %9952 = vst [vmem:[%s186 + $0x108] sm:$0xff] %v9639
        %9953 = vst [vmem:[%s186 + $0x110] sm:$0xff] %v9640
        %9954 = vst [vmem:[%s186 + $0x118] sm:$0xff] %v9641
        %9955 = vst [vmem:[%s186 + $0x120] sm:$0xff] %v9642
        %9956 = vst [vmem:[%s186 + $0x128] sm:$0xff] %v9643
        %9957 = vst [vmem:[%s186 + $0x130] sm:$0xff] %v9644
        %9958 = vst [vmem:[%s186 + $0x138] sm:$0xff] %v9645
        %9959 = vst [vmem:[%s186 + $0x140] sm:$0xff] %v9646
        %9960 = vst [vmem:[%s186 + $0x148] sm:$0xff] %v9647
        %9961 = vst [vmem:[%s186 + $0x150] sm:$0xff] %v9648
        %9962 = vst [vmem:[%s186 + $0x158] sm:$0xff] %v9649
        %9963 = vst [vmem:[%s186 + $0x160] sm:$0xff] %v9650
        %9964 = vst [vmem:[%s186 + $0x168] sm:$0xff] %v9651
        %9965 = vst [vmem:[%s186 + $0x170] sm:$0xff] %v9652
        %9966 = vst [vmem:[%s186 + $0x178] sm:$0xff] %v9653
        %9967 = vst [vmem:[%s186 + $0x180] sm:$0xff] %v9654
        %9968 = vst [vmem:[%s186 + $0x188] sm:$0xff] %v9655
        %9969 = vst [vmem:[%s186 + $0x190] sm:$0xff] %v9656
        %9970 = vst [vmem:[%s186 + $0x198] sm:$0xff] %v9657
        %9971 = vst [vmem:[%s186 + $0x1a0] sm:$0xff] %v9658
        %9972 = vst [vmem:[%s186 + $0x1a8] sm:$0xff] %v9659
        %9973 = vst [vmem:[%s186 + $0x1b0] sm:$0xff] %v9660
        %9974 = vst [vmem:[%s186 + $0x1b8] sm:$0xff] %v9661
        %9975 = vst [vmem:[%s186 + $0x1c0] sm:$0xff] %v9662
        %9976 = vst [vmem:[%s186 + $0x1c8] sm:$0xff] %v9663
        %9977 = vst [vmem:[%s186 + $0x1d0] sm:$0xff] %v9664
        %9978 = vst [vmem:[%s186 + $0x1d8] sm:$0xff] %v9665
        %9979 = vst [vmem:[%s186 + $0x1e0] sm:$0xff] %v9666
        %9980 = vst [vmem:[%s186 + $0x1e8] sm:$0xff] %v9667
        %9981 = vst [vmem:[%s186 + $0x1f0] sm:$0xff] %v9668
        %9982 = vst [vmem:[%s186 + $0x1f8] sm:$0xff] %v9669
        %9983 = vst [vmem:[%s186 + $0x200] sm:$0xff] %v9670
        %9984 = vst [vmem:[%s186 + $0x208] sm:$0xff] %v9671
        %9985 = vst [vmem:[%s186 + $0x210] sm:$0xff] %v9672
        %9986 = vst [vmem:[%s186 + $0x218] sm:$0xff] %v9673
        %9987 = vst [vmem:[%s186 + $0x220] sm:$0xff] %v9674
        %9988 = vst [vmem:[%s186 + $0x228] sm:$0xff] %v9675
        %9989 = vst [vmem:[%s186 + $0x230] sm:$0xff] %v9676
        %9990 = vst [vmem:[%s186 + $0x238] sm:$0xff] %v9677
        %9991 = vst [vmem:[%s186 + $0x240] sm:$0xff] %v9678
        %9992 = vst [vmem:[%s186 + $0x248] sm:$0xff] %v9679
        %9993 = vst [vmem:[%s186 + $0x250] sm:$0xff] %v9680
        %9994 = vst [vmem:[%s186 + $0x258] sm:$0xff] %v9681
        %9995 = vst [vmem:[%s186 + $0x260] sm:$0xff] %v9682
        %9996 = vst [vmem:[%s186 + $0x268] sm:$0xff] %v9683
        %9997 = vst [vmem:[%s186 + $0x270] sm:$0xff] %v9684
        %9998 = vst [vmem:[%s186 + $0x278] sm:$0xff] %v9685
        %9999 = vst [vmem:[%s186 + $0x280] sm:$0xff] %v9686
        %10000 = vst [vmem:[%s186 + $0x288] sm:$0xff] %v9687
        %10001 = vst [vmem:[%s186 + $0x290] sm:$0xff] %v9688
        %10002 = vst [vmem:[%s186 + $0x298] sm:$0xff] %v9689
        %10003 = vst [vmem:[%s186 + $0x2a0] sm:$0xff] %v9690
        %10004 = vst [vmem:[%s186 + $0x2a8] sm:$0xff] %v9691
        %10005 = vst [vmem:[%s186 + $0x2b0] sm:$0xff] %v9692
        %10006 = vst [vmem:[%s186 + $0x2b8] sm:$0xff] %v9693
        %10007 = vst [vmem:[%s186 + $0x2c0] sm:$0xff] %v9694
        %10008 = vst [vmem:[%s186 + $0x2c8] sm:$0xff] %v9695
        %10009 = vst [vmem:[%s186 + $0x2d0] sm:$0xff] %v9696
        %10010 = vst [vmem:[%s186 + $0x2d8] sm:$0xff] %v9697
        %10011 = vst [vmem:[%s186 + $0x2e0] sm:$0xff] %v9698
        %10012 = vst [vmem:[%s186 + $0x2e8] sm:$0xff] %v9699
        %10013 = vst [vmem:[%s186 + $0x2f0] sm:$0xff] %v9700
        %10014 = vst [vmem:[%s186 + $0x2f8] sm:$0xff] %v9701
        %10015 = vst [vmem:[%s186 + $0x300] sm:$0xff] %v9702
        %10016 = vst [vmem:[%s186 + $0x308] sm:$0xff] %v9703
        %10017 = vst [vmem:[%s186 + $0x310] sm:$0xff] %v9704
        %10018 = vst [vmem:[%s186 + $0x318] sm:$0xff] %v9705
        %10019 = vst [vmem:[%s186 + $0x320] sm:$0xff] %v9706
        %10020 = vst [vmem:[%s186 + $0x328] sm:$0xff] %v9707
        %10021 = vst [vmem:[%s186 + $0x330] sm:$0xff] %v9708
        %10022 = vst [vmem:[%s186 + $0x338] sm:$0xff] %v9709
        %10023 = vst [vmem:[%s186 + $0x340] sm:$0xff] %v9710
        %10024 = vst [vmem:[%s186 + $0x348] sm:$0xff] %v9711
        %10025 = vst [vmem:[%s186 + $0x350] sm:$0xff] %v9712
        %10026 = vst [vmem:[%s186 + $0x358] sm:$0xff] %v9713
        %10027 = vst [vmem:[%s186 + $0x360] sm:$0xff] %v9714
        %10028 = vst [vmem:[%s186 + $0x368] sm:$0xff] %v9715
        %10029 = vst [vmem:[%s186 + $0x370] sm:$0xff] %v9716
        %10030 = vst [vmem:[%s186 + $0x378] sm:$0xff] %v9717
        %10031 = vst [vmem:[%s186 + $0x380] sm:$0xff] %v9718
        %10032 = vst [vmem:[%s186 + $0x388] sm:$0xff] %v9719
        %10033 = vst [vmem:[%s186 + $0x390] sm:$0xff] %v9720
        %10034 = vst [vmem:[%s186 + $0x398] sm:$0xff] %v9721
        %10035 = vst [vmem:[%s186 + $0x3a0] sm:$0xff] %v9722
        %10036 = vst [vmem:[%s186 + $0x3a8] sm:$0xff] %v9723
        %10037 = vst [vmem:[%s186 + $0x3b0] sm:$0xff] %v9724
        %10038 = vst [vmem:[%s186 + $0x3b8] sm:$0xff] %v9725
        %10039 = vst [vmem:[%s186 + $0x3c0] sm:$0xff] %v9726
        %10040 = vst [vmem:[%s186 + $0x3c8] sm:$0xff] %v9727
        %10041 = vst [vmem:[%s186 + $0x3d0] sm:$0xff] %v9728
        %10042 = vst [vmem:[%s186 + $0x3d8] sm:$0xff] %v9729
        %10043 = vst [vmem:[%s186 + $0x3e0] sm:$0xff] %v9730
        %10044 = vst [vmem:[%s186 + $0x3e8] sm:$0xff] %v9731
        %10045 = vst [vmem:[%s186 + $0x3f0] sm:$0xff] %v9732
        %10046 = vst [vmem:[%s186 + $0x3f8] sm:$0xff] %v9733
        %10047 = vst [vmem:[%s186 + $0x400] sm:$0xff] %v9734
        %10048 = vst [vmem:[%s186 + $0x408] sm:$0xff] %v9735
        %10049 = vst [vmem:[%s186 + $0x410] sm:$0xff] %v9736
        %10050 = vst [vmem:[%s186 + $0x418] sm:$0xff] %v9737
        %10051 = vst [vmem:[%s186 + $0x420] sm:$0xff] %v9738
        %10052 = vst [vmem:[%s186 + $0x428] sm:$0xff] %v9739
        %10053 = vst [vmem:[%s186 + $0x430] sm:$0xff] %v9740
        %10054 = vst [vmem:[%s186 + $0x438] sm:$0xff] %v9741
        %10055 = vst [vmem:[%s186 + $0x440] sm:$0xff] %v9742
        %10056 = vst [vmem:[%s186 + $0x448] sm:$0xff] %v9743
        %10057 = vst [vmem:[%s186 + $0x450] sm:$0xff] %v9744
        %10058 = vst [vmem:[%s186 + $0x458] sm:$0xff] %v9745
        %10059 = vst [vmem:[%s186 + $0x460] sm:$0xff] %v9746
        %10060 = vst [vmem:[%s186 + $0x468] sm:$0xff] %v9747
        %10061 = vst [vmem:[%s186 + $0x470] sm:$0xff] %v9748
        %10062 = vst [vmem:[%s186 + $0x478] sm:$0xff] %v9749
        %10063 = vst [vmem:[%s186 + $0x480] sm:$0xff] %v9750
        %10064 = vst [vmem:[%s186 + $0x488] sm:$0xff] %v9751
        %10065 = vst [vmem:[%s186 + $0x490] sm:$0xff] %v9752
        %10066 = vst [vmem:[%s186 + $0x498] sm:$0xff] %v9753
        %10067 = vst [vmem:[%s186 + $0x4a0] sm:$0xff] %v9754
        %10068 = vst [vmem:[%s186 + $0x4a8] sm:$0xff] %v9755
        %10069 = vst [vmem:[%s186 + $0x4b0] sm:$0xff] %v9756
        %10070 = vst [vmem:[%s186 + $0x4b8] sm:$0xff] %v9757
        %10071 = vst [vmem:[%s186 + $0x4c0] sm:$0xff] %v9758
        %10072 = vst [vmem:[%s186 + $0x4c8] sm:$0xff] %v9759
        %10073 = vst [vmem:[%s186 + $0x4d0] sm:$0xff] %v9760
        %10074 = vst [vmem:[%s186 + $0x4d8] sm:$0xff] %v9761
        %10075 = vst [vmem:[%s186 + $0x4e0] sm:$0xff] %v9762
        %10076 = vst [vmem:[%s186 + $0x4e8] sm:$0xff] %v9763
        %10077 = vst [vmem:[%s186 + $0x4f0] sm:$0xff] %v9764
        %10078 = vst [vmem:[%s186 + $0x4f8] sm:$0xff] %v9765
        %10079 = vst [vmem:[%s186 + $0x500] sm:$0xff] %v9766
        %10080 = vst [vmem:[%s186 + $0x508] sm:$0xff] %v9767
        %10081 = vst [vmem:[%s186 + $0x510] sm:$0xff] %v9768
        %10082 = vst [vmem:[%s186 + $0x518] sm:$0xff] %v9769
        %10083 = vst [vmem:[%s186 + $0x520] sm:$0xff] %v9770
        %10084 = vst [vmem:[%s186 + $0x528] sm:$0xff] %v9771
        %10085 = vst [vmem:[%s186 + $0x530] sm:$0xff] %v9772
        %10086 = vst [vmem:[%s186 + $0x538] sm:$0xff] %v9773
        %10087 = vst [vmem:[%s186 + $0x540] sm:$0xff] %v9774
        %10088 = vst [vmem:[%s186 + $0x548] sm:$0xff] %v9775
        %10089 = vst [vmem:[%s186 + $0x550] sm:$0xff] %v9776
        %10090 = vst [vmem:[%s186 + $0x558] sm:$0xff] %v9777
        %10091 = vst [vmem:[%s186 + $0x560] sm:$0xff] %v9778
        %10092 = vst [vmem:[%s186 + $0x568] sm:$0xff] %v9779
        %10093 = vst [vmem:[%s186 + $0x570] sm:$0xff] %v9780
        %10094 = vst [vmem:[%s186 + $0x578] sm:$0xff] %v9781
        %10095 = vst [vmem:[%s186 + $0x580] sm:$0xff] %v9782
        %10096 = vst [vmem:[%s186 + $0x588] sm:$0xff] %v9783
        %10097 = vst [vmem:[%s186 + $0x590] sm:$0xff] %v9784
        %10098 = vst [vmem:[%s186 + $0x598] sm:$0xff] %v9785
        %10099 = vst [vmem:[%s186 + $0x5a0] sm:$0xff] %v9786
        %10100 = vst [vmem:[%s186 + $0x5a8] sm:$0xff] %v9787
        %10101 = vst [vmem:[%s186 + $0x5b0] sm:$0xff] %v9788
        %10102 = vst [vmem:[%s186 + $0x5b8] sm:$0xff] %v9789
        %10103 = vst [vmem:[%s186 + $0x5c0] sm:$0xff] %v9790
        %10104 = vst [vmem:[%s186 + $0x5c8] sm:$0xff] %v9791
        %10105 = vst [vmem:[%s186 + $0x5d0] sm:$0xff] %v9792
        %10106 = vst [vmem:[%s186 + $0x5d8] sm:$0xff] %v9793
        %10107 = vst [vmem:[%s186 + $0x5e0] sm:$0xff] %v9794
        %10108 = vst [vmem:[%s186 + $0x5e8] sm:$0xff] %v9795
        %10109 = vst [vmem:[%s186 + $0x5f0] sm:$0xff] %v9796
        %10110 = vst [vmem:[%s186 + $0x5f8] sm:$0xff] %v9797
        %10111 = vst [vmem:[%s186 + $0x600] sm:$0xff] %v9798
        %10112 = vst [vmem:[%s186 + $0x608] sm:$0xff] %v9799
        %10113 = vst [vmem:[%s186 + $0x610] sm:$0xff] %v9800
        %10114 = vst [vmem:[%s186 + $0x618] sm:$0xff] %v9801
        %10115 = vst [vmem:[%s186 + $0x620] sm:$0xff] %v9802
        %10116 = vst [vmem:[%s186 + $0x628] sm:$0xff] %v9803
        %10117 = vst [vmem:[%s186 + $0x630] sm:$0xff] %v9804
        %10118 = vst [vmem:[%s186 + $0x638] sm:$0xff] %v9805
        %10119 = vst [vmem:[%s186 + $0x640] sm:$0xff] %v9806
        %10120 = vst [vmem:[%s186 + $0x648] sm:$0xff] %v9807
        %10121 = vst [vmem:[%s186 + $0x650] sm:$0xff] %v9808
        %10122 = vst [vmem:[%s186 + $0x658] sm:$0xff] %v9809
        %10123 = vst [vmem:[%s186 + $0x660] sm:$0xff] %v9810
        %10124 = vst [vmem:[%s186 + $0x668] sm:$0xff] %v9811
        %10125 = vst [vmem:[%s186 + $0x670] sm:$0xff] %v9812
        %10126 = vst [vmem:[%s186 + $0x678] sm:$0xff] %v9813
        %10127 = vst [vmem:[%s186 + $0x680] sm:$0xff] %v9814
        %10128 = vst [vmem:[%s186 + $0x688] sm:$0xff] %v9815
        %10129 = vst [vmem:[%s186 + $0x690] sm:$0xff] %v9816
        %10130 = vst [vmem:[%s186 + $0x698] sm:$0xff] %v9817
        %10131 = vst [vmem:[%s186 + $0x6a0] sm:$0xff] %v9818
        %10132 = vst [vmem:[%s186 + $0x6a8] sm:$0xff] %v9819
        %10133 = vst [vmem:[%s186 + $0x6b0] sm:$0xff] %v9820
        %10134 = vst [vmem:[%s186 + $0x6b8] sm:$0xff] %v9821
        %10135 = vst [vmem:[%s186 + $0x6c0] sm:$0xff] %v9822
        %10136 = vst [vmem:[%s186 + $0x6c8] sm:$0xff] %v9823
        %10137 = vst [vmem:[%s186 + $0x6d0] sm:$0xff] %v9824
        %10138 = vst [vmem:[%s186 + $0x6d8] sm:$0xff] %v9825
        %10139 = vst [vmem:[%s186 + $0x6e0] sm:$0xff] %v9826
        %10140 = vst [vmem:[%s186 + $0x6e8] sm:$0xff] %v9827
        %10141 = vst [vmem:[%s186 + $0x6f0] sm:$0xff] %v9828
        %10142 = vst [vmem:[%s186 + $0x6f8] sm:$0xff] %v9829
        %10143 = vst [vmem:[%s186 + $0x700] sm:$0xff] %v9830
        %10144 = vst [vmem:[%s186 + $0x708] sm:$0xff] %v9831
        %10145 = vst [vmem:[%s186 + $0x710] sm:$0xff] %v9832
        %10146 = vst [vmem:[%s186 + $0x718] sm:$0xff] %v9833
        %10147 = vst [vmem:[%s186 + $0x720] sm:$0xff] %v9834
        %10148 = vst [vmem:[%s186 + $0x728] sm:$0xff] %v9835
        %10149 = vst [vmem:[%s186 + $0x730] sm:$0xff] %v9836
        %10150 = vst [vmem:[%s186 + $0x738] sm:$0xff] %v9837
        %10151 = vst [vmem:[%s186 + $0x740] sm:$0xff] %v9838
        %10152 = vst [vmem:[%s186 + $0x748] sm:$0xff] %v9839
        %10153 = vst [vmem:[%s186 + $0x750] sm:$0xff] %v9840
        %10154 = vst [vmem:[%s186 + $0x758] sm:$0xff] %v9841
        %10155 = vst [vmem:[%s186 + $0x760] sm:$0xff] %v9842
        %10156 = vst [vmem:[%s186 + $0x768] sm:$0xff] %v9843
        %10157 = vst [vmem:[%s186 + $0x770] sm:$0xff] %v9844
        %10158 = vst [vmem:[%s186 + $0x778] sm:$0xff] %v9845
        %10159 = vst [vmem:[%s186 + $0x780] sm:$0xff] %v9846
        %10160 = vst [vmem:[%s186 + $0x788] sm:$0xff] %v9847
        %10161 = vst [vmem:[%s186 + $0x790] sm:$0xff] %v9848
        %10162 = vst [vmem:[%s186 + $0x798] sm:$0xff] %v9849
        %10163 = vst [vmem:[%s186 + $0x7a0] sm:$0xff] %v9850
        %10164 = vst [vmem:[%s186 + $0x7a8] sm:$0xff] %v9851
        %10165 = vst [vmem:[%s186 + $0x7b0] sm:$0xff] %v9852
        %10166 = vst [vmem:[%s186 + $0x7b8] sm:$0xff] %v9853
        %10167 = vst [vmem:[%s186 + $0x7c0] sm:$0xff] %v9854
        %10168 = vst [vmem:[%s186 + $0x7c8] sm:$0xff] %v9855
        %10169 = vst [vmem:[%s186 + $0x7d0] sm:$0xff] %v9856
        %10170 = vst [vmem:[%s186 + $0x7d8] sm:$0xff] %v9857
        %10171 = vst [vmem:[%s186 + $0x7e0] sm:$0xff] %v9858
        %10172 = vst [vmem:[%s186 + $0x7e8] sm:$0xff] %v9859
        %10173 = vst [vmem:[%s186 + $0x7f0] sm:$0xff] %v9860
        %10174 = vst [vmem:[%s186 + $0x7f8] sm:$0xff] %v9861
        %10175 = vst [vmem:[%s186 + $0x800] sm:$0xff] %v9862
        %10176 = vst [vmem:[%s186 + $0x808] sm:$0xff] %v9863
        %10177 = vst [vmem:[%s186 + $0x810] sm:$0xff] %v9864
        %10178 = vst [vmem:[%s186 + $0x818] sm:$0xff] %v9865
        %10179 = vst [vmem:[%s186 + $0x820] sm:$0xff] %v9866
        %10180 = vst [vmem:[%s186 + $0x828] sm:$0xff] %v9867
        %10181 = vst [vmem:[%s186 + $0x830] sm:$0xff] %v9868
        %10182 = vst [vmem:[%s186 + $0x838] sm:$0xff] %v9869
        %10183 = vst [vmem:[%s186 + $0x840] sm:$0xff] %v9870
        %10184 = vst [vmem:[%s186 + $0x848] sm:$0xff] %v9871
        %10185 = vst [vmem:[%s186 + $0x850] sm:$0xff] %v9872
        %10186 = vst [vmem:[%s186 + $0x858] sm:$0xff] %v9873
        %10187 = vst [vmem:[%s186 + $0x860] sm:$0xff] %v9874
        %10188 = vst [vmem:[%s186 + $0x868] sm:$0xff] %v9875
        %10189 = vst [vmem:[%s186 + $0x870] sm:$0xff] %v9876
        %10190 = vst [vmem:[%s186 + $0x878] sm:$0xff] %v9877
        %10191 = vst [vmem:[%s186 + $0x880] sm:$0xff] %v9878
        %10192 = vst [vmem:[%s186 + $0x888] sm:$0xff] %v9879
        %10193 = vst [vmem:[%s186 + $0x890] sm:$0xff] %v9880
        %10194 = vst [vmem:[%s186 + $0x898] sm:$0xff] %v9881
        %10195 = vst [vmem:[%s186 + $0x8a0] sm:$0xff] %v9882
        %10196 = vst [vmem:[%s186 + $0x8a8] sm:$0xff] %v9883
        %10197 = vst [vmem:[%s186 + $0x8b0] sm:$0xff] %v9884
        %10198 = vst [vmem:[%s186 + $0x8b8] sm:$0xff] %v9885
        %10199 = vst [vmem:[%s186 + $0x8c0] sm:$0xff] %v9886
        %10200 = vst [vmem:[%s186 + $0x8c8] sm:$0xff] %v9887
        %10201 = vst [vmem:[%s186 + $0x8d0] sm:$0xff] %v9888
        %10202 = vst [vmem:[%s186 + $0x8d8] sm:$0xff] %v9889
        %10203 = vst [vmem:[%s186 + $0x8e0] sm:$0xff] %v9890
        %10204 = vst [vmem:[%s186 + $0x8e8] sm:$0xff] %v9891
        %10205 = vst [vmem:[%s186 + $0x8f0] sm:$0xff] %v9892
        %10206 = vst [vmem:[%s186 + $0x8f8] sm:$0xff] %v9893
        %10207 = vst [vmem:[%s186 + $0x900] sm:$0xff] %v9894
        %10208 = vst [vmem:[%s186 + $0x908] sm:$0xff] %v9895
        %10209 = vst [vmem:[%s186 + $0x910] sm:$0xff] %v9896
        %10210 = vst [vmem:[%s186 + $0x918] sm:$0xff] %v9897
        %10211 = vst [vmem:[%s186 + $0x920] sm:$0xff] %v9898
        %10212 = vst [vmem:[%s186 + $0x928] sm:$0xff] %v9899
        %10213 = vst [vmem:[%s186 + $0x930] sm:$0xff] %v9900
        %10214 = vst [vmem:[%s186 + $0x938] sm:$0xff] %v9901
        %10215 = vst [vmem:[%s186 + $0x940] sm:$0xff] %v9902
        %10216 = vst [vmem:[%s186 + $0x948] sm:$0xff] %v9903
        %10217 = vst [vmem:[%s186 + $0x950] sm:$0xff] %v9904
        %10218 = vst [vmem:[%s186 + $0x958] sm:$0xff] %v9905
        %10219 = vst [vmem:[%s186 + $0x960] sm:$0xff] %v9906
        %10220 = vst [vmem:[%s186 + $0x968] sm:$0xff] %v9907
        %10221 = vst [vmem:[%s186 + $0x970] sm:$0xff] %v9908
        %10222 = vst [vmem:[%s186 + $0x978] sm:$0xff] %v9909
        %10223 = vst [vmem:[%s186 + $0x980] sm:$0xff] %v9910
        %10224 = vst [vmem:[%s186 + $0x988] sm:$0xff] %v9911
        %10225 = vst [vmem:[%s186 + $0x990] sm:$0xff] %v9912
        %10226 = vst [vmem:[%s186 + $0x998] sm:$0xff] %v9913
        %10227 = vst [vmem:[%s186 + $0x9a0] sm:$0xff] %v9914
        %10228 = vst [vmem:[%s186 + $0x9a8] sm:$0xff] %v9915
        %10229 = vst [vmem:[%s186 + $0x9b0] sm:$0xff] %v9916
        %10230 = vst [vmem:[%s186 + $0x9b8] sm:$0xff] %v9917
        %10231 = vst [vmem:[%s186 + $0x9c0] sm:$0xff] %v9918
        %s10232 = sand.u32 %s90, 1
        %s10233 = scalar_lea.sflag [#allocation4], %s10232
        %s10234 = sand.u32 %s90, 1
        %s10235 = smul.addr %s10234, 2504
        %s10236 = scalar_lea.vmem [#allocation8], %s10235
        // Predicated region
        $region45: #{tpu_custom_call.1} parent=31 // pred_check
          %p10237 = pneg %p100
        $region46: #{tpu_custom_call.1} parent=31 // pred_check_branch
          %10239 = sbr.rel (%p10237) target = $region48
        $region47: #{tpu_custom_call.1} parent=31 // pred_region
          %s10240 = smul.u32 313, %s19
          %s10241 = ssub.s32 625, %s10240
          %p10242 = scmp.lt.s32.totalorder %s10241, 313
          %s10243 = scalar_select %p10242, %s10241, 313
          %s10244 = smul.u32 128, %s10243
          %s10246 = ssub.s32 40064, %s10244
          %10247 = vsyncadd %s10233, %s10246
          %p10248 = scmp.ne.s32.totalorder 0, %s10244
          %s10249 = smul.addr %s10240, 128
          %s10250 = scalar_lea.hbm %s3, %s10249
          %s10251 = smul.u32 8, %s10243
          %s10252 = sshll.u32 %s10236, 4
          %s10253 = int_to_ptr.vmem [resolvable:$true] %s10252
          %s10254 = sshll.u32 %s10251, 4
          %10258 = dma.vmem_to_hbm [thread:$0]  (%p10248), %s10253, %s10254, %s10250, %s10233, 128, 128, 8
        $region48: #{tpu_custom_call.1} parent=31 // pred_fallthru
          _
      $region32: #{tpu_custom_call.1} parent=5 // pred_fallthru
        _
      %p10259 = scmp.le.s32.totalorder 2, %s14
      // Predicated region
      $region49: #{tpu_custom_call.1} parent=5 // pred_check
        %p10260 = pneg %p10259
      $region50: #{tpu_custom_call.1} parent=5 // pred_check_branch
        %10262 = sbr.rel (%p10260) target = $region52
      $region51: #{tpu_custom_call.1} parent=5 // pred_region
        %s10263 = ssub.s32 %s14, 2
        // Predicated region
        $region53: #{tpu_custom_call.1} parent=51 // pred_check
          %p10264 = pneg %p106
        $region54: #{tpu_custom_call.1} parent=51 // pred_check_branch
          %10266 = sbr.rel (%p10264) target = $region56
        $region55: #{tpu_custom_call.1} parent=51 // pred_region
          %s10267 = sand.u32 %s91, 1
          %s10268 = scalar_lea.sflag [#allocation4], %s10267
          %s10269 = sand.u32 %s91, 1
          %s10270 = smul.addr %s10269, 2504
          %s10271 = scalar_lea.vmem [#allocation8], %s10270
          %10272 = dma.done %s10268, 40064
        $region56: #{tpu_custom_call.1} parent=51 // pred_fallthru
          _
      $region52: #{tpu_custom_call.1} parent=5 // pred_fallthru
        _
    $region6: #{tpu_custom_call.1} parent=1 // loop_footer
      %s18 = sadd.s32 1, %s14
    $region7: #{tpu_custom_call.1} parent=1 // loop_footer_branch
      %13 = sbr.rel target = $region3
    $region8: #{tpu_custom_call.1} parent=1 // loop_exit
      _
    %10273 = vsyncpa [#allocation3], 1
    %s10274 = scalar_lea.sflag [#allocation3], 1
    %10275 = vsyncpa %s10274, 1
    %10276 = vsyncpa [#allocation6], 1
    %10277 = vsyncpa [#allocation4], 1
    %s10278 = scalar_lea.sflag [#allocation4], 1
    %10279 = vsyncpa %s10278, 1

</llo_original>
